<compile_context>
chip_gen: v6e
topology: v6e:2x2x1
jax: 0.10.0
libtpu: 0.0.40
codegen_flags: <defaults>
</compile_context>

<pallas_src>
import numpy as np

import jax
import jax.numpy as jnp
from jax import lax
from jax.experimental import pallas as pl
from jax.experimental.pallas import tpu as pltpu


# ----------------------------- static geometry -----------------------------
H = W = 28                    # input spatial size implied by fc1 (9216 = 64*12*12)
C1, C2 = 32, 64               # conv channel counts
L1 = 25 * 28 + 25 + 1         # 726: conv1 columns computed (28-wide stripes)
L2 = 23 * 28 + 23 + 1         # 668: conv2 columns computed
LM = 22 * 28 + 22 + 1         # 639: pool-max columns computed
NPOOL = 12 * 12               # 144 pooled positions per channel
FLAT = C2 * NPOOL             # 9216
_TAP_OFFS = tuple(di * 28 + dj for di in range(3) for dj in range(3))


# ------------------------------ Pallas kernels ------------------------------

def conv_pool_kernel(x_ref, w1_ref, b1_ref, w2_ref, b2_ref, sel_ref, o_ref):
    """Fused conv1+relu+conv2+relu+maxpool(2) for a block of B images.

    Layout per image: channels on sublanes, flattened (row-stripe) spatial
    positions on lanes.  Stripe columns j in {26,27} (conv1) / {24..27}
    (conv2) are junk and are never selected by the pooling matrix.
      x_ref  : (B, 1, 784) f32     w1_ref : (32, 9)  f32    b1_ref : (32, 1) f32
      w2_ref : (64, 288)  bf16     b2_ref : (64, 1)  f32    sel_ref: (639, 144) bf16
      o_ref  : (B, 64, 144) bf16  -- (C, H*W) order == PyTorch flatten order
    """
    f32, bf16 = jnp.float32, jnp.bfloat16
    w1 = w1_ref[...]                                   # (32, 9)
    b1 = b1_ref[...]                                   # (32, 1)
    w2 = w2_ref[...]                                   # (64, 288) bf16
    b2 = b2_ref[...]                                   # (64, 1)
    sel = sel_ref[...]                                 # (639, 144) bf16
    n_img = x_ref.shape[0]

    for b in range(n_img):                             # unrolled; images independent
        xf = x_ref[b]                                  # (1, 784)

        # conv1 + bias + ReLU on the VPU: 9 shifted broadcast MACs, init = tap 0.
        y1 = w1[:, 0:1] * xf[:, _TAP_OFFS[0]:_TAP_OFFS[0] + L1]
        for t in range(1, 9):
            d = _TAP_OFFS[t]
            y1 = y1 + w1[:, t:t + 1] * xf[:, d:d + L1]
        y1 = jnp.maximum(y1 + b1, 0.0).astype(bf16)    # (32, 726) bf16, single cast

        # conv2 + bias + ReLU: one stacked K=288 bf16 MXU matmul.
        y1s = jnp.concatenate([y1[:, d:d + L2] for d in _TAP_OFFS], axis=0)  # (288, 668)
        z = jnp.dot(w2, y1s, preferred_element_type=f32)                     # (64, 668)
        z = jnp.maximum(z + b2, 0.0).astype(bf16)

        # 2x2 max-pool: row-pair max (offset 28) then column-pair max (offset 1),
        # then pick the stride-2 base columns with a constant 0/1 selection matmul.
        r = jnp.maximum(z[:, 0:LM + 1], z[:, 28:LM + 29])   # (64, 640)
        m = jnp.maximum(r[:, 0:LM], r[:, 1:LM + 1])         # (64, 639)
        pooled = jnp.dot(m, sel, preferred_element_type=f32)  # (64, 144)
        o_ref[b] = pooled.astype(o_ref.dtype)


def mlp_head_kernel(x_ref, w1_ref, b1_ref, w2_ref, b2_ref, o_ref):
    """fc1 -> relu -> fc2 -> log_softmax on one tile of rows.

    x:(TN,9216) bf16, w1:(9216,128) bf16, w2:(128,10) f32, out:(TN,10) f32.
    """
    h = jnp.dot(x_ref[...], w1_ref[...], preferred_element_type=jnp.float32)
    h = jnp.maximum(h + b1_ref[...], 0.0)
    logits = jnp.dot(h, w2_ref[...], preferred_element_type=jnp.float32)
    logits = logits + b2_ref[...]
    mx = jnp.max(logits, axis=-1, keepdims=True)
    zc = logits - mx
    lse = jnp.log(jnp.sum(jnp.exp(zc), axis=-1, keepdims=True))
    o_ref[...] = zc - lse


# --------------------------------- wrapper ----------------------------------

def _round_up(x, m):
    return (x + m - 1) // m * m


def _pool_select_matrix():
    """0/1 matrix that picks column 56*pi + 2*pj -> pooled slot 12*pi + pj."""
    sel = np.zeros((LM, NPOOL), np.float32)
    for pi in range(12):
        for pj in range(12):
            sel[56 * pi + 2 * pj, pi * 12 + pj] = 1.0
    return jnp.asarray(sel, dtype=jnp.bfloat16)


@jax.jit
def net_forward(x_nchw, params):
    """Forward pass equivalent to Net.forward (eval mode)."""
    N = x_nchw.shape[0]
    f32, bf16 = jnp.float32, jnp.bfloat16
    vmem = 32 * 1024 * 1024

    # ---- weight repacking (tiny; traced once under jit) ----
    w1k = params["conv1_w"].reshape(C1, 9).astype(f32)                  # (32, 9)
    b1k = params["conv1_b"].reshape(C1, 1).astype(f32)
    # conv2 taps stacked along K: column t*32 + c_in  (t = kh*3 + kw).
    w2s = (params["conv2_w"].transpose(0, 2, 3, 1)
           .reshape(C2, 9 * C1).astype(bf16))                           # (64, 288)
    b2k = params["conv2_b"].reshape(C2, 1).astype(f32)
    sel = _pool_select_matrix()                                         # (639, 144)
    w_fc1 = params["fc1_w"].T.astype(bf16)                              # (9216, 128)
    b_fc1 = params["fc1_b"].reshape(1, 128).astype(f32)
    w_fc2 = params["fc2_w"].T.astype(f32)                               # (128, 10)
    b_fc2 = params["fc2_b"].reshape(1, 10).astype(f32)

    # ---- fused conv1+relu+conv2+relu+maxpool: B images per grid step ----
    x_flat = x_nchw.reshape(N, 1, H * W).astype(f32)                    # (N, 1, 784)
    bimg = 8 if N >= 16 else max(1, (N + 1) // 2)   # keep >=2 grid steps (v7x 2 TCs)
    conv_grid = pl.cdiv(N, bimg)
    conv_flops = 2 * N * (C1 * 9 * L1 + C2 * (9 * C1) * L2 + C2 * LM * NPOOL)
    conv_bytes = (N * (H * W * 4 + FLAT * 2)
                  + (C1 * 9 + C1 + C2) * 4 + (C2 * 9 * C1 + LM * NPOOL) * 2)
    pooled = pl.pallas_call(
        conv_pool_kernel,
        out_shape=jax.ShapeDtypeStruct((N, C2, NPOOL), bf16),
        grid=(conv_grid,),
        in_specs=[
            pl.BlockSpec((bimg, 1, H * W), lambda i: (i, 0, 0)),  # image block
            pl.BlockSpec((C1, 9), lambda i: (0, 0)),              # resident weights
            pl.BlockSpec((C1, 1), lambda i: (0, 0)),
            pl.BlockSpec((C2, 9 * C1), lambda i: (0, 0)),
            pl.BlockSpec((C2, 1), lambda i: (0, 0)),
            pl.BlockSpec((LM, NPOOL), lambda i: (0, 0)),
        ],
        out_specs=pl.BlockSpec((bimg, C2, NPOOL), lambda i: (i, 0, 0)),
        compiler_params=pltpu.CompilerParams(
            dimension_semantics=("parallel",), vmem_limit_bytes=vmem),
        cost_estimate=pl.CostEstimate(
            flops=conv_flops, transcendentals=0, bytes_accessed=conv_bytes),
    )(x_flat, w1k, b1k, w2s, b2k, sel)

    # dropout1 / dropout2: identity at inference (module in eval mode).
    # TODO(synk): training-mode dropout (RNG Bernoulli masking) not implemented.

    # ---- flatten (already PyTorch (C,H,W) order) + fc1/relu/fc2/log_softmax ----
    flat = pooled.reshape(N, FLAT)                                      # (N, 9216) bf16
    if N >= 512:
        tn = 256
    else:
        tn = min(256, max(8, _round_up((N + 1) // 2, 8)))  # >=2 steps when possible
    mlp_grid = pl.cdiv(N, tn)
    mlp_flops = 2 * N * (FLAT * 128 + 128 * 10)
    mlp_bytes = (N * FLAT * 2 + FLAT * 128 * 2
                 + (128 + 128 * 10 + 10 + N * 10) * 4)
    out = pl.pallas_call(
        mlp_head_kernel,
        out_shape=jax.ShapeDtypeStruct((N, 10), f32),
        grid=(mlp_grid,),
        in_specs=[
            pl.BlockSpec((tn, FLAT), lambda i: (i, 0)),           # row tile (last may be partial)
            pl.BlockSpec((FLAT, 128), lambda i: (0, 0)),          # resident weights
            pl.BlockSpec((1, 128), lambda i: (0, 0)),
            pl.BlockSpec((128, 10), lambda i: (0, 0)),
            pl.BlockSpec((1, 10), lambda i: (0, 0)),
        ],
        out_specs=pl.BlockSpec((tn, 10), lambda i: (i, 0)),
        compiler_params=pltpu.CompilerParams(
            dimension_semantics=("parallel",), vmem_limit_bytes=vmem),
        cost_estimate=pl.CostEstimate(
            flops=mlp_flops, transcendentals=11 * N, bytes_accessed=mlp_bytes),
    )(flat, w_fc1, b_fc1, w_fc2, b_fc2)
    return out


# ---------------------------- pure-JAX reference ----------------------------

def reference_forward(x, params):
    hp = lax.Precision.HIGHEST
    y = lax.conv_general_dilated(x, params["conv1_w"], (1, 1), "VALID",
                                 dimension_numbers=("NCHW", "OIHW", "NCHW"),
                                 precision=hp)
    y = jax.nn.relu(y + params["conv1_b"][None, :, None, None])
    y = lax.conv_general_dilated(y, params["conv2_w"], (1, 1), "VALID",
                                 dimension_numbers=("NCHW", "OIHW", "NCHW"),
                                 precision=hp)
    y = jax.nn.relu(y + params["conv2_b"][None, :, None, None])
    y = lax.reduce_window(y, -jnp.inf, lax.max, (1, 1, 2, 2), (1, 1, 2, 2), "VALID")
    y = y.reshape(y.shape[0], -1)                 # PyTorch flatten: (C, H, W) order
    y = jax.nn.relu(jnp.dot(y, params["fc1_w"].T, precision=hp) + params["fc1_b"])
    y = jnp.dot(y, params["fc2_w"].T, precision=hp) + params["fc2_b"]
    return jax.nn.log_softmax(y, axis=1)


# -------------------------------- parameters --------------------------------

def init_params(key):
    def uniform(k, shape, fan_in):
        bound = 1.0 / jnp.sqrt(jnp.float32(fan_in))
        return jax.random.uniform(k, shape, jnp.float32, -bound, bound)

    ks = jax.random.split(key, 8)
    return {
        "conv1_w": uniform(ks[0], (32, 1, 3, 3), 1 * 9),
        "conv1_b": uniform(ks[1], (32,), 1 * 9),
        "conv2_w": uniform(ks[2], (64, 32, 3, 3), 32 * 9),
        "conv2_b": uniform(ks[3], (64,), 32 * 9),
        "fc1_w": uniform(ks[4], (128, 9216), 9216),
        "fc1_b": uniform(ks[5], (128,), 9216),
        "fc2_w": uniform(ks[6], (10, 128), 128),
        "fc2_b": uniform(ks[7], (10,), 128),
    }


if __name__ == "__main__":
    key = jax.random.PRNGKey(0)
    k_params, k_x = jax.random.split(key)
    params = init_params(k_params)
    # 28x28 single-channel input is implied by fc1's 9216 = 64 * 12 * 12.
    x = jax.random.normal(k_x, (2, 1, 28, 28), dtype=jnp.float32)

    out = jax.block_until_ready(net_forward(x, params))
    ref = jax.block_until_ready(reference_forward(x, params))

    # bf16 operands with f32 accumulation (conv2, selection matmul, fc1) give
    # ~1e-3 error on log-probs vs the f32 reference; this is intentional.
    if not jnp.allclose(out, ref, rtol=2e-2, atol=2e-2):
        raise AssertionError(
            f"Pallas output mismatch vs reference; max abs err = "
            f"{float(jnp.max(jnp.abs(out - ref)))}")
    print("KERNEL_OK")
</pallas_src>

<mosaic_0001>
module attributes {stable_mosaic.version = 11 : i64} {
  func.func @conv_pool_kernel(%arg0: i32, %arg1: memref<1x1x784xf32, #tpu.memory_space<vmem>>, %arg2: memref<32x9xf32, #tpu.memory_space<vmem>>, %arg3: memref<32x1xf32, #tpu.memory_space<vmem>>, %arg4: memref<64x288xbf16, #tpu.memory_space<vmem>>, %arg5: memref<64x1xf32, #tpu.memory_space<vmem>>, %arg6: memref<639x144xbf16, #tpu.memory_space<vmem>>, %arg7: memref<1x64x144xbf16, #tpu.memory_space<vmem>>) attributes {dimension_semantics = [#tpu.dimension_semantics<parallel>], iteration_bounds = array<i64: 2>, scalar_prefetch = 0 : i64, scratch_operands = 0 : i64, tpu.core_type = #tpu.core_type<tc>, window_params = [{transform_indices = @transform_0, window_bounds = array<i64: 1, 1, 784>}, {pipeline_mode = #tpu.pipeline_mode<synchronous>, transform_indices = @transform_1, window_bounds = array<i64: 32, 9>}, {pipeline_mode = #tpu.pipeline_mode<synchronous>, transform_indices = @transform_2, window_bounds = array<i64: 32, 1>}, {pipeline_mode = #tpu.pipeline_mode<synchronous>, transform_indices = @transform_3, window_bounds = array<i64: 64, 288>}, {pipeline_mode = #tpu.pipeline_mode<synchronous>, transform_indices = @transform_4, window_bounds = array<i64: 64, 1>}, {pipeline_mode = #tpu.pipeline_mode<synchronous>, transform_indices = @transform_5, window_bounds = array<i64: 639, 144>}, {transform_indices = @transform_6, window_bounds = array<i64: 1, 64, 144>}]} {
    %c0 = arith.constant 0 : index
    %c0_0 = arith.constant 0 : index
    %0 = vector.load %arg2[%c0, %c0_0] : memref<32x9xf32, #tpu.memory_space<vmem>>, vector<32x9xf32>
    %c0_1 = arith.constant 0 : index
    %c0_2 = arith.constant 0 : index
    %1 = vector.load %arg3[%c0_1, %c0_2] : memref<32x1xf32, #tpu.memory_space<vmem>>, vector<32x1xf32>
    %c0_3 = arith.constant 0 : index
    %c0_4 = arith.constant 0 : index
    %2 = vector.load %arg4[%c0_3, %c0_4] : memref<64x288xbf16, #tpu.memory_space<vmem>>, vector<64x288xbf16>
    %c0_5 = arith.constant 0 : index
    %c0_6 = arith.constant 0 : index
    %3 = vector.load %arg5[%c0_5, %c0_6] : memref<64x1xf32, #tpu.memory_space<vmem>>, vector<64x1xf32>
    %c0_7 = arith.constant 0 : index
    %c0_8 = arith.constant 0 : index
    %4 = vector.load %arg6[%c0_7, %c0_8] : memref<639x144xbf16, #tpu.memory_space<vmem>>, vector<639x144xbf16>
    %c0_9 = arith.constant 0 : index
    %c0_10 = arith.constant 0 : index
    %c0_11 = arith.constant 0 : index
    %5 = vector.load %arg1[%c0_9, %c0_10, %c0_11] : memref<1x1x784xf32, #tpu.memory_space<vmem>>, vector<1x1x784xf32>
    %6 = vector.shape_cast %5 : vector<1x1x784xf32> to vector<1x784xf32>
    %7 = vector.extract_strided_slice %0 {offsets = [0, 0], sizes = [32, 1], strides = [1, 1]} : vector<32x9xf32> to vector<32x1xf32>
    %8 = vector.extract_strided_slice %6 {offsets = [0, 0], sizes = [1, 726], strides = [1, 1]} : vector<1x784xf32> to vector<1x726xf32>
    %9 = vector.broadcast %7 : vector<32x1xf32> to vector<32x726xf32>
    %10 = vector.broadcast %8 : vector<1x726xf32> to vector<32x726xf32>
    %11 = arith.mulf %9, %10 : vector<32x726xf32>
    %12 = vector.extract_strided_slice %0 {offsets = [0, 1], sizes = [32, 1], strides = [1, 1]} : vector<32x9xf32> to vector<32x1xf32>
    %13 = vector.extract_strided_slice %6 {offsets = [0, 1], sizes = [1, 726], strides = [1, 1]} : vector<1x784xf32> to vector<1x726xf32>
    %14 = vector.broadcast %12 : vector<32x1xf32> to vector<32x726xf32>
    %15 = vector.broadcast %13 : vector<1x726xf32> to vector<32x726xf32>
    %16 = arith.mulf %14, %15 : vector<32x726xf32>
    %17 = arith.addf %11, %16 : vector<32x726xf32>
    %18 = vector.extract_strided_slice %0 {offsets = [0, 2], sizes = [32, 1], strides = [1, 1]} : vector<32x9xf32> to vector<32x1xf32>
    %19 = vector.extract_strided_slice %6 {offsets = [0, 2], sizes = [1, 726], strides = [1, 1]} : vector<1x784xf32> to vector<1x726xf32>
    %20 = vector.broadcast %18 : vector<32x1xf32> to vector<32x726xf32>
    %21 = vector.broadcast %19 : vector<1x726xf32> to vector<32x726xf32>
    %22 = arith.mulf %20, %21 : vector<32x726xf32>
    %23 = arith.addf %17, %22 : vector<32x726xf32>
    %24 = vector.extract_strided_slice %0 {offsets = [0, 3], sizes = [32, 1], strides = [1, 1]} : vector<32x9xf32> to vector<32x1xf32>
    %25 = vector.extract_strided_slice %6 {offsets = [0, 28], sizes = [1, 726], strides = [1, 1]} : vector<1x784xf32> to vector<1x726xf32>
    %26 = vector.broadcast %24 : vector<32x1xf32> to vector<32x726xf32>
    %27 = vector.broadcast %25 : vector<1x726xf32> to vector<32x726xf32>
    %28 = arith.mulf %26, %27 : vector<32x726xf32>
    %29 = arith.addf %23, %28 : vector<32x726xf32>
    %30 = vector.extract_strided_slice %0 {offsets = [0, 4], sizes = [32, 1], strides = [1, 1]} : vector<32x9xf32> to vector<32x1xf32>
    %31 = vector.extract_strided_slice %6 {offsets = [0, 29], sizes = [1, 726], strides = [1, 1]} : vector<1x784xf32> to vector<1x726xf32>
    %32 = vector.broadcast %30 : vector<32x1xf32> to vector<32x726xf32>
    %33 = vector.broadcast %31 : vector<1x726xf32> to vector<32x726xf32>
    %34 = arith.mulf %32, %33 : vector<32x726xf32>
    %35 = arith.addf %29, %34 : vector<32x726xf32>
    %36 = vector.extract_strided_slice %0 {offsets = [0, 5], sizes = [32, 1], strides = [1, 1]} : vector<32x9xf32> to vector<32x1xf32>
    %37 = vector.extract_strided_slice %6 {offsets = [0, 30], sizes = [1, 726], strides = [1, 1]} : vector<1x784xf32> to vector<1x726xf32>
    %38 = vector.broadcast %36 : vector<32x1xf32> to vector<32x726xf32>
    %39 = vector.broadcast %37 : vector<1x726xf32> to vector<32x726xf32>
    %40 = arith.mulf %38, %39 : vector<32x726xf32>
    %41 = arith.addf %35, %40 : vector<32x726xf32>
    %42 = vector.extract_strided_slice %0 {offsets = [0, 6], sizes = [32, 1], strides = [1, 1]} : vector<32x9xf32> to vector<32x1xf32>
    %43 = vector.extract_strided_slice %6 {offsets = [0, 56], sizes = [1, 726], strides = [1, 1]} : vector<1x784xf32> to vector<1x726xf32>
    %44 = vector.broadcast %42 : vector<32x1xf32> to vector<32x726xf32>
    %45 = vector.broadcast %43 : vector<1x726xf32> to vector<32x726xf32>
    %46 = arith.mulf %44, %45 : vector<32x726xf32>
    %47 = arith.addf %41, %46 : vector<32x726xf32>
    %48 = vector.extract_strided_slice %0 {offsets = [0, 7], sizes = [32, 1], strides = [1, 1]} : vector<32x9xf32> to vector<32x1xf32>
    %49 = vector.extract_strided_slice %6 {offsets = [0, 57], sizes = [1, 726], strides = [1, 1]} : vector<1x784xf32> to vector<1x726xf32>
    %50 = vector.broadcast %48 : vector<32x1xf32> to vector<32x726xf32>
    %51 = vector.broadcast %49 : vector<1x726xf32> to vector<32x726xf32>
    %52 = arith.mulf %50, %51 : vector<32x726xf32>
    %53 = arith.addf %47, %52 : vector<32x726xf32>
    %54 = vector.extract_strided_slice %0 {offsets = [0, 8], sizes = [32, 1], strides = [1, 1]} : vector<32x9xf32> to vector<32x1xf32>
    %55 = vector.extract_strided_slice %6 {offsets = [0, 58], sizes = [1, 726], strides = [1, 1]} : vector<1x784xf32> to vector<1x726xf32>
    %56 = vector.broadcast %54 : vector<32x1xf32> to vector<32x726xf32>
    %57 = vector.broadcast %55 : vector<1x726xf32> to vector<32x726xf32>
    %58 = arith.mulf %56, %57 : vector<32x726xf32>
    %59 = arith.addf %53, %58 : vector<32x726xf32>
    %60 = vector.broadcast %1 : vector<32x1xf32> to vector<32x726xf32>
    %61 = arith.addf %59, %60 : vector<32x726xf32>
    %cst = arith.constant 0.000000e+00 : f32
    %62 = vector.broadcast %cst : f32 to vector<32x726xf32>
    %63 = arith.maximumf %61, %62 : vector<32x726xf32>
    %64 = arith.truncf %63 : vector<32x726xf32> to vector<32x726xbf16>
    %65 = vector.extract_strided_slice %64 {offsets = [0, 0], sizes = [32, 668], strides = [1, 1]} : vector<32x726xbf16> to vector<32x668xbf16>
    %66 = vector.extract_strided_slice %64 {offsets = [0, 1], sizes = [32, 668], strides = [1, 1]} : vector<32x726xbf16> to vector<32x668xbf16>
    %67 = vector.extract_strided_slice %64 {offsets = [0, 2], sizes = [32, 668], strides = [1, 1]} : vector<32x726xbf16> to vector<32x668xbf16>
    %68 = vector.extract_strided_slice %64 {offsets = [0, 28], sizes = [32, 668], strides = [1, 1]} : vector<32x726xbf16> to vector<32x668xbf16>
    %69 = vector.extract_strided_slice %64 {offsets = [0, 29], sizes = [32, 668], strides = [1, 1]} : vector<32x726xbf16> to vector<32x668xbf16>
    %70 = vector.extract_strided_slice %64 {offsets = [0, 30], sizes = [32, 668], strides = [1, 1]} : vector<32x726xbf16> to vector<32x668xbf16>
    %71 = vector.extract_strided_slice %64 {offsets = [0, 56], sizes = [32, 668], strides = [1, 1]} : vector<32x726xbf16> to vector<32x668xbf16>
    %72 = vector.extract_strided_slice %64 {offsets = [0, 57], sizes = [32, 668], strides = [1, 1]} : vector<32x726xbf16> to vector<32x668xbf16>
    %73 = vector.extract_strided_slice %64 {offsets = [0, 58], sizes = [32, 668], strides = [1, 1]} : vector<32x726xbf16> to vector<32x668xbf16>
    %74 = tpu.concatenate %65, %66, %67, %68, %69, %70, %71, %72, %73 in 0 : vector<32x668xbf16>, vector<32x668xbf16>, vector<32x668xbf16>, vector<32x668xbf16>, vector<32x668xbf16>, vector<32x668xbf16>, vector<32x668xbf16>, vector<32x668xbf16>, vector<32x668xbf16> -> vector<288x668xbf16>
    %cst_12 = arith.constant dense<0.000000e+00> : vector<64x668xf32>
    %75 = tpu.matmul %2, %74, %cst_12 {dimension_numbers = #tpu.dot_dimension_numbers<[1], [0], [0], [1], [0, 0, 1, 1], [], []>} : vector<64x288xbf16>, vector<288x668xbf16>, vector<64x668xf32> -> vector<64x668xf32>
    %76 = vector.broadcast %3 : vector<64x1xf32> to vector<64x668xf32>
    %77 = arith.addf %75, %76 : vector<64x668xf32>
    %cst_13 = arith.constant 0.000000e+00 : f32
    %78 = vector.broadcast %cst_13 : f32 to vector<64x668xf32>
    %79 = arith.maximumf %77, %78 : vector<64x668xf32>
    %80 = arith.truncf %79 : vector<64x668xf32> to vector<64x668xbf16>
    %81 = vector.extract_strided_slice %80 {offsets = [0, 0], sizes = [64, 640], strides = [1, 1]} : vector<64x668xbf16> to vector<64x640xbf16>
    %82 = vector.extract_strided_slice %80 {offsets = [0, 28], sizes = [64, 640], strides = [1, 1]} : vector<64x668xbf16> to vector<64x640xbf16>
    %83 = arith.maximumf %81, %82 : vector<64x640xbf16>
    %84 = vector.extract_strided_slice %83 {offsets = [0, 0], sizes = [64, 639], strides = [1, 1]} : vector<64x640xbf16> to vector<64x639xbf16>
    %85 = vector.extract_strided_slice %83 {offsets = [0, 1], sizes = [64, 639], strides = [1, 1]} : vector<64x640xbf16> to vector<64x639xbf16>
    %86 = arith.maximumf %84, %85 : vector<64x639xbf16>
    %cst_14 = arith.constant dense<0.000000e+00> : vector<64x144xf32>
    %87 = tpu.matmul %86, %4, %cst_14 {dimension_numbers = #tpu.dot_dimension_numbers<[1], [0], [0], [1], [0, 0, 1, 1], [], []>} : vector<64x639xbf16>, vector<639x144xbf16>, vector<64x144xf32> -> vector<64x144xf32>
    %88 = arith.truncf %87 : vector<64x144xf32> to vector<64x144xbf16>
    %c0_15 = arith.constant 0 : index
    %c0_16 = arith.constant 0 : index
    %c0_17 = arith.constant 0 : index
    %89 = vector.load %arg7[%c0_15, %c0_16, %c0_17] : memref<1x64x144xbf16, #tpu.memory_space<vmem>>, vector<1x64x144xbf16>
    %90 = vector.shape_cast %89 : vector<1x64x144xbf16> to vector<64x144xbf16>
    %91 = vector.shape_cast %88 : vector<64x144xbf16> to vector<1x64x144xbf16>
    tpu.vector_store %arg7[%c0_15, %c0_16, %c0_17], %91 {strides = array<i32>} : memref<1x64x144xbf16, #tpu.memory_space<vmem>>, vector<1x64x144xbf16>,
    return
  }
  func.func @transform_0(%arg0: i32) -> (i32, i32, i32) {
    %c0_i32 = arith.constant 0 : i32
    %c0_i32_0 = arith.constant 0 : i32
    %c0_i32_1 = arith.constant 0 : i32
    return %arg0, %c0_i32, %c0_i32_0 : i32, i32, i32
  }
  func.func @transform_1(%arg0: i32) -> (i32, i32) {
    %c0_i32 = arith.constant 0 : i32
    %c0_i32_0 = arith.constant 0 : i32
    %c0_i32_1 = arith.constant 0 : i32
    return %c0_i32, %c0_i32_0 : i32, i32
  }
  func.func @transform_2(%arg0: i32) -> (i32, i32) {
    %c0_i32 = arith.constant 0 : i32
    %c0_i32_0 = arith.constant 0 : i32
    %c0_i32_1 = arith.constant 0 : i32
    return %c0_i32, %c0_i32_0 : i32, i32
  }
  func.func @transform_3(%arg0: i32) -> (i32, i32) {
    %c0_i32 = arith.constant 0 : i32
    %c0_i32_0 = arith.constant 0 : i32
    %c0_i32_1 = arith.constant 0 : i32
    return %c0_i32, %c0_i32_0 : i32, i32
  }
  func.func @transform_4(%arg0: i32) -> (i32, i32) {
    %c0_i32 = arith.constant 0 : i32
    %c0_i32_0 = arith.constant 0 : i32
    %c0_i32_1 = arith.constant 0 : i32
    return %c0_i32, %c0_i32_0 : i32, i32
  }
  func.func @transform_5(%arg0: i32) -> (i32, i32) {
    %c0_i32 = arith.constant 0 : i32
    %c0_i32_0 = arith.constant 0 : i32
    %c0_i32_1 = arith.constant 0 : i32
    return %c0_i32, %c0_i32_0 : i32, i32
  }
  func.func @transform_6(%arg0: i32) -> (i32, i32, i32) {
    %c0_i32 = arith.constant 0 : i32
    %c0_i32_0 = arith.constant 0 : i32
    %c0_i32_1 = arith.constant 0 : i32
    return %arg0, %c0_i32, %c0_i32_0 : i32, i32, i32
  }
}

module attributes {stable_mosaic.version = 11 : i64} {
  func.func @mlp_head_kernel(%arg0: i32, %arg1: memref<8x9216xbf16, #tpu.memory_space<vmem>>, %arg2: memref<9216x128xbf16, #tpu.memory_space<vmem>>, %arg3: memref<1x128xf32, #tpu.memory_space<vmem>>, %arg4: memref<128x10xf32, #tpu.memory_space<vmem>>, %arg5: memref<1x10xf32, #tpu.memory_space<vmem>>, %arg6: memref<8x10xf32, #tpu.memory_space<vmem>>) attributes {dimension_semantics = [#tpu.dimension_semantics<parallel>], iteration_bounds = array<i64: 1>, scalar_prefetch = 0 : i64, scratch_operands = 0 : i64, tpu.core_type = #tpu.core_type<tc>, window_params = [{transform_indices = @transform_0, window_bounds = array<i64: 8, 9216>}, {pipeline_mode = #tpu.pipeline_mode<synchronous>, transform_indices = @transform_1, window_bounds = array<i64: 9216, 128>}, {pipeline_mode = #tpu.pipeline_mode<synchronous>, transform_indices = @transform_2, window_bounds = array<i64: 1, 128>}, {pipeline_mode = #tpu.pipeline_mode<synchronous>, transform_indices = @transform_3, window_bounds = array<i64: 128, 10>}, {pipeline_mode = #tpu.pipeline_mode<synchronous>, transform_indices = @transform_4, window_bounds = array<i64: 1, 10>}, {transform_indices = @transform_5, window_bounds = array<i64: 8, 10>}]} {
    %c0 = arith.constant 0 : index
    %c0_0 = arith.constant 0 : index
    %0 = vector.load %arg1[%c0, %c0_0] : memref<8x9216xbf16, #tpu.memory_space<vmem>>, vector<8x9216xbf16>
    %c0_1 = arith.constant 0 : index
    %c0_2 = arith.constant 0 : index
    %1 = vector.load %arg2[%c0_1, %c0_2] : memref<9216x128xbf16, #tpu.memory_space<vmem>>, vector<9216x128xbf16>
    %cst = arith.constant dense<0.000000e+00> : vector<8x128xf32>
    %2 = tpu.matmul %0, %1, %cst {dimension_numbers = #tpu.dot_dimension_numbers<[1], [0], [0], [1], [0, 0, 1, 1], [], []>} : vector<8x9216xbf16>, vector<9216x128xbf16>, vector<8x128xf32> -> vector<8x128xf32>
    %c0_3 = arith.constant 0 : index
    %c0_4 = arith.constant 0 : index
    %3 = vector.load %arg3[%c0_3, %c0_4] : memref<1x128xf32, #tpu.memory_space<vmem>>, vector<1x128xf32>
    %4 = vector.broadcast %3 : vector<1x128xf32> to vector<8x128xf32>
    %5 = arith.addf %2, %4 : vector<8x128xf32>
    %cst_5 = arith.constant 0.000000e+00 : f32
    %6 = vector.broadcast %cst_5 : f32 to vector<8x128xf32>
    %7 = arith.maximumf %5, %6 : vector<8x128xf32>
    %c0_6 = arith.constant 0 : index
    %c0_7 = arith.constant 0 : index
    %8 = vector.load %arg4[%c0_6, %c0_7] : memref<128x10xf32, #tpu.memory_space<vmem>>, vector<128x10xf32>
    %cst_8 = arith.constant dense<0.000000e+00> : vector<8x10xf32>
    %9 = tpu.matmul %7, %8, %cst_8 {dimension_numbers = #tpu.dot_dimension_numbers<[1], [0], [0], [1], [0, 0, 1, 1], [], []>} : vector<8x128xf32>, vector<128x10xf32>, vector<8x10xf32> -> vector<8x10xf32>
    %c0_9 = arith.constant 0 : index
    %c0_10 = arith.constant 0 : index
    %10 = vector.load %arg5[%c0_9, %c0_10] : memref<1x10xf32, #tpu.memory_space<vmem>>, vector<1x10xf32>
    %11 = vector.broadcast %10 : vector<1x10xf32> to vector<8x10xf32>
    %12 = arith.addf %9, %11 : vector<8x10xf32>
    %cst_11 = arith.constant dense<0xFF800000> : vector<8xf32>
    %13 = vector.multi_reduction <maximumf>, %12, %cst_11 [1] : vector<8x10xf32> to vector<8xf32>
    %14 = vector.shape_cast %13 : vector<8xf32> to vector<8x1xf32>
    %15 = vector.broadcast %14 : vector<8x1xf32> to vector<8x10xf32>
    %16 = arith.subf %12, %15 : vector<8x10xf32>
    %17 = math.exp %16 : vector<8x10xf32>
    %cst_12 = arith.constant dense<0.000000e+00> : vector<8xf32>
    %18 = vector.multi_reduction <add>, %17, %cst_12 [1] : vector<8x10xf32> to vector<8xf32>
    %19 = vector.shape_cast %18 : vector<8xf32> to vector<8x1xf32>
    %20 = math.log %19 : vector<8x1xf32>
    %21 = vector.broadcast %20 : vector<8x1xf32> to vector<8x10xf32>
    %22 = arith.subf %16, %21 : vector<8x10xf32>
    %c0_13 = arith.constant 0 : index
    %c0_14 = arith.constant 0 : index
    %23 = vector.load %arg6[%c0_13, %c0_14] : memref<8x10xf32, #tpu.memory_space<vmem>>, vector<8x10xf32>
    tpu.vector_store %arg6[%c0_13, %c0_14], %22 {strides = array<i32>} : memref<8x10xf32, #tpu.memory_space<vmem>>, vector<8x10xf32>,
    return
  }
  func.func @transform_0(%arg0: i32) -> (i32, i32) {
    %c0_i32 = arith.constant 0 : i32
    %c0_i32_0 = arith.constant 0 : i32
    return %arg0, %c0_i32 : i32, i32
  }
  func.func @transform_1(%arg0: i32) -> (i32, i32) {
    %c0_i32 = arith.constant 0 : i32
    %c0_i32_0 = arith.constant 0 : i32
    %c0_i32_1 = arith.constant 0 : i32
    return %c0_i32, %c0_i32_0 : i32, i32
  }
  func.func @transform_2(%arg0: i32) -> (i32, i32) {
    %c0_i32 = arith.constant 0 : i32
    %c0_i32_0 = arith.constant 0 : i32
    %c0_i32_1 = arith.constant 0 : i32
    return %c0_i32, %c0_i32_0 : i32, i32
  }
  func.func @transform_3(%arg0: i32) -> (i32, i32) {
    %c0_i32 = arith.constant 0 : i32
    %c0_i32_0 = arith.constant 0 : i32
    %c0_i32_1 = arith.constant 0 : i32
    return %c0_i32, %c0_i32_0 : i32, i32
  }
  func.func @transform_4(%arg0: i32) -> (i32, i32) {
    %c0_i32 = arith.constant 0 : i32
    %c0_i32_0 = arith.constant 0 : i32
    %c0_i32_1 = arith.constant 0 : i32
    return %c0_i32, %c0_i32_0 : i32, i32
  }
  func.func @transform_5(%arg0: i32) -> (i32, i32) {
    %c0_i32 = arith.constant 0 : i32
    %c0_i32_0 = arith.constant 0 : i32
    return %arg0, %c0_i32 : i32, i32
  }
}

</mosaic_0001>

<llo_original>
// kernel: net_forward.2
$region0: #{net_forward.2}
  #allocation0 [shape = 'u32[]', space=smem, size = 0x4, offset = 0x4, fixed_abs, tag = 'smem constant byte address 0x4 - core index']
  #allocation1 [shape = 'u32[144,128]{1,0:T(1,128)}', space=vmem, size = 0x12000, scoped, tag = 'internal scratch']
  %s0 = inlined_call_operand.vmem [shape: f32[2,1,784], index: 0, kind: input, shape index: {}]
  %s1 = inlined_call_operand.vmem [shape: f32[32,9], index: 1, kind: input, shape index: {}]
  %s2 = inlined_call_operand.vmem [shape: f32[32,1], index: 2, kind: input, shape index: {}]
  %s3 = inlined_call_operand.vmem [shape: bf16[64,288], index: 3, kind: input, shape index: {}]
  %s4 = inlined_call_operand.vmem [shape: f32[64,1], index: 4, kind: input, shape index: {}]
  %s5 = inlined_call_operand.hbm [shape: bf16[639,144], index: 5, kind: input, shape index: {}]
  %s6 = inlined_call_operand.vmem [shape: bf16[2,64,144], index: 6, kind: output, shape index: {}]
  %s7 = sld [smem:[#allocation0]]
  $region61: #{net_forward.2} parent=0
    _
  %s9 = ssub.s32 1, %s7
  %s10 = scalar_select 0, %s9, %s7
  $region1: #{net_forward.2} parent=0
    #allocation2 [shape = 'u8[327680]{0}', space=vmem, size = 0x50000, scoped, tag = 'input window, operand 5, single buffered']
    #allocation3 [shape = 's32[2]{0}', space=sflag, size = 0x8, scoped, tag = 'scoped memory for net_forward.2']
    %11 = vsyncpa [#allocation3], 0
    loop: start=0, step=1, limit=4
    $region2: #{net_forward.2} parent=1 // loop_pre_header
      _
    $region3: #{net_forward.2} parent=1 // loop_header
      %s13 = sphi 0, %s17
      %p14 = scmp.ge.s32.totalorder %s13, 4
      %s23 = sphi 0, %s25
      %s26 = sphi 0, %s23
      %s27 = sphi 0, %s26
      %s43 = sphi 0, %s27
      %s47 = sphi 0, %s47
      %s49 = sphi 0, %s47
      %s50 = sphi 0, %s49
      %s64 = sphi 0, %s50
      %s68 = sphi 0, %s68
      %s70 = sphi 0, %s68
      %s71 = sphi 0, %s70
      %s85 = sphi 0, %s71
      %s89 = sphi 0, %s89
      %s91 = sphi 0, %s89
      %s92 = sphi 0, %s91
      %s106 = sphi 0, %s92
      %s110 = sphi 0, %s110
      %s112 = sphi 0, %s110
      %s113 = sphi 0, %s112
      %s127 = sphi 0, %s113
      %s131 = sphi 0, %s131
      %s133 = sphi 0, %s131
      %s134 = sphi 0, %s133
      %s148 = sphi 0, %s134
      %s154 = sphi 0, %s156
      %s157 = sphi 0, %s154
      %s158 = sphi 0, %s157
      %s174 = sphi 0, %s158
    $region4: #{net_forward.2} parent=1 // loop_header_branch
      %16 = sbr.rel (%p14) target = $region8
    $region5: #{net_forward.2} parent=1 // loop_body
      %s18 = ssub.s32 %s13, 1
      %s19 = ssub.s32 %s13, 2
      %s20 = sadd.s32 %s13, 1
      %s21 = ssub.s32 %s13, %s20
      %p22 = scmp.eq.s32.totalorder %s21, 0
      %s24 = sadd.s32 %s23, 1
      %s25 = scalar_select %p22, %s23, %s24
      %p28 = pneg %p22
      %p29 = scmp.eq.s32.totalorder %s13, 1
      %p30 = por %p28, %p29
      %p31 = scmp.ne.s32.totalorder %s23, %s26
      %p32 = scmp.eq.s32.totalorder %s13, 0
      %p33 = por %p31, %p32
      %p34 = scmp.ne.s32.totalorder %s23, %s26
      %p35 = scmp.eq.s32.totalorder %s18, 1
      %p36 = por %p34, %p35
      %p37 = scmp.ne.s32.totalorder %s26, %s27
      %p38 = scmp.eq.s32.totalorder %s18, 0
      %p39 = por %p37, %p38
      %p40 = scmp.ne.s32.totalorder %s26, %s27
      %p41 = scmp.eq.s32.totalorder %s19, 1
      %p42 = por %p40, %p41
      %p44 = scmp.ne.s32.totalorder %s27, %s43
      %p45 = scmp.eq.s32.totalorder %s19, 0
      %p46 = por %p44, %p45
      %s48 = sadd.s32 %s47, 1
      %p51 = scmp.eq.s32.totalorder %s13, 1
      %p52 = scmp.ne.s32.totalorder %s47, %s49
      %p53 = scmp.eq.s32.totalorder %s13, 0
      %p54 = por %p52, %p53
      %p55 = scmp.ne.s32.totalorder %s47, %s49
      %p56 = scmp.eq.s32.totalorder %s18, 1
      %p57 = por %p55, %p56
      %p58 = scmp.ne.s32.totalorder %s49, %s50
      %p59 = scmp.eq.s32.totalorder %s18, 0
      %p60 = por %p58, %p59
      %p61 = scmp.ne.s32.totalorder %s49, %s50
      %p62 = scmp.eq.s32.totalorder %s19, 1
      %p63 = por %p61, %p62
      %p65 = scmp.ne.s32.totalorder %s50, %s64
      %p66 = scmp.eq.s32.totalorder %s19, 0
      %p67 = por %p65, %p66
      %s69 = sadd.s32 %s68, 1
      %p72 = scmp.eq.s32.totalorder %s13, 1
      %p73 = scmp.ne.s32.totalorder %s68, %s70
      %p74 = scmp.eq.s32.totalorder %s13, 0
      %p75 = por %p73, %p74
      %p76 = scmp.ne.s32.totalorder %s68, %s70
      %p77 = scmp.eq.s32.totalorder %s18, 1
      %p78 = por %p76, %p77
      %p79 = scmp.ne.s32.totalorder %s70, %s71
      %p80 = scmp.eq.s32.totalorder %s18, 0
      %p81 = por %p79, %p80
      %p82 = scmp.ne.s32.totalorder %s70, %s71
      %p83 = scmp.eq.s32.totalorder %s19, 1
      %p84 = por %p82, %p83
      %p86 = scmp.ne.s32.totalorder %s71, %s85
      %p87 = scmp.eq.s32.totalorder %s19, 0
      %p88 = por %p86, %p87
      %s90 = sadd.s32 %s89, 1
      %p93 = scmp.eq.s32.totalorder %s13, 1
      %p94 = scmp.ne.s32.totalorder %s89, %s91
      %p95 = scmp.eq.s32.totalorder %s13, 0
      %p96 = por %p94, %p95
      %p97 = scmp.ne.s32.totalorder %s89, %s91
      %p98 = scmp.eq.s32.totalorder %s18, 1
      %p99 = por %p97, %p98
      %p100 = scmp.ne.s32.totalorder %s91, %s92
      %p101 = scmp.eq.s32.totalorder %s18, 0
      %p102 = por %p100, %p101
      %p103 = scmp.ne.s32.totalorder %s91, %s92
      %p104 = scmp.eq.s32.totalorder %s19, 1
      %p105 = por %p103, %p104
      %p107 = scmp.ne.s32.totalorder %s92, %s106
      %p108 = scmp.eq.s32.totalorder %s19, 0
      %p109 = por %p107, %p108
      %s111 = sadd.s32 %s110, 1
      %p114 = scmp.eq.s32.totalorder %s13, 1
      %p115 = scmp.ne.s32.totalorder %s110, %s112
      %p116 = scmp.eq.s32.totalorder %s13, 0
      %p117 = por %p115, %p116
      %p118 = scmp.ne.s32.totalorder %s110, %s112
      %p119 = scmp.eq.s32.totalorder %s18, 1
      %p120 = por %p118, %p119
      %p121 = scmp.ne.s32.totalorder %s112, %s113
      %p122 = scmp.eq.s32.totalorder %s18, 0
      %p123 = por %p121, %p122
      %p124 = scmp.ne.s32.totalorder %s112, %s113
      %p125 = scmp.eq.s32.totalorder %s19, 1
      %p126 = por %p124, %p125
      %p128 = scmp.ne.s32.totalorder %s113, %s127
      %p129 = scmp.eq.s32.totalorder %s19, 0
      %p130 = por %p128, %p129
      %s132 = sadd.s32 %s131, 1
      %p135 = scmp.eq.s32.totalorder %s13, 1
      %p136 = scmp.ne.s32.totalorder %s131, %s133
      %p137 = scmp.eq.s32.totalorder %s13, 0
      %p138 = por %p136, %p137
      %p139 = scmp.ne.s32.totalorder %s131, %s133
      %p140 = scmp.eq.s32.totalorder %s18, 1
      %p141 = por %p139, %p140
      %p142 = scmp.ne.s32.totalorder %s133, %s134
      %p143 = scmp.eq.s32.totalorder %s18, 0
      %p144 = por %p142, %p143
      %p145 = scmp.ne.s32.totalorder %s133, %s134
      %p146 = scmp.eq.s32.totalorder %s19, 1
      %p147 = por %p145, %p146
      %p149 = scmp.ne.s32.totalorder %s134, %s148
      %p150 = scmp.eq.s32.totalorder %s19, 0
      %p151 = por %p149, %p150
      %s152 = ssub.s32 %s13, %s20
      %p153 = scmp.eq.s32.totalorder %s152, 0
      %s155 = sadd.s32 %s154, 1
      %s156 = scalar_select %p153, %s154, %s155
      %p159 = pneg %p153
      %p160 = scmp.eq.s32.totalorder %s13, 1
      %p161 = por %p159, %p160
      %p162 = scmp.ne.s32.totalorder %s154, %s157
      %p163 = scmp.eq.s32.totalorder %s13, 0
      %p164 = por %p162, %p163
      %p165 = scmp.ne.s32.totalorder %s154, %s157
      %p166 = scmp.eq.s32.totalorder %s18, 1
      %p167 = por %p165, %p166
      %p168 = scmp.ne.s32.totalorder %s157, %s158
      %p169 = scmp.eq.s32.totalorder %s18, 0
      %p170 = por %p168, %p169
      %p171 = scmp.ne.s32.totalorder %s157, %s158
      %p172 = scmp.eq.s32.totalorder %s19, 1
      %p173 = por %p171, %p172
      %p175 = scmp.ne.s32.totalorder %s158, %s174
      %p176 = scmp.eq.s32.totalorder %s19, 0
      %p177 = por %p175, %p176
      %p178 = scmp.le.s32.totalorder 1, %s13
      %p179 = scmp.lt.s32.totalorder %s13, 3
      %p180 = pnand %p178, %p179
      %p181 = pneg %p180
      // Predicated region
      $region9: #{net_forward.2} parent=5 // pred_check
        _
      $region10: #{net_forward.2} parent=5 // pred_check_branch
        %183 = sbr.rel (%p180) target = $region12
      $region11: #{net_forward.2} parent=5 // pred_region
        %s184 = ssub.s32 %s13, 1
        // Predicated region
        $region13: #{net_forward.2} parent=11 // pred_check
          %p185 = pneg %p60
        $region14: #{net_forward.2} parent=11 // pred_check_branch
          %187 = sbr.rel (%p185) target = $region16
        $region15: #{net_forward.2} parent=11 // pred_region
          _
        $region16: #{net_forward.2} parent=11 // pred_fallthru
          _
        // Predicated region
        $region17: #{net_forward.2} parent=11 // pred_check
          %p188 = pneg %p81
        $region18: #{net_forward.2} parent=11 // pred_check_branch
          %190 = sbr.rel (%p188) target = $region20
        $region19: #{net_forward.2} parent=11 // pred_region
          _
        $region20: #{net_forward.2} parent=11 // pred_fallthru
          _
        // Predicated region
        $region21: #{net_forward.2} parent=11 // pred_check
          %p191 = pneg %p102
        $region22: #{net_forward.2} parent=11 // pred_check_branch
          %193 = sbr.rel (%p191) target = $region24
        $region23: #{net_forward.2} parent=11 // pred_region
          _
        $region24: #{net_forward.2} parent=11 // pred_fallthru
          _
        // Predicated region
        $region25: #{net_forward.2} parent=11 // pred_check
          %p194 = pneg %p123
        $region26: #{net_forward.2} parent=11 // pred_check_branch
          %196 = sbr.rel (%p194) target = $region28
        $region27: #{net_forward.2} parent=11 // pred_region
          _
        $region28: #{net_forward.2} parent=11 // pred_fallthru
          _
        // Predicated region
        $region29: #{net_forward.2} parent=11 // pred_check
          %p197 = pneg %p144
        $region30: #{net_forward.2} parent=11 // pred_check_branch
          %199 = sbr.rel (%p197) target = $region32
        $region31: #{net_forward.2} parent=11 // pred_region
          %s201 = ssub.s32 10240, 10240
          %202 = vsyncadd [#allocation3], %s201
          %s203 = sshll.u32 [#allocation2], 4
          %s204 = int_to_ptr.vmem [resolvable:$true] %s203
          %209 = dma.hbm_to_vmem [thread:$0]  %s5, 10240, %s204, [#allocation3], 128, 128, 8
        $region32: #{net_forward.2} parent=11 // pred_fallthru
          _
      $region12: #{net_forward.2} parent=5 // pred_fallthru
        _
      %p210 = scmp.lt.s32.totalorder %s13, 2
      // Predicated region
      $region33: #{net_forward.2} parent=5 // pred_check
        %p211 = pneg %p210
      $region34: #{net_forward.2} parent=5 // pred_check_branch
        %213 = sbr.rel (%p211) target = $region36
      $region35: #{net_forward.2} parent=5 // pred_region
        // Predicated region
        $region37: #{net_forward.2} parent=35 // pred_check
          %p214 = pneg %p33
        $region38: #{net_forward.2} parent=35 // pred_check_branch
          %216 = sbr.rel (%p214) target = $region40
        $region39: #{net_forward.2} parent=35 // pred_region
          %p217 = scmp.lt.s32.totalorder %s13, 1
          %s218 = scalar_select %p217, %s13, 1
          %s219 = smul.addr %s218, 7
          %s220 = scalar_lea.vmem %s0, %s219
        $region40: #{net_forward.2} parent=35 // pred_fallthru
          _
      $region36: #{net_forward.2} parent=5 // pred_fallthru
        _
      %p221 = scmp.le.s32.totalorder 1, %s13
      %p222 = scmp.lt.s32.totalorder %s13, 3
      %p223 = pnand %p221, %p222
      %p224 = pneg %p223
      // Predicated region
      $region41: #{net_forward.2} parent=5 // pred_check
        _
      $region42: #{net_forward.2} parent=5 // pred_check_branch
        %226 = sbr.rel (%p223) target = $region44
      $region43: #{net_forward.2} parent=5 // pred_region
        %s227 = ssub.s32 %s13, 1
        // Predicated region
        $region45: #{net_forward.2} parent=43 // pred_check
          %p228 = pneg %p144
        $region46: #{net_forward.2} parent=43 // pred_check_branch
          %230 = sbr.rel (%p228) target = $region48
        $region47: #{net_forward.2} parent=43 // pred_region
          %231 = dma.done [#allocation3], 10240
        $region48: #{net_forward.2} parent=43 // pred_fallthru
          _
        %p232 = scmp.lt.s32.totalorder %s18, 1
        %s233 = scalar_select %p232, %s18, 1
        %s234 = smul.addr %s233, 7
        %s235 = scalar_lea.vmem %s0, %s234
        %p236 = pneg %p39
        %p237 = pneg %p36
        %p238 = pneg %p60
        %p239 = pneg %p57
        %p240 = pneg %p81
        %p241 = pneg %p78
        %p242 = pneg %p102
        %p243 = pneg %p99
        %p244 = pneg %p123
        %p245 = pneg %p120
        %p246 = pneg %p144
        %p247 = pneg %p141
        %p248 = pneg %p170
        %p249 = pneg %p167
        %p250 = scmp.lt.s32.totalorder %s18, 1
        %s251 = scalar_select %p250, %s18, 1
        %s252 = smul.addr %s251, 16
        %s253 = smul.addr %s252, 4
        %s254 = scalar_lea.vmem %s6, %s253
        %p255 = scmp.lt.s32.totalorder %s18, 1
        %s256 = scalar_select %p255, %s18, 1
        %s257 = smul.addr %s256, 7
        %s258 = scalar_lea.vmem %s0, %s257
        %p259 = scmp.lt.s32.totalorder %s18, 1
        %s260 = scalar_select %p259, %s18, 1
        %s261 = smul.addr %s260, 16
        %s262 = smul.addr %s261, 4
        %s263 = scalar_lea.vmem %s6, %s262
        %v265 = vld [vmem:[%s1] sm:$0xff]
        %v266 = vld [vmem:[%s1 + $0x8] sm:$0xff]
        %v267 = vld [vmem:[%s1 + $0x10] sm:$0xff]
        %v268 = vld [vmem:[%s1 + $0x18] sm:$0xff]
        %v269 = vld [vmem:[%s2] sm:$0xff]
        %v270 = vld [vmem:[%s2 + $0x8] sm:$0xff]
        %v271 = vld [vmem:[%s2 + $0x10] sm:$0xff]
        %v272 = vld [vmem:[%s2 + $0x18] sm:$0xff]
        %v273 = vld [vmem:[%s3] sm:$0xff]
        %v274 = vld [vmem:[%s3 + $0x8] sm:$0xf]
        %v275 = vld [vmem:[%s3 + $0xc] sm:$0xff]
        %v276 = vld [vmem:[%s3 + $0x14] sm:$0xf]
        %v277 = vld [vmem:[%s3 + $0x18] sm:$0xff]
        %v278 = vld [vmem:[%s3 + $0x20] sm:$0xf]
        %v279 = vld [vmem:[%s3 + $0x24] sm:$0xff]
        %v280 = vld [vmem:[%s3 + $0x2c] sm:$0xf]
        %v281 = vld [vmem:[%s3 + $0x30] sm:$0xff]
        %v282 = vld [vmem:[%s3 + $0x38] sm:$0xf]
        %v283 = vld [vmem:[%s3 + $0x3c] sm:$0xff]
        %v284 = vld [vmem:[%s3 + $0x44] sm:$0xf]
        %v285 = vld [vmem:[%s3 + $0x48] sm:$0xff]
        %v286 = vld [vmem:[%s3 + $0x50] sm:$0xf]
        %v287 = vld [vmem:[%s3 + $0x54] sm:$0xff]
        %v288 = vld [vmem:[%s3 + $0x5c] sm:$0xf]
        %v289 = vld [vmem:[%s4] sm:$0xff]
        %v290 = vld [vmem:[%s4 + $0x8] sm:$0xff]
        %v291 = vld [vmem:[%s4 + $0x10] sm:$0xff]
        %v292 = vld [vmem:[%s4 + $0x18] sm:$0xff]
        %v293 = vld [vmem:[%s4 + $0x20] sm:$0xff]
        %v294 = vld [vmem:[%s4 + $0x28] sm:$0xff]
        %v295 = vld [vmem:[%s4 + $0x30] sm:$0xff]
        %v296 = vld [vmem:[%s4 + $0x38] sm:$0xff]
        %v297 = vld [vmem:[#allocation2] sm:$0xff]
        %v298 = vld [vmem:[#allocation2 + $0x8] sm:$0xff]
        %v299 = vld [vmem:[#allocation2 + $0x10] sm:$0xff]
        %v300 = vld [vmem:[#allocation2 + $0x18] sm:$0xff]
        %v301 = vld [vmem:[#allocation2 + $0x20] sm:$0xff]
        %v302 = vld [vmem:[#allocation2 + $0x28] sm:$0xff]
        %v303 = vld [vmem:[#allocation2 + $0x30] sm:$0xff]
        %v304 = vld [vmem:[#allocation2 + $0x38] sm:$0xff]
        %v305 = vld [vmem:[#allocation2 + $0x40] sm:$0xff]
        %v306 = vld [vmem:[#allocation2 + $0x48] sm:$0xff]
        %v307 = vld [vmem:[#allocation2 + $0x50] sm:$0xff]
        %v308 = vld [vmem:[#allocation2 + $0x58] sm:$0xff]
        %v309 = vld [vmem:[#allocation2 + $0x60] sm:$0xff]
        %v310 = vld [vmem:[#allocation2 + $0x68] sm:$0xff]
        %v311 = vld [vmem:[#allocation2 + $0x70] sm:$0xff]
        %v312 = vld [vmem:[#allocation2 + $0x78] sm:$0xff]
        %v313 = vld [vmem:[#allocation2 + $0x80] sm:$0xff]
        %v314 = vld [vmem:[#allocation2 + $0x88] sm:$0xff]
        %v315 = vld [vmem:[#allocation2 + $0x90] sm:$0xff]
        %v316 = vld [vmem:[#allocation2 + $0x98] sm:$0xff]
        %v317 = vld [vmem:[#allocation2 + $0xa0] sm:$0xff]
        %v318 = vld [vmem:[#allocation2 + $0xa8] sm:$0xff]
        %v319 = vld [vmem:[#allocation2 + $0xb0] sm:$0xff]
        %v320 = vld [vmem:[#allocation2 + $0xb8] sm:$0xff]
        %v321 = vld [vmem:[#allocation2 + $0xc0] sm:$0xff]
        %v322 = vld [vmem:[#allocation2 + $0xc8] sm:$0xff]
        %v323 = vld [vmem:[#allocation2 + $0xd0] sm:$0xff]
        %v324 = vld [vmem:[#allocation2 + $0xd8] sm:$0xff]
        %v325 = vld [vmem:[#allocation2 + $0xe0] sm:$0xff]
        %v326 = vld [vmem:[#allocation2 + $0xe8] sm:$0xff]
        %v327 = vld [vmem:[#allocation2 + $0xf0] sm:$0xff]
        %v328 = vld [vmem:[#allocation2 + $0xf8] sm:$0xff]
        %v329 = vld [vmem:[#allocation2 + $0x100] sm:$0xff]
        %v330 = vld [vmem:[#allocation2 + $0x108] sm:$0xff]
        %v331 = vld [vmem:[#allocation2 + $0x110] sm:$0xff]
        %v332 = vld [vmem:[#allocation2 + $0x118] sm:$0xff]
        %v333 = vld [vmem:[#allocation2 + $0x120] sm:$0xff]
        %v334 = vld [vmem:[#allocation2 + $0x128] sm:$0xff]
        %v335 = vld [vmem:[#allocation2 + $0x130] sm:$0xff]
        %v336 = vld [vmem:[#allocation2 + $0x138] sm:$0xff]
        %v337 = vld [vmem:[#allocation2 + $0x140] sm:$0xff]
        %v338 = vld [vmem:[#allocation2 + $0x148] sm:$0xff]
        %v339 = vld [vmem:[#allocation2 + $0x150] sm:$0xff]
        %v340 = vld [vmem:[#allocation2 + $0x158] sm:$0xff]
        %v341 = vld [vmem:[#allocation2 + $0x160] sm:$0xff]
        %v342 = vld [vmem:[#allocation2 + $0x168] sm:$0xff]
        %v343 = vld [vmem:[#allocation2 + $0x170] sm:$0xff]
        %v344 = vld [vmem:[#allocation2 + $0x178] sm:$0xff]
        %v345 = vld [vmem:[#allocation2 + $0x180] sm:$0xff]
        %v346 = vld [vmem:[#allocation2 + $0x188] sm:$0xff]
        %v347 = vld [vmem:[#allocation2 + $0x190] sm:$0xff]
        %v348 = vld [vmem:[#allocation2 + $0x198] sm:$0xff]
        %v349 = vld [vmem:[#allocation2 + $0x1a0] sm:$0xff]
        %v350 = vld [vmem:[#allocation2 + $0x1a8] sm:$0xff]
        %v351 = vld [vmem:[#allocation2 + $0x1b0] sm:$0xff]
        %v352 = vld [vmem:[#allocation2 + $0x1b8] sm:$0xff]
        %v353 = vld [vmem:[#allocation2 + $0x1c0] sm:$0xff]
        %v354 = vld [vmem:[#allocation2 + $0x1c8] sm:$0xff]
        %v355 = vld [vmem:[#allocation2 + $0x1d0] sm:$0xff]
        %v356 = vld [vmem:[#allocation2 + $0x1d8] sm:$0xff]
        %v357 = vld [vmem:[#allocation2 + $0x1e0] sm:$0xff]
        %v358 = vld [vmem:[#allocation2 + $0x1e8] sm:$0xff]
        %v359 = vld [vmem:[#allocation2 + $0x1f0] sm:$0xff]
        %v360 = vld [vmem:[#allocation2 + $0x1f8] sm:$0xff]
        %v361 = vld [vmem:[#allocation2 + $0x200] sm:$0xff]
        %v362 = vld [vmem:[#allocation2 + $0x208] sm:$0xff]
        %v363 = vld [vmem:[#allocation2 + $0x210] sm:$0xff]
        %v364 = vld [vmem:[#allocation2 + $0x218] sm:$0xff]
        %v365 = vld [vmem:[#allocation2 + $0x220] sm:$0xff]
        %v366 = vld [vmem:[#allocation2 + $0x228] sm:$0xff]
        %v367 = vld [vmem:[#allocation2 + $0x230] sm:$0xff]
        %v368 = vld [vmem:[#allocation2 + $0x238] sm:$0xff]
        %v369 = vld [vmem:[#allocation2 + $0x240] sm:$0xff]
        %v370 = vld [vmem:[#allocation2 + $0x248] sm:$0xff]
        %v371 = vld [vmem:[#allocation2 + $0x250] sm:$0xff]
        %v372 = vld [vmem:[#allocation2 + $0x258] sm:$0xff]
        %v373 = vld [vmem:[#allocation2 + $0x260] sm:$0xff]
        %v374 = vld [vmem:[#allocation2 + $0x268] sm:$0xff]
        %v375 = vld [vmem:[#allocation2 + $0x270] sm:$0xff]
        %v376 = vld [vmem:[#allocation2 + $0x278] sm:$0xff]
        %v377 = vld [vmem:[%s258] sm:$0x7f]
        %379 = vset.pattern.permute.xlu0 0
        %380 = vperm.xlu0 %379, %v265
        %v381 = vpop.permute.xlu0 %380
        %384 = vset.pattern.permute.xlu0 0
        %385 = vperm.xlu0 %384, %v266
        %v386 = vpop.permute.xlu0 %385
        %389 = vset.pattern.permute.xlu0 0
        %390 = vperm.xlu0 %389, %v267
        %v391 = vpop.permute.xlu0 %390
        %394 = vset.pattern.permute.xlu0 0
        %395 = vperm.xlu0 %394, %v268
        %v396 = vpop.permute.xlu0 %395
        %v399 = vlaneseq
        %v400 = vshrl.u32 %v399, 7
        %v401 = vsub.s32 0, %v400
        %v402 = vrot.slane %v377, %v401
        %v403 = vlaneseq
        %v404 = vshrl.u32 %v403, 7
        %v405 = vsub.s32 1, %v404
        %v406 = vrot.slane %v377, %v405
        %v407 = vlaneseq
        %v408 = vshrl.u32 %v407, 7
        %v409 = vsub.s32 2, %v408
        %v410 = vrot.slane %v377, %v409
        %v411 = vlaneseq
        %v412 = vshrl.u32 %v411, 7
        %v413 = vsub.s32 3, %v412
        %v414 = vrot.slane %v377, %v413
        %v415 = vlaneseq
        %v416 = vshrl.u32 %v415, 7
        %v417 = vsub.s32 4, %v416
        %v418 = vrot.slane %v377, %v417
        %v419 = vlaneseq
        %v420 = vshrl.u32 %v419, 7
        %v421 = vsub.s32 5, %v420
        %v422 = vrot.slane %v377, %v421
        %v429 = vmul.f32 %v381, %v402
        %v430 = vmul.f32 %v381, %v406
        %v431 = vmul.f32 %v381, %v410
        %v432 = vmul.f32 %v381, %v414
        %v433 = vmul.f32 %v381, %v418
        %v434 = vmul.f32 %v381, %v422
        %v435 = vmul.f32 %v386, %v402
        %v436 = vmul.f32 %v386, %v406
        %v437 = vmul.f32 %v386, %v410
        %v438 = vmul.f32 %v386, %v414
        %v439 = vmul.f32 %v386, %v418
        %v440 = vmul.f32 %v386, %v422
        %v441 = vmul.f32 %v391, %v402
        %v442 = vmul.f32 %v391, %v406
        %v443 = vmul.f32 %v391, %v410
        %v444 = vmul.f32 %v391, %v414
        %v445 = vmul.f32 %v391, %v418
        %v446 = vmul.f32 %v391, %v422
        %v447 = vmul.f32 %v396, %v402
        %v448 = vmul.f32 %v396, %v406
        %v449 = vmul.f32 %v396, %v410
        %v450 = vmul.f32 %v396, %v414
        %v451 = vmul.f32 %v396, %v418
        %v452 = vmul.f32 %v396, %v422
        %453 = vset.pattern.permute.xlu0 1
        %454 = vperm.xlu0 %453, %v265
        %v455 = vpop.permute.xlu0 %454
        %457 = vset.pattern.permute.xlu0 1
        %458 = vperm.xlu0 %457, %v266
        %v459 = vpop.permute.xlu0 %458
        %461 = vset.pattern.permute.xlu0 1
        %462 = vperm.xlu0 %461, %v267
        %v463 = vpop.permute.xlu0 %462
        %465 = vset.pattern.permute.xlu0 1
        %466 = vperm.xlu0 %465, %v268
        %v467 = vpop.permute.xlu0 %466
        %v469 = vmul.f32 %v455, %v402
        %v470 = vmul.f32 %v455, %v406
        %v471 = vmul.f32 %v455, %v410
        %v472 = vmul.f32 %v455, %v414
        %v473 = vmul.f32 %v455, %v418
        %v474 = vmul.f32 %v455, %v422
        %v475 = vmul.f32 %v459, %v402
        %v476 = vmul.f32 %v459, %v406
        %v477 = vmul.f32 %v459, %v410
        %v478 = vmul.f32 %v459, %v414
        %v479 = vmul.f32 %v459, %v418
        %v480 = vmul.f32 %v459, %v422
        %v481 = vmul.f32 %v463, %v402
        %v482 = vmul.f32 %v463, %v406
        %v483 = vmul.f32 %v463, %v410
        %v484 = vmul.f32 %v463, %v414
        %v485 = vmul.f32 %v463, %v418
        %v486 = vmul.f32 %v463, %v422
        %v487 = vmul.f32 %v467, %v402
        %v488 = vmul.f32 %v467, %v406
        %v489 = vmul.f32 %v467, %v410
        %v490 = vmul.f32 %v467, %v414
        %v491 = vmul.f32 %v467, %v418
        %v492 = vmul.f32 %v467, %v422
        %517 = vrot.lane.b32.xlu0 %v469, 127
        %v518 = vpop.permute.xlu0 %517
        %519 = vrot.lane.b32.xlu0 %v470, 127
        %v520 = vpop.permute.xlu0 %519
        %521 = vrot.lane.b32.xlu0 %v471, 127
        %v522 = vpop.permute.xlu0 %521
        %523 = vrot.lane.b32.xlu0 %v472, 127
        %v524 = vpop.permute.xlu0 %523
        %525 = vrot.lane.b32.xlu0 %v473, 127
        %v526 = vpop.permute.xlu0 %525
        %527 = vrot.lane.b32.xlu0 %v474, 127
        %v528 = vpop.permute.xlu0 %527
        %529 = vrot.lane.b32.xlu0 %v475, 127
        %v530 = vpop.permute.xlu0 %529
        %531 = vrot.lane.b32.xlu0 %v476, 127
        %v532 = vpop.permute.xlu0 %531
        %533 = vrot.lane.b32.xlu0 %v477, 127
        %v534 = vpop.permute.xlu0 %533
        %535 = vrot.lane.b32.xlu0 %v478, 127
        %v536 = vpop.permute.xlu0 %535
        %537 = vrot.lane.b32.xlu0 %v479, 127
        %v538 = vpop.permute.xlu0 %537
        %539 = vrot.lane.b32.xlu0 %v480, 127
        %v540 = vpop.permute.xlu0 %539
        %541 = vrot.lane.b32.xlu0 %v481, 127
        %v542 = vpop.permute.xlu0 %541
        %543 = vrot.lane.b32.xlu0 %v482, 127
        %v544 = vpop.permute.xlu0 %543
        %545 = vrot.lane.b32.xlu0 %v483, 127
        %v546 = vpop.permute.xlu0 %545
        %547 = vrot.lane.b32.xlu0 %v484, 127
        %v548 = vpop.permute.xlu0 %547
        %549 = vrot.lane.b32.xlu0 %v485, 127
        %v550 = vpop.permute.xlu0 %549
        %551 = vrot.lane.b32.xlu0 %v486, 127
        %v552 = vpop.permute.xlu0 %551
        %553 = vrot.lane.b32.xlu0 %v487, 127
        %v554 = vpop.permute.xlu0 %553
        %555 = vrot.lane.b32.xlu0 %v488, 127
        %v556 = vpop.permute.xlu0 %555
        %557 = vrot.lane.b32.xlu0 %v489, 127
        %v558 = vpop.permute.xlu0 %557
        %559 = vrot.lane.b32.xlu0 %v490, 127
        %v560 = vpop.permute.xlu0 %559
        %561 = vrot.lane.b32.xlu0 %v491, 127
        %v562 = vpop.permute.xlu0 %561
        %563 = vrot.lane.b32.xlu0 %v492, 127
        %v564 = vpop.permute.xlu0 %563
        %vm565 = vcmask 1039360
        %v566 = vsel %vm565, %v518, %v520
        %v567 = vsel %vm565, %v520, %v522
        %v568 = vsel %vm565, %v522, %v524
        %v569 = vsel %vm565, %v524, %v526
        %v570 = vsel %vm565, %v526, %v528
        %v571 = vsel %vm565, %v530, %v532
        %v572 = vsel %vm565, %v532, %v534
        %v573 = vsel %vm565, %v534, %v536
        %v574 = vsel %vm565, %v536, %v538
        %v575 = vsel %vm565, %v538, %v540
        %v576 = vsel %vm565, %v542, %v544
        %v577 = vsel %vm565, %v544, %v546
        %v578 = vsel %vm565, %v546, %v548
        %v579 = vsel %vm565, %v548, %v550
        %v580 = vsel %vm565, %v550, %v552
        %v581 = vsel %vm565, %v554, %v556
        %v582 = vsel %vm565, %v556, %v558
        %v583 = vsel %vm565, %v558, %v560
        %v584 = vsel %vm565, %v560, %v562
        %v585 = vsel %vm565, %v562, %v564
        %v610 = vadd.f32 %v429, %v566
        %v611 = vadd.f32 %v430, %v567
        %v612 = vadd.f32 %v431, %v568
        %v613 = vadd.f32 %v432, %v569
        %v614 = vadd.f32 %v433, %v570
        %v615 = vadd.f32 %v434, %v528
        %v616 = vadd.f32 %v435, %v571
        %v617 = vadd.f32 %v436, %v572
        %v618 = vadd.f32 %v437, %v573
        %v619 = vadd.f32 %v438, %v574
        %v620 = vadd.f32 %v439, %v575
        %v621 = vadd.f32 %v440, %v540
        %v622 = vadd.f32 %v441, %v576
        %v623 = vadd.f32 %v442, %v577
        %v624 = vadd.f32 %v443, %v578
        %v625 = vadd.f32 %v444, %v579
        %v626 = vadd.f32 %v445, %v580
        %v627 = vadd.f32 %v446, %v552
        %v628 = vadd.f32 %v447, %v581
        %v629 = vadd.f32 %v448, %v582
        %v630 = vadd.f32 %v449, %v583
        %v631 = vadd.f32 %v450, %v584
        %v632 = vadd.f32 %v451, %v585
        %v633 = vadd.f32 %v452, %v564
        %634 = vset.pattern.permute.xlu0 2
        %635 = vperm.xlu0 %634, %v265
        %v636 = vpop.permute.xlu0 %635
        %638 = vset.pattern.permute.xlu0 2
        %639 = vperm.xlu0 %638, %v266
        %v640 = vpop.permute.xlu0 %639
        %642 = vset.pattern.permute.xlu0 2
        %643 = vperm.xlu0 %642, %v267
        %v644 = vpop.permute.xlu0 %643
        %646 = vset.pattern.permute.xlu0 2
        %647 = vperm.xlu0 %646, %v268
        %v648 = vpop.permute.xlu0 %647
        %v650 = vmul.f32 %v636, %v402
        %v651 = vmul.f32 %v636, %v406
        %v652 = vmul.f32 %v636, %v410
        %v653 = vmul.f32 %v636, %v414
        %v654 = vmul.f32 %v636, %v418
        %v655 = vmul.f32 %v636, %v422
        %v656 = vmul.f32 %v640, %v402
        %v657 = vmul.f32 %v640, %v406
        %v658 = vmul.f32 %v640, %v410
        %v659 = vmul.f32 %v640, %v414
        %v660 = vmul.f32 %v640, %v418
        %v661 = vmul.f32 %v640, %v422
        %v662 = vmul.f32 %v644, %v402
        %v663 = vmul.f32 %v644, %v406
        %v664 = vmul.f32 %v644, %v410
        %v665 = vmul.f32 %v644, %v414
        %v666 = vmul.f32 %v644, %v418
        %v667 = vmul.f32 %v644, %v422
        %v668 = vmul.f32 %v648, %v402
        %v669 = vmul.f32 %v648, %v406
        %v670 = vmul.f32 %v648, %v410
        %v671 = vmul.f32 %v648, %v414
        %v672 = vmul.f32 %v648, %v418
        %v673 = vmul.f32 %v648, %v422
        %698 = vrot.lane.b32.xlu0 %v650, 126
        %v699 = vpop.permute.xlu0 %698
        %700 = vrot.lane.b32.xlu0 %v651, 126
        %v701 = vpop.permute.xlu0 %700
        %702 = vrot.lane.b32.xlu0 %v652, 126
        %v703 = vpop.permute.xlu0 %702
        %704 = vrot.lane.b32.xlu0 %v653, 126
        %v705 = vpop.permute.xlu0 %704
        %706 = vrot.lane.b32.xlu0 %v654, 126
        %v707 = vpop.permute.xlu0 %706
        %708 = vrot.lane.b32.xlu0 %v655, 126
        %v709 = vpop.permute.xlu0 %708
        %710 = vrot.lane.b32.xlu0 %v656, 126
        %v711 = vpop.permute.xlu0 %710
        %712 = vrot.lane.b32.xlu0 %v657, 126
        %v713 = vpop.permute.xlu0 %712
        %714 = vrot.lane.b32.xlu0 %v658, 126
        %v715 = vpop.permute.xlu0 %714
        %716 = vrot.lane.b32.xlu0 %v659, 126
        %v717 = vpop.permute.xlu0 %716
        %718 = vrot.lane.b32.xlu0 %v660, 126
        %v719 = vpop.permute.xlu0 %718
        %720 = vrot.lane.b32.xlu0 %v661, 126
        %v721 = vpop.permute.xlu0 %720
        %722 = vrot.lane.b32.xlu0 %v662, 126
        %v723 = vpop.permute.xlu0 %722
        %724 = vrot.lane.b32.xlu0 %v663, 126
        %v725 = vpop.permute.xlu0 %724
        %726 = vrot.lane.b32.xlu0 %v664, 126
        %v727 = vpop.permute.xlu0 %726
        %728 = vrot.lane.b32.xlu0 %v665, 126
        %v729 = vpop.permute.xlu0 %728
        %730 = vrot.lane.b32.xlu0 %v666, 126
        %v731 = vpop.permute.xlu0 %730
        %732 = vrot.lane.b32.xlu0 %v667, 126
        %v733 = vpop.permute.xlu0 %732
        %734 = vrot.lane.b32.xlu0 %v668, 126
        %v735 = vpop.permute.xlu0 %734
        %736 = vrot.lane.b32.xlu0 %v669, 126
        %v737 = vpop.permute.xlu0 %736
        %738 = vrot.lane.b32.xlu0 %v670, 126
        %v739 = vpop.permute.xlu0 %738
        %740 = vrot.lane.b32.xlu0 %v671, 126
        %v741 = vpop.permute.xlu0 %740
        %742 = vrot.lane.b32.xlu0 %v672, 126
        %v743 = vpop.permute.xlu0 %742
        %744 = vrot.lane.b32.xlu0 %v673, 126
        %v745 = vpop.permute.xlu0 %744
        %vm746 = vcmask 1031168
        %v747 = vsel %vm746, %v699, %v701
        %v748 = vsel %vm746, %v701, %v703
        %v749 = vsel %vm746, %v703, %v705
        %v750 = vsel %vm746, %v705, %v707
        %v751 = vsel %vm746, %v707, %v709
        %v752 = vsel %vm746, %v711, %v713
        %v753 = vsel %vm746, %v713, %v715
        %v754 = vsel %vm746, %v715, %v717
        %v755 = vsel %vm746, %v717, %v719
        %v756 = vsel %vm746, %v719, %v721
        %v757 = vsel %vm746, %v723, %v725
        %v758 = vsel %vm746, %v725, %v727
        %v759 = vsel %vm746, %v727, %v729
        %v760 = vsel %vm746, %v729, %v731
        %v761 = vsel %vm746, %v731, %v733
        %v762 = vsel %vm746, %v735, %v737
        %v763 = vsel %vm746, %v737, %v739
        %v764 = vsel %vm746, %v739, %v741
        %v765 = vsel %vm746, %v741, %v743
        %v766 = vsel %vm746, %v743, %v745
        %v791 = vadd.f32 %v610, %v747
        %v792 = vadd.f32 %v611, %v748
        %v793 = vadd.f32 %v612, %v749
        %v794 = vadd.f32 %v613, %v750
        %v795 = vadd.f32 %v614, %v751
        %v796 = vadd.f32 %v615, %v709
        %v797 = vadd.f32 %v616, %v752
        %v798 = vadd.f32 %v617, %v753
        %v799 = vadd.f32 %v618, %v754
        %v800 = vadd.f32 %v619, %v755
        %v801 = vadd.f32 %v620, %v756
        %v802 = vadd.f32 %v621, %v721
        %v803 = vadd.f32 %v622, %v757
        %v804 = vadd.f32 %v623, %v758
        %v805 = vadd.f32 %v624, %v759
        %v806 = vadd.f32 %v625, %v760
        %v807 = vadd.f32 %v626, %v761
        %v808 = vadd.f32 %v627, %v733
        %v809 = vadd.f32 %v628, %v762
        %v810 = vadd.f32 %v629, %v763
        %v811 = vadd.f32 %v630, %v764
        %v812 = vadd.f32 %v631, %v765
        %v813 = vadd.f32 %v632, %v766
        %v814 = vadd.f32 %v633, %v745
        %815 = vset.pattern.permute.xlu0 3
        %816 = vperm.xlu0 %815, %v265
        %v817 = vpop.permute.xlu0 %816
        %819 = vset.pattern.permute.xlu0 3
        %820 = vperm.xlu0 %819, %v266
        %v821 = vpop.permute.xlu0 %820
        %823 = vset.pattern.permute.xlu0 3
        %824 = vperm.xlu0 %823, %v267
        %v825 = vpop.permute.xlu0 %824
        %827 = vset.pattern.permute.xlu0 3
        %828 = vperm.xlu0 %827, %v268
        %v829 = vpop.permute.xlu0 %828
        %v831 = vmul.f32 %v817, %v402
        %v832 = vmul.f32 %v817, %v406
        %v833 = vmul.f32 %v817, %v410
        %v834 = vmul.f32 %v817, %v414
        %v835 = vmul.f32 %v817, %v418
        %v836 = vmul.f32 %v817, %v422
        %v837 = vmul.f32 %v821, %v402
        %v838 = vmul.f32 %v821, %v406
        %v839 = vmul.f32 %v821, %v410
        %v840 = vmul.f32 %v821, %v414
        %v841 = vmul.f32 %v821, %v418
        %v842 = vmul.f32 %v821, %v422
        %v843 = vmul.f32 %v825, %v402
        %v844 = vmul.f32 %v825, %v406
        %v845 = vmul.f32 %v825, %v410
        %v846 = vmul.f32 %v825, %v414
        %v847 = vmul.f32 %v825, %v418
        %v848 = vmul.f32 %v825, %v422
        %v849 = vmul.f32 %v829, %v402
        %v850 = vmul.f32 %v829, %v406
        %v851 = vmul.f32 %v829, %v410
        %v852 = vmul.f32 %v829, %v414
        %v853 = vmul.f32 %v829, %v418
        %v854 = vmul.f32 %v829, %v422
        %879 = vrot.lane.b32.xlu0 %v831, 100
        %v880 = vpop.permute.xlu0 %879
        %881 = vrot.lane.b32.xlu0 %v832, 100
        %v882 = vpop.permute.xlu0 %881
        %883 = vrot.lane.b32.xlu0 %v833, 100
        %v884 = vpop.permute.xlu0 %883
        %885 = vrot.lane.b32.xlu0 %v834, 100
        %v886 = vpop.permute.xlu0 %885
        %887 = vrot.lane.b32.xlu0 %v835, 100
        %v888 = vpop.permute.xlu0 %887
        %889 = vrot.lane.b32.xlu0 %v836, 100
        %v890 = vpop.permute.xlu0 %889
        %891 = vrot.lane.b32.xlu0 %v837, 100
        %v892 = vpop.permute.xlu0 %891
        %893 = vrot.lane.b32.xlu0 %v838, 100
        %v894 = vpop.permute.xlu0 %893
        %895 = vrot.lane.b32.xlu0 %v839, 100
        %v896 = vpop.permute.xlu0 %895
        %897 = vrot.lane.b32.xlu0 %v840, 100
        %v898 = vpop.permute.xlu0 %897
        %899 = vrot.lane.b32.xlu0 %v841, 100
        %v900 = vpop.permute.xlu0 %899
        %901 = vrot.lane.b32.xlu0 %v842, 100
        %v902 = vpop.permute.xlu0 %901
        %903 = vrot.lane.b32.xlu0 %v843, 100
        %v904 = vpop.permute.xlu0 %903
        %905 = vrot.lane.b32.xlu0 %v844, 100
        %v906 = vpop.permute.xlu0 %905
        %907 = vrot.lane.b32.xlu0 %v845, 100
        %v908 = vpop.permute.xlu0 %907
        %909 = vrot.lane.b32.xlu0 %v846, 100
        %v910 = vpop.permute.xlu0 %909
        %911 = vrot.lane.b32.xlu0 %v847, 100
        %v912 = vpop.permute.xlu0 %911
        %913 = vrot.lane.b32.xlu0 %v848, 100
        %v914 = vpop.permute.xlu0 %913
        %915 = vrot.lane.b32.xlu0 %v849, 100
        %v916 = vpop.permute.xlu0 %915
        %917 = vrot.lane.b32.xlu0 %v850, 100
        %v918 = vpop.permute.xlu0 %917
        %919 = vrot.lane.b32.xlu0 %v851, 100
        %v920 = vpop.permute.xlu0 %919
        %921 = vrot.lane.b32.xlu0 %v852, 100
        %v922 = vpop.permute.xlu0 %921
        %923 = vrot.lane.b32.xlu0 %v853, 100
        %v924 = vpop.permute.xlu0 %923
        %925 = vrot.lane.b32.xlu0 %v854, 100
        %v926 = vpop.permute.xlu0 %925
        %vm927 = vcmask 818176
        %v928 = vsel %vm927, %v880, %v882
        %v929 = vsel %vm927, %v882, %v884
        %v930 = vsel %vm927, %v884, %v886
        %v931 = vsel %vm927, %v886, %v888
        %v932 = vsel %vm927, %v888, %v890
        %v933 = vsel %vm927, %v892, %v894
        %v934 = vsel %vm927, %v894, %v896
        %v935 = vsel %vm927, %v896, %v898
        %v936 = vsel %vm927, %v898, %v900
        %v937 = vsel %vm927, %v900, %v902
        %v938 = vsel %vm927, %v904, %v906
        %v939 = vsel %vm927, %v906, %v908
        %v940 = vsel %vm927, %v908, %v910
        %v941 = vsel %vm927, %v910, %v912
        %v942 = vsel %vm927, %v912, %v914
        %v943 = vsel %vm927, %v916, %v918
        %v944 = vsel %vm927, %v918, %v920
        %v945 = vsel %vm927, %v920, %v922
        %v946 = vsel %vm927, %v922, %v924
        %v947 = vsel %vm927, %v924, %v926
        %v972 = vadd.f32 %v791, %v928
        %v973 = vadd.f32 %v792, %v929
        %v974 = vadd.f32 %v793, %v930
        %v975 = vadd.f32 %v794, %v931
        %v976 = vadd.f32 %v795, %v932
        %v977 = vadd.f32 %v796, %v890
        %v978 = vadd.f32 %v797, %v933
        %v979 = vadd.f32 %v798, %v934
        %v980 = vadd.f32 %v799, %v935
        %v981 = vadd.f32 %v800, %v936
        %v982 = vadd.f32 %v801, %v937
        %v983 = vadd.f32 %v802, %v902
        %v984 = vadd.f32 %v803, %v938
        %v985 = vadd.f32 %v804, %v939
        %v986 = vadd.f32 %v805, %v940
        %v987 = vadd.f32 %v806, %v941
        %v988 = vadd.f32 %v807, %v942
        %v989 = vadd.f32 %v808, %v914
        %v990 = vadd.f32 %v809, %v943
        %v991 = vadd.f32 %v810, %v944
        %v992 = vadd.f32 %v811, %v945
        %v993 = vadd.f32 %v812, %v946
        %v994 = vadd.f32 %v813, %v947
        %v995 = vadd.f32 %v814, %v926
        %996 = vset.pattern.permute.xlu0 4
        %997 = vperm.xlu0 %996, %v265
        %v998 = vpop.permute.xlu0 %997
        %1000 = vset.pattern.permute.xlu0 4
        %1001 = vperm.xlu0 %1000, %v266
        %v1002 = vpop.permute.xlu0 %1001
        %1004 = vset.pattern.permute.xlu0 4
        %1005 = vperm.xlu0 %1004, %v267
        %v1006 = vpop.permute.xlu0 %1005
        %1008 = vset.pattern.permute.xlu0 4
        %1009 = vperm.xlu0 %1008, %v268
        %v1010 = vpop.permute.xlu0 %1009
        %v1012 = vmul.f32 %v998, %v402
        %v1013 = vmul.f32 %v998, %v406
        %v1014 = vmul.f32 %v998, %v410
        %v1015 = vmul.f32 %v998, %v414
        %v1016 = vmul.f32 %v998, %v418
        %v1017 = vmul.f32 %v998, %v422
        %v1018 = vmul.f32 %v1002, %v402
        %v1019 = vmul.f32 %v1002, %v406
        %v1020 = vmul.f32 %v1002, %v410
        %v1021 = vmul.f32 %v1002, %v414
        %v1022 = vmul.f32 %v1002, %v418
        %v1023 = vmul.f32 %v1002, %v422
        %v1024 = vmul.f32 %v1006, %v402
        %v1025 = vmul.f32 %v1006, %v406
        %v1026 = vmul.f32 %v1006, %v410
        %v1027 = vmul.f32 %v1006, %v414
        %v1028 = vmul.f32 %v1006, %v418
        %v1029 = vmul.f32 %v1006, %v422
        %v1030 = vmul.f32 %v1010, %v402
        %v1031 = vmul.f32 %v1010, %v406
        %v1032 = vmul.f32 %v1010, %v410
        %v1033 = vmul.f32 %v1010, %v414
        %v1034 = vmul.f32 %v1010, %v418
        %v1035 = vmul.f32 %v1010, %v422
        %1060 = vrot.lane.b32.xlu0 %v1012, 99
        %v1061 = vpop.permute.xlu0 %1060
        %1062 = vrot.lane.b32.xlu0 %v1013, 99
        %v1063 = vpop.permute.xlu0 %1062
        %1064 = vrot.lane.b32.xlu0 %v1014, 99
        %v1065 = vpop.permute.xlu0 %1064
        %1066 = vrot.lane.b32.xlu0 %v1015, 99
        %v1067 = vpop.permute.xlu0 %1066
        %1068 = vrot.lane.b32.xlu0 %v1016, 99
        %v1069 = vpop.permute.xlu0 %1068
        %1070 = vrot.lane.b32.xlu0 %v1017, 99
        %v1071 = vpop.permute.xlu0 %1070
        %1072 = vrot.lane.b32.xlu0 %v1018, 99
        %v1073 = vpop.permute.xlu0 %1072
        %1074 = vrot.lane.b32.xlu0 %v1019, 99
        %v1075 = vpop.permute.xlu0 %1074
        %1076 = vrot.lane.b32.xlu0 %v1020, 99
        %v1077 = vpop.permute.xlu0 %1076
        %1078 = vrot.lane.b32.xlu0 %v1021, 99
        %v1079 = vpop.permute.xlu0 %1078
        %1080 = vrot.lane.b32.xlu0 %v1022, 99
        %v1081 = vpop.permute.xlu0 %1080
        %1082 = vrot.lane.b32.xlu0 %v1023, 99
        %v1083 = vpop.permute.xlu0 %1082
        %1084 = vrot.lane.b32.xlu0 %v1024, 99
        %v1085 = vpop.permute.xlu0 %1084
        %1086 = vrot.lane.b32.xlu0 %v1025, 99
        %v1087 = vpop.permute.xlu0 %1086
        %1088 = vrot.lane.b32.xlu0 %v1026, 99
        %v1089 = vpop.permute.xlu0 %1088
        %1090 = vrot.lane.b32.xlu0 %v1027, 99
        %v1091 = vpop.permute.xlu0 %1090
        %1092 = vrot.lane.b32.xlu0 %v1028, 99
        %v1093 = vpop.permute.xlu0 %1092
        %1094 = vrot.lane.b32.xlu0 %v1029, 99
        %v1095 = vpop.permute.xlu0 %1094
        %1096 = vrot.lane.b32.xlu0 %v1030, 99
        %v1097 = vpop.permute.xlu0 %1096
        %1098 = vrot.lane.b32.xlu0 %v1031, 99
        %v1099 = vpop.permute.xlu0 %1098
        %1100 = vrot.lane.b32.xlu0 %v1032, 99
        %v1101 = vpop.permute.xlu0 %1100
        %1102 = vrot.lane.b32.xlu0 %v1033, 99
        %v1103 = vpop.permute.xlu0 %1102
        %1104 = vrot.lane.b32.xlu0 %v1034, 99
        %v1105 = vpop.permute.xlu0 %1104
        %1106 = vrot.lane.b32.xlu0 %v1035, 99
        %v1107 = vpop.permute.xlu0 %1106
        %vm1108 = vcmask 809984
        %v1109 = vsel %vm1108, %v1061, %v1063
        %v1110 = vsel %vm1108, %v1063, %v1065
        %v1111 = vsel %vm1108, %v1065, %v1067
        %v1112 = vsel %vm1108, %v1067, %v1069
        %v1113 = vsel %vm1108, %v1069, %v1071
        %v1114 = vsel %vm1108, %v1073, %v1075
        %v1115 = vsel %vm1108, %v1075, %v1077
        %v1116 = vsel %vm1108, %v1077, %v1079
        %v1117 = vsel %vm1108, %v1079, %v1081
        %v1118 = vsel %vm1108, %v1081, %v1083
        %v1119 = vsel %vm1108, %v1085, %v1087
        %v1120 = vsel %vm1108, %v1087, %v1089
        %v1121 = vsel %vm1108, %v1089, %v1091
        %v1122 = vsel %vm1108, %v1091, %v1093
        %v1123 = vsel %vm1108, %v1093, %v1095
        %v1124 = vsel %vm1108, %v1097, %v1099
        %v1125 = vsel %vm1108, %v1099, %v1101
        %v1126 = vsel %vm1108, %v1101, %v1103
        %v1127 = vsel %vm1108, %v1103, %v1105
        %v1128 = vsel %vm1108, %v1105, %v1107
        %v1153 = vadd.f32 %v972, %v1109
        %v1154 = vadd.f32 %v973, %v1110
        %v1155 = vadd.f32 %v974, %v1111
        %v1156 = vadd.f32 %v975, %v1112
        %v1157 = vadd.f32 %v976, %v1113
        %v1158 = vadd.f32 %v977, %v1071
        %v1159 = vadd.f32 %v978, %v1114
        %v1160 = vadd.f32 %v979, %v1115
        %v1161 = vadd.f32 %v980, %v1116
        %v1162 = vadd.f32 %v981, %v1117
        %v1163 = vadd.f32 %v982, %v1118
        %v1164 = vadd.f32 %v983, %v1083
        %v1165 = vadd.f32 %v984, %v1119
        %v1166 = vadd.f32 %v985, %v1120
        %v1167 = vadd.f32 %v986, %v1121
        %v1168 = vadd.f32 %v987, %v1122
        %v1169 = vadd.f32 %v988, %v1123
        %v1170 = vadd.f32 %v989, %v1095
        %v1171 = vadd.f32 %v990, %v1124
        %v1172 = vadd.f32 %v991, %v1125
        %v1173 = vadd.f32 %v992, %v1126
        %v1174 = vadd.f32 %v993, %v1127
        %v1175 = vadd.f32 %v994, %v1128
        %v1176 = vadd.f32 %v995, %v1107
        %1177 = vset.pattern.permute.xlu0 5
        %1178 = vperm.xlu0 %1177, %v265
        %v1179 = vpop.permute.xlu0 %1178
        %1181 = vset.pattern.permute.xlu0 5
        %1182 = vperm.xlu0 %1181, %v266
        %v1183 = vpop.permute.xlu0 %1182
        %1185 = vset.pattern.permute.xlu0 5
        %1186 = vperm.xlu0 %1185, %v267
        %v1187 = vpop.permute.xlu0 %1186
        %1189 = vset.pattern.permute.xlu0 5
        %1190 = vperm.xlu0 %1189, %v268
        %v1191 = vpop.permute.xlu0 %1190
        %v1193 = vmul.f32 %v1179, %v402
        %v1194 = vmul.f32 %v1179, %v406
        %v1195 = vmul.f32 %v1179, %v410
        %v1196 = vmul.f32 %v1179, %v414
        %v1197 = vmul.f32 %v1179, %v418
        %v1198 = vmul.f32 %v1179, %v422
        %v1199 = vmul.f32 %v1183, %v402
        %v1200 = vmul.f32 %v1183, %v406
        %v1201 = vmul.f32 %v1183, %v410
        %v1202 = vmul.f32 %v1183, %v414
        %v1203 = vmul.f32 %v1183, %v418
        %v1204 = vmul.f32 %v1183, %v422
        %v1205 = vmul.f32 %v1187, %v402
        %v1206 = vmul.f32 %v1187, %v406
        %v1207 = vmul.f32 %v1187, %v410
        %v1208 = vmul.f32 %v1187, %v414
        %v1209 = vmul.f32 %v1187, %v418
        %v1210 = vmul.f32 %v1187, %v422
        %v1211 = vmul.f32 %v1191, %v402
        %v1212 = vmul.f32 %v1191, %v406
        %v1213 = vmul.f32 %v1191, %v410
        %v1214 = vmul.f32 %v1191, %v414
        %v1215 = vmul.f32 %v1191, %v418
        %v1216 = vmul.f32 %v1191, %v422
        %1241 = vrot.lane.b32.xlu0 %v1193, 98
        %v1242 = vpop.permute.xlu0 %1241
        %1243 = vrot.lane.b32.xlu0 %v1194, 98
        %v1244 = vpop.permute.xlu0 %1243
        %1245 = vrot.lane.b32.xlu0 %v1195, 98
        %v1246 = vpop.permute.xlu0 %1245
        %1247 = vrot.lane.b32.xlu0 %v1196, 98
        %v1248 = vpop.permute.xlu0 %1247
        %1249 = vrot.lane.b32.xlu0 %v1197, 98
        %v1250 = vpop.permute.xlu0 %1249
        %1251 = vrot.lane.b32.xlu0 %v1198, 98
        %v1252 = vpop.permute.xlu0 %1251
        %1253 = vrot.lane.b32.xlu0 %v1199, 98
        %v1254 = vpop.permute.xlu0 %1253
        %1255 = vrot.lane.b32.xlu0 %v1200, 98
        %v1256 = vpop.permute.xlu0 %1255
        %1257 = vrot.lane.b32.xlu0 %v1201, 98
        %v1258 = vpop.permute.xlu0 %1257
        %1259 = vrot.lane.b32.xlu0 %v1202, 98
        %v1260 = vpop.permute.xlu0 %1259
        %1261 = vrot.lane.b32.xlu0 %v1203, 98
        %v1262 = vpop.permute.xlu0 %1261
        %1263 = vrot.lane.b32.xlu0 %v1204, 98
        %v1264 = vpop.permute.xlu0 %1263
        %1265 = vrot.lane.b32.xlu0 %v1205, 98
        %v1266 = vpop.permute.xlu0 %1265
        %1267 = vrot.lane.b32.xlu0 %v1206, 98
        %v1268 = vpop.permute.xlu0 %1267
        %1269 = vrot.lane.b32.xlu0 %v1207, 98
        %v1270 = vpop.permute.xlu0 %1269
        %1271 = vrot.lane.b32.xlu0 %v1208, 98
        %v1272 = vpop.permute.xlu0 %1271
        %1273 = vrot.lane.b32.xlu0 %v1209, 98
        %v1274 = vpop.permute.xlu0 %1273
        %1275 = vrot.lane.b32.xlu0 %v1210, 98
        %v1276 = vpop.permute.xlu0 %1275
        %1277 = vrot.lane.b32.xlu0 %v1211, 98
        %v1278 = vpop.permute.xlu0 %1277
        %1279 = vrot.lane.b32.xlu0 %v1212, 98
        %v1280 = vpop.permute.xlu0 %1279
        %1281 = vrot.lane.b32.xlu0 %v1213, 98
        %v1282 = vpop.permute.xlu0 %1281
        %1283 = vrot.lane.b32.xlu0 %v1214, 98
        %v1284 = vpop.permute.xlu0 %1283
        %1285 = vrot.lane.b32.xlu0 %v1215, 98
        %v1286 = vpop.permute.xlu0 %1285
        %1287 = vrot.lane.b32.xlu0 %v1216, 98
        %v1288 = vpop.permute.xlu0 %1287
        %vm1289 = vcmask 801792
        %v1290 = vsel %vm1289, %v1242, %v1244
        %v1291 = vsel %vm1289, %v1244, %v1246
        %v1292 = vsel %vm1289, %v1246, %v1248
        %v1293 = vsel %vm1289, %v1248, %v1250
        %v1294 = vsel %vm1289, %v1250, %v1252
        %v1295 = vsel %vm1289, %v1254, %v1256
        %v1296 = vsel %vm1289, %v1256, %v1258
        %v1297 = vsel %vm1289, %v1258, %v1260
        %v1298 = vsel %vm1289, %v1260, %v1262
        %v1299 = vsel %vm1289, %v1262, %v1264
        %v1300 = vsel %vm1289, %v1266, %v1268
        %v1301 = vsel %vm1289, %v1268, %v1270
        %v1302 = vsel %vm1289, %v1270, %v1272
        %v1303 = vsel %vm1289, %v1272, %v1274
        %v1304 = vsel %vm1289, %v1274, %v1276
        %v1305 = vsel %vm1289, %v1278, %v1280
        %v1306 = vsel %vm1289, %v1280, %v1282
        %v1307 = vsel %vm1289, %v1282, %v1284
        %v1308 = vsel %vm1289, %v1284, %v1286
        %v1309 = vsel %vm1289, %v1286, %v1288
        %v1334 = vadd.f32 %v1153, %v1290
        %v1335 = vadd.f32 %v1154, %v1291
        %v1336 = vadd.f32 %v1155, %v1292
        %v1337 = vadd.f32 %v1156, %v1293
        %v1338 = vadd.f32 %v1157, %v1294
        %v1339 = vadd.f32 %v1158, %v1252
        %v1340 = vadd.f32 %v1159, %v1295
        %v1341 = vadd.f32 %v1160, %v1296
        %v1342 = vadd.f32 %v1161, %v1297
        %v1343 = vadd.f32 %v1162, %v1298
        %v1344 = vadd.f32 %v1163, %v1299
        %v1345 = vadd.f32 %v1164, %v1264
        %v1346 = vadd.f32 %v1165, %v1300
        %v1347 = vadd.f32 %v1166, %v1301
        %v1348 = vadd.f32 %v1167, %v1302
        %v1349 = vadd.f32 %v1168, %v1303
        %v1350 = vadd.f32 %v1169, %v1304
        %v1351 = vadd.f32 %v1170, %v1276
        %v1352 = vadd.f32 %v1171, %v1305
        %v1353 = vadd.f32 %v1172, %v1306
        %v1354 = vadd.f32 %v1173, %v1307
        %v1355 = vadd.f32 %v1174, %v1308
        %v1356 = vadd.f32 %v1175, %v1309
        %v1357 = vadd.f32 %v1176, %v1288
        %1358 = vset.pattern.permute.xlu0 6
        %1359 = vperm.xlu0 %1358, %v265
        %v1360 = vpop.permute.xlu0 %1359
        %1362 = vset.pattern.permute.xlu0 6
        %1363 = vperm.xlu0 %1362, %v266
        %v1364 = vpop.permute.xlu0 %1363
        %1366 = vset.pattern.permute.xlu0 6
        %1367 = vperm.xlu0 %1366, %v267
        %v1368 = vpop.permute.xlu0 %1367
        %1370 = vset.pattern.permute.xlu0 6
        %1371 = vperm.xlu0 %1370, %v268
        %v1372 = vpop.permute.xlu0 %1371
        %v1374 = vlaneseq
        %v1375 = vshrl.u32 %v1374, 7
        %v1376 = vsub.s32 6, %v1375
        %v1377 = vrot.slane %v377, %v1376
        %v1379 = vmul.f32 %v1360, %v402
        %v1380 = vmul.f32 %v1360, %v406
        %v1381 = vmul.f32 %v1360, %v410
        %v1382 = vmul.f32 %v1360, %v414
        %v1383 = vmul.f32 %v1360, %v418
        %v1384 = vmul.f32 %v1360, %v422
        %v1385 = vmul.f32 %v1360, %v1377
        %v1386 = vmul.f32 %v1364, %v402
        %v1387 = vmul.f32 %v1364, %v406
        %v1388 = vmul.f32 %v1364, %v410
        %v1389 = vmul.f32 %v1364, %v414
        %v1390 = vmul.f32 %v1364, %v418
        %v1391 = vmul.f32 %v1364, %v422
        %v1392 = vmul.f32 %v1364, %v1377
        %v1393 = vmul.f32 %v1368, %v402
        %v1394 = vmul.f32 %v1368, %v406
        %v1395 = vmul.f32 %v1368, %v410
        %v1396 = vmul.f32 %v1368, %v414
        %v1397 = vmul.f32 %v1368, %v418
        %v1398 = vmul.f32 %v1368, %v422
        %v1399 = vmul.f32 %v1368, %v1377
        %v1400 = vmul.f32 %v1372, %v402
        %v1401 = vmul.f32 %v1372, %v406
        %v1402 = vmul.f32 %v1372, %v410
        %v1403 = vmul.f32 %v1372, %v414
        %v1404 = vmul.f32 %v1372, %v418
        %v1405 = vmul.f32 %v1372, %v422
        %v1406 = vmul.f32 %v1372, %v1377
        %1435 = vrot.lane.b32.xlu0 %v1379, 72
        %v1436 = vpop.permute.xlu0 %1435
        %1437 = vrot.lane.b32.xlu0 %v1380, 72
        %v1438 = vpop.permute.xlu0 %1437
        %1439 = vrot.lane.b32.xlu0 %v1381, 72
        %v1440 = vpop.permute.xlu0 %1439
        %1441 = vrot.lane.b32.xlu0 %v1382, 72
        %v1442 = vpop.permute.xlu0 %1441
        %1443 = vrot.lane.b32.xlu0 %v1383, 72
        %v1444 = vpop.permute.xlu0 %1443
        %1445 = vrot.lane.b32.xlu0 %v1384, 72
        %v1446 = vpop.permute.xlu0 %1445
        %1447 = vrot.lane.b32.xlu0 %v1385, 72
        %v1448 = vpop.permute.xlu0 %1447
        %1449 = vrot.lane.b32.xlu0 %v1386, 72
        %v1450 = vpop.permute.xlu0 %1449
        %1451 = vrot.lane.b32.xlu0 %v1387, 72
        %v1452 = vpop.permute.xlu0 %1451
        %1453 = vrot.lane.b32.xlu0 %v1388, 72
        %v1454 = vpop.permute.xlu0 %1453
        %1455 = vrot.lane.b32.xlu0 %v1389, 72
        %v1456 = vpop.permute.xlu0 %1455
        %1457 = vrot.lane.b32.xlu0 %v1390, 72
        %v1458 = vpop.permute.xlu0 %1457
        %1459 = vrot.lane.b32.xlu0 %v1391, 72
        %v1460 = vpop.permute.xlu0 %1459
        %1461 = vrot.lane.b32.xlu0 %v1392, 72
        %v1462 = vpop.permute.xlu0 %1461
        %1463 = vrot.lane.b32.xlu0 %v1393, 72
        %v1464 = vpop.permute.xlu0 %1463
        %1465 = vrot.lane.b32.xlu0 %v1394, 72
        %v1466 = vpop.permute.xlu0 %1465
        %1467 = vrot.lane.b32.xlu0 %v1395, 72
        %v1468 = vpop.permute.xlu0 %1467
        %1469 = vrot.lane.b32.xlu0 %v1396, 72
        %v1470 = vpop.permute.xlu0 %1469
        %1471 = vrot.lane.b32.xlu0 %v1397, 72
        %v1472 = vpop.permute.xlu0 %1471
        %1473 = vrot.lane.b32.xlu0 %v1398, 72
        %v1474 = vpop.permute.xlu0 %1473
        %1475 = vrot.lane.b32.xlu0 %v1399, 72
        %v1476 = vpop.permute.xlu0 %1475
        %1477 = vrot.lane.b32.xlu0 %v1400, 72
        %v1478 = vpop.permute.xlu0 %1477
        %1479 = vrot.lane.b32.xlu0 %v1401, 72
        %v1480 = vpop.permute.xlu0 %1479
        %1481 = vrot.lane.b32.xlu0 %v1402, 72
        %v1482 = vpop.permute.xlu0 %1481
        %1483 = vrot.lane.b32.xlu0 %v1403, 72
        %v1484 = vpop.permute.xlu0 %1483
        %1485 = vrot.lane.b32.xlu0 %v1404, 72
        %v1486 = vpop.permute.xlu0 %1485
        %1487 = vrot.lane.b32.xlu0 %v1405, 72
        %v1488 = vpop.permute.xlu0 %1487
        %1489 = vrot.lane.b32.xlu0 %v1406, 72
        %v1490 = vpop.permute.xlu0 %1489
        %vm1491 = vcmask 588800
        %v1492 = vsel %vm1491, %v1436, %v1438
        %v1493 = vsel %vm1491, %v1438, %v1440
        %v1494 = vsel %vm1491, %v1440, %v1442
        %v1495 = vsel %vm1491, %v1442, %v1444
        %v1496 = vsel %vm1491, %v1444, %v1446
        %v1497 = vsel %vm1491, %v1446, %v1448
        %v1498 = vsel %vm1491, %v1450, %v1452
        %v1499 = vsel %vm1491, %v1452, %v1454
        %v1500 = vsel %vm1491, %v1454, %v1456
        %v1501 = vsel %vm1491, %v1456, %v1458
        %v1502 = vsel %vm1491, %v1458, %v1460
        %v1503 = vsel %vm1491, %v1460, %v1462
        %v1504 = vsel %vm1491, %v1464, %v1466
        %v1505 = vsel %vm1491, %v1466, %v1468
        %v1506 = vsel %vm1491, %v1468, %v1470
        %v1507 = vsel %vm1491, %v1470, %v1472
        %v1508 = vsel %vm1491, %v1472, %v1474
        %v1509 = vsel %vm1491, %v1474, %v1476
        %v1510 = vsel %vm1491, %v1478, %v1480
        %v1511 = vsel %vm1491, %v1480, %v1482
        %v1512 = vsel %vm1491, %v1482, %v1484
        %v1513 = vsel %vm1491, %v1484, %v1486
        %v1514 = vsel %vm1491, %v1486, %v1488
        %v1515 = vsel %vm1491, %v1488, %v1490
        %v1540 = vadd.f32 %v1334, %v1492
        %v1541 = vadd.f32 %v1335, %v1493
        %v1542 = vadd.f32 %v1336, %v1494
        %v1543 = vadd.f32 %v1337, %v1495
        %v1544 = vadd.f32 %v1338, %v1496
        %v1545 = vadd.f32 %v1339, %v1497
        %v1546 = vadd.f32 %v1340, %v1498
        %v1547 = vadd.f32 %v1341, %v1499
        %v1548 = vadd.f32 %v1342, %v1500
        %v1549 = vadd.f32 %v1343, %v1501
        %v1550 = vadd.f32 %v1344, %v1502
        %v1551 = vadd.f32 %v1345, %v1503
        %v1552 = vadd.f32 %v1346, %v1504
        %v1553 = vadd.f32 %v1347, %v1505
        %v1554 = vadd.f32 %v1348, %v1506
        %v1555 = vadd.f32 %v1349, %v1507
        %v1556 = vadd.f32 %v1350, %v1508
        %v1557 = vadd.f32 %v1351, %v1509
        %v1558 = vadd.f32 %v1352, %v1510
        %v1559 = vadd.f32 %v1353, %v1511
        %v1560 = vadd.f32 %v1354, %v1512
        %v1561 = vadd.f32 %v1355, %v1513
        %v1562 = vadd.f32 %v1356, %v1514
        %v1563 = vadd.f32 %v1357, %v1515
        %1564 = vset.pattern.permute.xlu0 7
        %1565 = vperm.xlu0 %1564, %v265
        %v1566 = vpop.permute.xlu0 %1565
        %1568 = vset.pattern.permute.xlu0 7
        %1569 = vperm.xlu0 %1568, %v266
        %v1570 = vpop.permute.xlu0 %1569
        %1572 = vset.pattern.permute.xlu0 7
        %1573 = vperm.xlu0 %1572, %v267
        %v1574 = vpop.permute.xlu0 %1573
        %1576 = vset.pattern.permute.xlu0 7
        %1577 = vperm.xlu0 %1576, %v268
        %v1578 = vpop.permute.xlu0 %1577
        %v1580 = vmul.f32 %v1566, %v402
        %v1581 = vmul.f32 %v1566, %v406
        %v1582 = vmul.f32 %v1566, %v410
        %v1583 = vmul.f32 %v1566, %v414
        %v1584 = vmul.f32 %v1566, %v418
        %v1585 = vmul.f32 %v1566, %v422
        %v1586 = vmul.f32 %v1566, %v1377
        %v1587 = vmul.f32 %v1570, %v402
        %v1588 = vmul.f32 %v1570, %v406
        %v1589 = vmul.f32 %v1570, %v410
        %v1590 = vmul.f32 %v1570, %v414
        %v1591 = vmul.f32 %v1570, %v418
        %v1592 = vmul.f32 %v1570, %v422
        %v1593 = vmul.f32 %v1570, %v1377
        %v1594 = vmul.f32 %v1574, %v402
        %v1595 = vmul.f32 %v1574, %v406
        %v1596 = vmul.f32 %v1574, %v410
        %v1597 = vmul.f32 %v1574, %v414
        %v1598 = vmul.f32 %v1574, %v418
        %v1599 = vmul.f32 %v1574, %v422
        %v1600 = vmul.f32 %v1574, %v1377
        %v1601 = vmul.f32 %v1578, %v402
        %v1602 = vmul.f32 %v1578, %v406
        %v1603 = vmul.f32 %v1578, %v410
        %v1604 = vmul.f32 %v1578, %v414
        %v1605 = vmul.f32 %v1578, %v418
        %v1606 = vmul.f32 %v1578, %v422
        %v1607 = vmul.f32 %v1578, %v1377
        %1636 = vrot.lane.b32.xlu0 %v1580, 71
        %v1637 = vpop.permute.xlu0 %1636
        %1638 = vrot.lane.b32.xlu0 %v1581, 71
        %v1639 = vpop.permute.xlu0 %1638
        %1640 = vrot.lane.b32.xlu0 %v1582, 71
        %v1641 = vpop.permute.xlu0 %1640
        %1642 = vrot.lane.b32.xlu0 %v1583, 71
        %v1643 = vpop.permute.xlu0 %1642
        %1644 = vrot.lane.b32.xlu0 %v1584, 71
        %v1645 = vpop.permute.xlu0 %1644
        %1646 = vrot.lane.b32.xlu0 %v1585, 71
        %v1647 = vpop.permute.xlu0 %1646
        %1648 = vrot.lane.b32.xlu0 %v1586, 71
        %v1649 = vpop.permute.xlu0 %1648
        %1650 = vrot.lane.b32.xlu0 %v1587, 71
        %v1651 = vpop.permute.xlu0 %1650
        %1652 = vrot.lane.b32.xlu0 %v1588, 71
        %v1653 = vpop.permute.xlu0 %1652
        %1654 = vrot.lane.b32.xlu0 %v1589, 71
        %v1655 = vpop.permute.xlu0 %1654
        %1656 = vrot.lane.b32.xlu0 %v1590, 71
        %v1657 = vpop.permute.xlu0 %1656
        %1658 = vrot.lane.b32.xlu0 %v1591, 71
        %v1659 = vpop.permute.xlu0 %1658
        %1660 = vrot.lane.b32.xlu0 %v1592, 71
        %v1661 = vpop.permute.xlu0 %1660
        %1662 = vrot.lane.b32.xlu0 %v1593, 71
        %v1663 = vpop.permute.xlu0 %1662
        %1664 = vrot.lane.b32.xlu0 %v1594, 71
        %v1665 = vpop.permute.xlu0 %1664
        %1666 = vrot.lane.b32.xlu0 %v1595, 71
        %v1667 = vpop.permute.xlu0 %1666
        %1668 = vrot.lane.b32.xlu0 %v1596, 71
        %v1669 = vpop.permute.xlu0 %1668
        %1670 = vrot.lane.b32.xlu0 %v1597, 71
        %v1671 = vpop.permute.xlu0 %1670
        %1672 = vrot.lane.b32.xlu0 %v1598, 71
        %v1673 = vpop.permute.xlu0 %1672
        %1674 = vrot.lane.b32.xlu0 %v1599, 71
        %v1675 = vpop.permute.xlu0 %1674
        %1676 = vrot.lane.b32.xlu0 %v1600, 71
        %v1677 = vpop.permute.xlu0 %1676
        %1678 = vrot.lane.b32.xlu0 %v1601, 71
        %v1679 = vpop.permute.xlu0 %1678
        %1680 = vrot.lane.b32.xlu0 %v1602, 71
        %v1681 = vpop.permute.xlu0 %1680
        %1682 = vrot.lane.b32.xlu0 %v1603, 71
        %v1683 = vpop.permute.xlu0 %1682
        %1684 = vrot.lane.b32.xlu0 %v1604, 71
        %v1685 = vpop.permute.xlu0 %1684
        %1686 = vrot.lane.b32.xlu0 %v1605, 71
        %v1687 = vpop.permute.xlu0 %1686
        %1688 = vrot.lane.b32.xlu0 %v1606, 71
        %v1689 = vpop.permute.xlu0 %1688
        %1690 = vrot.lane.b32.xlu0 %v1607, 71
        %v1691 = vpop.permute.xlu0 %1690
        %vm1692 = vcmask 580608
        %v1693 = vsel %vm1692, %v1637, %v1639
        %v1694 = vsel %vm1692, %v1639, %v1641
        %v1695 = vsel %vm1692, %v1641, %v1643
        %v1696 = vsel %vm1692, %v1643, %v1645
        %v1697 = vsel %vm1692, %v1645, %v1647
        %v1698 = vsel %vm1692, %v1647, %v1649
        %v1699 = vsel %vm1692, %v1651, %v1653
        %v1700 = vsel %vm1692, %v1653, %v1655
        %v1701 = vsel %vm1692, %v1655, %v1657
        %v1702 = vsel %vm1692, %v1657, %v1659
        %v1703 = vsel %vm1692, %v1659, %v1661
        %v1704 = vsel %vm1692, %v1661, %v1663
        %v1705 = vsel %vm1692, %v1665, %v1667
        %v1706 = vsel %vm1692, %v1667, %v1669
        %v1707 = vsel %vm1692, %v1669, %v1671
        %v1708 = vsel %vm1692, %v1671, %v1673
        %v1709 = vsel %vm1692, %v1673, %v1675
        %v1710 = vsel %vm1692, %v1675, %v1677
        %v1711 = vsel %vm1692, %v1679, %v1681
        %v1712 = vsel %vm1692, %v1681, %v1683
        %v1713 = vsel %vm1692, %v1683, %v1685
        %v1714 = vsel %vm1692, %v1685, %v1687
        %v1715 = vsel %vm1692, %v1687, %v1689
        %v1716 = vsel %vm1692, %v1689, %v1691
        %v1741 = vadd.f32 %v1540, %v1693
        %v1742 = vadd.f32 %v1541, %v1694
        %v1743 = vadd.f32 %v1542, %v1695
        %v1744 = vadd.f32 %v1543, %v1696
        %v1745 = vadd.f32 %v1544, %v1697
        %v1746 = vadd.f32 %v1545, %v1698
        %v1747 = vadd.f32 %v1546, %v1699
        %v1748 = vadd.f32 %v1547, %v1700
        %v1749 = vadd.f32 %v1548, %v1701
        %v1750 = vadd.f32 %v1549, %v1702
        %v1751 = vadd.f32 %v1550, %v1703
        %v1752 = vadd.f32 %v1551, %v1704
        %v1753 = vadd.f32 %v1552, %v1705
        %v1754 = vadd.f32 %v1553, %v1706
        %v1755 = vadd.f32 %v1554, %v1707
        %v1756 = vadd.f32 %v1555, %v1708
        %v1757 = vadd.f32 %v1556, %v1709
        %v1758 = vadd.f32 %v1557, %v1710
        %v1759 = vadd.f32 %v1558, %v1711
        %v1760 = vadd.f32 %v1559, %v1712
        %v1761 = vadd.f32 %v1560, %v1713
        %v1762 = vadd.f32 %v1561, %v1714
        %v1763 = vadd.f32 %v1562, %v1715
        %v1764 = vadd.f32 %v1563, %v1716
        %1765 = vset.pattern.permute.xlu0 8
        %1766 = vperm.xlu0 %1765, %v265
        %v1767 = vpop.permute.xlu0 %1766
        %1769 = vset.pattern.permute.xlu0 8
        %1770 = vperm.xlu0 %1769, %v266
        %v1771 = vpop.permute.xlu0 %1770
        %1773 = vset.pattern.permute.xlu0 8
        %1774 = vperm.xlu0 %1773, %v267
        %v1775 = vpop.permute.xlu0 %1774
        %1777 = vset.pattern.permute.xlu0 8
        %1778 = vperm.xlu0 %1777, %v268
        %v1779 = vpop.permute.xlu0 %1778
        %v1781 = vmul.f32 %v1767, %v402
        %v1782 = vmul.f32 %v1767, %v406
        %v1783 = vmul.f32 %v1767, %v410
        %v1784 = vmul.f32 %v1767, %v414
        %v1785 = vmul.f32 %v1767, %v418
        %v1786 = vmul.f32 %v1767, %v422
        %v1787 = vmul.f32 %v1767, %v1377
        %v1788 = vmul.f32 %v1771, %v402
        %v1789 = vmul.f32 %v1771, %v406
        %v1790 = vmul.f32 %v1771, %v410
        %v1791 = vmul.f32 %v1771, %v414
        %v1792 = vmul.f32 %v1771, %v418
        %v1793 = vmul.f32 %v1771, %v422
        %v1794 = vmul.f32 %v1771, %v1377
        %v1795 = vmul.f32 %v1775, %v402
        %v1796 = vmul.f32 %v1775, %v406
        %v1797 = vmul.f32 %v1775, %v410
        %v1798 = vmul.f32 %v1775, %v414
        %v1799 = vmul.f32 %v1775, %v418
        %v1800 = vmul.f32 %v1775, %v422
        %v1801 = vmul.f32 %v1775, %v1377
        %v1802 = vmul.f32 %v1779, %v402
        %v1803 = vmul.f32 %v1779, %v406
        %v1804 = vmul.f32 %v1779, %v410
        %v1805 = vmul.f32 %v1779, %v414
        %v1806 = vmul.f32 %v1779, %v418
        %v1807 = vmul.f32 %v1779, %v422
        %v1808 = vmul.f32 %v1779, %v1377
        %1837 = vrot.lane.b32.xlu0 %v1781, 70
        %v1838 = vpop.permute.xlu0 %1837
        %1839 = vrot.lane.b32.xlu0 %v1782, 70
        %v1840 = vpop.permute.xlu0 %1839
        %1841 = vrot.lane.b32.xlu0 %v1783, 70
        %v1842 = vpop.permute.xlu0 %1841
        %1843 = vrot.lane.b32.xlu0 %v1784, 70
        %v1844 = vpop.permute.xlu0 %1843
        %1845 = vrot.lane.b32.xlu0 %v1785, 70
        %v1846 = vpop.permute.xlu0 %1845
        %1847 = vrot.lane.b32.xlu0 %v1786, 70
        %v1848 = vpop.permute.xlu0 %1847
        %1849 = vrot.lane.b32.xlu0 %v1787, 70
        %v1850 = vpop.permute.xlu0 %1849
        %1851 = vrot.lane.b32.xlu0 %v1788, 70
        %v1852 = vpop.permute.xlu0 %1851
        %1853 = vrot.lane.b32.xlu0 %v1789, 70
        %v1854 = vpop.permute.xlu0 %1853
        %1855 = vrot.lane.b32.xlu0 %v1790, 70
        %v1856 = vpop.permute.xlu0 %1855
        %1857 = vrot.lane.b32.xlu0 %v1791, 70
        %v1858 = vpop.permute.xlu0 %1857
        %1859 = vrot.lane.b32.xlu0 %v1792, 70
        %v1860 = vpop.permute.xlu0 %1859
        %1861 = vrot.lane.b32.xlu0 %v1793, 70
        %v1862 = vpop.permute.xlu0 %1861
        %1863 = vrot.lane.b32.xlu0 %v1794, 70
        %v1864 = vpop.permute.xlu0 %1863
        %1865 = vrot.lane.b32.xlu0 %v1795, 70
        %v1866 = vpop.permute.xlu0 %1865
        %1867 = vrot.lane.b32.xlu0 %v1796, 70
        %v1868 = vpop.permute.xlu0 %1867
        %1869 = vrot.lane.b32.xlu0 %v1797, 70
        %v1870 = vpop.permute.xlu0 %1869
        %1871 = vrot.lane.b32.xlu0 %v1798, 70
        %v1872 = vpop.permute.xlu0 %1871
        %1873 = vrot.lane.b32.xlu0 %v1799, 70
        %v1874 = vpop.permute.xlu0 %1873
        %1875 = vrot.lane.b32.xlu0 %v1800, 70
        %v1876 = vpop.permute.xlu0 %1875
        %1877 = vrot.lane.b32.xlu0 %v1801, 70
        %v1878 = vpop.permute.xlu0 %1877
        %1879 = vrot.lane.b32.xlu0 %v1802, 70
        %v1880 = vpop.permute.xlu0 %1879
        %1881 = vrot.lane.b32.xlu0 %v1803, 70
        %v1882 = vpop.permute.xlu0 %1881
        %1883 = vrot.lane.b32.xlu0 %v1804, 70
        %v1884 = vpop.permute.xlu0 %1883
        %1885 = vrot.lane.b32.xlu0 %v1805, 70
        %v1886 = vpop.permute.xlu0 %1885
        %1887 = vrot.lane.b32.xlu0 %v1806, 70
        %v1888 = vpop.permute.xlu0 %1887
        %1889 = vrot.lane.b32.xlu0 %v1807, 70
        %v1890 = vpop.permute.xlu0 %1889
        %1891 = vrot.lane.b32.xlu0 %v1808, 70
        %v1892 = vpop.permute.xlu0 %1891
        %vm1893 = vcmask 572416
        %v1894 = vsel %vm1893, %v1838, %v1840
        %v1895 = vsel %vm1893, %v1840, %v1842
        %v1896 = vsel %vm1893, %v1842, %v1844
        %v1897 = vsel %vm1893, %v1844, %v1846
        %v1898 = vsel %vm1893, %v1846, %v1848
        %v1899 = vsel %vm1893, %v1848, %v1850
        %v1900 = vsel %vm1893, %v1852, %v1854
        %v1901 = vsel %vm1893, %v1854, %v1856
        %v1902 = vsel %vm1893, %v1856, %v1858
        %v1903 = vsel %vm1893, %v1858, %v1860
        %v1904 = vsel %vm1893, %v1860, %v1862
        %v1905 = vsel %vm1893, %v1862, %v1864
        %v1906 = vsel %vm1893, %v1866, %v1868
        %v1907 = vsel %vm1893, %v1868, %v1870
        %v1908 = vsel %vm1893, %v1870, %v1872
        %v1909 = vsel %vm1893, %v1872, %v1874
        %v1910 = vsel %vm1893, %v1874, %v1876
        %v1911 = vsel %vm1893, %v1876, %v1878
        %v1912 = vsel %vm1893, %v1880, %v1882
        %v1913 = vsel %vm1893, %v1882, %v1884
        %v1914 = vsel %vm1893, %v1884, %v1886
        %v1915 = vsel %vm1893, %v1886, %v1888
        %v1916 = vsel %vm1893, %v1888, %v1890
        %v1917 = vsel %vm1893, %v1890, %v1892
        %v1942 = vadd.f32 %v1741, %v1894
        %v1943 = vadd.f32 %v1742, %v1895
        %v1944 = vadd.f32 %v1743, %v1896
        %v1945 = vadd.f32 %v1744, %v1897
        %v1946 = vadd.f32 %v1745, %v1898
        %v1947 = vadd.f32 %v1746, %v1899
        %v1948 = vadd.f32 %v1747, %v1900
        %v1949 = vadd.f32 %v1748, %v1901
        %v1950 = vadd.f32 %v1749, %v1902
        %v1951 = vadd.f32 %v1750, %v1903
        %v1952 = vadd.f32 %v1751, %v1904
        %v1953 = vadd.f32 %v1752, %v1905
        %v1954 = vadd.f32 %v1753, %v1906
        %v1955 = vadd.f32 %v1754, %v1907
        %v1956 = vadd.f32 %v1755, %v1908
        %v1957 = vadd.f32 %v1756, %v1909
        %v1958 = vadd.f32 %v1757, %v1910
        %v1959 = vadd.f32 %v1758, %v1911
        %v1960 = vadd.f32 %v1759, %v1912
        %v1961 = vadd.f32 %v1760, %v1913
        %v1962 = vadd.f32 %v1761, %v1914
        %v1963 = vadd.f32 %v1762, %v1915
        %v1964 = vadd.f32 %v1763, %v1916
        %v1965 = vadd.f32 %v1764, %v1917
        %1967 = vset.pattern.permute.xlu0 0
        %1968 = vperm.xlu0 %1967, %v269
        %v1969 = vpop.permute.xlu0 %1968
        %1972 = vset.pattern.permute.xlu0 0
        %1973 = vperm.xlu0 %1972, %v270
        %v1974 = vpop.permute.xlu0 %1973
        %1977 = vset.pattern.permute.xlu0 0
        %1978 = vperm.xlu0 %1977, %v271
        %v1979 = vpop.permute.xlu0 %1978
        %1982 = vset.pattern.permute.xlu0 0
        %1983 = vperm.xlu0 %1982, %v272
        %v1984 = vpop.permute.xlu0 %1983
        %v1986 = vadd.f32 %v1942, %v1969
        %v1987 = vadd.f32 %v1943, %v1969
        %v1988 = vadd.f32 %v1944, %v1969
        %v1989 = vadd.f32 %v1945, %v1969
        %v1990 = vadd.f32 %v1946, %v1969
        %v1991 = vadd.f32 %v1947, %v1969
        %v1992 = vadd.f32 %v1948, %v1974
        %v1993 = vadd.f32 %v1949, %v1974
        %v1994 = vadd.f32 %v1950, %v1974
        %v1995 = vadd.f32 %v1951, %v1974
        %v1996 = vadd.f32 %v1952, %v1974
        %v1997 = vadd.f32 %v1953, %v1974
        %v1998 = vadd.f32 %v1954, %v1979
        %v1999 = vadd.f32 %v1955, %v1979
        %v2000 = vadd.f32 %v1956, %v1979
        %v2001 = vadd.f32 %v1957, %v1979
        %v2002 = vadd.f32 %v1958, %v1979
        %v2003 = vadd.f32 %v1959, %v1979
        %v2004 = vadd.f32 %v1960, %v1984
        %v2005 = vadd.f32 %v1961, %v1984
        %v2006 = vadd.f32 %v1962, %v1984
        %v2007 = vadd.f32 %v1963, %v1984
        %v2008 = vadd.f32 %v1964, %v1984
        %v2009 = vadd.f32 %v1965, %v1984
        %v2010 = vmax.f32 %v1986, 0.0
        %v2011 = vmax.f32 %v1987, 0.0
        %v2012 = vmax.f32 %v1988, 0.0
        %v2013 = vmax.f32 %v1989, 0.0
        %v2014 = vmax.f32 %v1990, 0.0
        %v2015 = vmax.f32 %v1991, 0.0
        %v2016 = vmax.f32 %v1992, 0.0
        %v2017 = vmax.f32 %v1993, 0.0
        %v2018 = vmax.f32 %v1994, 0.0
        %v2019 = vmax.f32 %v1995, 0.0
        %v2020 = vmax.f32 %v1996, 0.0
        %v2021 = vmax.f32 %v1997, 0.0
        %v2022 = vmax.f32 %v1998, 0.0
        %v2023 = vmax.f32 %v1999, 0.0
        %v2024 = vmax.f32 %v2000, 0.0
        %v2025 = vmax.f32 %v2001, 0.0
        %v2026 = vmax.f32 %v2002, 0.0
        %v2027 = vmax.f32 %v2003, 0.0
        %v2028 = vmax.f32 %v2004, 0.0
        %v2029 = vmax.f32 %v2005, 0.0
        %v2030 = vmax.f32 %v2006, 0.0
        %v2031 = vmax.f32 %v2007, 0.0
        %v2032 = vmax.f32 %v2008, 0.0
        %v2033 = vmax.f32 %v2009, 0.0
        %v2034 = vpack.c.bf16 %v2016, %v2010
        %v2035 = vpack.c.bf16 %v2017, %v2011
        %v2036 = vpack.c.bf16 %v2018, %v2012
        %v2037 = vpack.c.bf16 %v2019, %v2013
        %v2038 = vpack.c.bf16 %v2020, %v2014
        %v2039 = vpack.c.bf16 %v2021, %v2015
        %v2040 = vpack.c.bf16 %v2028, %v2022
        %v2041 = vpack.c.bf16 %v2029, %v2023
        %v2042 = vpack.c.bf16 %v2030, %v2024
        %v2043 = vpack.c.bf16 %v2031, %v2025
        %v2044 = vpack.c.bf16 %v2032, %v2026
        %v2045 = vpack.c.bf16 %v2033, %v2027
        %2058 = vrot.lane.b32.xlu0 %v2034, 127
        %v2059 = vpop.permute.xlu0 %2058
        %2060 = vrot.lane.b32.xlu0 %v2035, 127
        %v2061 = vpop.permute.xlu0 %2060
        %2062 = vrot.lane.b32.xlu0 %v2036, 127
        %v2063 = vpop.permute.xlu0 %2062
        %2064 = vrot.lane.b32.xlu0 %v2037, 127
        %v2065 = vpop.permute.xlu0 %2064
        %2066 = vrot.lane.b32.xlu0 %v2038, 127
        %v2067 = vpop.permute.xlu0 %2066
        %2068 = vrot.lane.b32.xlu0 %v2039, 127
        %v2069 = vpop.permute.xlu0 %2068
        %2070 = vrot.lane.b32.xlu0 %v2040, 127
        %v2071 = vpop.permute.xlu0 %2070
        %2072 = vrot.lane.b32.xlu0 %v2041, 127
        %v2073 = vpop.permute.xlu0 %2072
        %2074 = vrot.lane.b32.xlu0 %v2042, 127
        %v2075 = vpop.permute.xlu0 %2074
        %2076 = vrot.lane.b32.xlu0 %v2043, 127
        %v2077 = vpop.permute.xlu0 %2076
        %2078 = vrot.lane.b32.xlu0 %v2044, 127
        %v2079 = vpop.permute.xlu0 %2078
        %2080 = vrot.lane.b32.xlu0 %v2045, 127
        %v2081 = vpop.permute.xlu0 %2080
        %vm2082 = vcmask 1039360
        %v2083 = vsel %vm2082, %v2059, %v2061
        %v2084 = vsel %vm2082, %v2061, %v2063
        %v2085 = vsel %vm2082, %v2063, %v2065
        %v2086 = vsel %vm2082, %v2065, %v2067
        %v2087 = vsel %vm2082, %v2067, %v2069
        %v2088 = vsel %vm2082, %v2071, %v2073
        %v2089 = vsel %vm2082, %v2073, %v2075
        %v2090 = vsel %vm2082, %v2075, %v2077
        %v2091 = vsel %vm2082, %v2077, %v2079
        %v2092 = vsel %vm2082, %v2079, %v2081
        %2105 = vrot.lane.b32.xlu0 %v2034, 126
        %v2106 = vpop.permute.xlu0 %2105
        %2107 = vrot.lane.b32.xlu0 %v2035, 126
        %v2108 = vpop.permute.xlu0 %2107
        %2109 = vrot.lane.b32.xlu0 %v2036, 126
        %v2110 = vpop.permute.xlu0 %2109
        %2111 = vrot.lane.b32.xlu0 %v2037, 126
        %v2112 = vpop.permute.xlu0 %2111
        %2113 = vrot.lane.b32.xlu0 %v2038, 126
        %v2114 = vpop.permute.xlu0 %2113
        %2115 = vrot.lane.b32.xlu0 %v2039, 126
        %v2116 = vpop.permute.xlu0 %2115
        %2117 = vrot.lane.b32.xlu0 %v2040, 126
        %v2118 = vpop.permute.xlu0 %2117
        %2119 = vrot.lane.b32.xlu0 %v2041, 126
        %v2120 = vpop.permute.xlu0 %2119
        %2121 = vrot.lane.b32.xlu0 %v2042, 126
        %v2122 = vpop.permute.xlu0 %2121
        %2123 = vrot.lane.b32.xlu0 %v2043, 126
        %v2124 = vpop.permute.xlu0 %2123
        %2125 = vrot.lane.b32.xlu0 %v2044, 126
        %v2126 = vpop.permute.xlu0 %2125
        %2127 = vrot.lane.b32.xlu0 %v2045, 126
        %v2128 = vpop.permute.xlu0 %2127
        %vm2129 = vcmask 1031168
        %v2130 = vsel %vm2129, %v2106, %v2108
        %v2131 = vsel %vm2129, %v2108, %v2110
        %v2132 = vsel %vm2129, %v2110, %v2112
        %v2133 = vsel %vm2129, %v2112, %v2114
        %v2134 = vsel %vm2129, %v2114, %v2116
        %v2135 = vsel %vm2129, %v2118, %v2120
        %v2136 = vsel %vm2129, %v2120, %v2122
        %v2137 = vsel %vm2129, %v2122, %v2124
        %v2138 = vsel %vm2129, %v2124, %v2126
        %v2139 = vsel %vm2129, %v2126, %v2128
        %2152 = vrot.lane.b32.xlu0 %v2034, 100
        %v2153 = vpop.permute.xlu0 %2152
        %2154 = vrot.lane.b32.xlu0 %v2035, 100
        %v2155 = vpop.permute.xlu0 %2154
        %2156 = vrot.lane.b32.xlu0 %v2036, 100
        %v2157 = vpop.permute.xlu0 %2156
        %2158 = vrot.lane.b32.xlu0 %v2037, 100
        %v2159 = vpop.permute.xlu0 %2158
        %2160 = vrot.lane.b32.xlu0 %v2038, 100
        %v2161 = vpop.permute.xlu0 %2160
        %2162 = vrot.lane.b32.xlu0 %v2039, 100
        %v2163 = vpop.permute.xlu0 %2162
        %2164 = vrot.lane.b32.xlu0 %v2040, 100
        %v2165 = vpop.permute.xlu0 %2164
        %2166 = vrot.lane.b32.xlu0 %v2041, 100
        %v2167 = vpop.permute.xlu0 %2166
        %2168 = vrot.lane.b32.xlu0 %v2042, 100
        %v2169 = vpop.permute.xlu0 %2168
        %2170 = vrot.lane.b32.xlu0 %v2043, 100
        %v2171 = vpop.permute.xlu0 %2170
        %2172 = vrot.lane.b32.xlu0 %v2044, 100
        %v2173 = vpop.permute.xlu0 %2172
        %2174 = vrot.lane.b32.xlu0 %v2045, 100
        %v2175 = vpop.permute.xlu0 %2174
        %vm2176 = vcmask 818176
        %v2177 = vsel %vm2176, %v2153, %v2155
        %v2178 = vsel %vm2176, %v2155, %v2157
        %v2179 = vsel %vm2176, %v2157, %v2159
        %v2180 = vsel %vm2176, %v2159, %v2161
        %v2181 = vsel %vm2176, %v2161, %v2163
        %v2182 = vsel %vm2176, %v2165, %v2167
        %v2183 = vsel %vm2176, %v2167, %v2169
        %v2184 = vsel %vm2176, %v2169, %v2171
        %v2185 = vsel %vm2176, %v2171, %v2173
        %v2186 = vsel %vm2176, %v2173, %v2175
        %2199 = vrot.lane.b32.xlu0 %v2034, 99
        %v2200 = vpop.permute.xlu0 %2199
        %2201 = vrot.lane.b32.xlu0 %v2035, 99
        %v2202 = vpop.permute.xlu0 %2201
        %2203 = vrot.lane.b32.xlu0 %v2036, 99
        %v2204 = vpop.permute.xlu0 %2203
        %2205 = vrot.lane.b32.xlu0 %v2037, 99
        %v2206 = vpop.permute.xlu0 %2205
        %2207 = vrot.lane.b32.xlu0 %v2038, 99
        %v2208 = vpop.permute.xlu0 %2207
        %2209 = vrot.lane.b32.xlu0 %v2039, 99
        %v2210 = vpop.permute.xlu0 %2209
        %2211 = vrot.lane.b32.xlu0 %v2040, 99
        %v2212 = vpop.permute.xlu0 %2211
        %2213 = vrot.lane.b32.xlu0 %v2041, 99
        %v2214 = vpop.permute.xlu0 %2213
        %2215 = vrot.lane.b32.xlu0 %v2042, 99
        %v2216 = vpop.permute.xlu0 %2215
        %2217 = vrot.lane.b32.xlu0 %v2043, 99
        %v2218 = vpop.permute.xlu0 %2217
        %2219 = vrot.lane.b32.xlu0 %v2044, 99
        %v2220 = vpop.permute.xlu0 %2219
        %2221 = vrot.lane.b32.xlu0 %v2045, 99
        %v2222 = vpop.permute.xlu0 %2221
        %vm2223 = vcmask 809984
        %v2224 = vsel %vm2223, %v2200, %v2202
        %v2225 = vsel %vm2223, %v2202, %v2204
        %v2226 = vsel %vm2223, %v2204, %v2206
        %v2227 = vsel %vm2223, %v2206, %v2208
        %v2228 = vsel %vm2223, %v2208, %v2210
        %v2229 = vsel %vm2223, %v2212, %v2214
        %v2230 = vsel %vm2223, %v2214, %v2216
        %v2231 = vsel %vm2223, %v2216, %v2218
        %v2232 = vsel %vm2223, %v2218, %v2220
        %v2233 = vsel %vm2223, %v2220, %v2222
        %2246 = vrot.lane.b32.xlu0 %v2034, 98
        %v2247 = vpop.permute.xlu0 %2246
        %2248 = vrot.lane.b32.xlu0 %v2035, 98
        %v2249 = vpop.permute.xlu0 %2248
        %2250 = vrot.lane.b32.xlu0 %v2036, 98
        %v2251 = vpop.permute.xlu0 %2250
        %2252 = vrot.lane.b32.xlu0 %v2037, 98
        %v2253 = vpop.permute.xlu0 %2252
        %2254 = vrot.lane.b32.xlu0 %v2038, 98
        %v2255 = vpop.permute.xlu0 %2254
        %2256 = vrot.lane.b32.xlu0 %v2039, 98
        %v2257 = vpop.permute.xlu0 %2256
        %2258 = vrot.lane.b32.xlu0 %v2040, 98
        %v2259 = vpop.permute.xlu0 %2258
        %2260 = vrot.lane.b32.xlu0 %v2041, 98
        %v2261 = vpop.permute.xlu0 %2260
        %2262 = vrot.lane.b32.xlu0 %v2042, 98
        %v2263 = vpop.permute.xlu0 %2262
        %2264 = vrot.lane.b32.xlu0 %v2043, 98
        %v2265 = vpop.permute.xlu0 %2264
        %2266 = vrot.lane.b32.xlu0 %v2044, 98
        %v2267 = vpop.permute.xlu0 %2266
        %2268 = vrot.lane.b32.xlu0 %v2045, 98
        %v2269 = vpop.permute.xlu0 %2268
        %vm2270 = vcmask 801792
        %v2271 = vsel %vm2270, %v2247, %v2249
        %v2272 = vsel %vm2270, %v2249, %v2251
        %v2273 = vsel %vm2270, %v2251, %v2253
        %v2274 = vsel %vm2270, %v2253, %v2255
        %v2275 = vsel %vm2270, %v2255, %v2257
        %v2276 = vsel %vm2270, %v2259, %v2261
        %v2277 = vsel %vm2270, %v2261, %v2263
        %v2278 = vsel %vm2270, %v2263, %v2265
        %v2279 = vsel %vm2270, %v2265, %v2267
        %v2280 = vsel %vm2270, %v2267, %v2269
        %2293 = vrot.lane.b32.xlu0 %v2034, 72
        %v2294 = vpop.permute.xlu0 %2293
        %2295 = vrot.lane.b32.xlu0 %v2035, 72
        %v2296 = vpop.permute.xlu0 %2295
        %2297 = vrot.lane.b32.xlu0 %v2036, 72
        %v2298 = vpop.permute.xlu0 %2297
        %2299 = vrot.lane.b32.xlu0 %v2037, 72
        %v2300 = vpop.permute.xlu0 %2299
        %2301 = vrot.lane.b32.xlu0 %v2038, 72
        %v2302 = vpop.permute.xlu0 %2301
        %2303 = vrot.lane.b32.xlu0 %v2039, 72
        %v2304 = vpop.permute.xlu0 %2303
        %2305 = vrot.lane.b32.xlu0 %v2040, 72
        %v2306 = vpop.permute.xlu0 %2305
        %2307 = vrot.lane.b32.xlu0 %v2041, 72
        %v2308 = vpop.permute.xlu0 %2307
        %2309 = vrot.lane.b32.xlu0 %v2042, 72
        %v2310 = vpop.permute.xlu0 %2309
        %2311 = vrot.lane.b32.xlu0 %v2043, 72
        %v2312 = vpop.permute.xlu0 %2311
        %2313 = vrot.lane.b32.xlu0 %v2044, 72
        %v2314 = vpop.permute.xlu0 %2313
        %2315 = vrot.lane.b32.xlu0 %v2045, 72
        %v2316 = vpop.permute.xlu0 %2315
        %vm2317 = vcmask 588800
        %v2318 = vsel %vm2317, %v2294, %v2296
        %v2319 = vsel %vm2317, %v2296, %v2298
        %v2320 = vsel %vm2317, %v2298, %v2300
        %v2321 = vsel %vm2317, %v2300, %v2302
        %v2322 = vsel %vm2317, %v2302, %v2304
        %v2323 = vsel %vm2317, %v2306, %v2308
        %v2324 = vsel %vm2317, %v2308, %v2310
        %v2325 = vsel %vm2317, %v2310, %v2312
        %v2326 = vsel %vm2317, %v2312, %v2314
        %v2327 = vsel %vm2317, %v2314, %v2316
        %2340 = vrot.lane.b32.xlu0 %v2034, 71
        %v2341 = vpop.permute.xlu0 %2340
        %2342 = vrot.lane.b32.xlu0 %v2035, 71
        %v2343 = vpop.permute.xlu0 %2342
        %2344 = vrot.lane.b32.xlu0 %v2036, 71
        %v2345 = vpop.permute.xlu0 %2344
        %2346 = vrot.lane.b32.xlu0 %v2037, 71
        %v2347 = vpop.permute.xlu0 %2346
        %2348 = vrot.lane.b32.xlu0 %v2038, 71
        %v2349 = vpop.permute.xlu0 %2348
        %2350 = vrot.lane.b32.xlu0 %v2039, 71
        %v2351 = vpop.permute.xlu0 %2350
        %2352 = vrot.lane.b32.xlu0 %v2040, 71
        %v2353 = vpop.permute.xlu0 %2352
        %2354 = vrot.lane.b32.xlu0 %v2041, 71
        %v2355 = vpop.permute.xlu0 %2354
        %2356 = vrot.lane.b32.xlu0 %v2042, 71
        %v2357 = vpop.permute.xlu0 %2356
        %2358 = vrot.lane.b32.xlu0 %v2043, 71
        %v2359 = vpop.permute.xlu0 %2358
        %2360 = vrot.lane.b32.xlu0 %v2044, 71
        %v2361 = vpop.permute.xlu0 %2360
        %2362 = vrot.lane.b32.xlu0 %v2045, 71
        %v2363 = vpop.permute.xlu0 %2362
        %vm2364 = vcmask 580608
        %v2365 = vsel %vm2364, %v2341, %v2343
        %v2366 = vsel %vm2364, %v2343, %v2345
        %v2367 = vsel %vm2364, %v2345, %v2347
        %v2368 = vsel %vm2364, %v2347, %v2349
        %v2369 = vsel %vm2364, %v2349, %v2351
        %v2370 = vsel %vm2364, %v2353, %v2355
        %v2371 = vsel %vm2364, %v2355, %v2357
        %v2372 = vsel %vm2364, %v2357, %v2359
        %v2373 = vsel %vm2364, %v2359, %v2361
        %v2374 = vsel %vm2364, %v2361, %v2363
        %2387 = vrot.lane.b32.xlu0 %v2034, 70
        %v2388 = vpop.permute.xlu0 %2387
        %2389 = vrot.lane.b32.xlu0 %v2035, 70
        %v2390 = vpop.permute.xlu0 %2389
        %2391 = vrot.lane.b32.xlu0 %v2036, 70
        %v2392 = vpop.permute.xlu0 %2391
        %2393 = vrot.lane.b32.xlu0 %v2037, 70
        %v2394 = vpop.permute.xlu0 %2393
        %2395 = vrot.lane.b32.xlu0 %v2038, 70
        %v2396 = vpop.permute.xlu0 %2395
        %2397 = vrot.lane.b32.xlu0 %v2039, 70
        %v2398 = vpop.permute.xlu0 %2397
        %2399 = vrot.lane.b32.xlu0 %v2040, 70
        %v2400 = vpop.permute.xlu0 %2399
        %2401 = vrot.lane.b32.xlu0 %v2041, 70
        %v2402 = vpop.permute.xlu0 %2401
        %2403 = vrot.lane.b32.xlu0 %v2042, 70
        %v2404 = vpop.permute.xlu0 %2403
        %2405 = vrot.lane.b32.xlu0 %v2043, 70
        %v2406 = vpop.permute.xlu0 %2405
        %2407 = vrot.lane.b32.xlu0 %v2044, 70
        %v2408 = vpop.permute.xlu0 %2407
        %2409 = vrot.lane.b32.xlu0 %v2045, 70
        %v2410 = vpop.permute.xlu0 %2409
        %vm2411 = vcmask 572416
        %v2412 = vsel %vm2411, %v2388, %v2390
        %v2413 = vsel %vm2411, %v2390, %v2392
        %v2414 = vsel %vm2411, %v2392, %v2394
        %v2415 = vsel %vm2411, %v2394, %v2396
        %v2416 = vsel %vm2411, %v2396, %v2398
        %v2417 = vsel %vm2411, %v2400, %v2402
        %v2418 = vsel %vm2411, %v2402, %v2404
        %v2419 = vsel %vm2411, %v2404, %v2406
        %v2420 = vsel %vm2411, %v2406, %v2408
        %v2421 = vsel %vm2411, %v2408, %v2410
        %2435 = vset.pattern.permute.xlu0 0
        %2436 = vperm.xlu0 %2435, %v289
        %v2437 = vpop.permute.xlu0 %2436
        %2440 = vset.pattern.permute.xlu0 0
        %2441 = vperm.xlu0 %2440, %v290
        %v2442 = vpop.permute.xlu0 %2441
        %2445 = vset.pattern.permute.xlu0 0
        %2446 = vperm.xlu0 %2445, %v291
        %v2447 = vpop.permute.xlu0 %2446
        %2450 = vset.pattern.permute.xlu0 0
        %2451 = vperm.xlu0 %2450, %v292
        %v2452 = vpop.permute.xlu0 %2451
        %2455 = vset.pattern.permute.xlu0 0
        %2456 = vperm.xlu0 %2455, %v293
        %v2457 = vpop.permute.xlu0 %2456
        %2460 = vset.pattern.permute.xlu0 0
        %2461 = vperm.xlu0 %2460, %v294
        %v2462 = vpop.permute.xlu0 %2461
        %2465 = vset.pattern.permute.xlu0 0
        %2466 = vperm.xlu0 %2465, %v295
        %v2467 = vpop.permute.xlu0 %2466
        %2470 = vset.pattern.permute.xlu0 0
        %2471 = vperm.xlu0 %2470, %v296
        %v2472 = vpop.permute.xlu0 %2471
        %v2490 = vunpack.c.l.b16 %v273
        %v2491 = vunpack.c.h.b16 %v273
        %v2492 = vunpack.c.l.b16 %v274
        %v2493 = vunpack.c.l.b16 %v275
        %v2494 = vunpack.c.h.b16 %v275
        %v2495 = vunpack.c.l.b16 %v276
        %v2496 = vunpack.c.l.b16 %v277
        %v2497 = vunpack.c.h.b16 %v277
        %v2498 = vunpack.c.l.b16 %v278
        %v2499 = vunpack.c.l.b16 %v279
        %v2500 = vunpack.c.h.b16 %v279
        %v2501 = vunpack.c.l.b16 %v280
        %v2502 = vunpack.c.l.b16 %v281
        %v2503 = vunpack.c.h.b16 %v281
        %v2504 = vunpack.c.l.b16 %v282
        %v2505 = vunpack.c.l.b16 %v283
        %v2506 = vunpack.c.h.b16 %v283
        %v2507 = vunpack.c.l.b16 %v284
        %v2508 = vunpack.c.l.b16 %v285
        %v2509 = vunpack.c.h.b16 %v285
        %v2510 = vunpack.c.l.b16 %v286
        %v2511 = vunpack.c.l.b16 %v287
        %v2512 = vunpack.c.h.b16 %v287
        %v2513 = vunpack.c.l.b16 %v288
        %v2514 = vpack.c.b16 %v2493, %v2490
        %v2515 = vpack.c.b16 %v2494, %v2491
        %v2516 = vpack.c.b16 %v2495, %v2492
        %v2517 = vpack.c.b16 %v2499, %v2496
        %v2518 = vpack.c.b16 %v2500, %v2497
        %v2519 = vpack.c.b16 %v2501, %v2498
        %v2520 = vpack.c.b16 %v2505, %v2502
        %v2521 = vpack.c.b16 %v2506, %v2503
        %v2522 = vpack.c.b16 %v2507, %v2504
        %v2523 = vpack.c.b16 %v2511, %v2508
        %v2524 = vpack.c.b16 %v2512, %v2509
        %v2525 = vpack.c.b16 %v2513, %v2510
        %vm2534 = vcmask 261120
        %v2536 = vsel %vm2534, %v2516, 0
        %v2539 = vsel %vm2534, %v2519, 0
        %v2542 = vsel %vm2534, %v2522, 0
        %v2545 = vsel %vm2534, %v2525, 0
        %2547 = vmatprep.subr.bf16.mxu0 %v2183
        %2548 = vmatpush1.bf16.msra.mxu0 %v2182
        %2549 = vmatprep.subr.bf16.mxu0 %v2178
        %2550 = vmatpush1.bf16.msra.mxu0 %v2177
        %2551 = vmatprep.subr.bf16.mxu0 %v2136
        %2552 = vmatpush1.bf16.msra.mxu0 %v2135
        %2553 = vmatprep.subr.bf16.mxu0 %v2131
        %2554 = vmatpush1.bf16.msra.mxu0 %v2130
        %2555 = vmatprep.subr.bf16.mxu0 %v2089
        %2556 = vmatpush1.bf16.msra.mxu0 %v2088
        %2557 = vmatprep.subr.bf16.mxu0 %v2084
        %2558 = vmatpush1.bf16.msra.mxu0 %v2083
        %2559 = vmatprep.subr.bf16.mxu0 %v2041
        %2560 = vmatpush1.bf16.msra.mxu0 %v2040
        %2561 = vmatprep.subr.bf16.mxu0 %v2035
        %2562 = vmatpush1.bf16.msra.mxu0 %v2034
        %2563 = vmatprep.subr.bf16.mxu0 %v2371
        %2564 = vmatpush2.bf16.msra.mxu0 %v2370
        %2565 = vmatprep.subr.bf16.mxu0 %v2366
        %2566 = vmatpush2.bf16.msra.mxu0 %v2365
        %2567 = vmatprep.subr.bf16.mxu0 %v2324
        %2568 = vmatpush2.bf16.msra.mxu0 %v2323
        %2569 = vmatprep.subr.bf16.mxu0 %v2319
        %2570 = vmatpush2.bf16.msra.mxu0 %v2318
        %2571 = vmatprep.subr.bf16.mxu0 %v2277
        %2572 = vmatpush2.bf16.msra.mxu0 %v2276
        %2573 = vmatprep.subr.bf16.mxu0 %v2272
        %2574 = vmatpush2.bf16.msra.mxu0 %v2271
        %2575 = vmatprep.subr.bf16.mxu0 %v2230
        %2576 = vmatpush2.bf16.msra.mxu0 %v2229
        %2577 = vmatprep.subr.bf16.mxu0 %v2225
        %2578 = vmatpush2.bf16.msra.mxu0 %v2224
        %2579 = vmatprep.mubr.bf16.mxu0 %v2515
        %2580 = vmatmul.mubr.bf16.gmra.mxu0 %v2514
        %v2581 = vpop.f32.mrf.mxu0
        %v2582 = vadd.f32 %v2437, %v2581
        %v2583 = vpop.f32.mrf.mxu0
        %v2584 = vadd.f32 %v2437, %v2583
        %v2585 = vpop.f32.mrf.mxu0
        %v2586 = vadd.f32 %v2442, %v2585
        %v2587 = vpop.f32.mrf.mxu0
        %v2588 = vadd.f32 %v2442, %v2587
        %2589 = vmatprep.mubr.bf16.mxu0 %v2518
        %2590 = vmatmul.mubr.bf16.gmra.mxu0 %v2517
        %v2591 = vpop.f32.mrf.mxu0
        %v2592 = vadd.f32 %v2447, %v2591
        %v2593 = vpop.f32.mrf.mxu0
        %v2594 = vadd.f32 %v2447, %v2593
        %v2595 = vpop.f32.mrf.mxu0
        %v2596 = vadd.f32 %v2452, %v2595
        %v2597 = vpop.f32.mrf.mxu0
        %v2598 = vadd.f32 %v2452, %v2597
        %2599 = vmatprep.mubr.bf16.mxu0 %v2521
        %2600 = vmatmul.mubr.bf16.gmra.mxu0 %v2520
        %v2601 = vpop.f32.mrf.mxu0
        %v2602 = vadd.f32 %v2457, %v2601
        %v2603 = vpop.f32.mrf.mxu0
        %v2604 = vadd.f32 %v2457, %v2603
        %v2605 = vpop.f32.mrf.mxu0
        %v2606 = vadd.f32 %v2462, %v2605
        %v2607 = vpop.f32.mrf.mxu0
        %v2608 = vadd.f32 %v2462, %v2607
        %2609 = vmatprep.mubr.bf16.mxu0 %v2524
        %2610 = vmatmul.mubr.bf16.gmra.mxu0 %v2523
        %v2611 = vpop.f32.mrf.mxu0
        %v2612 = vadd.f32 %v2467, %v2611
        %v2613 = vpop.f32.mrf.mxu0
        %v2614 = vadd.f32 %v2467, %v2613
        %v2615 = vpop.f32.mrf.mxu0
        %v2616 = vadd.f32 %v2472, %v2615
        %v2617 = vpop.f32.mrf.mxu0
        %v2618 = vadd.f32 %v2472, %v2617
        %2619 = vdwg.mxu0
        %2620 = vmatprep.subr.bf16.mxu0 0
        %2621 = vmatpush1.bf16.msra.mxu0 0
        %2622 = vmatprep.subr.bf16.mxu0 0
        %2623 = vmatpush1.bf16.msra.mxu0 0
        %2624 = vmatprep.subr.bf16.mxu0 0
        %2625 = vmatpush1.bf16.msra.mxu0 0
        %2626 = vmatprep.subr.bf16.mxu0 0
        %2627 = vmatpush1.bf16.msra.mxu0 0
        %2628 = vmatprep.subr.bf16.mxu0 0
        %2629 = vmatpush1.bf16.msra.mxu0 0
        %2630 = vmatprep.subr.bf16.mxu0 0
        %2631 = vmatpush1.bf16.msra.mxu0 0
        %2632 = vmatprep.subr.bf16.mxu0 %v2418
        %2633 = vmatpush1.bf16.msra.mxu0 %v2417
        %2634 = vmatprep.subr.bf16.mxu0 %v2413
        %2635 = vmatpush1.bf16.msra.mxu0 %v2412
        %2636 = vmatprep.subr.bf16.mxu0 0
        %2637 = vmatpush2.bf16.msra.mxu0 0
        %2638 = vmatprep.subr.bf16.mxu0 0
        %2639 = vmatpush2.bf16.msra.mxu0 0
        %2640 = vmatprep.subr.bf16.mxu0 0
        %2641 = vmatpush2.bf16.msra.mxu0 0
        %2642 = vmatprep.subr.bf16.mxu0 0
        %2643 = vmatpush2.bf16.msra.mxu0 0
        %2644 = vmatprep.subr.bf16.mxu0 0
        %2645 = vmatpush2.bf16.msra.mxu0 0
        %2646 = vmatprep.subr.bf16.mxu0 0
        %2647 = vmatpush2.bf16.msra.mxu0 0
        %2648 = vmatprep.subr.bf16.mxu0 0
        %2649 = vmatpush2.bf16.msra.mxu0 0
        %2650 = vmatprep.subr.bf16.mxu0 0
        %2651 = vmatpush2.bf16.msra.mxu0 0
        %2652 = vmatprep.mubr.bf16.mxu0 0
        %2653 = vmatmul.mubr.bf16.gmra.mxu0 %v2536
        %v2654 = vpop.f32.mrf.mxu0
        %v2655 = vadd.f32 %v2582, %v2654
        %v2656 = vpop.f32.mrf.mxu0
        %v2657 = vadd.f32 %v2584, %v2656
        %v2658 = vpop.f32.mrf.mxu0
        %v2659 = vadd.f32 %v2586, %v2658
        %v2660 = vpop.f32.mrf.mxu0
        %v2661 = vadd.f32 %v2588, %v2660
        %2662 = vmatprep.mubr.bf16.mxu0 0
        %2663 = vmatmul.mubr.bf16.gmra.mxu0 %v2539
        %v2664 = vpop.f32.mrf.mxu0
        %v2665 = vadd.f32 %v2592, %v2664
        %v2666 = vpop.f32.mrf.mxu0
        %v2667 = vadd.f32 %v2594, %v2666
        %v2668 = vpop.f32.mrf.mxu0
        %v2669 = vadd.f32 %v2596, %v2668
        %v2670 = vpop.f32.mrf.mxu0
        %v2671 = vadd.f32 %v2598, %v2670
        %2672 = vmatprep.mubr.bf16.mxu0 0
        %2673 = vmatmul.mubr.bf16.gmra.mxu0 %v2542
        %v2674 = vpop.f32.mrf.mxu0
        %v2675 = vadd.f32 %v2602, %v2674
        %v2676 = vpop.f32.mrf.mxu0
        %v2677 = vadd.f32 %v2604, %v2676
        %v2678 = vpop.f32.mrf.mxu0
        %v2679 = vadd.f32 %v2606, %v2678
        %v2680 = vpop.f32.mrf.mxu0
        %v2681 = vadd.f32 %v2608, %v2680
        %2682 = vmatprep.mubr.bf16.mxu0 0
        %2683 = vmatmul.mubr.bf16.gmra.mxu0 %v2545
        %v2684 = vpop.f32.mrf.mxu0
        %v2685 = vadd.f32 %v2612, %v2684
        %v2686 = vpop.f32.mrf.mxu0
        %v2687 = vadd.f32 %v2614, %v2686
        %v2688 = vpop.f32.mrf.mxu0
        %v2689 = vadd.f32 %v2616, %v2688
        %v2690 = vpop.f32.mrf.mxu0
        %v2691 = vadd.f32 %v2618, %v2690
        %2692 = vdwg.mxu0
        %2693 = vmatprep.subr.bf16.mxu0 %v2185
        %2694 = vmatpush1.bf16.msra.mxu0 %v2184
        %2695 = vmatprep.subr.bf16.mxu0 %v2180
        %2696 = vmatpush1.bf16.msra.mxu0 %v2179
        %2697 = vmatprep.subr.bf16.mxu0 %v2138
        %2698 = vmatpush1.bf16.msra.mxu0 %v2137
        %2699 = vmatprep.subr.bf16.mxu0 %v2133
        %2700 = vmatpush1.bf16.msra.mxu0 %v2132
        %2701 = vmatprep.subr.bf16.mxu0 %v2091
        %2702 = vmatpush1.bf16.msra.mxu0 %v2090
        %2703 = vmatprep.subr.bf16.mxu0 %v2086
        %2704 = vmatpush1.bf16.msra.mxu0 %v2085
        %2705 = vmatprep.subr.bf16.mxu0 %v2043
        %2706 = vmatpush1.bf16.msra.mxu0 %v2042
        %2707 = vmatprep.subr.bf16.mxu0 %v2037
        %2708 = vmatpush1.bf16.msra.mxu0 %v2036
        %2709 = vmatprep.subr.bf16.mxu0 %v2373
        %2710 = vmatpush2.bf16.msra.mxu0 %v2372
        %2711 = vmatprep.subr.bf16.mxu0 %v2368
        %2712 = vmatpush2.bf16.msra.mxu0 %v2367
        %2713 = vmatprep.subr.bf16.mxu0 %v2326
        %2714 = vmatpush2.bf16.msra.mxu0 %v2325
        %2715 = vmatprep.subr.bf16.mxu0 %v2321
        %2716 = vmatpush2.bf16.msra.mxu0 %v2320
        %2717 = vmatprep.subr.bf16.mxu0 %v2279
        %2718 = vmatpush2.bf16.msra.mxu0 %v2278
        %2719 = vmatprep.subr.bf16.mxu0 %v2274
        %2720 = vmatpush2.bf16.msra.mxu0 %v2273
        %2721 = vmatprep.subr.bf16.mxu0 %v2232
        %2722 = vmatpush2.bf16.msra.mxu0 %v2231
        %2723 = vmatprep.subr.bf16.mxu0 %v2227
        %2724 = vmatpush2.bf16.msra.mxu0 %v2226
        %2725 = vmatprep.mubr.bf16.mxu0 %v2515
        %2726 = vmatmul.mubr.bf16.gmra.mxu0 %v2514
        %v2727 = vpop.f32.mrf.mxu0
        %v2728 = vadd.f32 %v2437, %v2727
        %v2729 = vpop.f32.mrf.mxu0
        %v2730 = vadd.f32 %v2437, %v2729
        %v2731 = vpop.f32.mrf.mxu0
        %v2732 = vadd.f32 %v2442, %v2731
        %v2733 = vpop.f32.mrf.mxu0
        %v2734 = vadd.f32 %v2442, %v2733
        %2735 = vmatprep.mubr.bf16.mxu0 %v2518
        %2736 = vmatmul.mubr.bf16.gmra.mxu0 %v2517
        %v2737 = vpop.f32.mrf.mxu0
        %v2738 = vadd.f32 %v2447, %v2737
        %v2739 = vpop.f32.mrf.mxu0
        %v2740 = vadd.f32 %v2447, %v2739
        %v2741 = vpop.f32.mrf.mxu0
        %v2742 = vadd.f32 %v2452, %v2741
        %v2743 = vpop.f32.mrf.mxu0
        %v2744 = vadd.f32 %v2452, %v2743
        %2745 = vmatprep.mubr.bf16.mxu0 %v2521
        %2746 = vmatmul.mubr.bf16.gmra.mxu0 %v2520
        %v2747 = vpop.f32.mrf.mxu0
        %v2748 = vadd.f32 %v2457, %v2747
        %v2749 = vpop.f32.mrf.mxu0
        %v2750 = vadd.f32 %v2457, %v2749
        %v2751 = vpop.f32.mrf.mxu0
        %v2752 = vadd.f32 %v2462, %v2751
        %v2753 = vpop.f32.mrf.mxu0
        %v2754 = vadd.f32 %v2462, %v2753
        %2755 = vmatprep.mubr.bf16.mxu0 %v2524
        %2756 = vmatmul.mubr.bf16.gmra.mxu0 %v2523
        %v2757 = vpop.f32.mrf.mxu0
        %v2758 = vadd.f32 %v2467, %v2757
        %v2759 = vpop.f32.mrf.mxu0
        %v2760 = vadd.f32 %v2467, %v2759
        %v2761 = vpop.f32.mrf.mxu0
        %v2762 = vadd.f32 %v2472, %v2761
        %v2763 = vpop.f32.mrf.mxu0
        %v2764 = vadd.f32 %v2472, %v2763
        %2765 = vdwg.mxu0
        %2766 = vmatprep.subr.bf16.mxu0 0
        %2767 = vmatpush1.bf16.msra.mxu0 0
        %2768 = vmatprep.subr.bf16.mxu0 0
        %2769 = vmatpush1.bf16.msra.mxu0 0
        %2770 = vmatprep.subr.bf16.mxu0 0
        %2771 = vmatpush1.bf16.msra.mxu0 0
        %2772 = vmatprep.subr.bf16.mxu0 0
        %2773 = vmatpush1.bf16.msra.mxu0 0
        %2774 = vmatprep.subr.bf16.mxu0 0
        %2775 = vmatpush1.bf16.msra.mxu0 0
        %2776 = vmatprep.subr.bf16.mxu0 0
        %2777 = vmatpush1.bf16.msra.mxu0 0
        %2778 = vmatprep.subr.bf16.mxu0 %v2420
        %2779 = vmatpush1.bf16.msra.mxu0 %v2419
        %2780 = vmatprep.subr.bf16.mxu0 %v2415
        %2781 = vmatpush1.bf16.msra.mxu0 %v2414
        %2782 = vmatprep.subr.bf16.mxu0 0
        %2783 = vmatpush2.bf16.msra.mxu0 0
        %2784 = vmatprep.subr.bf16.mxu0 0
        %2785 = vmatpush2.bf16.msra.mxu0 0
        %2786 = vmatprep.subr.bf16.mxu0 0
        %2787 = vmatpush2.bf16.msra.mxu0 0
        %2788 = vmatprep.subr.bf16.mxu0 0
        %2789 = vmatpush2.bf16.msra.mxu0 0
        %2790 = vmatprep.subr.bf16.mxu0 0
        %2791 = vmatpush2.bf16.msra.mxu0 0
        %2792 = vmatprep.subr.bf16.mxu0 0
        %2793 = vmatpush2.bf16.msra.mxu0 0
        %2794 = vmatprep.subr.bf16.mxu0 0
        %2795 = vmatpush2.bf16.msra.mxu0 0
        %2796 = vmatprep.subr.bf16.mxu0 0
        %2797 = vmatpush2.bf16.msra.mxu0 0
        %2798 = vmatprep.mubr.bf16.mxu0 0
        %2799 = vmatmul.mubr.bf16.gmra.mxu0 %v2536
        %v2800 = vpop.f32.mrf.mxu0
        %v2801 = vadd.f32 %v2728, %v2800
        %v2802 = vpop.f32.mrf.mxu0
        %v2803 = vadd.f32 %v2730, %v2802
        %v2804 = vpop.f32.mrf.mxu0
        %v2805 = vadd.f32 %v2732, %v2804
        %v2806 = vpop.f32.mrf.mxu0
        %v2807 = vadd.f32 %v2734, %v2806
        %2808 = vmatprep.mubr.bf16.mxu0 0
        %2809 = vmatmul.mubr.bf16.gmra.mxu0 %v2539
        %v2810 = vpop.f32.mrf.mxu0
        %v2811 = vadd.f32 %v2738, %v2810
        %v2812 = vpop.f32.mrf.mxu0
        %v2813 = vadd.f32 %v2740, %v2812
        %v2814 = vpop.f32.mrf.mxu0
        %v2815 = vadd.f32 %v2742, %v2814
        %v2816 = vpop.f32.mrf.mxu0
        %v2817 = vadd.f32 %v2744, %v2816
        %2818 = vmatprep.mubr.bf16.mxu0 0
        %2819 = vmatmul.mubr.bf16.gmra.mxu0 %v2542
        %v2820 = vpop.f32.mrf.mxu0
        %v2821 = vadd.f32 %v2748, %v2820
        %v2822 = vpop.f32.mrf.mxu0
        %v2823 = vadd.f32 %v2750, %v2822
        %v2824 = vpop.f32.mrf.mxu0
        %v2825 = vadd.f32 %v2752, %v2824
        %v2826 = vpop.f32.mrf.mxu0
        %v2827 = vadd.f32 %v2754, %v2826
        %2828 = vmatprep.mubr.bf16.mxu0 0
        %2829 = vmatmul.mubr.bf16.gmra.mxu0 %v2545
        %v2830 = vpop.f32.mrf.mxu0
        %v2831 = vadd.f32 %v2758, %v2830
        %v2832 = vpop.f32.mrf.mxu0
        %v2833 = vadd.f32 %v2760, %v2832
        %v2834 = vpop.f32.mrf.mxu0
        %v2835 = vadd.f32 %v2762, %v2834
        %v2836 = vpop.f32.mrf.mxu0
        %v2837 = vadd.f32 %v2764, %v2836
        %2838 = vdwg.mxu0
        %2839 = vmatprep.subr.bf16.mxu0 %v2175
        %2840 = vmatpush1.bf16.msra.mxu0 %v2186
        %2841 = vmatprep.subr.bf16.mxu0 %v2163
        %2842 = vmatpush1.bf16.msra.mxu0 %v2181
        %2843 = vmatprep.subr.bf16.mxu0 %v2128
        %2844 = vmatpush1.bf16.msra.mxu0 %v2139
        %2845 = vmatprep.subr.bf16.mxu0 %v2116
        %2846 = vmatpush1.bf16.msra.mxu0 %v2134
        %2847 = vmatprep.subr.bf16.mxu0 %v2081
        %2848 = vmatpush1.bf16.msra.mxu0 %v2092
        %2849 = vmatprep.subr.bf16.mxu0 %v2069
        %2850 = vmatpush1.bf16.msra.mxu0 %v2087
        %2851 = vmatprep.subr.bf16.mxu0 %v2045
        %2852 = vmatpush1.bf16.msra.mxu0 %v2044
        %2853 = vmatprep.subr.bf16.mxu0 %v2039
        %2854 = vmatpush1.bf16.msra.mxu0 %v2038
        %2855 = vmatprep.subr.bf16.mxu0 %v2363
        %2856 = vmatpush2.bf16.msra.mxu0 %v2374
        %2857 = vmatprep.subr.bf16.mxu0 %v2351
        %2858 = vmatpush2.bf16.msra.mxu0 %v2369
        %2859 = vmatprep.subr.bf16.mxu0 %v2316
        %2860 = vmatpush2.bf16.msra.mxu0 %v2327
        %2861 = vmatprep.subr.bf16.mxu0 %v2304
        %2862 = vmatpush2.bf16.msra.mxu0 %v2322
        %2863 = vmatprep.subr.bf16.mxu0 %v2269
        %2864 = vmatpush2.bf16.msra.mxu0 %v2280
        %2865 = vmatprep.subr.bf16.mxu0 %v2257
        %2866 = vmatpush2.bf16.msra.mxu0 %v2275
        %2867 = vmatprep.subr.bf16.mxu0 %v2222
        %2868 = vmatpush2.bf16.msra.mxu0 %v2233
        %2869 = vmatprep.subr.bf16.mxu0 %v2210
        %2870 = vmatpush2.bf16.msra.mxu0 %v2228
        %2871 = vmatprep.mubr.bf16.mxu0 %v2515
        %2872 = vmatmul.mubr.bf16.gmra.mxu0 %v2514
        %v2873 = vpop.f32.mrf.mxu0
        %v2874 = vadd.f32 %v2437, %v2873
        %v2875 = vpop.f32.mrf.mxu0
        %v2876 = vadd.f32 %v2437, %v2875
        %v2877 = vpop.f32.mrf.mxu0
        %v2878 = vadd.f32 %v2442, %v2877
        %v2879 = vpop.f32.mrf.mxu0
        %v2880 = vadd.f32 %v2442, %v2879
        %2881 = vmatprep.mubr.bf16.mxu0 %v2518
        %2882 = vmatmul.mubr.bf16.gmra.mxu0 %v2517
        %v2883 = vpop.f32.mrf.mxu0
        %v2884 = vadd.f32 %v2447, %v2883
        %v2885 = vpop.f32.mrf.mxu0
        %v2886 = vadd.f32 %v2447, %v2885
        %v2887 = vpop.f32.mrf.mxu0
        %v2888 = vadd.f32 %v2452, %v2887
        %v2889 = vpop.f32.mrf.mxu0
        %v2890 = vadd.f32 %v2452, %v2889
        %2891 = vmatprep.mubr.bf16.mxu0 %v2521
        %2892 = vmatmul.mubr.bf16.gmra.mxu0 %v2520
        %v2893 = vpop.f32.mrf.mxu0
        %v2894 = vadd.f32 %v2457, %v2893
        %v2895 = vpop.f32.mrf.mxu0
        %v2896 = vadd.f32 %v2457, %v2895
        %v2897 = vpop.f32.mrf.mxu0
        %v2898 = vadd.f32 %v2462, %v2897
        %v2899 = vpop.f32.mrf.mxu0
        %v2900 = vadd.f32 %v2462, %v2899
        %2901 = vmatprep.mubr.bf16.mxu0 %v2524
        %2902 = vmatmul.mubr.bf16.gmra.mxu0 %v2523
        %v2903 = vpop.f32.mrf.mxu0
        %v2904 = vadd.f32 %v2467, %v2903
        %v2905 = vpop.f32.mrf.mxu0
        %v2906 = vadd.f32 %v2467, %v2905
        %v2907 = vpop.f32.mrf.mxu0
        %v2908 = vadd.f32 %v2472, %v2907
        %v2909 = vpop.f32.mrf.mxu0
        %v2910 = vadd.f32 %v2472, %v2909
        %2911 = vdwg.mxu0
        %2912 = vmatprep.subr.bf16.mxu0 0
        %2913 = vmatpush1.bf16.msra.mxu0 0
        %2914 = vmatprep.subr.bf16.mxu0 0
        %2915 = vmatpush1.bf16.msra.mxu0 0
        %2916 = vmatprep.subr.bf16.mxu0 0
        %2917 = vmatpush1.bf16.msra.mxu0 0
        %2918 = vmatprep.subr.bf16.mxu0 0
        %2919 = vmatpush1.bf16.msra.mxu0 0
        %2920 = vmatprep.subr.bf16.mxu0 0
        %2921 = vmatpush1.bf16.msra.mxu0 0
        %2922 = vmatprep.subr.bf16.mxu0 0
        %2923 = vmatpush1.bf16.msra.mxu0 0
        %2924 = vmatprep.subr.bf16.mxu0 %v2410
        %2925 = vmatpush1.bf16.msra.mxu0 %v2421
        %2926 = vmatprep.subr.bf16.mxu0 %v2398
        %2927 = vmatpush1.bf16.msra.mxu0 %v2416
        %2928 = vmatprep.subr.bf16.mxu0 0
        %2929 = vmatpush2.bf16.msra.mxu0 0
        %2930 = vmatprep.subr.bf16.mxu0 0
        %2931 = vmatpush2.bf16.msra.mxu0 0
        %2932 = vmatprep.subr.bf16.mxu0 0
        %2933 = vmatpush2.bf16.msra.mxu0 0
        %2934 = vmatprep.subr.bf16.mxu0 0
        %2935 = vmatpush2.bf16.msra.mxu0 0
        %2936 = vmatprep.subr.bf16.mxu0 0
        %2937 = vmatpush2.bf16.msra.mxu0 0
        %2938 = vmatprep.subr.bf16.mxu0 0
        %2939 = vmatpush2.bf16.msra.mxu0 0
        %2940 = vmatprep.subr.bf16.mxu0 0
        %2941 = vmatpush2.bf16.msra.mxu0 0
        %2942 = vmatprep.subr.bf16.mxu0 0
        %2943 = vmatpush2.bf16.msra.mxu0 0
        %2944 = vmatprep.mubr.bf16.mxu0 0
        %2945 = vmatmul.mubr.bf16.gmra.mxu0 %v2536
        %v2946 = vpop.f32.mrf.mxu0
        %v2947 = vadd.f32 %v2874, %v2946
        %v2948 = vpop.f32.mrf.mxu0
        %v2949 = vadd.f32 %v2876, %v2948
        %v2950 = vpop.f32.mrf.mxu0
        %v2951 = vadd.f32 %v2878, %v2950
        %v2952 = vpop.f32.mrf.mxu0
        %v2953 = vadd.f32 %v2880, %v2952
        %2954 = vmatprep.mubr.bf16.mxu0 0
        %2955 = vmatmul.mubr.bf16.gmra.mxu0 %v2539
        %v2956 = vpop.f32.mrf.mxu0
        %v2957 = vadd.f32 %v2884, %v2956
        %v2958 = vpop.f32.mrf.mxu0
        %v2959 = vadd.f32 %v2886, %v2958
        %v2960 = vpop.f32.mrf.mxu0
        %v2961 = vadd.f32 %v2888, %v2960
        %v2962 = vpop.f32.mrf.mxu0
        %v2963 = vadd.f32 %v2890, %v2962
        %2964 = vmatprep.mubr.bf16.mxu0 0
        %2965 = vmatmul.mubr.bf16.gmra.mxu0 %v2542
        %v2966 = vpop.f32.mrf.mxu0
        %v2967 = vadd.f32 %v2894, %v2966
        %v2968 = vpop.f32.mrf.mxu0
        %v2969 = vadd.f32 %v2896, %v2968
        %v2970 = vpop.f32.mrf.mxu0
        %v2971 = vadd.f32 %v2898, %v2970
        %v2972 = vpop.f32.mrf.mxu0
        %v2973 = vadd.f32 %v2900, %v2972
        %2974 = vmatprep.mubr.bf16.mxu0 0
        %2975 = vmatmul.mubr.bf16.gmra.mxu0 %v2545
        %v2976 = vpop.f32.mrf.mxu0
        %v2977 = vadd.f32 %v2904, %v2976
        %v2978 = vpop.f32.mrf.mxu0
        %v2979 = vadd.f32 %v2906, %v2978
        %v2980 = vpop.f32.mrf.mxu0
        %v2981 = vadd.f32 %v2908, %v2980
        %v2982 = vpop.f32.mrf.mxu0
        %v2983 = vadd.f32 %v2910, %v2982
        %2984 = vdwg.mxu0
        %v2985 = vmax.f32 %v2655, 0.0
        %v2986 = vmax.f32 %v2657, 0.0
        %v2987 = vmax.f32 %v2801, 0.0
        %v2988 = vmax.f32 %v2803, 0.0
        %v2989 = vmax.f32 %v2947, 0.0
        %v2990 = vmax.f32 %v2949, 0.0
        %v2991 = vmax.f32 %v2659, 0.0
        %v2992 = vmax.f32 %v2661, 0.0
        %v2993 = vmax.f32 %v2805, 0.0
        %v2994 = vmax.f32 %v2807, 0.0
        %v2995 = vmax.f32 %v2951, 0.0
        %v2996 = vmax.f32 %v2953, 0.0
        %v2997 = vmax.f32 %v2665, 0.0
        %v2998 = vmax.f32 %v2667, 0.0
        %v2999 = vmax.f32 %v2811, 0.0
        %v3000 = vmax.f32 %v2813, 0.0
        %v3001 = vmax.f32 %v2957, 0.0
        %v3002 = vmax.f32 %v2959, 0.0
        %v3003 = vmax.f32 %v2669, 0.0
        %v3004 = vmax.f32 %v2671, 0.0
        %v3005 = vmax.f32 %v2815, 0.0
        %v3006 = vmax.f32 %v2817, 0.0
        %v3007 = vmax.f32 %v2961, 0.0
        %v3008 = vmax.f32 %v2963, 0.0
        %v3009 = vmax.f32 %v2675, 0.0
        %v3010 = vmax.f32 %v2677, 0.0
        %v3011 = vmax.f32 %v2821, 0.0
        %v3012 = vmax.f32 %v2823, 0.0
        %v3013 = vmax.f32 %v2967, 0.0
        %v3014 = vmax.f32 %v2969, 0.0
        %v3015 = vmax.f32 %v2679, 0.0
        %v3016 = vmax.f32 %v2681, 0.0
        %v3017 = vmax.f32 %v2825, 0.0
        %v3018 = vmax.f32 %v2827, 0.0
        %v3019 = vmax.f32 %v2971, 0.0
        %v3020 = vmax.f32 %v2973, 0.0
        %v3021 = vmax.f32 %v2685, 0.0
        %v3022 = vmax.f32 %v2687, 0.0
        %v3023 = vmax.f32 %v2831, 0.0
        %v3024 = vmax.f32 %v2833, 0.0
        %v3025 = vmax.f32 %v2977, 0.0
        %v3026 = vmax.f32 %v2979, 0.0
        %v3027 = vmax.f32 %v2689, 0.0
        %v3028 = vmax.f32 %v2691, 0.0
        %v3029 = vmax.f32 %v2835, 0.0
        %v3030 = vmax.f32 %v2837, 0.0
        %v3031 = vmax.f32 %v2981, 0.0
        %v3032 = vmax.f32 %v2983, 0.0
        %v3033 = vpack.c.bf16 %v2991, %v2985
        %v3034 = vpack.c.bf16 %v2992, %v2986
        %v3035 = vpack.c.bf16 %v2993, %v2987
        %v3036 = vpack.c.bf16 %v2994, %v2988
        %v3037 = vpack.c.bf16 %v2995, %v2989
        %v3038 = vpack.c.bf16 %v2996, %v2990
        %v3039 = vpack.c.bf16 %v3003, %v2997
        %v3040 = vpack.c.bf16 %v3004, %v2998
        %v3041 = vpack.c.bf16 %v3005, %v2999
        %v3042 = vpack.c.bf16 %v3006, %v3000
        %v3043 = vpack.c.bf16 %v3007, %v3001
        %v3044 = vpack.c.bf16 %v3008, %v3002
        %v3045 = vpack.c.bf16 %v3015, %v3009
        %v3046 = vpack.c.bf16 %v3016, %v3010
        %v3047 = vpack.c.bf16 %v3017, %v3011
        %v3048 = vpack.c.bf16 %v3018, %v3012
        %v3049 = vpack.c.bf16 %v3019, %v3013
        %v3050 = vpack.c.bf16 %v3020, %v3014
        %v3051 = vpack.c.bf16 %v3027, %v3021
        %v3052 = vpack.c.bf16 %v3028, %v3022
        %v3053 = vpack.c.bf16 %v3029, %v3023
        %v3054 = vpack.c.bf16 %v3030, %v3024
        %v3055 = vpack.c.bf16 %v3031, %v3025
        %v3056 = vpack.c.bf16 %v3032, %v3026
        %3081 = vrot.lane.b32.xlu0 %v3033, 100
        %v3082 = vpop.permute.xlu0 %3081
        %3083 = vrot.lane.b32.xlu0 %v3034, 100
        %v3084 = vpop.permute.xlu0 %3083
        %3085 = vrot.lane.b32.xlu0 %v3035, 100
        %v3086 = vpop.permute.xlu0 %3085
        %3087 = vrot.lane.b32.xlu0 %v3036, 100
        %v3088 = vpop.permute.xlu0 %3087
        %3089 = vrot.lane.b32.xlu0 %v3037, 100
        %v3090 = vpop.permute.xlu0 %3089
        %3091 = vrot.lane.b32.xlu0 %v3038, 100
        %v3092 = vpop.permute.xlu0 %3091
        %3093 = vrot.lane.b32.xlu0 %v3039, 100
        %v3094 = vpop.permute.xlu0 %3093
        %3095 = vrot.lane.b32.xlu0 %v3040, 100
        %v3096 = vpop.permute.xlu0 %3095
        %3097 = vrot.lane.b32.xlu0 %v3041, 100
        %v3098 = vpop.permute.xlu0 %3097
        %3099 = vrot.lane.b32.xlu0 %v3042, 100
        %v3100 = vpop.permute.xlu0 %3099
        %3101 = vrot.lane.b32.xlu0 %v3043, 100
        %v3102 = vpop.permute.xlu0 %3101
        %3103 = vrot.lane.b32.xlu0 %v3044, 100
        %v3104 = vpop.permute.xlu0 %3103
        %3105 = vrot.lane.b32.xlu0 %v3045, 100
        %v3106 = vpop.permute.xlu0 %3105
        %3107 = vrot.lane.b32.xlu0 %v3046, 100
        %v3108 = vpop.permute.xlu0 %3107
        %3109 = vrot.lane.b32.xlu0 %v3047, 100
        %v3110 = vpop.permute.xlu0 %3109
        %3111 = vrot.lane.b32.xlu0 %v3048, 100
        %v3112 = vpop.permute.xlu0 %3111
        %3113 = vrot.lane.b32.xlu0 %v3049, 100
        %v3114 = vpop.permute.xlu0 %3113
        %3115 = vrot.lane.b32.xlu0 %v3050, 100
        %v3116 = vpop.permute.xlu0 %3115
        %3117 = vrot.lane.b32.xlu0 %v3051, 100
        %v3118 = vpop.permute.xlu0 %3117
        %3119 = vrot.lane.b32.xlu0 %v3052, 100
        %v3120 = vpop.permute.xlu0 %3119
        %3121 = vrot.lane.b32.xlu0 %v3053, 100
        %v3122 = vpop.permute.xlu0 %3121
        %3123 = vrot.lane.b32.xlu0 %v3054, 100
        %v3124 = vpop.permute.xlu0 %3123
        %3125 = vrot.lane.b32.xlu0 %v3055, 100
        %v3126 = vpop.permute.xlu0 %3125
        %3127 = vrot.lane.b32.xlu0 %v3056, 100
        %v3128 = vpop.permute.xlu0 %3127
        %v3129 = vsel %vm2176, %v3082, %v3084
        %v3130 = vsel %vm2176, %v3084, %v3086
        %v3131 = vsel %vm2176, %v3086, %v3088
        %v3132 = vsel %vm2176, %v3088, %v3090
        %v3133 = vsel %vm2176, %v3090, %v3092
        %v3134 = vsel %vm2176, %v3094, %v3096
        %v3135 = vsel %vm2176, %v3096, %v3098
        %v3136 = vsel %vm2176, %v3098, %v3100
        %v3137 = vsel %vm2176, %v3100, %v3102
        %v3138 = vsel %vm2176, %v3102, %v3104
        %v3139 = vsel %vm2176, %v3106, %v3108
        %v3140 = vsel %vm2176, %v3108, %v3110
        %v3141 = vsel %vm2176, %v3110, %v3112
        %v3142 = vsel %vm2176, %v3112, %v3114
        %v3143 = vsel %vm2176, %v3114, %v3116
        %v3144 = vsel %vm2176, %v3118, %v3120
        %v3145 = vsel %vm2176, %v3120, %v3122
        %v3146 = vsel %vm2176, %v3122, %v3124
        %v3147 = vsel %vm2176, %v3124, %v3126
        %v3148 = vsel %vm2176, %v3126, %v3128
        %v3169 = vmax.bf16 %v3033, %v3129
        %v3170 = vmax.bf16 %v3034, %v3130
        %v3171 = vmax.bf16 %v3035, %v3131
        %v3172 = vmax.bf16 %v3036, %v3132
        %v3173 = vmax.bf16 %v3037, %v3133
        %v3174 = vmax.bf16 %v3039, %v3134
        %v3175 = vmax.bf16 %v3040, %v3135
        %v3176 = vmax.bf16 %v3041, %v3136
        %v3177 = vmax.bf16 %v3042, %v3137
        %v3178 = vmax.bf16 %v3043, %v3138
        %v3179 = vmax.bf16 %v3045, %v3139
        %v3180 = vmax.bf16 %v3046, %v3140
        %v3181 = vmax.bf16 %v3047, %v3141
        %v3182 = vmax.bf16 %v3048, %v3142
        %v3183 = vmax.bf16 %v3049, %v3143
        %v3184 = vmax.bf16 %v3051, %v3144
        %v3185 = vmax.bf16 %v3052, %v3145
        %v3186 = vmax.bf16 %v3053, %v3146
        %v3187 = vmax.bf16 %v3054, %v3147
        %v3188 = vmax.bf16 %v3055, %v3148
        %3209 = vrot.lane.b32.xlu0 %v3169, 127
        %v3210 = vpop.permute.xlu0 %3209
        %3211 = vrot.lane.b32.xlu0 %v3170, 127
        %v3212 = vpop.permute.xlu0 %3211
        %3213 = vrot.lane.b32.xlu0 %v3171, 127
        %v3214 = vpop.permute.xlu0 %3213
        %3215 = vrot.lane.b32.xlu0 %v3172, 127
        %v3216 = vpop.permute.xlu0 %3215
        %3217 = vrot.lane.b32.xlu0 %v3173, 127
        %v3218 = vpop.permute.xlu0 %3217
        %3219 = vrot.lane.b32.xlu0 %v3174, 127
        %v3220 = vpop.permute.xlu0 %3219
        %3221 = vrot.lane.b32.xlu0 %v3175, 127
        %v3222 = vpop.permute.xlu0 %3221
        %3223 = vrot.lane.b32.xlu0 %v3176, 127
        %v3224 = vpop.permute.xlu0 %3223
        %3225 = vrot.lane.b32.xlu0 %v3177, 127
        %v3226 = vpop.permute.xlu0 %3225
        %3227 = vrot.lane.b32.xlu0 %v3178, 127
        %v3228 = vpop.permute.xlu0 %3227
        %3229 = vrot.lane.b32.xlu0 %v3179, 127
        %v3230 = vpop.permute.xlu0 %3229
        %3231 = vrot.lane.b32.xlu0 %v3180, 127
        %v3232 = vpop.permute.xlu0 %3231
        %3233 = vrot.lane.b32.xlu0 %v3181, 127
        %v3234 = vpop.permute.xlu0 %3233
        %3235 = vrot.lane.b32.xlu0 %v3182, 127
        %v3236 = vpop.permute.xlu0 %3235
        %3237 = vrot.lane.b32.xlu0 %v3183, 127
        %v3238 = vpop.permute.xlu0 %3237
        %3239 = vrot.lane.b32.xlu0 %v3184, 127
        %v3240 = vpop.permute.xlu0 %3239
        %3241 = vrot.lane.b32.xlu0 %v3185, 127
        %v3242 = vpop.permute.xlu0 %3241
        %3243 = vrot.lane.b32.xlu0 %v3186, 127
        %v3244 = vpop.permute.xlu0 %3243
        %3245 = vrot.lane.b32.xlu0 %v3187, 127
        %v3246 = vpop.permute.xlu0 %3245
        %3247 = vrot.lane.b32.xlu0 %v3188, 127
        %v3248 = vpop.permute.xlu0 %3247
        %v3249 = vsel %vm2082, %v3210, %v3212
        %v3250 = vsel %vm2082, %v3212, %v3214
        %v3251 = vsel %vm2082, %v3214, %v3216
        %v3252 = vsel %vm2082, %v3216, %v3218
        %v3253 = vsel %vm2082, %v3220, %v3222
        %v3254 = vsel %vm2082, %v3222, %v3224
        %v3255 = vsel %vm2082, %v3224, %v3226
        %v3256 = vsel %vm2082, %v3226, %v3228
        %v3257 = vsel %vm2082, %v3230, %v3232
        %v3258 = vsel %vm2082, %v3232, %v3234
        %v3259 = vsel %vm2082, %v3234, %v3236
        %v3260 = vsel %vm2082, %v3236, %v3238
        %v3261 = vsel %vm2082, %v3240, %v3242
        %v3262 = vsel %vm2082, %v3242, %v3244
        %v3263 = vsel %vm2082, %v3244, %v3246
        %v3264 = vsel %vm2082, %v3246, %v3248
        %v3285 = vmax.bf16 %v3169, %v3249
        %v3286 = vmax.bf16 %v3170, %v3250
        %v3287 = vmax.bf16 %v3171, %v3251
        %v3288 = vmax.bf16 %v3172, %v3252
        %v3289 = vmax.bf16 %v3173, %v3218
        %v3290 = vmax.bf16 %v3174, %v3253
        %v3291 = vmax.bf16 %v3175, %v3254
        %v3292 = vmax.bf16 %v3176, %v3255
        %v3293 = vmax.bf16 %v3177, %v3256
        %v3294 = vmax.bf16 %v3178, %v3228
        %v3295 = vmax.bf16 %v3179, %v3257
        %v3296 = vmax.bf16 %v3180, %v3258
        %v3297 = vmax.bf16 %v3181, %v3259
        %v3298 = vmax.bf16 %v3182, %v3260
        %v3299 = vmax.bf16 %v3183, %v3238
        %v3300 = vmax.bf16 %v3184, %v3261
        %v3301 = vmax.bf16 %v3185, %v3262
        %v3302 = vmax.bf16 %v3186, %v3263
        %v3303 = vmax.bf16 %v3187, %v3264
        %v3304 = vmax.bf16 %v3188, %v3248
        %v3385 = vunpack.c.l.b16 %v297
        %v3386 = vunpack.c.h.b16 %v297
        %v3387 = vunpack.c.l.b16 %v298
        %v3388 = vunpack.c.h.b16 %v298
        %v3389 = vunpack.c.l.b16 %v299
        %v3390 = vunpack.c.h.b16 %v299
        %v3391 = vunpack.c.l.b16 %v300
        %v3392 = vunpack.c.h.b16 %v300
        %v3393 = vunpack.c.l.b16 %v301
        %v3394 = vunpack.c.h.b16 %v301
        %v3395 = vunpack.c.l.b16 %v302
        %v3396 = vunpack.c.h.b16 %v302
        %v3397 = vunpack.c.l.b16 %v303
        %v3398 = vunpack.c.h.b16 %v303
        %v3399 = vunpack.c.l.b16 %v304
        %v3400 = vunpack.c.h.b16 %v304
        %v3401 = vunpack.c.l.b16 %v305
        %v3402 = vunpack.c.h.b16 %v305
        %v3403 = vunpack.c.l.b16 %v306
        %v3404 = vunpack.c.h.b16 %v306
        %v3405 = vunpack.c.l.b16 %v307
        %v3406 = vunpack.c.h.b16 %v307
        %v3407 = vunpack.c.l.b16 %v308
        %v3408 = vunpack.c.h.b16 %v308
        %v3409 = vunpack.c.l.b16 %v309
        %v3410 = vunpack.c.h.b16 %v309
        %v3411 = vunpack.c.l.b16 %v310
        %v3412 = vunpack.c.h.b16 %v310
        %v3413 = vunpack.c.l.b16 %v311
        %v3414 = vunpack.c.h.b16 %v311
        %v3415 = vunpack.c.l.b16 %v312
        %v3416 = vunpack.c.h.b16 %v312
        %v3417 = vunpack.c.l.b16 %v313
        %v3418 = vunpack.c.h.b16 %v313
        %v3419 = vunpack.c.l.b16 %v314
        %v3420 = vunpack.c.h.b16 %v314
        %v3421 = vunpack.c.l.b16 %v315
        %v3422 = vunpack.c.h.b16 %v315
        %v3423 = vunpack.c.l.b16 %v316
        %v3424 = vunpack.c.h.b16 %v316
        %v3425 = vunpack.c.l.b16 %v317
        %v3426 = vunpack.c.h.b16 %v317
        %v3427 = vunpack.c.l.b16 %v318
        %v3428 = vunpack.c.h.b16 %v318
        %v3429 = vunpack.c.l.b16 %v319
        %v3430 = vunpack.c.h.b16 %v319
        %v3431 = vunpack.c.l.b16 %v320
        %v3432 = vunpack.c.h.b16 %v320
        %v3433 = vunpack.c.l.b16 %v321
        %v3434 = vunpack.c.h.b16 %v321
        %v3435 = vunpack.c.l.b16 %v322
        %v3436 = vunpack.c.h.b16 %v322
        %v3437 = vunpack.c.l.b16 %v323
        %v3438 = vunpack.c.h.b16 %v323
        %v3439 = vunpack.c.l.b16 %v324
        %v3440 = vunpack.c.h.b16 %v324
        %v3441 = vunpack.c.l.b16 %v325
        %v3442 = vunpack.c.h.b16 %v325
        %v3443 = vunpack.c.l.b16 %v326
        %v3444 = vunpack.c.h.b16 %v326
        %v3445 = vunpack.c.l.b16 %v327
        %v3446 = vunpack.c.h.b16 %v327
        %v3447 = vunpack.c.l.b16 %v328
        %v3448 = vunpack.c.h.b16 %v328
        %v3449 = vunpack.c.l.b16 %v329
        %v3450 = vunpack.c.h.b16 %v329
        %v3451 = vunpack.c.l.b16 %v330
        %v3452 = vunpack.c.h.b16 %v330
        %v3453 = vunpack.c.l.b16 %v331
        %v3454 = vunpack.c.h.b16 %v331
        %v3455 = vunpack.c.l.b16 %v332
        %v3456 = vunpack.c.h.b16 %v332
        %v3457 = vunpack.c.l.b16 %v333
        %v3458 = vunpack.c.h.b16 %v333
        %v3459 = vunpack.c.l.b16 %v334
        %v3460 = vunpack.c.h.b16 %v334
        %v3461 = vunpack.c.l.b16 %v335
        %v3462 = vunpack.c.h.b16 %v335
        %v3463 = vunpack.c.l.b16 %v336
        %v3464 = vunpack.c.h.b16 %v336
        %v3465 = vunpack.c.l.b16 %v337
        %v3466 = vunpack.c.h.b16 %v337
        %v3467 = vunpack.c.l.b16 %v338
        %v3468 = vunpack.c.h.b16 %v338
        %v3469 = vunpack.c.l.b16 %v339
        %v3470 = vunpack.c.h.b16 %v339
        %v3471 = vunpack.c.l.b16 %v340
        %v3472 = vunpack.c.h.b16 %v340
        %v3473 = vunpack.c.l.b16 %v341
        %v3474 = vunpack.c.h.b16 %v341
        %v3475 = vunpack.c.l.b16 %v342
        %v3476 = vunpack.c.h.b16 %v342
        %v3477 = vunpack.c.l.b16 %v343
        %v3478 = vunpack.c.h.b16 %v343
        %v3479 = vunpack.c.l.b16 %v344
        %v3480 = vunpack.c.h.b16 %v344
        %v3481 = vunpack.c.l.b16 %v345
        %v3482 = vunpack.c.h.b16 %v345
        %v3483 = vunpack.c.l.b16 %v346
        %v3484 = vunpack.c.h.b16 %v346
        %v3485 = vunpack.c.l.b16 %v347
        %v3486 = vunpack.c.h.b16 %v347
        %v3487 = vunpack.c.l.b16 %v348
        %v3488 = vunpack.c.h.b16 %v348
        %v3489 = vunpack.c.l.b16 %v349
        %v3490 = vunpack.c.h.b16 %v349
        %v3491 = vunpack.c.l.b16 %v350
        %v3492 = vunpack.c.h.b16 %v350
        %v3493 = vunpack.c.l.b16 %v351
        %v3494 = vunpack.c.h.b16 %v351
        %v3495 = vunpack.c.l.b16 %v352
        %v3496 = vunpack.c.h.b16 %v352
        %v3497 = vunpack.c.l.b16 %v353
        %v3498 = vunpack.c.h.b16 %v353
        %v3499 = vunpack.c.l.b16 %v354
        %v3500 = vunpack.c.h.b16 %v354
        %v3501 = vunpack.c.l.b16 %v355
        %v3502 = vunpack.c.h.b16 %v355
        %v3503 = vunpack.c.l.b16 %v356
        %v3504 = vunpack.c.h.b16 %v356
        %v3505 = vunpack.c.l.b16 %v357
        %v3506 = vunpack.c.h.b16 %v357
        %v3507 = vunpack.c.l.b16 %v358
        %v3508 = vunpack.c.h.b16 %v358
        %v3509 = vunpack.c.l.b16 %v359
        %v3510 = vunpack.c.h.b16 %v359
        %v3511 = vunpack.c.l.b16 %v360
        %v3512 = vunpack.c.h.b16 %v360
        %v3513 = vunpack.c.l.b16 %v361
        %v3514 = vunpack.c.h.b16 %v361
        %v3515 = vunpack.c.l.b16 %v362
        %v3516 = vunpack.c.h.b16 %v362
        %v3517 = vunpack.c.l.b16 %v363
        %v3518 = vunpack.c.h.b16 %v363
        %v3519 = vunpack.c.l.b16 %v364
        %v3520 = vunpack.c.h.b16 %v364
        %v3521 = vunpack.c.l.b16 %v365
        %v3522 = vunpack.c.h.b16 %v365
        %v3523 = vunpack.c.l.b16 %v366
        %v3524 = vunpack.c.h.b16 %v366
        %v3525 = vunpack.c.l.b16 %v367
        %v3526 = vunpack.c.h.b16 %v367
        %v3527 = vunpack.c.l.b16 %v368
        %v3528 = vunpack.c.h.b16 %v368
        %v3529 = vunpack.c.l.b16 %v369
        %v3530 = vunpack.c.h.b16 %v369
        %v3531 = vunpack.c.l.b16 %v370
        %v3532 = vunpack.c.h.b16 %v370
        %v3533 = vunpack.c.l.b16 %v371
        %v3534 = vunpack.c.h.b16 %v371
        %v3535 = vunpack.c.l.b16 %v372
        %v3536 = vunpack.c.h.b16 %v372
        %v3537 = vunpack.c.l.b16 %v373
        %v3538 = vunpack.c.h.b16 %v373
        %v3539 = vunpack.c.l.b16 %v374
        %v3540 = vunpack.c.h.b16 %v374
        %v3541 = vunpack.c.l.b16 %v375
        %v3542 = vunpack.c.h.b16 %v375
        %v3543 = vunpack.c.l.b16 %v376
        %v3544 = vunpack.c.h.b16 %v376
        %v3545 = vpack.c.b16 %v3387, %v3385
        %v3546 = vpack.c.b16 %v3388, %v3386
        %v3547 = vpack.c.b16 %v3391, %v3389
        %v3548 = vpack.c.b16 %v3392, %v3390
        %v3549 = vpack.c.b16 %v3395, %v3393
        %v3550 = vpack.c.b16 %v3396, %v3394
        %v3551 = vpack.c.b16 %v3399, %v3397
        %v3552 = vpack.c.b16 %v3400, %v3398
        %v3553 = vpack.c.b16 %v3403, %v3401
        %v3554 = vpack.c.b16 %v3404, %v3402
        %v3555 = vpack.c.b16 %v3407, %v3405
        %v3556 = vpack.c.b16 %v3408, %v3406
        %v3557 = vpack.c.b16 %v3411, %v3409
        %v3558 = vpack.c.b16 %v3412, %v3410
        %v3559 = vpack.c.b16 %v3415, %v3413
        %v3560 = vpack.c.b16 %v3416, %v3414
        %v3561 = vpack.c.b16 %v3419, %v3417
        %v3562 = vpack.c.b16 %v3420, %v3418
        %v3563 = vpack.c.b16 %v3423, %v3421
        %v3564 = vpack.c.b16 %v3424, %v3422
        %v3565 = vpack.c.b16 %v3427, %v3425
        %v3566 = vpack.c.b16 %v3428, %v3426
        %v3567 = vpack.c.b16 %v3431, %v3429
        %v3568 = vpack.c.b16 %v3432, %v3430
        %v3569 = vpack.c.b16 %v3435, %v3433
        %v3570 = vpack.c.b16 %v3436, %v3434
        %v3571 = vpack.c.b16 %v3439, %v3437
        %v3572 = vpack.c.b16 %v3440, %v3438
        %v3573 = vpack.c.b16 %v3443, %v3441
        %v3574 = vpack.c.b16 %v3444, %v3442
        %v3575 = vpack.c.b16 %v3447, %v3445
        %v3576 = vpack.c.b16 %v3448, %v3446
        %v3577 = vpack.c.b16 %v3451, %v3449
        %v3578 = vpack.c.b16 %v3452, %v3450
        %v3579 = vpack.c.b16 %v3455, %v3453
        %v3580 = vpack.c.b16 %v3456, %v3454
        %v3581 = vpack.c.b16 %v3459, %v3457
        %v3582 = vpack.c.b16 %v3460, %v3458
        %v3583 = vpack.c.b16 %v3463, %v3461
        %v3584 = vpack.c.b16 %v3464, %v3462
        %v3585 = vpack.c.b16 %v3467, %v3465
        %v3586 = vpack.c.b16 %v3468, %v3466
        %v3587 = vpack.c.b16 %v3471, %v3469
        %v3588 = vpack.c.b16 %v3472, %v3470
        %v3589 = vpack.c.b16 %v3475, %v3473
        %v3590 = vpack.c.b16 %v3476, %v3474
        %v3591 = vpack.c.b16 %v3479, %v3477
        %v3592 = vpack.c.b16 %v3480, %v3478
        %v3593 = vpack.c.b16 %v3483, %v3481
        %v3594 = vpack.c.b16 %v3484, %v3482
        %v3595 = vpack.c.b16 %v3487, %v3485
        %v3596 = vpack.c.b16 %v3488, %v3486
        %v3597 = vpack.c.b16 %v3491, %v3489
        %v3598 = vpack.c.b16 %v3492, %v3490
        %v3599 = vpack.c.b16 %v3495, %v3493
        %v3600 = vpack.c.b16 %v3496, %v3494
        %v3601 = vpack.c.b16 %v3499, %v3497
        %v3602 = vpack.c.b16 %v3500, %v3498
        %v3603 = vpack.c.b16 %v3503, %v3501
        %v3604 = vpack.c.b16 %v3504, %v3502
        %v3605 = vpack.c.b16 %v3507, %v3505
        %v3606 = vpack.c.b16 %v3508, %v3506
        %v3607 = vpack.c.b16 %v3511, %v3509
        %v3608 = vpack.c.b16 %v3512, %v3510
        %v3609 = vpack.c.b16 %v3515, %v3513
        %v3610 = vpack.c.b16 %v3516, %v3514
        %v3611 = vpack.c.b16 %v3519, %v3517
        %v3612 = vpack.c.b16 %v3520, %v3518
        %v3613 = vpack.c.b16 %v3523, %v3521
        %v3614 = vpack.c.b16 %v3524, %v3522
        %v3615 = vpack.c.b16 %v3527, %v3525
        %v3616 = vpack.c.b16 %v3528, %v3526
        %v3617 = vpack.c.b16 %v3531, %v3529
        %v3618 = vpack.c.b16 %v3532, %v3530
        %v3619 = vpack.c.b16 %v3535, %v3533
        %v3620 = vpack.c.b16 %v3536, %v3534
        %v3621 = vpack.c.b16 %v3539, %v3537
        %v3622 = vpack.c.b16 %v3540, %v3538
        %v3623 = vpack.c.b16 %v3543, %v3541
        %v3624 = vpack.c.b16 %v3544, %v3542
        %v3704 = vsel %vm565, %v3289, 0
        %v3707 = vsel %vm565, %v3294, 0
        %v3710 = vsel %vm565, %v3299, 0
        %v3713 = vsel %vm565, %v3304, 0
        %vm3715 = vcmask 1046528
        %vm3716 = vcmask 1047552
        %v3717 = vsel %vm3715, 4294967295, 65535
        %v3718 = vsel %vm3716, %v3717, 0
        %v3720 = vand.u32 %v3623, %v3718
        %v3723 = vand.u32 %v3624, %v3718
        %3725 = vmatprep.subr.bf16.mxu0 %v3560
        %3726 = vmatpush1.bf16.msra.mxu0 %v3559
        %3727 = vmatprep.subr.bf16.mxu0 %v3558
        %3728 = vmatpush1.bf16.msra.mxu0 %v3557
        %3729 = vmatprep.subr.bf16.mxu0 %v3556
        %3730 = vmatpush1.bf16.msra.mxu0 %v3555
        %3731 = vmatprep.subr.bf16.mxu0 %v3554
        %3732 = vmatpush1.bf16.msra.mxu0 %v3553
        %3733 = vmatprep.subr.bf16.mxu0 %v3552
        %3734 = vmatpush1.bf16.msra.mxu0 %v3551
        %3735 = vmatprep.subr.bf16.mxu0 %v3550
        %3736 = vmatpush1.bf16.msra.mxu0 %v3549
        %3737 = vmatprep.subr.bf16.mxu0 %v3548
        %3738 = vmatpush1.bf16.msra.mxu0 %v3547
        %3739 = vmatprep.subr.bf16.mxu0 %v3546
        %3740 = vmatpush1.bf16.msra.mxu0 %v3545
        %3741 = vmatprep.subr.bf16.mxu0 %v3576
        %3742 = vmatpush2.bf16.msra.mxu0 %v3575
        %3743 = vmatprep.subr.bf16.mxu0 %v3574
        %3744 = vmatpush2.bf16.msra.mxu0 %v3573
        %3745 = vmatprep.subr.bf16.mxu0 %v3572
        %3746 = vmatpush2.bf16.msra.mxu0 %v3571
        %3747 = vmatprep.subr.bf16.mxu0 %v3570
        %3748 = vmatpush2.bf16.msra.mxu0 %v3569
        %3749 = vmatprep.subr.bf16.mxu0 %v3568
        %3750 = vmatpush2.bf16.msra.mxu0 %v3567
        %3751 = vmatprep.subr.bf16.mxu0 %v3566
        %3752 = vmatpush2.bf16.msra.mxu0 %v3565
        %3753 = vmatprep.subr.bf16.mxu0 %v3564
        %3754 = vmatpush2.bf16.msra.mxu0 %v3563
        %3755 = vmatprep.subr.bf16.mxu0 %v3562
        %3756 = vmatpush2.bf16.msra.mxu0 %v3561
        %3757 = vmatprep.mubr.bf16.mxu0 %v3286
        %3758 = vmatmul.mubr.bf16.gmra.mxu0 %v3285
        %v3759 = vpop.f32.mrf.mxu0
        %v3760 = vadd.f32 0.0, %v3759
        %v3761 = vpop.f32.mrf.mxu0
        %v3762 = vadd.f32 0.0, %v3761
        %v3763 = vpop.f32.mrf.mxu0
        %v3764 = vadd.f32 0.0, %v3763
        %v3765 = vpop.f32.mrf.mxu0
        %v3766 = vadd.f32 0.0, %v3765
        %3767 = vmatprep.mubr.bf16.mxu0 %v3291
        %3768 = vmatmul.mubr.bf16.gmra.mxu0 %v3290
        %v3769 = vpop.f32.mrf.mxu0
        %v3770 = vadd.f32 0.0, %v3769
        %v3771 = vpop.f32.mrf.mxu0
        %v3772 = vadd.f32 0.0, %v3771
        %v3773 = vpop.f32.mrf.mxu0
        %v3774 = vadd.f32 0.0, %v3773
        %v3775 = vpop.f32.mrf.mxu0
        %v3776 = vadd.f32 0.0, %v3775
        %3777 = vmatprep.mubr.bf16.mxu0 %v3296
        %3778 = vmatmul.mubr.bf16.gmra.mxu0 %v3295
        %v3779 = vpop.f32.mrf.mxu0
        %v3780 = vadd.f32 0.0, %v3779
        %v3781 = vpop.f32.mrf.mxu0
        %v3782 = vadd.f32 0.0, %v3781
        %v3783 = vpop.f32.mrf.mxu0
        %v3784 = vadd.f32 0.0, %v3783
        %v3785 = vpop.f32.mrf.mxu0
        %v3786 = vadd.f32 0.0, %v3785
        %3787 = vmatprep.mubr.bf16.mxu0 %v3301
        %3788 = vmatmul.mubr.bf16.gmra.mxu0 %v3300
        %v3789 = vpop.f32.mrf.mxu0
        %v3790 = vadd.f32 0.0, %v3789
        %v3791 = vpop.f32.mrf.mxu0
        %v3792 = vadd.f32 0.0, %v3791
        %v3793 = vpop.f32.mrf.mxu0
        %v3794 = vadd.f32 0.0, %v3793
        %v3795 = vpop.f32.mrf.mxu0
        %v3796 = vadd.f32 0.0, %v3795
        %3797 = vdwg.mxu0
        %3798 = vmatprep.subr.bf16.mxu0 %v3592
        %3799 = vmatpush1.bf16.msra.mxu0 %v3591
        %3800 = vmatprep.subr.bf16.mxu0 %v3590
        %3801 = vmatpush1.bf16.msra.mxu0 %v3589
        %3802 = vmatprep.subr.bf16.mxu0 %v3588
        %3803 = vmatpush1.bf16.msra.mxu0 %v3587
        %3804 = vmatprep.subr.bf16.mxu0 %v3586
        %3805 = vmatpush1.bf16.msra.mxu0 %v3585
        %3806 = vmatprep.subr.bf16.mxu0 %v3584
        %3807 = vmatpush1.bf16.msra.mxu0 %v3583
        %3808 = vmatprep.subr.bf16.mxu0 %v3582
        %3809 = vmatpush1.bf16.msra.mxu0 %v3581
        %3810 = vmatprep.subr.bf16.mxu0 %v3580
        %3811 = vmatpush1.bf16.msra.mxu0 %v3579
        %3812 = vmatprep.subr.bf16.mxu0 %v3578
        %3813 = vmatpush1.bf16.msra.mxu0 %v3577
        %3814 = vmatprep.subr.bf16.mxu0 %v3608
        %3815 = vmatpush2.bf16.msra.mxu0 %v3607
        %3816 = vmatprep.subr.bf16.mxu0 %v3606
        %3817 = vmatpush2.bf16.msra.mxu0 %v3605
        %3818 = vmatprep.subr.bf16.mxu0 %v3604
        %3819 = vmatpush2.bf16.msra.mxu0 %v3603
        %3820 = vmatprep.subr.bf16.mxu0 %v3602
        %3821 = vmatpush2.bf16.msra.mxu0 %v3601
        %3822 = vmatprep.subr.bf16.mxu0 %v3600
        %3823 = vmatpush2.bf16.msra.mxu0 %v3599
        %3824 = vmatprep.subr.bf16.mxu0 %v3598
        %3825 = vmatpush2.bf16.msra.mxu0 %v3597
        %3826 = vmatprep.subr.bf16.mxu0 %v3596
        %3827 = vmatpush2.bf16.msra.mxu0 %v3595
        %3828 = vmatprep.subr.bf16.mxu0 %v3594
        %3829 = vmatpush2.bf16.msra.mxu0 %v3593
        %3830 = vmatprep.mubr.bf16.mxu0 %v3288
        %3831 = vmatmul.mubr.bf16.gmra.mxu0 %v3287
        %v3832 = vpop.f32.mrf.mxu0
        %v3833 = vadd.f32 %v3760, %v3832
        %v3834 = vpop.f32.mrf.mxu0
        %v3835 = vadd.f32 %v3762, %v3834
        %v3836 = vpop.f32.mrf.mxu0
        %v3837 = vadd.f32 %v3764, %v3836
        %v3838 = vpop.f32.mrf.mxu0
        %v3839 = vadd.f32 %v3766, %v3838
        %3840 = vmatprep.mubr.bf16.mxu0 %v3293
        %3841 = vmatmul.mubr.bf16.gmra.mxu0 %v3292
        %v3842 = vpop.f32.mrf.mxu0
        %v3843 = vadd.f32 %v3770, %v3842
        %v3844 = vpop.f32.mrf.mxu0
        %v3845 = vadd.f32 %v3772, %v3844
        %v3846 = vpop.f32.mrf.mxu0
        %v3847 = vadd.f32 %v3774, %v3846
        %v3848 = vpop.f32.mrf.mxu0
        %v3849 = vadd.f32 %v3776, %v3848
        %3850 = vmatprep.mubr.bf16.mxu0 %v3298
        %3851 = vmatmul.mubr.bf16.gmra.mxu0 %v3297
        %v3852 = vpop.f32.mrf.mxu0
        %v3853 = vadd.f32 %v3780, %v3852
        %v3854 = vpop.f32.mrf.mxu0
        %v3855 = vadd.f32 %v3782, %v3854
        %v3856 = vpop.f32.mrf.mxu0
        %v3857 = vadd.f32 %v3784, %v3856
        %v3858 = vpop.f32.mrf.mxu0
        %v3859 = vadd.f32 %v3786, %v3858
        %3860 = vmatprep.mubr.bf16.mxu0 %v3303
        %3861 = vmatmul.mubr.bf16.gmra.mxu0 %v3302
        %v3862 = vpop.f32.mrf.mxu0
        %v3863 = vadd.f32 %v3790, %v3862
        %v3864 = vpop.f32.mrf.mxu0
        %v3865 = vadd.f32 %v3792, %v3864
        %v3866 = vpop.f32.mrf.mxu0
        %v3867 = vadd.f32 %v3794, %v3866
        %v3868 = vpop.f32.mrf.mxu0
        %v3869 = vadd.f32 %v3796, %v3868
        %3870 = vdwg.mxu0
        %3871 = vmatprep.subr.bf16.mxu0 %v3723
        %3872 = vmatpush1.bf16.msra.mxu0 %v3720
        %3873 = vmatprep.subr.bf16.mxu0 %v3622
        %3874 = vmatpush1.bf16.msra.mxu0 %v3621
        %3875 = vmatprep.subr.bf16.mxu0 %v3620
        %3876 = vmatpush1.bf16.msra.mxu0 %v3619
        %3877 = vmatprep.subr.bf16.mxu0 %v3618
        %3878 = vmatpush1.bf16.msra.mxu0 %v3617
        %3879 = vmatprep.subr.bf16.mxu0 %v3616
        %3880 = vmatpush1.bf16.msra.mxu0 %v3615
        %3881 = vmatprep.subr.bf16.mxu0 %v3614
        %3882 = vmatpush1.bf16.msra.mxu0 %v3613
        %3883 = vmatprep.subr.bf16.mxu0 %v3612
        %3884 = vmatpush1.bf16.msra.mxu0 %v3611
        %3885 = vmatprep.subr.bf16.mxu0 %v3610
        %3886 = vmatpush1.bf16.msra.mxu0 %v3609
        %3887 = vmatprep.subr.bf16.mxu0 0
        %3888 = vmatpush2.bf16.msra.mxu0 0
        %3889 = vmatprep.subr.bf16.mxu0 0
        %3890 = vmatpush2.bf16.msra.mxu0 0
        %3891 = vmatprep.subr.bf16.mxu0 0
        %3892 = vmatpush2.bf16.msra.mxu0 0
        %3893 = vmatprep.subr.bf16.mxu0 0
        %3894 = vmatpush2.bf16.msra.mxu0 0
        %3895 = vmatprep.subr.bf16.mxu0 0
        %3896 = vmatpush2.bf16.msra.mxu0 0
        %3897 = vmatprep.subr.bf16.mxu0 0
        %3898 = vmatpush2.bf16.msra.mxu0 0
        %3899 = vmatprep.subr.bf16.mxu0 0
        %3900 = vmatpush2.bf16.msra.mxu0 0
        %3901 = vmatprep.subr.bf16.mxu0 0
        %3902 = vmatpush2.bf16.msra.mxu0 0
        %3903 = vmatprep.mubr.bf16.mxu0 0
        %3904 = vmatmul.mubr.bf16.gmra.mxu0 %v3704
        %v3905 = vpop.f32.mrf.mxu0
        %v3906 = vadd.f32 %v3833, %v3905
        %v3907 = vpop.f32.mrf.mxu0
        %v3908 = vadd.f32 %v3835, %v3907
        %v3909 = vpop.f32.mrf.mxu0
        %v3910 = vadd.f32 %v3837, %v3909
        %v3911 = vpop.f32.mrf.mxu0
        %v3912 = vadd.f32 %v3839, %v3911
        %3913 = vmatprep.mubr.bf16.mxu0 0
        %3914 = vmatmul.mubr.bf16.gmra.mxu0 %v3707
        %v3915 = vpop.f32.mrf.mxu0
        %v3916 = vadd.f32 %v3843, %v3915
        %v3917 = vpop.f32.mrf.mxu0
        %v3918 = vadd.f32 %v3845, %v3917
        %v3919 = vpop.f32.mrf.mxu0
        %v3920 = vadd.f32 %v3847, %v3919
        %v3921 = vpop.f32.mrf.mxu0
        %v3922 = vadd.f32 %v3849, %v3921
        %3923 = vmatprep.mubr.bf16.mxu0 0
        %3924 = vmatmul.mubr.bf16.gmra.mxu0 %v3710
        %v3925 = vpop.f32.mrf.mxu0
        %v3926 = vadd.f32 %v3853, %v3925
        %v3927 = vpop.f32.mrf.mxu0
        %v3928 = vadd.f32 %v3855, %v3927
        %v3929 = vpop.f32.mrf.mxu0
        %v3930 = vadd.f32 %v3857, %v3929
        %v3931 = vpop.f32.mrf.mxu0
        %v3932 = vadd.f32 %v3859, %v3931
        %3933 = vmatprep.mubr.bf16.mxu0 0
        %3934 = vmatmul.mubr.bf16.gmra.mxu0 %v3713
        %v3935 = vpop.f32.mrf.mxu0
        %v3936 = vadd.f32 %v3863, %v3935
        %v3937 = vpop.f32.mrf.mxu0
        %v3938 = vadd.f32 %v3865, %v3937
        %v3939 = vpop.f32.mrf.mxu0
        %v3940 = vadd.f32 %v3867, %v3939
        %v3941 = vpop.f32.mrf.mxu0
        %v3942 = vadd.f32 %v3869, %v3941
        %3943 = vdwg.mxu0
        %v3944 = vpack.c.bf16 %v3910, %v3906
        %v3945 = vpack.c.bf16 %v3912, %v3908
        %v3946 = vpack.c.bf16 %v3920, %v3916
        %v3947 = vpack.c.bf16 %v3922, %v3918
        %v3948 = vpack.c.bf16 %v3930, %v3926
        %v3949 = vpack.c.bf16 %v3932, %v3928
        %v3950 = vpack.c.bf16 %v3940, %v3936
        %v3951 = vpack.c.bf16 %v3942, %v3938
        %v3960 = vunpack.c.l.b16 %v3944
        %v3961 = vunpack.c.l.b16 %v3945
        %v3962 = vunpack.c.h.b16 %v3944
        %v3963 = vunpack.c.h.b16 %v3945
        %v3964 = vunpack.c.l.b16 %v3946
        %v3965 = vunpack.c.l.b16 %v3947
        %v3966 = vunpack.c.h.b16 %v3946
        %v3967 = vunpack.c.h.b16 %v3947
        %v3968 = vunpack.c.l.b16 %v3948
        %v3969 = vunpack.c.l.b16 %v3949
        %v3970 = vunpack.c.h.b16 %v3948
        %v3971 = vunpack.c.h.b16 %v3949
        %v3972 = vunpack.c.l.b16 %v3950
        %v3973 = vunpack.c.l.b16 %v3951
        %v3974 = vunpack.c.h.b16 %v3950
        %v3975 = vunpack.c.h.b16 %v3951
        %v3976 = vpack.c.b16 %v3961, %v3960
        %v3977 = vpack.c.b16 %v3963, %v3962
        %v3978 = vpack.c.b16 %v3965, %v3964
        %v3979 = vpack.c.b16 %v3967, %v3966
        %v3980 = vpack.c.b16 %v3969, %v3968
        %v3981 = vpack.c.b16 %v3971, %v3970
        %v3982 = vpack.c.b16 %v3973, %v3972
        %v3983 = vpack.c.b16 %v3975, %v3974
        %vm3992 = vcmask 1043456
        %vm3993 = vcmask 130052
        %vm3994 = vmor %vm3993, %vm3992
        %3995 = vst.msk [vmem:[%s263] sm:$0xff] %vm3994, %v3976
        %3996 = vst.msk [vmem:[%s263 + $0x8] sm:$0xff] %vm3994, %v3977
        %3997 = vst.msk [vmem:[%s263 + $0x10] sm:$0xff] %vm3994, %v3978
        %3998 = vst.msk [vmem:[%s263 + $0x18] sm:$0xff] %vm3994, %v3979
        %3999 = vst.msk [vmem:[%s263 + $0x20] sm:$0xff] %vm3994, %v3980
        %4000 = vst.msk [vmem:[%s263 + $0x28] sm:$0xff] %vm3994, %v3981
        %4001 = vst.msk [vmem:[%s263 + $0x30] sm:$0xff] %vm3994, %v3982
        %4002 = vst.msk [vmem:[%s263 + $0x38] sm:$0xff] %vm3994, %v3983
        %p4003 = scmp.lt.s32.totalorder %s18, 1
        %s4004 = scalar_select %p4003, %s18, 1
        %s4005 = smul.addr %s4004, 16
        %s4006 = smul.addr %s4005, 4
        %s4007 = scalar_lea.vmem %s6, %s4006
        // Predicated region
        $region49: #{net_forward.2} parent=43 // pred_check
          %p4008 = pneg %p167
        $region50: #{net_forward.2} parent=43 // pred_check_branch
          %4010 = sbr.rel (%p4008) target = $region52
        $region51: #{net_forward.2} parent=43 // pred_region
          _
        $region52: #{net_forward.2} parent=43 // pred_fallthru
          _
      $region44: #{net_forward.2} parent=5 // pred_fallthru
        _
      %p4011 = scmp.le.s32.totalorder 2, %s13
      // Predicated region
      $region53: #{net_forward.2} parent=5 // pred_check
        %p4012 = pneg %p4011
      $region54: #{net_forward.2} parent=5 // pred_check_branch
        %4014 = sbr.rel (%p4012) target = $region56
      $region55: #{net_forward.2} parent=5 // pred_region
        %s4015 = ssub.s32 %s13, 2
        // Predicated region
        $region57: #{net_forward.2} parent=55 // pred_check
          %p4016 = pneg %p173
        $region58: #{net_forward.2} parent=55 // pred_check_branch
          %4018 = sbr.rel (%p4016) target = $region60
        $region59: #{net_forward.2} parent=55 // pred_region
          %p4019 = scmp.lt.s32.totalorder %s19, 1
          %s4020 = scalar_select %p4019, %s19, 1
          %s4021 = smul.addr %s4020, 16
          %s4022 = smul.addr %s4021, 4
          %s4023 = scalar_lea.vmem %s6, %s4022
        $region60: #{net_forward.2} parent=55 // pred_fallthru
          _
      $region56: #{net_forward.2} parent=5 // pred_fallthru
        _
    $region6: #{net_forward.2} parent=1 // loop_footer
      %s17 = sadd.s32 1, %s13
    $region7: #{net_forward.2} parent=1 // loop_footer_branch
      %12 = sbr.rel target = $region3
    $region8: #{net_forward.2} parent=1 // loop_exit
      _
    %4024 = vsyncpa [#allocation3], 1
    %s4025 = scalar_lea.sflag [#allocation3], 1
    %4026 = vsyncpa %s4025, 1

// kernel: net_forward.3
$region0: #{net_forward.3}
  #allocation0 [shape = 'u32[]', space=smem, size = 0x4, offset = 0x4, fixed_abs, tag = 'smem constant byte address 0x4 - core index']
  #allocation1 [shape = 'u32[144,128]{1,0:T(1,128)}', space=vmem, size = 0x12000, scoped, tag = 'internal scratch']
  %s0 = inlined_call_operand.vmem [shape: bf16[2,9216], index: 0, kind: input, shape index: {}]
  %s1 = inlined_call_operand.vmem [shape: bf16[9216,128], index: 1, kind: input, shape index: {}]
  %s2 = inlined_call_operand.vmem [shape: f32[1,128], index: 2, kind: input, shape index: {}]
  %s3 = inlined_call_operand.vmem [shape: f32[128,10], index: 3, kind: input, shape index: {}]
  %s4 = inlined_call_operand.vmem [shape: f32[1,10], index: 4, kind: input, shape index: {}]
  %s5 = inlined_call_operand.hbm [shape: f32[2,10], index: 5, kind: output, shape index: {}]
  %s6 = sld [smem:[#allocation0]]
  $region30: #{net_forward.3} parent=0
    _
  %s8 = ssub.s32 1, %s6
  %s9 = scalar_select 0, %s8, %s6
  $region1: #{net_forward.3} parent=0
    #allocation2 [shape = 'u8[4096]{0}', space=vmem, size = 0x1000, scoped, tag = 'output window, operand 0, single buffered']
    #allocation3 [shape = 's32[1]{0}', space=sflag, size = 0x4, scoped, tag = 'scoped memory for net_forward.3']
    %10 = vsyncpa [#allocation3], 0
    // Predicated region
    $region2: #{net_forward.3} parent=1 // pred_check
      _
    $region3: #{net_forward.3} parent=1 // pred_check_branch
      %12 = sbr.rel (0) target = $region5
    $region4: #{net_forward.3} parent=1 // pred_region
      _
    $region5: #{net_forward.3} parent=1 // pred_fallthru
      _
    // Predicated region
    $region6: #{net_forward.3} parent=1 // pred_check
      _
    $region7: #{net_forward.3} parent=1 // pred_check_branch
      %14 = sbr.rel (0) target = $region9
    $region8: #{net_forward.3} parent=1 // pred_region
      _
    $region9: #{net_forward.3} parent=1 // pred_fallthru
      _
    // Predicated region
    $region10: #{net_forward.3} parent=1 // pred_check
      _
    $region11: #{net_forward.3} parent=1 // pred_check_branch
      %16 = sbr.rel (0) target = $region13
    $region12: #{net_forward.3} parent=1 // pred_region
      _
    $region13: #{net_forward.3} parent=1 // pred_fallthru
      _
    // Predicated region
    $region14: #{net_forward.3} parent=1 // pred_check
      _
    $region15: #{net_forward.3} parent=1 // pred_check_branch
      %18 = sbr.rel (0) target = $region17
    $region16: #{net_forward.3} parent=1 // pred_region
      _
    $region17: #{net_forward.3} parent=1 // pred_fallthru
      _
    // Predicated region
    $region18: #{net_forward.3} parent=1 // pred_check
      _
    $region19: #{net_forward.3} parent=1 // pred_check_branch
      %20 = sbr.rel (0) target = $region21
    $region20: #{net_forward.3} parent=1 // pred_region
      _
    $region21: #{net_forward.3} parent=1 // pred_fallthru
      _
    %v22 = vld [vmem:[%s0] sm:$0xff]
    %v23 = vld [vmem:[%s0 + $0x8] sm:$0xff]
    %v24 = vld [vmem:[%s0 + $0x10] sm:$0xff]
    %v25 = vld [vmem:[%s0 + $0x18] sm:$0xff]
    %v26 = vld [vmem:[%s0 + $0x20] sm:$0xff]
    %v27 = vld [vmem:[%s0 + $0x28] sm:$0xff]
    %v28 = vld [vmem:[%s0 + $0x30] sm:$0xff]
    %v29 = vld [vmem:[%s0 + $0x38] sm:$0xff]
    %v30 = vld [vmem:[%s0 + $0x40] sm:$0xff]
    %v31 = vld [vmem:[%s0 + $0x48] sm:$0xff]
    %v32 = vld [vmem:[%s0 + $0x50] sm:$0xff]
    %v33 = vld [vmem:[%s0 + $0x58] sm:$0xff]
    %v34 = vld [vmem:[%s0 + $0x60] sm:$0xff]
    %v35 = vld [vmem:[%s0 + $0x68] sm:$0xff]
    %v36 = vld [vmem:[%s0 + $0x70] sm:$0xff]
    %v37 = vld [vmem:[%s0 + $0x78] sm:$0xff]
    %v38 = vld [vmem:[%s0 + $0x80] sm:$0xff]
    %v39 = vld [vmem:[%s0 + $0x88] sm:$0xff]
    %v40 = vld [vmem:[%s0 + $0x90] sm:$0xff]
    %v41 = vld [vmem:[%s0 + $0x98] sm:$0xff]
    %v42 = vld [vmem:[%s0 + $0xa0] sm:$0xff]
    %v43 = vld [vmem:[%s0 + $0xa8] sm:$0xff]
    %v44 = vld [vmem:[%s0 + $0xb0] sm:$0xff]
    %v45 = vld [vmem:[%s0 + $0xb8] sm:$0xff]
    %v46 = vld [vmem:[%s0 + $0xc0] sm:$0xff]
    %v47 = vld [vmem:[%s0 + $0xc8] sm:$0xff]
    %v48 = vld [vmem:[%s0 + $0xd0] sm:$0xff]
    %v49 = vld [vmem:[%s0 + $0xd8] sm:$0xff]
    %v50 = vld [vmem:[%s0 + $0xe0] sm:$0xff]
    %v51 = vld [vmem:[%s0 + $0xe8] sm:$0xff]
    %v52 = vld [vmem:[%s0 + $0xf0] sm:$0xff]
    %v53 = vld [vmem:[%s0 + $0xf8] sm:$0xff]
    %v54 = vld [vmem:[%s0 + $0x100] sm:$0xff]
    %v55 = vld [vmem:[%s0 + $0x108] sm:$0xff]
    %v56 = vld [vmem:[%s0 + $0x110] sm:$0xff]
    %v57 = vld [vmem:[%s0 + $0x118] sm:$0xff]
    %v58 = vld [vmem:[%s1] sm:$0xf]
    %v59 = vld [vmem:[%s1 + $0x4] sm:$0xf]
    %v60 = vld [vmem:[%s1 + $0x8] sm:$0xf]
    %v61 = vld [vmem:[%s1 + $0xc] sm:$0xf]
    %v62 = vld [vmem:[%s1 + $0x10] sm:$0xf]
    %v63 = vld [vmem:[%s1 + $0x14] sm:$0xf]
    %v64 = vld [vmem:[%s1 + $0x18] sm:$0xf]
    %v65 = vld [vmem:[%s1 + $0x1c] sm:$0xf]
    %v66 = vld [vmem:[%s1 + $0x20] sm:$0xf]
    %v67 = vld [vmem:[%s1 + $0x24] sm:$0xf]
    %v68 = vld [vmem:[%s1 + $0x28] sm:$0xf]
    %v69 = vld [vmem:[%s1 + $0x2c] sm:$0xf]
    %v70 = vld [vmem:[%s1 + $0x30] sm:$0xf]
    %v71 = vld [vmem:[%s1 + $0x34] sm:$0xf]
    %v72 = vld [vmem:[%s1 + $0x38] sm:$0xf]
    %v73 = vld [vmem:[%s1 + $0x3c] sm:$0xf]
    %v74 = vld [vmem:[%s1 + $0x40] sm:$0xf]
    %v75 = vld [vmem:[%s1 + $0x44] sm:$0xf]
    %v76 = vld [vmem:[%s1 + $0x48] sm:$0xf]
    %v77 = vld [vmem:[%s1 + $0x4c] sm:$0xf]
    %v78 = vld [vmem:[%s1 + $0x50] sm:$0xf]
    %v79 = vld [vmem:[%s1 + $0x54] sm:$0xf]
    %v80 = vld [vmem:[%s1 + $0x58] sm:$0xf]
    %v81 = vld [vmem:[%s1 + $0x5c] sm:$0xf]
    %v82 = vld [vmem:[%s1 + $0x60] sm:$0xf]
    %v83 = vld [vmem:[%s1 + $0x64] sm:$0xf]
    %v84 = vld [vmem:[%s1 + $0x68] sm:$0xf]
    %v85 = vld [vmem:[%s1 + $0x6c] sm:$0xf]
    %v86 = vld [vmem:[%s1 + $0x70] sm:$0xf]
    %v87 = vld [vmem:[%s1 + $0x74] sm:$0xf]
    %v88 = vld [vmem:[%s1 + $0x78] sm:$0xf]
    %v89 = vld [vmem:[%s1 + $0x7c] sm:$0xf]
    %v90 = vld [vmem:[%s1 + $0x80] sm:$0xf]
    %v91 = vld [vmem:[%s1 + $0x84] sm:$0xf]
    %v92 = vld [vmem:[%s1 + $0x88] sm:$0xf]
    %v93 = vld [vmem:[%s1 + $0x8c] sm:$0xf]
    %v94 = vld [vmem:[%s1 + $0x90] sm:$0xf]
    %v95 = vld [vmem:[%s1 + $0x94] sm:$0xf]
    %v96 = vld [vmem:[%s1 + $0x98] sm:$0xf]
    %v97 = vld [vmem:[%s1 + $0x9c] sm:$0xf]
    %v98 = vld [vmem:[%s1 + $0xa0] sm:$0xf]
    %v99 = vld [vmem:[%s1 + $0xa4] sm:$0xf]
    %v100 = vld [vmem:[%s1 + $0xa8] sm:$0xf]
    %v101 = vld [vmem:[%s1 + $0xac] sm:$0xf]
    %v102 = vld [vmem:[%s1 + $0xb0] sm:$0xf]
    %v103 = vld [vmem:[%s1 + $0xb4] sm:$0xf]
    %v104 = vld [vmem:[%s1 + $0xb8] sm:$0xf]
    %v105 = vld [vmem:[%s1 + $0xbc] sm:$0xf]
    %v106 = vld [vmem:[%s1 + $0xc0] sm:$0xf]
    %v107 = vld [vmem:[%s1 + $0xc4] sm:$0xf]
    %v108 = vld [vmem:[%s1 + $0xc8] sm:$0xf]
    %v109 = vld [vmem:[%s1 + $0xcc] sm:$0xf]
    %v110 = vld [vmem:[%s1 + $0xd0] sm:$0xf]
    %v111 = vld [vmem:[%s1 + $0xd4] sm:$0xf]
    %v112 = vld [vmem:[%s1 + $0xd8] sm:$0xf]
    %v113 = vld [vmem:[%s1 + $0xdc] sm:$0xf]
    %v114 = vld [vmem:[%s1 + $0xe0] sm:$0xf]
    %v115 = vld [vmem:[%s1 + $0xe4] sm:$0xf]
    %v116 = vld [vmem:[%s1 + $0xe8] sm:$0xf]
    %v117 = vld [vmem:[%s1 + $0xec] sm:$0xf]
    %v118 = vld [vmem:[%s1 + $0xf0] sm:$0xf]
    %v119 = vld [vmem:[%s1 + $0xf4] sm:$0xf]
    %v120 = vld [vmem:[%s1 + $0xf8] sm:$0xf]
    %v121 = vld [vmem:[%s1 + $0xfc] sm:$0xf]
    %v122 = vld [vmem:[%s1 + $0x100] sm:$0xf]
    %v123 = vld [vmem:[%s1 + $0x104] sm:$0xf]
    %v124 = vld [vmem:[%s1 + $0x108] sm:$0xf]
    %v125 = vld [vmem:[%s1 + $0x10c] sm:$0xf]
    %v126 = vld [vmem:[%s1 + $0x110] sm:$0xf]
    %v127 = vld [vmem:[%s1 + $0x114] sm:$0xf]
    %v128 = vld [vmem:[%s1 + $0x118] sm:$0xf]
    %v129 = vld [vmem:[%s1 + $0x11c] sm:$0xf]
    %v130 = vld [vmem:[%s1 + $0x120] sm:$0xf]
    %v131 = vld [vmem:[%s1 + $0x124] sm:$0xf]
    %v132 = vld [vmem:[%s1 + $0x128] sm:$0xf]
    %v133 = vld [vmem:[%s1 + $0x12c] sm:$0xf]
    %v134 = vld [vmem:[%s1 + $0x130] sm:$0xf]
    %v135 = vld [vmem:[%s1 + $0x134] sm:$0xf]
    %v136 = vld [vmem:[%s1 + $0x138] sm:$0xf]
    %v137 = vld [vmem:[%s1 + $0x13c] sm:$0xf]
    %v138 = vld [vmem:[%s1 + $0x140] sm:$0xf]
    %v139 = vld [vmem:[%s1 + $0x144] sm:$0xf]
    %v140 = vld [vmem:[%s1 + $0x148] sm:$0xf]
    %v141 = vld [vmem:[%s1 + $0x14c] sm:$0xf]
    %v142 = vld [vmem:[%s1 + $0x150] sm:$0xf]
    %v143 = vld [vmem:[%s1 + $0x154] sm:$0xf]
    %v144 = vld [vmem:[%s1 + $0x158] sm:$0xf]
    %v145 = vld [vmem:[%s1 + $0x15c] sm:$0xf]
    %v146 = vld [vmem:[%s1 + $0x160] sm:$0xf]
    %v147 = vld [vmem:[%s1 + $0x164] sm:$0xf]
    %v148 = vld [vmem:[%s1 + $0x168] sm:$0xf]
    %v149 = vld [vmem:[%s1 + $0x16c] sm:$0xf]
    %v150 = vld [vmem:[%s1 + $0x170] sm:$0xf]
    %v151 = vld [vmem:[%s1 + $0x174] sm:$0xf]
    %v152 = vld [vmem:[%s1 + $0x178] sm:$0xf]
    %v153 = vld [vmem:[%s1 + $0x17c] sm:$0xf]
    %v154 = vld [vmem:[%s1 + $0x180] sm:$0xf]
    %v155 = vld [vmem:[%s1 + $0x184] sm:$0xf]
    %v156 = vld [vmem:[%s1 + $0x188] sm:$0xf]
    %v157 = vld [vmem:[%s1 + $0x18c] sm:$0xf]
    %v158 = vld [vmem:[%s1 + $0x190] sm:$0xf]
    %v159 = vld [vmem:[%s1 + $0x194] sm:$0xf]
    %v160 = vld [vmem:[%s1 + $0x198] sm:$0xf]
    %v161 = vld [vmem:[%s1 + $0x19c] sm:$0xf]
    %v162 = vld [vmem:[%s1 + $0x1a0] sm:$0xf]
    %v163 = vld [vmem:[%s1 + $0x1a4] sm:$0xf]
    %v164 = vld [vmem:[%s1 + $0x1a8] sm:$0xf]
    %v165 = vld [vmem:[%s1 + $0x1ac] sm:$0xf]
    %v166 = vld [vmem:[%s1 + $0x1b0] sm:$0xf]
    %v167 = vld [vmem:[%s1 + $0x1b4] sm:$0xf]
    %v168 = vld [vmem:[%s1 + $0x1b8] sm:$0xf]
    %v169 = vld [vmem:[%s1 + $0x1bc] sm:$0xf]
    %v170 = vld [vmem:[%s1 + $0x1c0] sm:$0xf]
    %v171 = vld [vmem:[%s1 + $0x1c4] sm:$0xf]
    %v172 = vld [vmem:[%s1 + $0x1c8] sm:$0xf]
    %v173 = vld [vmem:[%s1 + $0x1cc] sm:$0xf]
    %v174 = vld [vmem:[%s1 + $0x1d0] sm:$0xf]
    %v175 = vld [vmem:[%s1 + $0x1d4] sm:$0xf]
    %v176 = vld [vmem:[%s1 + $0x1d8] sm:$0xf]
    %v177 = vld [vmem:[%s1 + $0x1dc] sm:$0xf]
    %v178 = vld [vmem:[%s1 + $0x1e0] sm:$0xf]
    %v179 = vld [vmem:[%s1 + $0x1e4] sm:$0xf]
    %v180 = vld [vmem:[%s1 + $0x1e8] sm:$0xf]
    %v181 = vld [vmem:[%s1 + $0x1ec] sm:$0xf]
    %v182 = vld [vmem:[%s1 + $0x1f0] sm:$0xf]
    %v183 = vld [vmem:[%s1 + $0x1f4] sm:$0xf]
    %v184 = vld [vmem:[%s1 + $0x1f8] sm:$0xf]
    %v185 = vld [vmem:[%s1 + $0x1fc] sm:$0xf]
    %v186 = vld [vmem:[%s1 + $0x200] sm:$0xf]
    %v187 = vld [vmem:[%s1 + $0x204] sm:$0xf]
    %v188 = vld [vmem:[%s1 + $0x208] sm:$0xf]
    %v189 = vld [vmem:[%s1 + $0x20c] sm:$0xf]
    %v190 = vld [vmem:[%s1 + $0x210] sm:$0xf]
    %v191 = vld [vmem:[%s1 + $0x214] sm:$0xf]
    %v192 = vld [vmem:[%s1 + $0x218] sm:$0xf]
    %v193 = vld [vmem:[%s1 + $0x21c] sm:$0xf]
    %v194 = vld [vmem:[%s1 + $0x220] sm:$0xf]
    %v195 = vld [vmem:[%s1 + $0x224] sm:$0xf]
    %v196 = vld [vmem:[%s1 + $0x228] sm:$0xf]
    %v197 = vld [vmem:[%s1 + $0x22c] sm:$0xf]
    %v198 = vld [vmem:[%s1 + $0x230] sm:$0xf]
    %v199 = vld [vmem:[%s1 + $0x234] sm:$0xf]
    %v200 = vld [vmem:[%s1 + $0x238] sm:$0xf]
    %v201 = vld [vmem:[%s1 + $0x23c] sm:$0xf]
    %v202 = vld [vmem:[%s1 + $0x240] sm:$0xf]
    %v203 = vld [vmem:[%s1 + $0x244] sm:$0xf]
    %v204 = vld [vmem:[%s1 + $0x248] sm:$0xf]
    %v205 = vld [vmem:[%s1 + $0x24c] sm:$0xf]
    %v206 = vld [vmem:[%s1 + $0x250] sm:$0xf]
    %v207 = vld [vmem:[%s1 + $0x254] sm:$0xf]
    %v208 = vld [vmem:[%s1 + $0x258] sm:$0xf]
    %v209 = vld [vmem:[%s1 + $0x25c] sm:$0xf]
    %v210 = vld [vmem:[%s1 + $0x260] sm:$0xf]
    %v211 = vld [vmem:[%s1 + $0x264] sm:$0xf]
    %v212 = vld [vmem:[%s1 + $0x268] sm:$0xf]
    %v213 = vld [vmem:[%s1 + $0x26c] sm:$0xf]
    %v214 = vld [vmem:[%s1 + $0x270] sm:$0xf]
    %v215 = vld [vmem:[%s1 + $0x274] sm:$0xf]
    %v216 = vld [vmem:[%s1 + $0x278] sm:$0xf]
    %v217 = vld [vmem:[%s1 + $0x27c] sm:$0xf]
    %v218 = vld [vmem:[%s1 + $0x280] sm:$0xf]
    %v219 = vld [vmem:[%s1 + $0x284] sm:$0xf]
    %v220 = vld [vmem:[%s1 + $0x288] sm:$0xf]
    %v221 = vld [vmem:[%s1 + $0x28c] sm:$0xf]
    %v222 = vld [vmem:[%s1 + $0x290] sm:$0xf]
    %v223 = vld [vmem:[%s1 + $0x294] sm:$0xf]
    %v224 = vld [vmem:[%s1 + $0x298] sm:$0xf]
    %v225 = vld [vmem:[%s1 + $0x29c] sm:$0xf]
    %v226 = vld [vmem:[%s1 + $0x2a0] sm:$0xf]
    %v227 = vld [vmem:[%s1 + $0x2a4] sm:$0xf]
    %v228 = vld [vmem:[%s1 + $0x2a8] sm:$0xf]
    %v229 = vld [vmem:[%s1 + $0x2ac] sm:$0xf]
    %v230 = vld [vmem:[%s1 + $0x2b0] sm:$0xf]
    %v231 = vld [vmem:[%s1 + $0x2b4] sm:$0xf]
    %v232 = vld [vmem:[%s1 + $0x2b8] sm:$0xf]
    %v233 = vld [vmem:[%s1 + $0x2bc] sm:$0xf]
    %v234 = vld [vmem:[%s1 + $0x2c0] sm:$0xf]
    %v235 = vld [vmem:[%s1 + $0x2c4] sm:$0xf]
    %v236 = vld [vmem:[%s1 + $0x2c8] sm:$0xf]
    %v237 = vld [vmem:[%s1 + $0x2cc] sm:$0xf]
    %v238 = vld [vmem:[%s1 + $0x2d0] sm:$0xf]
    %v239 = vld [vmem:[%s1 + $0x2d4] sm:$0xf]
    %v240 = vld [vmem:[%s1 + $0x2d8] sm:$0xf]
    %v241 = vld [vmem:[%s1 + $0x2dc] sm:$0xf]
    %v242 = vld [vmem:[%s1 + $0x2e0] sm:$0xf]
    %v243 = vld [vmem:[%s1 + $0x2e4] sm:$0xf]
    %v244 = vld [vmem:[%s1 + $0x2e8] sm:$0xf]
    %v245 = vld [vmem:[%s1 + $0x2ec] sm:$0xf]
    %v246 = vld [vmem:[%s1 + $0x2f0] sm:$0xf]
    %v247 = vld [vmem:[%s1 + $0x2f4] sm:$0xf]
    %v248 = vld [vmem:[%s1 + $0x2f8] sm:$0xf]
    %v249 = vld [vmem:[%s1 + $0x2fc] sm:$0xf]
    %v250 = vld [vmem:[%s1 + $0x300] sm:$0xf]
    %v251 = vld [vmem:[%s1 + $0x304] sm:$0xf]
    %v252 = vld [vmem:[%s1 + $0x308] sm:$0xf]
    %v253 = vld [vmem:[%s1 + $0x30c] sm:$0xf]
    %v254 = vld [vmem:[%s1 + $0x310] sm:$0xf]
    %v255 = vld [vmem:[%s1 + $0x314] sm:$0xf]
    %v256 = vld [vmem:[%s1 + $0x318] sm:$0xf]
    %v257 = vld [vmem:[%s1 + $0x31c] sm:$0xf]
    %v258 = vld [vmem:[%s1 + $0x320] sm:$0xf]
    %v259 = vld [vmem:[%s1 + $0x324] sm:$0xf]
    %v260 = vld [vmem:[%s1 + $0x328] sm:$0xf]
    %v261 = vld [vmem:[%s1 + $0x32c] sm:$0xf]
    %v262 = vld [vmem:[%s1 + $0x330] sm:$0xf]
    %v263 = vld [vmem:[%s1 + $0x334] sm:$0xf]
    %v264 = vld [vmem:[%s1 + $0x338] sm:$0xf]
    %v265 = vld [vmem:[%s1 + $0x33c] sm:$0xf]
    %v266 = vld [vmem:[%s1 + $0x340] sm:$0xf]
    %v267 = vld [vmem:[%s1 + $0x344] sm:$0xf]
    %v268 = vld [vmem:[%s1 + $0x348] sm:$0xf]
    %v269 = vld [vmem:[%s1 + $0x34c] sm:$0xf]
    %v270 = vld [vmem:[%s1 + $0x350] sm:$0xf]
    %v271 = vld [vmem:[%s1 + $0x354] sm:$0xf]
    %v272 = vld [vmem:[%s1 + $0x358] sm:$0xf]
    %v273 = vld [vmem:[%s1 + $0x35c] sm:$0xf]
    %v274 = vld [vmem:[%s1 + $0x360] sm:$0xf]
    %v275 = vld [vmem:[%s1 + $0x364] sm:$0xf]
    %v276 = vld [vmem:[%s1 + $0x368] sm:$0xf]
    %v277 = vld [vmem:[%s1 + $0x36c] sm:$0xf]
    %v278 = vld [vmem:[%s1 + $0x370] sm:$0xf]
    %v279 = vld [vmem:[%s1 + $0x374] sm:$0xf]
    %v280 = vld [vmem:[%s1 + $0x378] sm:$0xf]
    %v281 = vld [vmem:[%s1 + $0x37c] sm:$0xf]
    %v282 = vld [vmem:[%s1 + $0x380] sm:$0xf]
    %v283 = vld [vmem:[%s1 + $0x384] sm:$0xf]
    %v284 = vld [vmem:[%s1 + $0x388] sm:$0xf]
    %v285 = vld [vmem:[%s1 + $0x38c] sm:$0xf]
    %v286 = vld [vmem:[%s1 + $0x390] sm:$0xf]
    %v287 = vld [vmem:[%s1 + $0x394] sm:$0xf]
    %v288 = vld [vmem:[%s1 + $0x398] sm:$0xf]
    %v289 = vld [vmem:[%s1 + $0x39c] sm:$0xf]
    %v290 = vld [vmem:[%s1 + $0x3a0] sm:$0xf]
    %v291 = vld [vmem:[%s1 + $0x3a4] sm:$0xf]
    %v292 = vld [vmem:[%s1 + $0x3a8] sm:$0xf]
    %v293 = vld [vmem:[%s1 + $0x3ac] sm:$0xf]
    %v294 = vld [vmem:[%s1 + $0x3b0] sm:$0xf]
    %v295 = vld [vmem:[%s1 + $0x3b4] sm:$0xf]
    %v296 = vld [vmem:[%s1 + $0x3b8] sm:$0xf]
    %v297 = vld [vmem:[%s1 + $0x3bc] sm:$0xf]
    %v298 = vld [vmem:[%s1 + $0x3c0] sm:$0xf]
    %v299 = vld [vmem:[%s1 + $0x3c4] sm:$0xf]
    %v300 = vld [vmem:[%s1 + $0x3c8] sm:$0xf]
    %v301 = vld [vmem:[%s1 + $0x3cc] sm:$0xf]
    %v302 = vld [vmem:[%s1 + $0x3d0] sm:$0xf]
    %v303 = vld [vmem:[%s1 + $0x3d4] sm:$0xf]
    %v304 = vld [vmem:[%s1 + $0x3d8] sm:$0xf]
    %v305 = vld [vmem:[%s1 + $0x3dc] sm:$0xf]
    %v306 = vld [vmem:[%s1 + $0x3e0] sm:$0xf]
    %v307 = vld [vmem:[%s1 + $0x3e4] sm:$0xf]
    %v308 = vld [vmem:[%s1 + $0x3e8] sm:$0xf]
    %v309 = vld [vmem:[%s1 + $0x3ec] sm:$0xf]
    %v310 = vld [vmem:[%s1 + $0x3f0] sm:$0xf]
    %v311 = vld [vmem:[%s1 + $0x3f4] sm:$0xf]
    %v312 = vld [vmem:[%s1 + $0x3f8] sm:$0xf]
    %v313 = vld [vmem:[%s1 + $0x3fc] sm:$0xf]
    %v314 = vld [vmem:[%s1 + $0x400] sm:$0xf]
    %v315 = vld [vmem:[%s1 + $0x404] sm:$0xf]
    %v316 = vld [vmem:[%s1 + $0x408] sm:$0xf]
    %v317 = vld [vmem:[%s1 + $0x40c] sm:$0xf]
    %v318 = vld [vmem:[%s1 + $0x410] sm:$0xf]
    %v319 = vld [vmem:[%s1 + $0x414] sm:$0xf]
    %v320 = vld [vmem:[%s1 + $0x418] sm:$0xf]
    %v321 = vld [vmem:[%s1 + $0x41c] sm:$0xf]
    %v322 = vld [vmem:[%s1 + $0x420] sm:$0xf]
    %v323 = vld [vmem:[%s1 + $0x424] sm:$0xf]
    %v324 = vld [vmem:[%s1 + $0x428] sm:$0xf]
    %v325 = vld [vmem:[%s1 + $0x42c] sm:$0xf]
    %v326 = vld [vmem:[%s1 + $0x430] sm:$0xf]
    %v327 = vld [vmem:[%s1 + $0x434] sm:$0xf]
    %v328 = vld [vmem:[%s1 + $0x438] sm:$0xf]
    %v329 = vld [vmem:[%s1 + $0x43c] sm:$0xf]
    %v330 = vld [vmem:[%s1 + $0x440] sm:$0xf]
    %v331 = vld [vmem:[%s1 + $0x444] sm:$0xf]
    %v332 = vld [vmem:[%s1 + $0x448] sm:$0xf]
    %v333 = vld [vmem:[%s1 + $0x44c] sm:$0xf]
    %v334 = vld [vmem:[%s1 + $0x450] sm:$0xf]
    %v335 = vld [vmem:[%s1 + $0x454] sm:$0xf]
    %v336 = vld [vmem:[%s1 + $0x458] sm:$0xf]
    %v337 = vld [vmem:[%s1 + $0x45c] sm:$0xf]
    %v338 = vld [vmem:[%s1 + $0x460] sm:$0xf]
    %v339 = vld [vmem:[%s1 + $0x464] sm:$0xf]
    %v340 = vld [vmem:[%s1 + $0x468] sm:$0xf]
    %v341 = vld [vmem:[%s1 + $0x46c] sm:$0xf]
    %v342 = vld [vmem:[%s1 + $0x470] sm:$0xf]
    %v343 = vld [vmem:[%s1 + $0x474] sm:$0xf]
    %v344 = vld [vmem:[%s1 + $0x478] sm:$0xf]
    %v345 = vld [vmem:[%s1 + $0x47c] sm:$0xf]
    %v346 = vld [vmem:[%s1 + $0x480] sm:$0xf]
    %v347 = vld [vmem:[%s1 + $0x484] sm:$0xf]
    %v348 = vld [vmem:[%s1 + $0x488] sm:$0xf]
    %v349 = vld [vmem:[%s1 + $0x48c] sm:$0xf]
    %v350 = vld [vmem:[%s1 + $0x490] sm:$0xf]
    %v351 = vld [vmem:[%s1 + $0x494] sm:$0xf]
    %v352 = vld [vmem:[%s1 + $0x498] sm:$0xf]
    %v353 = vld [vmem:[%s1 + $0x49c] sm:$0xf]
    %v354 = vld [vmem:[%s1 + $0x4a0] sm:$0xf]
    %v355 = vld [vmem:[%s1 + $0x4a4] sm:$0xf]
    %v356 = vld [vmem:[%s1 + $0x4a8] sm:$0xf]
    %v357 = vld [vmem:[%s1 + $0x4ac] sm:$0xf]
    %v358 = vld [vmem:[%s1 + $0x4b0] sm:$0xf]
    %v359 = vld [vmem:[%s1 + $0x4b4] sm:$0xf]
    %v360 = vld [vmem:[%s1 + $0x4b8] sm:$0xf]
    %v361 = vld [vmem:[%s1 + $0x4bc] sm:$0xf]
    %v362 = vld [vmem:[%s1 + $0x4c0] sm:$0xf]
    %v363 = vld [vmem:[%s1 + $0x4c4] sm:$0xf]
    %v364 = vld [vmem:[%s1 + $0x4c8] sm:$0xf]
    %v365 = vld [vmem:[%s1 + $0x4cc] sm:$0xf]
    %v366 = vld [vmem:[%s1 + $0x4d0] sm:$0xf]
    %v367 = vld [vmem:[%s1 + $0x4d4] sm:$0xf]
    %v368 = vld [vmem:[%s1 + $0x4d8] sm:$0xf]
    %v369 = vld [vmem:[%s1 + $0x4dc] sm:$0xf]
    %v370 = vld [vmem:[%s1 + $0x4e0] sm:$0xf]
    %v371 = vld [vmem:[%s1 + $0x4e4] sm:$0xf]
    %v372 = vld [vmem:[%s1 + $0x4e8] sm:$0xf]
    %v373 = vld [vmem:[%s1 + $0x4ec] sm:$0xf]
    %v374 = vld [vmem:[%s1 + $0x4f0] sm:$0xf]
    %v375 = vld [vmem:[%s1 + $0x4f4] sm:$0xf]
    %v376 = vld [vmem:[%s1 + $0x4f8] sm:$0xf]
    %v377 = vld [vmem:[%s1 + $0x4fc] sm:$0xf]
    %v378 = vld [vmem:[%s1 + $0x500] sm:$0xf]
    %v379 = vld [vmem:[%s1 + $0x504] sm:$0xf]
    %v380 = vld [vmem:[%s1 + $0x508] sm:$0xf]
    %v381 = vld [vmem:[%s1 + $0x50c] sm:$0xf]
    %v382 = vld [vmem:[%s1 + $0x510] sm:$0xf]
    %v383 = vld [vmem:[%s1 + $0x514] sm:$0xf]
    %v384 = vld [vmem:[%s1 + $0x518] sm:$0xf]
    %v385 = vld [vmem:[%s1 + $0x51c] sm:$0xf]
    %v386 = vld [vmem:[%s1 + $0x520] sm:$0xf]
    %v387 = vld [vmem:[%s1 + $0x524] sm:$0xf]
    %v388 = vld [vmem:[%s1 + $0x528] sm:$0xf]
    %v389 = vld [vmem:[%s1 + $0x52c] sm:$0xf]
    %v390 = vld [vmem:[%s1 + $0x530] sm:$0xf]
    %v391 = vld [vmem:[%s1 + $0x534] sm:$0xf]
    %v392 = vld [vmem:[%s1 + $0x538] sm:$0xf]
    %v393 = vld [vmem:[%s1 + $0x53c] sm:$0xf]
    %v394 = vld [vmem:[%s1 + $0x540] sm:$0xf]
    %v395 = vld [vmem:[%s1 + $0x544] sm:$0xf]
    %v396 = vld [vmem:[%s1 + $0x548] sm:$0xf]
    %v397 = vld [vmem:[%s1 + $0x54c] sm:$0xf]
    %v398 = vld [vmem:[%s1 + $0x550] sm:$0xf]
    %v399 = vld [vmem:[%s1 + $0x554] sm:$0xf]
    %v400 = vld [vmem:[%s1 + $0x558] sm:$0xf]
    %v401 = vld [vmem:[%s1 + $0x55c] sm:$0xf]
    %v402 = vld [vmem:[%s1 + $0x560] sm:$0xf]
    %v403 = vld [vmem:[%s1 + $0x564] sm:$0xf]
    %v404 = vld [vmem:[%s1 + $0x568] sm:$0xf]
    %v405 = vld [vmem:[%s1 + $0x56c] sm:$0xf]
    %v406 = vld [vmem:[%s1 + $0x570] sm:$0xf]
    %v407 = vld [vmem:[%s1 + $0x574] sm:$0xf]
    %v408 = vld [vmem:[%s1 + $0x578] sm:$0xf]
    %v409 = vld [vmem:[%s1 + $0x57c] sm:$0xf]
    %v410 = vld [vmem:[%s1 + $0x580] sm:$0xf]
    %v411 = vld [vmem:[%s1 + $0x584] sm:$0xf]
    %v412 = vld [vmem:[%s1 + $0x588] sm:$0xf]
    %v413 = vld [vmem:[%s1 + $0x58c] sm:$0xf]
    %v414 = vld [vmem:[%s1 + $0x590] sm:$0xf]
    %v415 = vld [vmem:[%s1 + $0x594] sm:$0xf]
    %v416 = vld [vmem:[%s1 + $0x598] sm:$0xf]
    %v417 = vld [vmem:[%s1 + $0x59c] sm:$0xf]
    %v418 = vld [vmem:[%s1 + $0x5a0] sm:$0xf]
    %v419 = vld [vmem:[%s1 + $0x5a4] sm:$0xf]
    %v420 = vld [vmem:[%s1 + $0x5a8] sm:$0xf]
    %v421 = vld [vmem:[%s1 + $0x5ac] sm:$0xf]
    %v422 = vld [vmem:[%s1 + $0x5b0] sm:$0xf]
    %v423 = vld [vmem:[%s1 + $0x5b4] sm:$0xf]
    %v424 = vld [vmem:[%s1 + $0x5b8] sm:$0xf]
    %v425 = vld [vmem:[%s1 + $0x5bc] sm:$0xf]
    %v426 = vld [vmem:[%s1 + $0x5c0] sm:$0xf]
    %v427 = vld [vmem:[%s1 + $0x5c4] sm:$0xf]
    %v428 = vld [vmem:[%s1 + $0x5c8] sm:$0xf]
    %v429 = vld [vmem:[%s1 + $0x5cc] sm:$0xf]
    %v430 = vld [vmem:[%s1 + $0x5d0] sm:$0xf]
    %v431 = vld [vmem:[%s1 + $0x5d4] sm:$0xf]
    %v432 = vld [vmem:[%s1 + $0x5d8] sm:$0xf]
    %v433 = vld [vmem:[%s1 + $0x5dc] sm:$0xf]
    %v434 = vld [vmem:[%s1 + $0x5e0] sm:$0xf]
    %v435 = vld [vmem:[%s1 + $0x5e4] sm:$0xf]
    %v436 = vld [vmem:[%s1 + $0x5e8] sm:$0xf]
    %v437 = vld [vmem:[%s1 + $0x5ec] sm:$0xf]
    %v438 = vld [vmem:[%s1 + $0x5f0] sm:$0xf]
    %v439 = vld [vmem:[%s1 + $0x5f4] sm:$0xf]
    %v440 = vld [vmem:[%s1 + $0x5f8] sm:$0xf]
    %v441 = vld [vmem:[%s1 + $0x5fc] sm:$0xf]
    %v442 = vld [vmem:[%s1 + $0x600] sm:$0xf]
    %v443 = vld [vmem:[%s1 + $0x604] sm:$0xf]
    %v444 = vld [vmem:[%s1 + $0x608] sm:$0xf]
    %v445 = vld [vmem:[%s1 + $0x60c] sm:$0xf]
    %v446 = vld [vmem:[%s1 + $0x610] sm:$0xf]
    %v447 = vld [vmem:[%s1 + $0x614] sm:$0xf]
    %v448 = vld [vmem:[%s1 + $0x618] sm:$0xf]
    %v449 = vld [vmem:[%s1 + $0x61c] sm:$0xf]
    %v450 = vld [vmem:[%s1 + $0x620] sm:$0xf]
    %v451 = vld [vmem:[%s1 + $0x624] sm:$0xf]
    %v452 = vld [vmem:[%s1 + $0x628] sm:$0xf]
    %v453 = vld [vmem:[%s1 + $0x62c] sm:$0xf]
    %v454 = vld [vmem:[%s1 + $0x630] sm:$0xf]
    %v455 = vld [vmem:[%s1 + $0x634] sm:$0xf]
    %v456 = vld [vmem:[%s1 + $0x638] sm:$0xf]
    %v457 = vld [vmem:[%s1 + $0x63c] sm:$0xf]
    %v458 = vld [vmem:[%s1 + $0x640] sm:$0xf]
    %v459 = vld [vmem:[%s1 + $0x644] sm:$0xf]
    %v460 = vld [vmem:[%s1 + $0x648] sm:$0xf]
    %v461 = vld [vmem:[%s1 + $0x64c] sm:$0xf]
    %v462 = vld [vmem:[%s1 + $0x650] sm:$0xf]
    %v463 = vld [vmem:[%s1 + $0x654] sm:$0xf]
    %v464 = vld [vmem:[%s1 + $0x658] sm:$0xf]
    %v465 = vld [vmem:[%s1 + $0x65c] sm:$0xf]
    %v466 = vld [vmem:[%s1 + $0x660] sm:$0xf]
    %v467 = vld [vmem:[%s1 + $0x664] sm:$0xf]
    %v468 = vld [vmem:[%s1 + $0x668] sm:$0xf]
    %v469 = vld [vmem:[%s1 + $0x66c] sm:$0xf]
    %v470 = vld [vmem:[%s1 + $0x670] sm:$0xf]
    %v471 = vld [vmem:[%s1 + $0x674] sm:$0xf]
    %v472 = vld [vmem:[%s1 + $0x678] sm:$0xf]
    %v473 = vld [vmem:[%s1 + $0x67c] sm:$0xf]
    %v474 = vld [vmem:[%s1 + $0x680] sm:$0xf]
    %v475 = vld [vmem:[%s1 + $0x684] sm:$0xf]
    %v476 = vld [vmem:[%s1 + $0x688] sm:$0xf]
    %v477 = vld [vmem:[%s1 + $0x68c] sm:$0xf]
    %v478 = vld [vmem:[%s1 + $0x690] sm:$0xf]
    %v479 = vld [vmem:[%s1 + $0x694] sm:$0xf]
    %v480 = vld [vmem:[%s1 + $0x698] sm:$0xf]
    %v481 = vld [vmem:[%s1 + $0x69c] sm:$0xf]
    %v482 = vld [vmem:[%s1 + $0x6a0] sm:$0xf]
    %v483 = vld [vmem:[%s1 + $0x6a4] sm:$0xf]
    %v484 = vld [vmem:[%s1 + $0x6a8] sm:$0xf]
    %v485 = vld [vmem:[%s1 + $0x6ac] sm:$0xf]
    %v486 = vld [vmem:[%s1 + $0x6b0] sm:$0xf]
    %v487 = vld [vmem:[%s1 + $0x6b4] sm:$0xf]
    %v488 = vld [vmem:[%s1 + $0x6b8] sm:$0xf]
    %v489 = vld [vmem:[%s1 + $0x6bc] sm:$0xf]
    %v490 = vld [vmem:[%s1 + $0x6c0] sm:$0xf]
    %v491 = vld [vmem:[%s1 + $0x6c4] sm:$0xf]
    %v492 = vld [vmem:[%s1 + $0x6c8] sm:$0xf]
    %v493 = vld [vmem:[%s1 + $0x6cc] sm:$0xf]
    %v494 = vld [vmem:[%s1 + $0x6d0] sm:$0xf]
    %v495 = vld [vmem:[%s1 + $0x6d4] sm:$0xf]
    %v496 = vld [vmem:[%s1 + $0x6d8] sm:$0xf]
    %v497 = vld [vmem:[%s1 + $0x6dc] sm:$0xf]
    %v498 = vld [vmem:[%s1 + $0x6e0] sm:$0xf]
    %v499 = vld [vmem:[%s1 + $0x6e4] sm:$0xf]
    %v500 = vld [vmem:[%s1 + $0x6e8] sm:$0xf]
    %v501 = vld [vmem:[%s1 + $0x6ec] sm:$0xf]
    %v502 = vld [vmem:[%s1 + $0x6f0] sm:$0xf]
    %v503 = vld [vmem:[%s1 + $0x6f4] sm:$0xf]
    %v504 = vld [vmem:[%s1 + $0x6f8] sm:$0xf]
    %v505 = vld [vmem:[%s1 + $0x6fc] sm:$0xf]
    %v506 = vld [vmem:[%s1 + $0x700] sm:$0xf]
    %v507 = vld [vmem:[%s1 + $0x704] sm:$0xf]
    %v508 = vld [vmem:[%s1 + $0x708] sm:$0xf]
    %v509 = vld [vmem:[%s1 + $0x70c] sm:$0xf]
    %v510 = vld [vmem:[%s1 + $0x710] sm:$0xf]
    %v511 = vld [vmem:[%s1 + $0x714] sm:$0xf]
    %v512 = vld [vmem:[%s1 + $0x718] sm:$0xf]
    %v513 = vld [vmem:[%s1 + $0x71c] sm:$0xf]
    %v514 = vld [vmem:[%s1 + $0x720] sm:$0xf]
    %v515 = vld [vmem:[%s1 + $0x724] sm:$0xf]
    %v516 = vld [vmem:[%s1 + $0x728] sm:$0xf]
    %v517 = vld [vmem:[%s1 + $0x72c] sm:$0xf]
    %v518 = vld [vmem:[%s1 + $0x730] sm:$0xf]
    %v519 = vld [vmem:[%s1 + $0x734] sm:$0xf]
    %v520 = vld [vmem:[%s1 + $0x738] sm:$0xf]
    %v521 = vld [vmem:[%s1 + $0x73c] sm:$0xf]
    %v522 = vld [vmem:[%s1 + $0x740] sm:$0xf]
    %v523 = vld [vmem:[%s1 + $0x744] sm:$0xf]
    %v524 = vld [vmem:[%s1 + $0x748] sm:$0xf]
    %v525 = vld [vmem:[%s1 + $0x74c] sm:$0xf]
    %v526 = vld [vmem:[%s1 + $0x750] sm:$0xf]
    %v527 = vld [vmem:[%s1 + $0x754] sm:$0xf]
    %v528 = vld [vmem:[%s1 + $0x758] sm:$0xf]
    %v529 = vld [vmem:[%s1 + $0x75c] sm:$0xf]
    %v530 = vld [vmem:[%s1 + $0x760] sm:$0xf]
    %v531 = vld [vmem:[%s1 + $0x764] sm:$0xf]
    %v532 = vld [vmem:[%s1 + $0x768] sm:$0xf]
    %v533 = vld [vmem:[%s1 + $0x76c] sm:$0xf]
    %v534 = vld [vmem:[%s1 + $0x770] sm:$0xf]
    %v535 = vld [vmem:[%s1 + $0x774] sm:$0xf]
    %v536 = vld [vmem:[%s1 + $0x778] sm:$0xf]
    %v537 = vld [vmem:[%s1 + $0x77c] sm:$0xf]
    %v538 = vld [vmem:[%s1 + $0x780] sm:$0xf]
    %v539 = vld [vmem:[%s1 + $0x784] sm:$0xf]
    %v540 = vld [vmem:[%s1 + $0x788] sm:$0xf]
    %v541 = vld [vmem:[%s1 + $0x78c] sm:$0xf]
    %v542 = vld [vmem:[%s1 + $0x790] sm:$0xf]
    %v543 = vld [vmem:[%s1 + $0x794] sm:$0xf]
    %v544 = vld [vmem:[%s1 + $0x798] sm:$0xf]
    %v545 = vld [vmem:[%s1 + $0x79c] sm:$0xf]
    %v546 = vld [vmem:[%s1 + $0x7a0] sm:$0xf]
    %v547 = vld [vmem:[%s1 + $0x7a4] sm:$0xf]
    %v548 = vld [vmem:[%s1 + $0x7a8] sm:$0xf]
    %v549 = vld [vmem:[%s1 + $0x7ac] sm:$0xf]
    %v550 = vld [vmem:[%s1 + $0x7b0] sm:$0xf]
    %v551 = vld [vmem:[%s1 + $0x7b4] sm:$0xf]
    %v552 = vld [vmem:[%s1 + $0x7b8] sm:$0xf]
    %v553 = vld [vmem:[%s1 + $0x7bc] sm:$0xf]
    %v554 = vld [vmem:[%s1 + $0x7c0] sm:$0xf]
    %v555 = vld [vmem:[%s1 + $0x7c4] sm:$0xf]
    %v556 = vld [vmem:[%s1 + $0x7c8] sm:$0xf]
    %v557 = vld [vmem:[%s1 + $0x7cc] sm:$0xf]
    %v558 = vld [vmem:[%s1 + $0x7d0] sm:$0xf]
    %v559 = vld [vmem:[%s1 + $0x7d4] sm:$0xf]
    %v560 = vld [vmem:[%s1 + $0x7d8] sm:$0xf]
    %v561 = vld [vmem:[%s1 + $0x7dc] sm:$0xf]
    %v562 = vld [vmem:[%s1 + $0x7e0] sm:$0xf]
    %v563 = vld [vmem:[%s1 + $0x7e4] sm:$0xf]
    %v564 = vld [vmem:[%s1 + $0x7e8] sm:$0xf]
    %v565 = vld [vmem:[%s1 + $0x7ec] sm:$0xf]
    %v566 = vld [vmem:[%s1 + $0x7f0] sm:$0xf]
    %v567 = vld [vmem:[%s1 + $0x7f4] sm:$0xf]
    %v568 = vld [vmem:[%s1 + $0x7f8] sm:$0xf]
    %v569 = vld [vmem:[%s1 + $0x7fc] sm:$0xf]
    %v570 = vld [vmem:[%s1 + $0x800] sm:$0xf]
    %v571 = vld [vmem:[%s1 + $0x804] sm:$0xf]
    %v572 = vld [vmem:[%s1 + $0x808] sm:$0xf]
    %v573 = vld [vmem:[%s1 + $0x80c] sm:$0xf]
    %v574 = vld [vmem:[%s1 + $0x810] sm:$0xf]
    %v575 = vld [vmem:[%s1 + $0x814] sm:$0xf]
    %v576 = vld [vmem:[%s1 + $0x818] sm:$0xf]
    %v577 = vld [vmem:[%s1 + $0x81c] sm:$0xf]
    %v578 = vld [vmem:[%s1 + $0x820] sm:$0xf]
    %v579 = vld [vmem:[%s1 + $0x824] sm:$0xf]
    %v580 = vld [vmem:[%s1 + $0x828] sm:$0xf]
    %v581 = vld [vmem:[%s1 + $0x82c] sm:$0xf]
    %v582 = vld [vmem:[%s1 + $0x830] sm:$0xf]
    %v583 = vld [vmem:[%s1 + $0x834] sm:$0xf]
    %v584 = vld [vmem:[%s1 + $0x838] sm:$0xf]
    %v585 = vld [vmem:[%s1 + $0x83c] sm:$0xf]
    %v586 = vld [vmem:[%s1 + $0x840] sm:$0xf]
    %v587 = vld [vmem:[%s1 + $0x844] sm:$0xf]
    %v588 = vld [vmem:[%s1 + $0x848] sm:$0xf]
    %v589 = vld [vmem:[%s1 + $0x84c] sm:$0xf]
    %v590 = vld [vmem:[%s1 + $0x850] sm:$0xf]
    %v591 = vld [vmem:[%s1 + $0x854] sm:$0xf]
    %v592 = vld [vmem:[%s1 + $0x858] sm:$0xf]
    %v593 = vld [vmem:[%s1 + $0x85c] sm:$0xf]
    %v594 = vld [vmem:[%s1 + $0x860] sm:$0xf]
    %v595 = vld [vmem:[%s1 + $0x864] sm:$0xf]
    %v596 = vld [vmem:[%s1 + $0x868] sm:$0xf]
    %v597 = vld [vmem:[%s1 + $0x86c] sm:$0xf]
    %v598 = vld [vmem:[%s1 + $0x870] sm:$0xf]
    %v599 = vld [vmem:[%s1 + $0x874] sm:$0xf]
    %v600 = vld [vmem:[%s1 + $0x878] sm:$0xf]
    %v601 = vld [vmem:[%s1 + $0x87c] sm:$0xf]
    %v602 = vld [vmem:[%s1 + $0x880] sm:$0xf]
    %v603 = vld [vmem:[%s1 + $0x884] sm:$0xf]
    %v604 = vld [vmem:[%s1 + $0x888] sm:$0xf]
    %v605 = vld [vmem:[%s1 + $0x88c] sm:$0xf]
    %v606 = vld [vmem:[%s1 + $0x890] sm:$0xf]
    %v607 = vld [vmem:[%s1 + $0x894] sm:$0xf]
    %v608 = vld [vmem:[%s1 + $0x898] sm:$0xf]
    %v609 = vld [vmem:[%s1 + $0x89c] sm:$0xf]
    %v610 = vld [vmem:[%s1 + $0x8a0] sm:$0xf]
    %v611 = vld [vmem:[%s1 + $0x8a4] sm:$0xf]
    %v612 = vld [vmem:[%s1 + $0x8a8] sm:$0xf]
    %v613 = vld [vmem:[%s1 + $0x8ac] sm:$0xf]
    %v614 = vld [vmem:[%s1 + $0x8b0] sm:$0xf]
    %v615 = vld [vmem:[%s1 + $0x8b4] sm:$0xf]
    %v616 = vld [vmem:[%s1 + $0x8b8] sm:$0xf]
    %v617 = vld [vmem:[%s1 + $0x8bc] sm:$0xf]
    %v618 = vld [vmem:[%s1 + $0x8c0] sm:$0xf]
    %v619 = vld [vmem:[%s1 + $0x8c4] sm:$0xf]
    %v620 = vld [vmem:[%s1 + $0x8c8] sm:$0xf]
    %v621 = vld [vmem:[%s1 + $0x8cc] sm:$0xf]
    %v622 = vld [vmem:[%s1 + $0x8d0] sm:$0xf]
    %v623 = vld [vmem:[%s1 + $0x8d4] sm:$0xf]
    %v624 = vld [vmem:[%s1 + $0x8d8] sm:$0xf]
    %v625 = vld [vmem:[%s1 + $0x8dc] sm:$0xf]
    %v626 = vld [vmem:[%s1 + $0x8e0] sm:$0xf]
    %v627 = vld [vmem:[%s1 + $0x8e4] sm:$0xf]
    %v628 = vld [vmem:[%s1 + $0x8e8] sm:$0xf]
    %v629 = vld [vmem:[%s1 + $0x8ec] sm:$0xf]
    %v630 = vld [vmem:[%s1 + $0x8f0] sm:$0xf]
    %v631 = vld [vmem:[%s1 + $0x8f4] sm:$0xf]
    %v632 = vld [vmem:[%s1 + $0x8f8] sm:$0xf]
    %v633 = vld [vmem:[%s1 + $0x8fc] sm:$0xf]
    %v634 = vld [vmem:[%s1 + $0x900] sm:$0xf]
    %v635 = vld [vmem:[%s1 + $0x904] sm:$0xf]
    %v636 = vld [vmem:[%s1 + $0x908] sm:$0xf]
    %v637 = vld [vmem:[%s1 + $0x90c] sm:$0xf]
    %v638 = vld [vmem:[%s1 + $0x910] sm:$0xf]
    %v639 = vld [vmem:[%s1 + $0x914] sm:$0xf]
    %v640 = vld [vmem:[%s1 + $0x918] sm:$0xf]
    %v641 = vld [vmem:[%s1 + $0x91c] sm:$0xf]
    %v642 = vld [vmem:[%s1 + $0x920] sm:$0xf]
    %v643 = vld [vmem:[%s1 + $0x924] sm:$0xf]
    %v644 = vld [vmem:[%s1 + $0x928] sm:$0xf]
    %v645 = vld [vmem:[%s1 + $0x92c] sm:$0xf]
    %v646 = vld [vmem:[%s1 + $0x930] sm:$0xf]
    %v647 = vld [vmem:[%s1 + $0x934] sm:$0xf]
    %v648 = vld [vmem:[%s1 + $0x938] sm:$0xf]
    %v649 = vld [vmem:[%s1 + $0x93c] sm:$0xf]
    %v650 = vld [vmem:[%s1 + $0x940] sm:$0xf]
    %v651 = vld [vmem:[%s1 + $0x944] sm:$0xf]
    %v652 = vld [vmem:[%s1 + $0x948] sm:$0xf]
    %v653 = vld [vmem:[%s1 + $0x94c] sm:$0xf]
    %v654 = vld [vmem:[%s1 + $0x950] sm:$0xf]
    %v655 = vld [vmem:[%s1 + $0x954] sm:$0xf]
    %v656 = vld [vmem:[%s1 + $0x958] sm:$0xf]
    %v657 = vld [vmem:[%s1 + $0x95c] sm:$0xf]
    %v658 = vld [vmem:[%s1 + $0x960] sm:$0xf]
    %v659 = vld [vmem:[%s1 + $0x964] sm:$0xf]
    %v660 = vld [vmem:[%s1 + $0x968] sm:$0xf]
    %v661 = vld [vmem:[%s1 + $0x96c] sm:$0xf]
    %v662 = vld [vmem:[%s1 + $0x970] sm:$0xf]
    %v663 = vld [vmem:[%s1 + $0x974] sm:$0xf]
    %v664 = vld [vmem:[%s1 + $0x978] sm:$0xf]
    %v665 = vld [vmem:[%s1 + $0x97c] sm:$0xf]
    %v666 = vld [vmem:[%s1 + $0x980] sm:$0xf]
    %v667 = vld [vmem:[%s1 + $0x984] sm:$0xf]
    %v668 = vld [vmem:[%s1 + $0x988] sm:$0xf]
    %v669 = vld [vmem:[%s1 + $0x98c] sm:$0xf]
    %v670 = vld [vmem:[%s1 + $0x990] sm:$0xf]
    %v671 = vld [vmem:[%s1 + $0x994] sm:$0xf]
    %v672 = vld [vmem:[%s1 + $0x998] sm:$0xf]
    %v673 = vld [vmem:[%s1 + $0x99c] sm:$0xf]
    %v674 = vld [vmem:[%s1 + $0x9a0] sm:$0xf]
    %v675 = vld [vmem:[%s1 + $0x9a4] sm:$0xf]
    %v676 = vld [vmem:[%s1 + $0x9a8] sm:$0xf]
    %v677 = vld [vmem:[%s1 + $0x9ac] sm:$0xf]
    %v678 = vld [vmem:[%s1 + $0x9b0] sm:$0xf]
    %v679 = vld [vmem:[%s1 + $0x9b4] sm:$0xf]
    %v680 = vld [vmem:[%s1 + $0x9b8] sm:$0xf]
    %v681 = vld [vmem:[%s1 + $0x9bc] sm:$0xf]
    %v682 = vld [vmem:[%s1 + $0x9c0] sm:$0xf]
    %v683 = vld [vmem:[%s1 + $0x9c4] sm:$0xf]
    %v684 = vld [vmem:[%s1 + $0x9c8] sm:$0xf]
    %v685 = vld [vmem:[%s1 + $0x9cc] sm:$0xf]
    %v686 = vld [vmem:[%s1 + $0x9d0] sm:$0xf]
    %v687 = vld [vmem:[%s1 + $0x9d4] sm:$0xf]
    %v688 = vld [vmem:[%s1 + $0x9d8] sm:$0xf]
    %v689 = vld [vmem:[%s1 + $0x9dc] sm:$0xf]
    %v690 = vld [vmem:[%s1 + $0x9e0] sm:$0xf]
    %v691 = vld [vmem:[%s1 + $0x9e4] sm:$0xf]
    %v692 = vld [vmem:[%s1 + $0x9e8] sm:$0xf]
    %v693 = vld [vmem:[%s1 + $0x9ec] sm:$0xf]
    %v694 = vld [vmem:[%s1 + $0x9f0] sm:$0xf]
    %v695 = vld [vmem:[%s1 + $0x9f4] sm:$0xf]
    %v696 = vld [vmem:[%s1 + $0x9f8] sm:$0xf]
    %v697 = vld [vmem:[%s1 + $0x9fc] sm:$0xf]
    %v698 = vld [vmem:[%s1 + $0xa00] sm:$0xf]
    %v699 = vld [vmem:[%s1 + $0xa04] sm:$0xf]
    %v700 = vld [vmem:[%s1 + $0xa08] sm:$0xf]
    %v701 = vld [vmem:[%s1 + $0xa0c] sm:$0xf]
    %v702 = vld [vmem:[%s1 + $0xa10] sm:$0xf]
    %v703 = vld [vmem:[%s1 + $0xa14] sm:$0xf]
    %v704 = vld [vmem:[%s1 + $0xa18] sm:$0xf]
    %v705 = vld [vmem:[%s1 + $0xa1c] sm:$0xf]
    %v706 = vld [vmem:[%s1 + $0xa20] sm:$0xf]
    %v707 = vld [vmem:[%s1 + $0xa24] sm:$0xf]
    %v708 = vld [vmem:[%s1 + $0xa28] sm:$0xf]
    %v709 = vld [vmem:[%s1 + $0xa2c] sm:$0xf]
    %v710 = vld [vmem:[%s1 + $0xa30] sm:$0xf]
    %v711 = vld [vmem:[%s1 + $0xa34] sm:$0xf]
    %v712 = vld [vmem:[%s1 + $0xa38] sm:$0xf]
    %v713 = vld [vmem:[%s1 + $0xa3c] sm:$0xf]
    %v714 = vld [vmem:[%s1 + $0xa40] sm:$0xf]
    %v715 = vld [vmem:[%s1 + $0xa44] sm:$0xf]
    %v716 = vld [vmem:[%s1 + $0xa48] sm:$0xf]
    %v717 = vld [vmem:[%s1 + $0xa4c] sm:$0xf]
    %v718 = vld [vmem:[%s1 + $0xa50] sm:$0xf]
    %v719 = vld [vmem:[%s1 + $0xa54] sm:$0xf]
    %v720 = vld [vmem:[%s1 + $0xa58] sm:$0xf]
    %v721 = vld [vmem:[%s1 + $0xa5c] sm:$0xf]
    %v722 = vld [vmem:[%s1 + $0xa60] sm:$0xf]
    %v723 = vld [vmem:[%s1 + $0xa64] sm:$0xf]
    %v724 = vld [vmem:[%s1 + $0xa68] sm:$0xf]
    %v725 = vld [vmem:[%s1 + $0xa6c] sm:$0xf]
    %v726 = vld [vmem:[%s1 + $0xa70] sm:$0xf]
    %v727 = vld [vmem:[%s1 + $0xa74] sm:$0xf]
    %v728 = vld [vmem:[%s1 + $0xa78] sm:$0xf]
    %v729 = vld [vmem:[%s1 + $0xa7c] sm:$0xf]
    %v730 = vld [vmem:[%s1 + $0xa80] sm:$0xf]
    %v731 = vld [vmem:[%s1 + $0xa84] sm:$0xf]
    %v732 = vld [vmem:[%s1 + $0xa88] sm:$0xf]
    %v733 = vld [vmem:[%s1 + $0xa8c] sm:$0xf]
    %v734 = vld [vmem:[%s1 + $0xa90] sm:$0xf]
    %v735 = vld [vmem:[%s1 + $0xa94] sm:$0xf]
    %v736 = vld [vmem:[%s1 + $0xa98] sm:$0xf]
    %v737 = vld [vmem:[%s1 + $0xa9c] sm:$0xf]
    %v738 = vld [vmem:[%s1 + $0xaa0] sm:$0xf]
    %v739 = vld [vmem:[%s1 + $0xaa4] sm:$0xf]
    %v740 = vld [vmem:[%s1 + $0xaa8] sm:$0xf]
    %v741 = vld [vmem:[%s1 + $0xaac] sm:$0xf]
    %v742 = vld [vmem:[%s1 + $0xab0] sm:$0xf]
    %v743 = vld [vmem:[%s1 + $0xab4] sm:$0xf]
    %v744 = vld [vmem:[%s1 + $0xab8] sm:$0xf]
    %v745 = vld [vmem:[%s1 + $0xabc] sm:$0xf]
    %v746 = vld [vmem:[%s1 + $0xac0] sm:$0xf]
    %v747 = vld [vmem:[%s1 + $0xac4] sm:$0xf]
    %v748 = vld [vmem:[%s1 + $0xac8] sm:$0xf]
    %v749 = vld [vmem:[%s1 + $0xacc] sm:$0xf]
    %v750 = vld [vmem:[%s1 + $0xad0] sm:$0xf]
    %v751 = vld [vmem:[%s1 + $0xad4] sm:$0xf]
    %v752 = vld [vmem:[%s1 + $0xad8] sm:$0xf]
    %v753 = vld [vmem:[%s1 + $0xadc] sm:$0xf]
    %v754 = vld [vmem:[%s1 + $0xae0] sm:$0xf]
    %v755 = vld [vmem:[%s1 + $0xae4] sm:$0xf]
    %v756 = vld [vmem:[%s1 + $0xae8] sm:$0xf]
    %v757 = vld [vmem:[%s1 + $0xaec] sm:$0xf]
    %v758 = vld [vmem:[%s1 + $0xaf0] sm:$0xf]
    %v759 = vld [vmem:[%s1 + $0xaf4] sm:$0xf]
    %v760 = vld [vmem:[%s1 + $0xaf8] sm:$0xf]
    %v761 = vld [vmem:[%s1 + $0xafc] sm:$0xf]
    %v762 = vld [vmem:[%s1 + $0xb00] sm:$0xf]
    %v763 = vld [vmem:[%s1 + $0xb04] sm:$0xf]
    %v764 = vld [vmem:[%s1 + $0xb08] sm:$0xf]
    %v765 = vld [vmem:[%s1 + $0xb0c] sm:$0xf]
    %v766 = vld [vmem:[%s1 + $0xb10] sm:$0xf]
    %v767 = vld [vmem:[%s1 + $0xb14] sm:$0xf]
    %v768 = vld [vmem:[%s1 + $0xb18] sm:$0xf]
    %v769 = vld [vmem:[%s1 + $0xb1c] sm:$0xf]
    %v770 = vld [vmem:[%s1 + $0xb20] sm:$0xf]
    %v771 = vld [vmem:[%s1 + $0xb24] sm:$0xf]
    %v772 = vld [vmem:[%s1 + $0xb28] sm:$0xf]
    %v773 = vld [vmem:[%s1 + $0xb2c] sm:$0xf]
    %v774 = vld [vmem:[%s1 + $0xb30] sm:$0xf]
    %v775 = vld [vmem:[%s1 + $0xb34] sm:$0xf]
    %v776 = vld [vmem:[%s1 + $0xb38] sm:$0xf]
    %v777 = vld [vmem:[%s1 + $0xb3c] sm:$0xf]
    %v778 = vld [vmem:[%s1 + $0xb40] sm:$0xf]
    %v779 = vld [vmem:[%s1 + $0xb44] sm:$0xf]
    %v780 = vld [vmem:[%s1 + $0xb48] sm:$0xf]
    %v781 = vld [vmem:[%s1 + $0xb4c] sm:$0xf]
    %v782 = vld [vmem:[%s1 + $0xb50] sm:$0xf]
    %v783 = vld [vmem:[%s1 + $0xb54] sm:$0xf]
    %v784 = vld [vmem:[%s1 + $0xb58] sm:$0xf]
    %v785 = vld [vmem:[%s1 + $0xb5c] sm:$0xf]
    %v786 = vld [vmem:[%s1 + $0xb60] sm:$0xf]
    %v787 = vld [vmem:[%s1 + $0xb64] sm:$0xf]
    %v788 = vld [vmem:[%s1 + $0xb68] sm:$0xf]
    %v789 = vld [vmem:[%s1 + $0xb6c] sm:$0xf]
    %v790 = vld [vmem:[%s1 + $0xb70] sm:$0xf]
    %v791 = vld [vmem:[%s1 + $0xb74] sm:$0xf]
    %v792 = vld [vmem:[%s1 + $0xb78] sm:$0xf]
    %v793 = vld [vmem:[%s1 + $0xb7c] sm:$0xf]
    %v794 = vld [vmem:[%s1 + $0xb80] sm:$0xf]
    %v795 = vld [vmem:[%s1 + $0xb84] sm:$0xf]
    %v796 = vld [vmem:[%s1 + $0xb88] sm:$0xf]
    %v797 = vld [vmem:[%s1 + $0xb8c] sm:$0xf]
    %v798 = vld [vmem:[%s1 + $0xb90] sm:$0xf]
    %v799 = vld [vmem:[%s1 + $0xb94] sm:$0xf]
    %v800 = vld [vmem:[%s1 + $0xb98] sm:$0xf]
    %v801 = vld [vmem:[%s1 + $0xb9c] sm:$0xf]
    %v802 = vld [vmem:[%s1 + $0xba0] sm:$0xf]
    %v803 = vld [vmem:[%s1 + $0xba4] sm:$0xf]
    %v804 = vld [vmem:[%s1 + $0xba8] sm:$0xf]
    %v805 = vld [vmem:[%s1 + $0xbac] sm:$0xf]
    %v806 = vld [vmem:[%s1 + $0xbb0] sm:$0xf]
    %v807 = vld [vmem:[%s1 + $0xbb4] sm:$0xf]
    %v808 = vld [vmem:[%s1 + $0xbb8] sm:$0xf]
    %v809 = vld [vmem:[%s1 + $0xbbc] sm:$0xf]
    %v810 = vld [vmem:[%s1 + $0xbc0] sm:$0xf]
    %v811 = vld [vmem:[%s1 + $0xbc4] sm:$0xf]
    %v812 = vld [vmem:[%s1 + $0xbc8] sm:$0xf]
    %v813 = vld [vmem:[%s1 + $0xbcc] sm:$0xf]
    %v814 = vld [vmem:[%s1 + $0xbd0] sm:$0xf]
    %v815 = vld [vmem:[%s1 + $0xbd4] sm:$0xf]
    %v816 = vld [vmem:[%s1 + $0xbd8] sm:$0xf]
    %v817 = vld [vmem:[%s1 + $0xbdc] sm:$0xf]
    %v818 = vld [vmem:[%s1 + $0xbe0] sm:$0xf]
    %v819 = vld [vmem:[%s1 + $0xbe4] sm:$0xf]
    %v820 = vld [vmem:[%s1 + $0xbe8] sm:$0xf]
    %v821 = vld [vmem:[%s1 + $0xbec] sm:$0xf]
    %v822 = vld [vmem:[%s1 + $0xbf0] sm:$0xf]
    %v823 = vld [vmem:[%s1 + $0xbf4] sm:$0xf]
    %v824 = vld [vmem:[%s1 + $0xbf8] sm:$0xf]
    %v825 = vld [vmem:[%s1 + $0xbfc] sm:$0xf]
    %v826 = vld [vmem:[%s1 + $0xc00] sm:$0xf]
    %v827 = vld [vmem:[%s1 + $0xc04] sm:$0xf]
    %v828 = vld [vmem:[%s1 + $0xc08] sm:$0xf]
    %v829 = vld [vmem:[%s1 + $0xc0c] sm:$0xf]
    %v830 = vld [vmem:[%s1 + $0xc10] sm:$0xf]
    %v831 = vld [vmem:[%s1 + $0xc14] sm:$0xf]
    %v832 = vld [vmem:[%s1 + $0xc18] sm:$0xf]
    %v833 = vld [vmem:[%s1 + $0xc1c] sm:$0xf]
    %v834 = vld [vmem:[%s1 + $0xc20] sm:$0xf]
    %v835 = vld [vmem:[%s1 + $0xc24] sm:$0xf]
    %v836 = vld [vmem:[%s1 + $0xc28] sm:$0xf]
    %v837 = vld [vmem:[%s1 + $0xc2c] sm:$0xf]
    %v838 = vld [vmem:[%s1 + $0xc30] sm:$0xf]
    %v839 = vld [vmem:[%s1 + $0xc34] sm:$0xf]
    %v840 = vld [vmem:[%s1 + $0xc38] sm:$0xf]
    %v841 = vld [vmem:[%s1 + $0xc3c] sm:$0xf]
    %v842 = vld [vmem:[%s1 + $0xc40] sm:$0xf]
    %v843 = vld [vmem:[%s1 + $0xc44] sm:$0xf]
    %v844 = vld [vmem:[%s1 + $0xc48] sm:$0xf]
    %v845 = vld [vmem:[%s1 + $0xc4c] sm:$0xf]
    %v846 = vld [vmem:[%s1 + $0xc50] sm:$0xf]
    %v847 = vld [vmem:[%s1 + $0xc54] sm:$0xf]
    %v848 = vld [vmem:[%s1 + $0xc58] sm:$0xf]
    %v849 = vld [vmem:[%s1 + $0xc5c] sm:$0xf]
    %v850 = vld [vmem:[%s1 + $0xc60] sm:$0xf]
    %v851 = vld [vmem:[%s1 + $0xc64] sm:$0xf]
    %v852 = vld [vmem:[%s1 + $0xc68] sm:$0xf]
    %v853 = vld [vmem:[%s1 + $0xc6c] sm:$0xf]
    %v854 = vld [vmem:[%s1 + $0xc70] sm:$0xf]
    %v855 = vld [vmem:[%s1 + $0xc74] sm:$0xf]
    %v856 = vld [vmem:[%s1 + $0xc78] sm:$0xf]
    %v857 = vld [vmem:[%s1 + $0xc7c] sm:$0xf]
    %v858 = vld [vmem:[%s1 + $0xc80] sm:$0xf]
    %v859 = vld [vmem:[%s1 + $0xc84] sm:$0xf]
    %v860 = vld [vmem:[%s1 + $0xc88] sm:$0xf]
    %v861 = vld [vmem:[%s1 + $0xc8c] sm:$0xf]
    %v862 = vld [vmem:[%s1 + $0xc90] sm:$0xf]
    %v863 = vld [vmem:[%s1 + $0xc94] sm:$0xf]
    %v864 = vld [vmem:[%s1 + $0xc98] sm:$0xf]
    %v865 = vld [vmem:[%s1 + $0xc9c] sm:$0xf]
    %v866 = vld [vmem:[%s1 + $0xca0] sm:$0xf]
    %v867 = vld [vmem:[%s1 + $0xca4] sm:$0xf]
    %v868 = vld [vmem:[%s1 + $0xca8] sm:$0xf]
    %v869 = vld [vmem:[%s1 + $0xcac] sm:$0xf]
    %v870 = vld [vmem:[%s1 + $0xcb0] sm:$0xf]
    %v871 = vld [vmem:[%s1 + $0xcb4] sm:$0xf]
    %v872 = vld [vmem:[%s1 + $0xcb8] sm:$0xf]
    %v873 = vld [vmem:[%s1 + $0xcbc] sm:$0xf]
    %v874 = vld [vmem:[%s1 + $0xcc0] sm:$0xf]
    %v875 = vld [vmem:[%s1 + $0xcc4] sm:$0xf]
    %v876 = vld [vmem:[%s1 + $0xcc8] sm:$0xf]
    %v877 = vld [vmem:[%s1 + $0xccc] sm:$0xf]
    %v878 = vld [vmem:[%s1 + $0xcd0] sm:$0xf]
    %v879 = vld [vmem:[%s1 + $0xcd4] sm:$0xf]
    %v880 = vld [vmem:[%s1 + $0xcd8] sm:$0xf]
    %v881 = vld [vmem:[%s1 + $0xcdc] sm:$0xf]
    %v882 = vld [vmem:[%s1 + $0xce0] sm:$0xf]
    %v883 = vld [vmem:[%s1 + $0xce4] sm:$0xf]
    %v884 = vld [vmem:[%s1 + $0xce8] sm:$0xf]
    %v885 = vld [vmem:[%s1 + $0xcec] sm:$0xf]
    %v886 = vld [vmem:[%s1 + $0xcf0] sm:$0xf]
    %v887 = vld [vmem:[%s1 + $0xcf4] sm:$0xf]
    %v888 = vld [vmem:[%s1 + $0xcf8] sm:$0xf]
    %v889 = vld [vmem:[%s1 + $0xcfc] sm:$0xf]
    %v890 = vld [vmem:[%s1 + $0xd00] sm:$0xf]
    %v891 = vld [vmem:[%s1 + $0xd04] sm:$0xf]
    %v892 = vld [vmem:[%s1 + $0xd08] sm:$0xf]
    %v893 = vld [vmem:[%s1 + $0xd0c] sm:$0xf]
    %v894 = vld [vmem:[%s1 + $0xd10] sm:$0xf]
    %v895 = vld [vmem:[%s1 + $0xd14] sm:$0xf]
    %v896 = vld [vmem:[%s1 + $0xd18] sm:$0xf]
    %v897 = vld [vmem:[%s1 + $0xd1c] sm:$0xf]
    %v898 = vld [vmem:[%s1 + $0xd20] sm:$0xf]
    %v899 = vld [vmem:[%s1 + $0xd24] sm:$0xf]
    %v900 = vld [vmem:[%s1 + $0xd28] sm:$0xf]
    %v901 = vld [vmem:[%s1 + $0xd2c] sm:$0xf]
    %v902 = vld [vmem:[%s1 + $0xd30] sm:$0xf]
    %v903 = vld [vmem:[%s1 + $0xd34] sm:$0xf]
    %v904 = vld [vmem:[%s1 + $0xd38] sm:$0xf]
    %v905 = vld [vmem:[%s1 + $0xd3c] sm:$0xf]
    %v906 = vld [vmem:[%s1 + $0xd40] sm:$0xf]
    %v907 = vld [vmem:[%s1 + $0xd44] sm:$0xf]
    %v908 = vld [vmem:[%s1 + $0xd48] sm:$0xf]
    %v909 = vld [vmem:[%s1 + $0xd4c] sm:$0xf]
    %v910 = vld [vmem:[%s1 + $0xd50] sm:$0xf]
    %v911 = vld [vmem:[%s1 + $0xd54] sm:$0xf]
    %v912 = vld [vmem:[%s1 + $0xd58] sm:$0xf]
    %v913 = vld [vmem:[%s1 + $0xd5c] sm:$0xf]
    %v914 = vld [vmem:[%s1 + $0xd60] sm:$0xf]
    %v915 = vld [vmem:[%s1 + $0xd64] sm:$0xf]
    %v916 = vld [vmem:[%s1 + $0xd68] sm:$0xf]
    %v917 = vld [vmem:[%s1 + $0xd6c] sm:$0xf]
    %v918 = vld [vmem:[%s1 + $0xd70] sm:$0xf]
    %v919 = vld [vmem:[%s1 + $0xd74] sm:$0xf]
    %v920 = vld [vmem:[%s1 + $0xd78] sm:$0xf]
    %v921 = vld [vmem:[%s1 + $0xd7c] sm:$0xf]
    %v922 = vld [vmem:[%s1 + $0xd80] sm:$0xf]
    %v923 = vld [vmem:[%s1 + $0xd84] sm:$0xf]
    %v924 = vld [vmem:[%s1 + $0xd88] sm:$0xf]
    %v925 = vld [vmem:[%s1 + $0xd8c] sm:$0xf]
    %v926 = vld [vmem:[%s1 + $0xd90] sm:$0xf]
    %v927 = vld [vmem:[%s1 + $0xd94] sm:$0xf]
    %v928 = vld [vmem:[%s1 + $0xd98] sm:$0xf]
    %v929 = vld [vmem:[%s1 + $0xd9c] sm:$0xf]
    %v930 = vld [vmem:[%s1 + $0xda0] sm:$0xf]
    %v931 = vld [vmem:[%s1 + $0xda4] sm:$0xf]
    %v932 = vld [vmem:[%s1 + $0xda8] sm:$0xf]
    %v933 = vld [vmem:[%s1 + $0xdac] sm:$0xf]
    %v934 = vld [vmem:[%s1 + $0xdb0] sm:$0xf]
    %v935 = vld [vmem:[%s1 + $0xdb4] sm:$0xf]
    %v936 = vld [vmem:[%s1 + $0xdb8] sm:$0xf]
    %v937 = vld [vmem:[%s1 + $0xdbc] sm:$0xf]
    %v938 = vld [vmem:[%s1 + $0xdc0] sm:$0xf]
    %v939 = vld [vmem:[%s1 + $0xdc4] sm:$0xf]
    %v940 = vld [vmem:[%s1 + $0xdc8] sm:$0xf]
    %v941 = vld [vmem:[%s1 + $0xdcc] sm:$0xf]
    %v942 = vld [vmem:[%s1 + $0xdd0] sm:$0xf]
    %v943 = vld [vmem:[%s1 + $0xdd4] sm:$0xf]
    %v944 = vld [vmem:[%s1 + $0xdd8] sm:$0xf]
    %v945 = vld [vmem:[%s1 + $0xddc] sm:$0xf]
    %v946 = vld [vmem:[%s1 + $0xde0] sm:$0xf]
    %v947 = vld [vmem:[%s1 + $0xde4] sm:$0xf]
    %v948 = vld [vmem:[%s1 + $0xde8] sm:$0xf]
    %v949 = vld [vmem:[%s1 + $0xdec] sm:$0xf]
    %v950 = vld [vmem:[%s1 + $0xdf0] sm:$0xf]
    %v951 = vld [vmem:[%s1 + $0xdf4] sm:$0xf]
    %v952 = vld [vmem:[%s1 + $0xdf8] sm:$0xf]
    %v953 = vld [vmem:[%s1 + $0xdfc] sm:$0xf]
    %v954 = vld [vmem:[%s1 + $0xe00] sm:$0xf]
    %v955 = vld [vmem:[%s1 + $0xe04] sm:$0xf]
    %v956 = vld [vmem:[%s1 + $0xe08] sm:$0xf]
    %v957 = vld [vmem:[%s1 + $0xe0c] sm:$0xf]
    %v958 = vld [vmem:[%s1 + $0xe10] sm:$0xf]
    %v959 = vld [vmem:[%s1 + $0xe14] sm:$0xf]
    %v960 = vld [vmem:[%s1 + $0xe18] sm:$0xf]
    %v961 = vld [vmem:[%s1 + $0xe1c] sm:$0xf]
    %v962 = vld [vmem:[%s1 + $0xe20] sm:$0xf]
    %v963 = vld [vmem:[%s1 + $0xe24] sm:$0xf]
    %v964 = vld [vmem:[%s1 + $0xe28] sm:$0xf]
    %v965 = vld [vmem:[%s1 + $0xe2c] sm:$0xf]
    %v966 = vld [vmem:[%s1 + $0xe30] sm:$0xf]
    %v967 = vld [vmem:[%s1 + $0xe34] sm:$0xf]
    %v968 = vld [vmem:[%s1 + $0xe38] sm:$0xf]
    %v969 = vld [vmem:[%s1 + $0xe3c] sm:$0xf]
    %v970 = vld [vmem:[%s1 + $0xe40] sm:$0xf]
    %v971 = vld [vmem:[%s1 + $0xe44] sm:$0xf]
    %v972 = vld [vmem:[%s1 + $0xe48] sm:$0xf]
    %v973 = vld [vmem:[%s1 + $0xe4c] sm:$0xf]
    %v974 = vld [vmem:[%s1 + $0xe50] sm:$0xf]
    %v975 = vld [vmem:[%s1 + $0xe54] sm:$0xf]
    %v976 = vld [vmem:[%s1 + $0xe58] sm:$0xf]
    %v977 = vld [vmem:[%s1 + $0xe5c] sm:$0xf]
    %v978 = vld [vmem:[%s1 + $0xe60] sm:$0xf]
    %v979 = vld [vmem:[%s1 + $0xe64] sm:$0xf]
    %v980 = vld [vmem:[%s1 + $0xe68] sm:$0xf]
    %v981 = vld [vmem:[%s1 + $0xe6c] sm:$0xf]
    %v982 = vld [vmem:[%s1 + $0xe70] sm:$0xf]
    %v983 = vld [vmem:[%s1 + $0xe74] sm:$0xf]
    %v984 = vld [vmem:[%s1 + $0xe78] sm:$0xf]
    %v985 = vld [vmem:[%s1 + $0xe7c] sm:$0xf]
    %v986 = vld [vmem:[%s1 + $0xe80] sm:$0xf]
    %v987 = vld [vmem:[%s1 + $0xe84] sm:$0xf]
    %v988 = vld [vmem:[%s1 + $0xe88] sm:$0xf]
    %v989 = vld [vmem:[%s1 + $0xe8c] sm:$0xf]
    %v990 = vld [vmem:[%s1 + $0xe90] sm:$0xf]
    %v991 = vld [vmem:[%s1 + $0xe94] sm:$0xf]
    %v992 = vld [vmem:[%s1 + $0xe98] sm:$0xf]
    %v993 = vld [vmem:[%s1 + $0xe9c] sm:$0xf]
    %v994 = vld [vmem:[%s1 + $0xea0] sm:$0xf]
    %v995 = vld [vmem:[%s1 + $0xea4] sm:$0xf]
    %v996 = vld [vmem:[%s1 + $0xea8] sm:$0xf]
    %v997 = vld [vmem:[%s1 + $0xeac] sm:$0xf]
    %v998 = vld [vmem:[%s1 + $0xeb0] sm:$0xf]
    %v999 = vld [vmem:[%s1 + $0xeb4] sm:$0xf]
    %v1000 = vld [vmem:[%s1 + $0xeb8] sm:$0xf]
    %v1001 = vld [vmem:[%s1 + $0xebc] sm:$0xf]
    %v1002 = vld [vmem:[%s1 + $0xec0] sm:$0xf]
    %v1003 = vld [vmem:[%s1 + $0xec4] sm:$0xf]
    %v1004 = vld [vmem:[%s1 + $0xec8] sm:$0xf]
    %v1005 = vld [vmem:[%s1 + $0xecc] sm:$0xf]
    %v1006 = vld [vmem:[%s1 + $0xed0] sm:$0xf]
    %v1007 = vld [vmem:[%s1 + $0xed4] sm:$0xf]
    %v1008 = vld [vmem:[%s1 + $0xed8] sm:$0xf]
    %v1009 = vld [vmem:[%s1 + $0xedc] sm:$0xf]
    %v1010 = vld [vmem:[%s1 + $0xee0] sm:$0xf]
    %v1011 = vld [vmem:[%s1 + $0xee4] sm:$0xf]
    %v1012 = vld [vmem:[%s1 + $0xee8] sm:$0xf]
    %v1013 = vld [vmem:[%s1 + $0xeec] sm:$0xf]
    %v1014 = vld [vmem:[%s1 + $0xef0] sm:$0xf]
    %v1015 = vld [vmem:[%s1 + $0xef4] sm:$0xf]
    %v1016 = vld [vmem:[%s1 + $0xef8] sm:$0xf]
    %v1017 = vld [vmem:[%s1 + $0xefc] sm:$0xf]
    %v1018 = vld [vmem:[%s1 + $0xf00] sm:$0xf]
    %v1019 = vld [vmem:[%s1 + $0xf04] sm:$0xf]
    %v1020 = vld [vmem:[%s1 + $0xf08] sm:$0xf]
    %v1021 = vld [vmem:[%s1 + $0xf0c] sm:$0xf]
    %v1022 = vld [vmem:[%s1 + $0xf10] sm:$0xf]
    %v1023 = vld [vmem:[%s1 + $0xf14] sm:$0xf]
    %v1024 = vld [vmem:[%s1 + $0xf18] sm:$0xf]
    %v1025 = vld [vmem:[%s1 + $0xf1c] sm:$0xf]
    %v1026 = vld [vmem:[%s1 + $0xf20] sm:$0xf]
    %v1027 = vld [vmem:[%s1 + $0xf24] sm:$0xf]
    %v1028 = vld [vmem:[%s1 + $0xf28] sm:$0xf]
    %v1029 = vld [vmem:[%s1 + $0xf2c] sm:$0xf]
    %v1030 = vld [vmem:[%s1 + $0xf30] sm:$0xf]
    %v1031 = vld [vmem:[%s1 + $0xf34] sm:$0xf]
    %v1032 = vld [vmem:[%s1 + $0xf38] sm:$0xf]
    %v1033 = vld [vmem:[%s1 + $0xf3c] sm:$0xf]
    %v1034 = vld [vmem:[%s1 + $0xf40] sm:$0xf]
    %v1035 = vld [vmem:[%s1 + $0xf44] sm:$0xf]
    %v1036 = vld [vmem:[%s1 + $0xf48] sm:$0xf]
    %v1037 = vld [vmem:[%s1 + $0xf4c] sm:$0xf]
    %v1038 = vld [vmem:[%s1 + $0xf50] sm:$0xf]
    %v1039 = vld [vmem:[%s1 + $0xf54] sm:$0xf]
    %v1040 = vld [vmem:[%s1 + $0xf58] sm:$0xf]
    %v1041 = vld [vmem:[%s1 + $0xf5c] sm:$0xf]
    %v1042 = vld [vmem:[%s1 + $0xf60] sm:$0xf]
    %v1043 = vld [vmem:[%s1 + $0xf64] sm:$0xf]
    %v1044 = vld [vmem:[%s1 + $0xf68] sm:$0xf]
    %v1045 = vld [vmem:[%s1 + $0xf6c] sm:$0xf]
    %v1046 = vld [vmem:[%s1 + $0xf70] sm:$0xf]
    %v1047 = vld [vmem:[%s1 + $0xf74] sm:$0xf]
    %v1048 = vld [vmem:[%s1 + $0xf78] sm:$0xf]
    %v1049 = vld [vmem:[%s1 + $0xf7c] sm:$0xf]
    %v1050 = vld [vmem:[%s1 + $0xf80] sm:$0xf]
    %v1051 = vld [vmem:[%s1 + $0xf84] sm:$0xf]
    %v1052 = vld [vmem:[%s1 + $0xf88] sm:$0xf]
    %v1053 = vld [vmem:[%s1 + $0xf8c] sm:$0xf]
    %v1054 = vld [vmem:[%s1 + $0xf90] sm:$0xf]
    %v1055 = vld [vmem:[%s1 + $0xf94] sm:$0xf]
    %v1056 = vld [vmem:[%s1 + $0xf98] sm:$0xf]
    %v1057 = vld [vmem:[%s1 + $0xf9c] sm:$0xf]
    %v1058 = vld [vmem:[%s1 + $0xfa0] sm:$0xf]
    %v1059 = vld [vmem:[%s1 + $0xfa4] sm:$0xf]
    %v1060 = vld [vmem:[%s1 + $0xfa8] sm:$0xf]
    %v1061 = vld [vmem:[%s1 + $0xfac] sm:$0xf]
    %v1062 = vld [vmem:[%s1 + $0xfb0] sm:$0xf]
    %v1063 = vld [vmem:[%s1 + $0xfb4] sm:$0xf]
    %v1064 = vld [vmem:[%s1 + $0xfb8] sm:$0xf]
    %v1065 = vld [vmem:[%s1 + $0xfbc] sm:$0xf]
    %v1066 = vld [vmem:[%s1 + $0xfc0] sm:$0xf]
    %v1067 = vld [vmem:[%s1 + $0xfc4] sm:$0xf]
    %v1068 = vld [vmem:[%s1 + $0xfc8] sm:$0xf]
    %v1069 = vld [vmem:[%s1 + $0xfcc] sm:$0xf]
    %v1070 = vld [vmem:[%s1 + $0xfd0] sm:$0xf]
    %v1071 = vld [vmem:[%s1 + $0xfd4] sm:$0xf]
    %v1072 = vld [vmem:[%s1 + $0xfd8] sm:$0xf]
    %v1073 = vld [vmem:[%s1 + $0xfdc] sm:$0xf]
    %v1074 = vld [vmem:[%s1 + $0xfe0] sm:$0xf]
    %v1075 = vld [vmem:[%s1 + $0xfe4] sm:$0xf]
    %v1076 = vld [vmem:[%s1 + $0xfe8] sm:$0xf]
    %v1077 = vld [vmem:[%s1 + $0xfec] sm:$0xf]
    %v1078 = vld [vmem:[%s1 + $0xff0] sm:$0xf]
    %v1079 = vld [vmem:[%s1 + $0xff4] sm:$0xf]
    %v1080 = vld [vmem:[%s1 + $0xff8] sm:$0xf]
    %v1081 = vld [vmem:[%s1 + $0xffc] sm:$0xf]
    %v1082 = vld [vmem:[%s1 + $0x1000] sm:$0xf]
    %v1083 = vld [vmem:[%s1 + $0x1004] sm:$0xf]
    %v1084 = vld [vmem:[%s1 + $0x1008] sm:$0xf]
    %v1085 = vld [vmem:[%s1 + $0x100c] sm:$0xf]
    %v1086 = vld [vmem:[%s1 + $0x1010] sm:$0xf]
    %v1087 = vld [vmem:[%s1 + $0x1014] sm:$0xf]
    %v1088 = vld [vmem:[%s1 + $0x1018] sm:$0xf]
    %v1089 = vld [vmem:[%s1 + $0x101c] sm:$0xf]
    %v1090 = vld [vmem:[%s1 + $0x1020] sm:$0xf]
    %v1091 = vld [vmem:[%s1 + $0x1024] sm:$0xf]
    %v1092 = vld [vmem:[%s1 + $0x1028] sm:$0xf]
    %v1093 = vld [vmem:[%s1 + $0x102c] sm:$0xf]
    %v1094 = vld [vmem:[%s1 + $0x1030] sm:$0xf]
    %v1095 = vld [vmem:[%s1 + $0x1034] sm:$0xf]
    %v1096 = vld [vmem:[%s1 + $0x1038] sm:$0xf]
    %v1097 = vld [vmem:[%s1 + $0x103c] sm:$0xf]
    %v1098 = vld [vmem:[%s1 + $0x1040] sm:$0xf]
    %v1099 = vld [vmem:[%s1 + $0x1044] sm:$0xf]
    %v1100 = vld [vmem:[%s1 + $0x1048] sm:$0xf]
    %v1101 = vld [vmem:[%s1 + $0x104c] sm:$0xf]
    %v1102 = vld [vmem:[%s1 + $0x1050] sm:$0xf]
    %v1103 = vld [vmem:[%s1 + $0x1054] sm:$0xf]
    %v1104 = vld [vmem:[%s1 + $0x1058] sm:$0xf]
    %v1105 = vld [vmem:[%s1 + $0x105c] sm:$0xf]
    %v1106 = vld [vmem:[%s1 + $0x1060] sm:$0xf]
    %v1107 = vld [vmem:[%s1 + $0x1064] sm:$0xf]
    %v1108 = vld [vmem:[%s1 + $0x1068] sm:$0xf]
    %v1109 = vld [vmem:[%s1 + $0x106c] sm:$0xf]
    %v1110 = vld [vmem:[%s1 + $0x1070] sm:$0xf]
    %v1111 = vld [vmem:[%s1 + $0x1074] sm:$0xf]
    %v1112 = vld [vmem:[%s1 + $0x1078] sm:$0xf]
    %v1113 = vld [vmem:[%s1 + $0x107c] sm:$0xf]
    %v1114 = vld [vmem:[%s1 + $0x1080] sm:$0xf]
    %v1115 = vld [vmem:[%s1 + $0x1084] sm:$0xf]
    %v1116 = vld [vmem:[%s1 + $0x1088] sm:$0xf]
    %v1117 = vld [vmem:[%s1 + $0x108c] sm:$0xf]
    %v1118 = vld [vmem:[%s1 + $0x1090] sm:$0xf]
    %v1119 = vld [vmem:[%s1 + $0x1094] sm:$0xf]
    %v1120 = vld [vmem:[%s1 + $0x1098] sm:$0xf]
    %v1121 = vld [vmem:[%s1 + $0x109c] sm:$0xf]
    %v1122 = vld [vmem:[%s1 + $0x10a0] sm:$0xf]
    %v1123 = vld [vmem:[%s1 + $0x10a4] sm:$0xf]
    %v1124 = vld [vmem:[%s1 + $0x10a8] sm:$0xf]
    %v1125 = vld [vmem:[%s1 + $0x10ac] sm:$0xf]
    %v1126 = vld [vmem:[%s1 + $0x10b0] sm:$0xf]
    %v1127 = vld [vmem:[%s1 + $0x10b4] sm:$0xf]
    %v1128 = vld [vmem:[%s1 + $0x10b8] sm:$0xf]
    %v1129 = vld [vmem:[%s1 + $0x10bc] sm:$0xf]
    %v1130 = vld [vmem:[%s1 + $0x10c0] sm:$0xf]
    %v1131 = vld [vmem:[%s1 + $0x10c4] sm:$0xf]
    %v1132 = vld [vmem:[%s1 + $0x10c8] sm:$0xf]
    %v1133 = vld [vmem:[%s1 + $0x10cc] sm:$0xf]
    %v1134 = vld [vmem:[%s1 + $0x10d0] sm:$0xf]
    %v1135 = vld [vmem:[%s1 + $0x10d4] sm:$0xf]
    %v1136 = vld [vmem:[%s1 + $0x10d8] sm:$0xf]
    %v1137 = vld [vmem:[%s1 + $0x10dc] sm:$0xf]
    %v1138 = vld [vmem:[%s1 + $0x10e0] sm:$0xf]
    %v1139 = vld [vmem:[%s1 + $0x10e4] sm:$0xf]
    %v1140 = vld [vmem:[%s1 + $0x10e8] sm:$0xf]
    %v1141 = vld [vmem:[%s1 + $0x10ec] sm:$0xf]
    %v1142 = vld [vmem:[%s1 + $0x10f0] sm:$0xf]
    %v1143 = vld [vmem:[%s1 + $0x10f4] sm:$0xf]
    %v1144 = vld [vmem:[%s1 + $0x10f8] sm:$0xf]
    %v1145 = vld [vmem:[%s1 + $0x10fc] sm:$0xf]
    %v1146 = vld [vmem:[%s1 + $0x1100] sm:$0xf]
    %v1147 = vld [vmem:[%s1 + $0x1104] sm:$0xf]
    %v1148 = vld [vmem:[%s1 + $0x1108] sm:$0xf]
    %v1149 = vld [vmem:[%s1 + $0x110c] sm:$0xf]
    %v1150 = vld [vmem:[%s1 + $0x1110] sm:$0xf]
    %v1151 = vld [vmem:[%s1 + $0x1114] sm:$0xf]
    %v1152 = vld [vmem:[%s1 + $0x1118] sm:$0xf]
    %v1153 = vld [vmem:[%s1 + $0x111c] sm:$0xf]
    %v1154 = vld [vmem:[%s1 + $0x1120] sm:$0xf]
    %v1155 = vld [vmem:[%s1 + $0x1124] sm:$0xf]
    %v1156 = vld [vmem:[%s1 + $0x1128] sm:$0xf]
    %v1157 = vld [vmem:[%s1 + $0x112c] sm:$0xf]
    %v1158 = vld [vmem:[%s1 + $0x1130] sm:$0xf]
    %v1159 = vld [vmem:[%s1 + $0x1134] sm:$0xf]
    %v1160 = vld [vmem:[%s1 + $0x1138] sm:$0xf]
    %v1161 = vld [vmem:[%s1 + $0x113c] sm:$0xf]
    %v1162 = vld [vmem:[%s1 + $0x1140] sm:$0xf]
    %v1163 = vld [vmem:[%s1 + $0x1144] sm:$0xf]
    %v1164 = vld [vmem:[%s1 + $0x1148] sm:$0xf]
    %v1165 = vld [vmem:[%s1 + $0x114c] sm:$0xf]
    %v1166 = vld [vmem:[%s1 + $0x1150] sm:$0xf]
    %v1167 = vld [vmem:[%s1 + $0x1154] sm:$0xf]
    %v1168 = vld [vmem:[%s1 + $0x1158] sm:$0xf]
    %v1169 = vld [vmem:[%s1 + $0x115c] sm:$0xf]
    %v1170 = vld [vmem:[%s1 + $0x1160] sm:$0xf]
    %v1171 = vld [vmem:[%s1 + $0x1164] sm:$0xf]
    %v1172 = vld [vmem:[%s1 + $0x1168] sm:$0xf]
    %v1173 = vld [vmem:[%s1 + $0x116c] sm:$0xf]
    %v1174 = vld [vmem:[%s1 + $0x1170] sm:$0xf]
    %v1175 = vld [vmem:[%s1 + $0x1174] sm:$0xf]
    %v1176 = vld [vmem:[%s1 + $0x1178] sm:$0xf]
    %v1177 = vld [vmem:[%s1 + $0x117c] sm:$0xf]
    %v1178 = vld [vmem:[%s1 + $0x1180] sm:$0xf]
    %v1179 = vld [vmem:[%s1 + $0x1184] sm:$0xf]
    %v1180 = vld [vmem:[%s1 + $0x1188] sm:$0xf]
    %v1181 = vld [vmem:[%s1 + $0x118c] sm:$0xf]
    %v1182 = vld [vmem:[%s1 + $0x1190] sm:$0xf]
    %v1183 = vld [vmem:[%s1 + $0x1194] sm:$0xf]
    %v1184 = vld [vmem:[%s1 + $0x1198] sm:$0xf]
    %v1185 = vld [vmem:[%s1 + $0x119c] sm:$0xf]
    %v1186 = vld [vmem:[%s1 + $0x11a0] sm:$0xf]
    %v1187 = vld [vmem:[%s1 + $0x11a4] sm:$0xf]
    %v1188 = vld [vmem:[%s1 + $0x11a8] sm:$0xf]
    %v1189 = vld [vmem:[%s1 + $0x11ac] sm:$0xf]
    %v1190 = vld [vmem:[%s1 + $0x11b0] sm:$0xf]
    %v1191 = vld [vmem:[%s1 + $0x11b4] sm:$0xf]
    %v1192 = vld [vmem:[%s1 + $0x11b8] sm:$0xf]
    %v1193 = vld [vmem:[%s1 + $0x11bc] sm:$0xf]
    %v1194 = vld [vmem:[%s1 + $0x11c0] sm:$0xf]
    %v1195 = vld [vmem:[%s1 + $0x11c4] sm:$0xf]
    %v1196 = vld [vmem:[%s1 + $0x11c8] sm:$0xf]
    %v1197 = vld [vmem:[%s1 + $0x11cc] sm:$0xf]
    %v1198 = vld [vmem:[%s1 + $0x11d0] sm:$0xf]
    %v1199 = vld [vmem:[%s1 + $0x11d4] sm:$0xf]
    %v1200 = vld [vmem:[%s1 + $0x11d8] sm:$0xf]
    %v1201 = vld [vmem:[%s1 + $0x11dc] sm:$0xf]
    %v1202 = vld [vmem:[%s1 + $0x11e0] sm:$0xf]
    %v1203 = vld [vmem:[%s1 + $0x11e4] sm:$0xf]
    %v1204 = vld [vmem:[%s1 + $0x11e8] sm:$0xf]
    %v1205 = vld [vmem:[%s1 + $0x11ec] sm:$0xf]
    %v1206 = vld [vmem:[%s1 + $0x11f0] sm:$0xf]
    %v1207 = vld [vmem:[%s1 + $0x11f4] sm:$0xf]
    %v1208 = vld [vmem:[%s1 + $0x11f8] sm:$0xf]
    %v1209 = vld [vmem:[%s1 + $0x11fc] sm:$0xf]
    %v1210 = vld [vmem:[%s2] sm:$0x1]
    %v1212 = vlaneseq
    %v1213 = vshrl.u32 %v1212, 7
    %v1214 = vsub.s32 0, %v1213
    %v1215 = vrot.slane %v1210, %v1214
    %v1253 = vcombine.low %v22, %v31
    %v1254 = vcombine.high %v22, %v31
    %v1255 = vcombine.low %v40, %v49
    %v1256 = vcombine.high %v40, %v49
    %v1258 = vunpack.c.l.s4 1966171168
    %v1259 = vunpack.c.0.s8 %v1258
    %v1260 = vlaneseq
    %v1261 = vshrl.u32 %v1260, 7
    %v1262 = vsub.s32 %v1259, %v1261
    %v1263 = vrot.slane %v1253, %v1262
    %v1265 = vunpack.c.l.s4 1966171168
    %v1266 = vunpack.c.0.s8 %v1265
    %v1267 = vlaneseq
    %v1268 = vshrl.u32 %v1267, 7
    %v1269 = vsub.s32 %v1266, %v1268
    %v1270 = vrot.slane %v1254, %v1269
    %v1272 = vunpack.c.l.s4 1966171168
    %v1273 = vunpack.c.0.s8 %v1272
    %v1274 = vlaneseq
    %v1275 = vshrl.u32 %v1274, 7
    %v1276 = vsub.s32 %v1273, %v1275
    %v1277 = vrot.slane %v1255, %v1276
    %v1279 = vunpack.c.l.s4 1966171168
    %v1280 = vunpack.c.0.s8 %v1279
    %v1281 = vlaneseq
    %v1282 = vshrl.u32 %v1281, 7
    %v1283 = vsub.s32 %v1280, %v1282
    %v1284 = vrot.slane %v1256, %v1283
    %v1285 = vcombine.low %v1263, %v1277
    %v1286 = vcombine.high %v1263, %v1277
    %v1287 = vcombine.low %v1270, %v1284
    %v1288 = vcombine.high %v1270, %v1284
    %v1290 = vunpack.c.l.s4 1966171168
    %v1291 = vunpack.c.0.s8 %v1290
    %v1292 = vlaneseq
    %v1293 = vshrl.u32 %v1292, 7
    %v1294 = vsub.s32 %v1291, %v1293
    %v1295 = vrot.slane %v1285, %v1294
    %v1297 = vunpack.c.l.s4 1966171168
    %v1298 = vunpack.c.0.s8 %v1297
    %v1299 = vlaneseq
    %v1300 = vshrl.u32 %v1299, 7
    %v1301 = vsub.s32 %v1298, %v1300
    %v1302 = vrot.slane %v1287, %v1301
    %v1304 = vunpack.c.l.s4 1966171168
    %v1305 = vunpack.c.0.s8 %v1304
    %v1306 = vlaneseq
    %v1307 = vshrl.u32 %v1306, 7
    %v1308 = vsub.s32 %v1305, %v1307
    %v1309 = vrot.slane %v1286, %v1308
    %v1311 = vunpack.c.l.s4 1966171168
    %v1312 = vunpack.c.0.s8 %v1311
    %v1313 = vlaneseq
    %v1314 = vshrl.u32 %v1313, 7
    %v1315 = vsub.s32 %v1312, %v1314
    %v1316 = vrot.slane %v1288, %v1315
    %v1317 = vcombine.high %v1295, %v1295
    %v1318 = vcombine.high %v1302, %v1302
    %v1319 = vcombine.high %v1309, %v1309
    %v1320 = vcombine.high %v1316, %v1316
    %v1321 = vcombine.low %v23, %v32
    %v1322 = vcombine.high %v23, %v32
    %v1323 = vcombine.low %v41, %v50
    %v1324 = vcombine.high %v41, %v50
    %v1326 = vunpack.c.l.s4 1966171168
    %v1327 = vunpack.c.0.s8 %v1326
    %v1328 = vlaneseq
    %v1329 = vshrl.u32 %v1328, 7
    %v1330 = vsub.s32 %v1327, %v1329
    %v1331 = vrot.slane %v1321, %v1330
    %v1333 = vunpack.c.l.s4 1966171168
    %v1334 = vunpack.c.0.s8 %v1333
    %v1335 = vlaneseq
    %v1336 = vshrl.u32 %v1335, 7
    %v1337 = vsub.s32 %v1334, %v1336
    %v1338 = vrot.slane %v1322, %v1337
    %v1340 = vunpack.c.l.s4 1966171168
    %v1341 = vunpack.c.0.s8 %v1340
    %v1342 = vlaneseq
    %v1343 = vshrl.u32 %v1342, 7
    %v1344 = vsub.s32 %v1341, %v1343
    %v1345 = vrot.slane %v1323, %v1344
    %v1347 = vunpack.c.l.s4 1966171168
    %v1348 = vunpack.c.0.s8 %v1347
    %v1349 = vlaneseq
    %v1350 = vshrl.u32 %v1349, 7
    %v1351 = vsub.s32 %v1348, %v1350
    %v1352 = vrot.slane %v1324, %v1351
    %v1353 = vcombine.low %v1331, %v1345
    %v1354 = vcombine.high %v1331, %v1345
    %v1355 = vcombine.low %v1338, %v1352
    %v1356 = vcombine.high %v1338, %v1352
    %v1358 = vunpack.c.l.s4 1966171168
    %v1359 = vunpack.c.0.s8 %v1358
    %v1360 = vlaneseq
    %v1361 = vshrl.u32 %v1360, 7
    %v1362 = vsub.s32 %v1359, %v1361
    %v1363 = vrot.slane %v1353, %v1362
    %v1365 = vunpack.c.l.s4 1966171168
    %v1366 = vunpack.c.0.s8 %v1365
    %v1367 = vlaneseq
    %v1368 = vshrl.u32 %v1367, 7
    %v1369 = vsub.s32 %v1366, %v1368
    %v1370 = vrot.slane %v1355, %v1369
    %v1372 = vunpack.c.l.s4 1966171168
    %v1373 = vunpack.c.0.s8 %v1372
    %v1374 = vlaneseq
    %v1375 = vshrl.u32 %v1374, 7
    %v1376 = vsub.s32 %v1373, %v1375
    %v1377 = vrot.slane %v1354, %v1376
    %v1379 = vunpack.c.l.s4 1966171168
    %v1380 = vunpack.c.0.s8 %v1379
    %v1381 = vlaneseq
    %v1382 = vshrl.u32 %v1381, 7
    %v1383 = vsub.s32 %v1380, %v1382
    %v1384 = vrot.slane %v1356, %v1383
    %v1385 = vcombine.high %v1363, %v1363
    %v1386 = vcombine.high %v1370, %v1370
    %v1387 = vcombine.high %v1377, %v1377
    %v1388 = vcombine.high %v1384, %v1384
    %v1389 = vcombine.low %v24, %v33
    %v1390 = vcombine.high %v24, %v33
    %v1391 = vcombine.low %v42, %v51
    %v1392 = vcombine.high %v42, %v51
    %v1394 = vunpack.c.l.s4 1966171168
    %v1395 = vunpack.c.0.s8 %v1394
    %v1396 = vlaneseq
    %v1397 = vshrl.u32 %v1396, 7
    %v1398 = vsub.s32 %v1395, %v1397
    %v1399 = vrot.slane %v1389, %v1398
    %v1401 = vunpack.c.l.s4 1966171168
    %v1402 = vunpack.c.0.s8 %v1401
    %v1403 = vlaneseq
    %v1404 = vshrl.u32 %v1403, 7
    %v1405 = vsub.s32 %v1402, %v1404
    %v1406 = vrot.slane %v1390, %v1405
    %v1408 = vunpack.c.l.s4 1966171168
    %v1409 = vunpack.c.0.s8 %v1408
    %v1410 = vlaneseq
    %v1411 = vshrl.u32 %v1410, 7
    %v1412 = vsub.s32 %v1409, %v1411
    %v1413 = vrot.slane %v1391, %v1412
    %v1415 = vunpack.c.l.s4 1966171168
    %v1416 = vunpack.c.0.s8 %v1415
    %v1417 = vlaneseq
    %v1418 = vshrl.u32 %v1417, 7
    %v1419 = vsub.s32 %v1416, %v1418
    %v1420 = vrot.slane %v1392, %v1419
    %v1421 = vcombine.low %v1399, %v1413
    %v1422 = vcombine.high %v1399, %v1413
    %v1423 = vcombine.low %v1406, %v1420
    %v1424 = vcombine.high %v1406, %v1420
    %v1426 = vunpack.c.l.s4 1966171168
    %v1427 = vunpack.c.0.s8 %v1426
    %v1428 = vlaneseq
    %v1429 = vshrl.u32 %v1428, 7
    %v1430 = vsub.s32 %v1427, %v1429
    %v1431 = vrot.slane %v1421, %v1430
    %v1433 = vunpack.c.l.s4 1966171168
    %v1434 = vunpack.c.0.s8 %v1433
    %v1435 = vlaneseq
    %v1436 = vshrl.u32 %v1435, 7
    %v1437 = vsub.s32 %v1434, %v1436
    %v1438 = vrot.slane %v1423, %v1437
    %v1440 = vunpack.c.l.s4 1966171168
    %v1441 = vunpack.c.0.s8 %v1440
    %v1442 = vlaneseq
    %v1443 = vshrl.u32 %v1442, 7
    %v1444 = vsub.s32 %v1441, %v1443
    %v1445 = vrot.slane %v1422, %v1444
    %v1447 = vunpack.c.l.s4 1966171168
    %v1448 = vunpack.c.0.s8 %v1447
    %v1449 = vlaneseq
    %v1450 = vshrl.u32 %v1449, 7
    %v1451 = vsub.s32 %v1448, %v1450
    %v1452 = vrot.slane %v1424, %v1451
    %v1453 = vcombine.high %v1431, %v1431
    %v1454 = vcombine.high %v1438, %v1438
    %v1455 = vcombine.high %v1445, %v1445
    %v1456 = vcombine.high %v1452, %v1452
    %v1457 = vcombine.low %v25, %v34
    %v1458 = vcombine.high %v25, %v34
    %v1459 = vcombine.low %v43, %v52
    %v1460 = vcombine.high %v43, %v52
    %v1462 = vunpack.c.l.s4 1966171168
    %v1463 = vunpack.c.0.s8 %v1462
    %v1464 = vlaneseq
    %v1465 = vshrl.u32 %v1464, 7
    %v1466 = vsub.s32 %v1463, %v1465
    %v1467 = vrot.slane %v1457, %v1466
    %v1469 = vunpack.c.l.s4 1966171168
    %v1470 = vunpack.c.0.s8 %v1469
    %v1471 = vlaneseq
    %v1472 = vshrl.u32 %v1471, 7
    %v1473 = vsub.s32 %v1470, %v1472
    %v1474 = vrot.slane %v1458, %v1473
    %v1476 = vunpack.c.l.s4 1966171168
    %v1477 = vunpack.c.0.s8 %v1476
    %v1478 = vlaneseq
    %v1479 = vshrl.u32 %v1478, 7
    %v1480 = vsub.s32 %v1477, %v1479
    %v1481 = vrot.slane %v1459, %v1480
    %v1483 = vunpack.c.l.s4 1966171168
    %v1484 = vunpack.c.0.s8 %v1483
    %v1485 = vlaneseq
    %v1486 = vshrl.u32 %v1485, 7
    %v1487 = vsub.s32 %v1484, %v1486
    %v1488 = vrot.slane %v1460, %v1487
    %v1489 = vcombine.low %v1467, %v1481
    %v1490 = vcombine.high %v1467, %v1481
    %v1491 = vcombine.low %v1474, %v1488
    %v1492 = vcombine.high %v1474, %v1488
    %v1494 = vunpack.c.l.s4 1966171168
    %v1495 = vunpack.c.0.s8 %v1494
    %v1496 = vlaneseq
    %v1497 = vshrl.u32 %v1496, 7
    %v1498 = vsub.s32 %v1495, %v1497
    %v1499 = vrot.slane %v1489, %v1498
    %v1501 = vunpack.c.l.s4 1966171168
    %v1502 = vunpack.c.0.s8 %v1501
    %v1503 = vlaneseq
    %v1504 = vshrl.u32 %v1503, 7
    %v1505 = vsub.s32 %v1502, %v1504
    %v1506 = vrot.slane %v1491, %v1505
    %v1508 = vunpack.c.l.s4 1966171168
    %v1509 = vunpack.c.0.s8 %v1508
    %v1510 = vlaneseq
    %v1511 = vshrl.u32 %v1510, 7
    %v1512 = vsub.s32 %v1509, %v1511
    %v1513 = vrot.slane %v1490, %v1512
    %v1515 = vunpack.c.l.s4 1966171168
    %v1516 = vunpack.c.0.s8 %v1515
    %v1517 = vlaneseq
    %v1518 = vshrl.u32 %v1517, 7
    %v1519 = vsub.s32 %v1516, %v1518
    %v1520 = vrot.slane %v1492, %v1519
    %v1521 = vcombine.high %v1499, %v1499
    %v1522 = vcombine.high %v1506, %v1506
    %v1523 = vcombine.high %v1513, %v1513
    %v1524 = vcombine.high %v1520, %v1520
    %v1525 = vcombine.low %v26, %v35
    %v1526 = vcombine.high %v26, %v35
    %v1527 = vcombine.low %v44, %v53
    %v1528 = vcombine.high %v44, %v53
    %v1530 = vunpack.c.l.s4 1966171168
    %v1531 = vunpack.c.0.s8 %v1530
    %v1532 = vlaneseq
    %v1533 = vshrl.u32 %v1532, 7
    %v1534 = vsub.s32 %v1531, %v1533
    %v1535 = vrot.slane %v1525, %v1534
    %v1537 = vunpack.c.l.s4 1966171168
    %v1538 = vunpack.c.0.s8 %v1537
    %v1539 = vlaneseq
    %v1540 = vshrl.u32 %v1539, 7
    %v1541 = vsub.s32 %v1538, %v1540
    %v1542 = vrot.slane %v1526, %v1541
    %v1544 = vunpack.c.l.s4 1966171168
    %v1545 = vunpack.c.0.s8 %v1544
    %v1546 = vlaneseq
    %v1547 = vshrl.u32 %v1546, 7
    %v1548 = vsub.s32 %v1545, %v1547
    %v1549 = vrot.slane %v1527, %v1548
    %v1551 = vunpack.c.l.s4 1966171168
    %v1552 = vunpack.c.0.s8 %v1551
    %v1553 = vlaneseq
    %v1554 = vshrl.u32 %v1553, 7
    %v1555 = vsub.s32 %v1552, %v1554
    %v1556 = vrot.slane %v1528, %v1555
    %v1557 = vcombine.low %v1535, %v1549
    %v1558 = vcombine.high %v1535, %v1549
    %v1559 = vcombine.low %v1542, %v1556
    %v1560 = vcombine.high %v1542, %v1556
    %v1562 = vunpack.c.l.s4 1966171168
    %v1563 = vunpack.c.0.s8 %v1562
    %v1564 = vlaneseq
    %v1565 = vshrl.u32 %v1564, 7
    %v1566 = vsub.s32 %v1563, %v1565
    %v1567 = vrot.slane %v1557, %v1566
    %v1569 = vunpack.c.l.s4 1966171168
    %v1570 = vunpack.c.0.s8 %v1569
    %v1571 = vlaneseq
    %v1572 = vshrl.u32 %v1571, 7
    %v1573 = vsub.s32 %v1570, %v1572
    %v1574 = vrot.slane %v1559, %v1573
    %v1576 = vunpack.c.l.s4 1966171168
    %v1577 = vunpack.c.0.s8 %v1576
    %v1578 = vlaneseq
    %v1579 = vshrl.u32 %v1578, 7
    %v1580 = vsub.s32 %v1577, %v1579
    %v1581 = vrot.slane %v1558, %v1580
    %v1583 = vunpack.c.l.s4 1966171168
    %v1584 = vunpack.c.0.s8 %v1583
    %v1585 = vlaneseq
    %v1586 = vshrl.u32 %v1585, 7
    %v1587 = vsub.s32 %v1584, %v1586
    %v1588 = vrot.slane %v1560, %v1587
    %v1589 = vcombine.high %v1567, %v1567
    %v1590 = vcombine.high %v1574, %v1574
    %v1591 = vcombine.high %v1581, %v1581
    %v1592 = vcombine.high %v1588, %v1588
    %v1593 = vcombine.low %v27, %v36
    %v1594 = vcombine.high %v27, %v36
    %v1595 = vcombine.low %v45, %v54
    %v1596 = vcombine.high %v45, %v54
    %v1598 = vunpack.c.l.s4 1966171168
    %v1599 = vunpack.c.0.s8 %v1598
    %v1600 = vlaneseq
    %v1601 = vshrl.u32 %v1600, 7
    %v1602 = vsub.s32 %v1599, %v1601
    %v1603 = vrot.slane %v1593, %v1602
    %v1605 = vunpack.c.l.s4 1966171168
    %v1606 = vunpack.c.0.s8 %v1605
    %v1607 = vlaneseq
    %v1608 = vshrl.u32 %v1607, 7
    %v1609 = vsub.s32 %v1606, %v1608
    %v1610 = vrot.slane %v1594, %v1609
    %v1612 = vunpack.c.l.s4 1966171168
    %v1613 = vunpack.c.0.s8 %v1612
    %v1614 = vlaneseq
    %v1615 = vshrl.u32 %v1614, 7
    %v1616 = vsub.s32 %v1613, %v1615
    %v1617 = vrot.slane %v1595, %v1616
    %v1619 = vunpack.c.l.s4 1966171168
    %v1620 = vunpack.c.0.s8 %v1619
    %v1621 = vlaneseq
    %v1622 = vshrl.u32 %v1621, 7
    %v1623 = vsub.s32 %v1620, %v1622
    %v1624 = vrot.slane %v1596, %v1623
    %v1625 = vcombine.low %v1603, %v1617
    %v1626 = vcombine.high %v1603, %v1617
    %v1627 = vcombine.low %v1610, %v1624
    %v1628 = vcombine.high %v1610, %v1624
    %v1630 = vunpack.c.l.s4 1966171168
    %v1631 = vunpack.c.0.s8 %v1630
    %v1632 = vlaneseq
    %v1633 = vshrl.u32 %v1632, 7
    %v1634 = vsub.s32 %v1631, %v1633
    %v1635 = vrot.slane %v1625, %v1634
    %v1637 = vunpack.c.l.s4 1966171168
    %v1638 = vunpack.c.0.s8 %v1637
    %v1639 = vlaneseq
    %v1640 = vshrl.u32 %v1639, 7
    %v1641 = vsub.s32 %v1638, %v1640
    %v1642 = vrot.slane %v1627, %v1641
    %v1644 = vunpack.c.l.s4 1966171168
    %v1645 = vunpack.c.0.s8 %v1644
    %v1646 = vlaneseq
    %v1647 = vshrl.u32 %v1646, 7
    %v1648 = vsub.s32 %v1645, %v1647
    %v1649 = vrot.slane %v1626, %v1648
    %v1651 = vunpack.c.l.s4 1966171168
    %v1652 = vunpack.c.0.s8 %v1651
    %v1653 = vlaneseq
    %v1654 = vshrl.u32 %v1653, 7
    %v1655 = vsub.s32 %v1652, %v1654
    %v1656 = vrot.slane %v1628, %v1655
    %v1657 = vcombine.high %v1635, %v1635
    %v1658 = vcombine.high %v1642, %v1642
    %v1659 = vcombine.high %v1649, %v1649
    %v1660 = vcombine.high %v1656, %v1656
    %v1661 = vcombine.low %v28, %v37
    %v1662 = vcombine.high %v28, %v37
    %v1663 = vcombine.low %v46, %v55
    %v1664 = vcombine.high %v46, %v55
    %v1666 = vunpack.c.l.s4 1966171168
    %v1667 = vunpack.c.0.s8 %v1666
    %v1668 = vlaneseq
    %v1669 = vshrl.u32 %v1668, 7
    %v1670 = vsub.s32 %v1667, %v1669
    %v1671 = vrot.slane %v1661, %v1670
    %v1673 = vunpack.c.l.s4 1966171168
    %v1674 = vunpack.c.0.s8 %v1673
    %v1675 = vlaneseq
    %v1676 = vshrl.u32 %v1675, 7
    %v1677 = vsub.s32 %v1674, %v1676
    %v1678 = vrot.slane %v1662, %v1677
    %v1680 = vunpack.c.l.s4 1966171168
    %v1681 = vunpack.c.0.s8 %v1680
    %v1682 = vlaneseq
    %v1683 = vshrl.u32 %v1682, 7
    %v1684 = vsub.s32 %v1681, %v1683
    %v1685 = vrot.slane %v1663, %v1684
    %v1687 = vunpack.c.l.s4 1966171168
    %v1688 = vunpack.c.0.s8 %v1687
    %v1689 = vlaneseq
    %v1690 = vshrl.u32 %v1689, 7
    %v1691 = vsub.s32 %v1688, %v1690
    %v1692 = vrot.slane %v1664, %v1691
    %v1693 = vcombine.low %v1671, %v1685
    %v1694 = vcombine.high %v1671, %v1685
    %v1695 = vcombine.low %v1678, %v1692
    %v1696 = vcombine.high %v1678, %v1692
    %v1698 = vunpack.c.l.s4 1966171168
    %v1699 = vunpack.c.0.s8 %v1698
    %v1700 = vlaneseq
    %v1701 = vshrl.u32 %v1700, 7
    %v1702 = vsub.s32 %v1699, %v1701
    %v1703 = vrot.slane %v1693, %v1702
    %v1705 = vunpack.c.l.s4 1966171168
    %v1706 = vunpack.c.0.s8 %v1705
    %v1707 = vlaneseq
    %v1708 = vshrl.u32 %v1707, 7
    %v1709 = vsub.s32 %v1706, %v1708
    %v1710 = vrot.slane %v1695, %v1709
    %v1712 = vunpack.c.l.s4 1966171168
    %v1713 = vunpack.c.0.s8 %v1712
    %v1714 = vlaneseq
    %v1715 = vshrl.u32 %v1714, 7
    %v1716 = vsub.s32 %v1713, %v1715
    %v1717 = vrot.slane %v1694, %v1716
    %v1719 = vunpack.c.l.s4 1966171168
    %v1720 = vunpack.c.0.s8 %v1719
    %v1721 = vlaneseq
    %v1722 = vshrl.u32 %v1721, 7
    %v1723 = vsub.s32 %v1720, %v1722
    %v1724 = vrot.slane %v1696, %v1723
    %v1725 = vcombine.high %v1703, %v1703
    %v1726 = vcombine.high %v1710, %v1710
    %v1727 = vcombine.high %v1717, %v1717
    %v1728 = vcombine.high %v1724, %v1724
    %v1729 = vcombine.low %v29, %v38
    %v1730 = vcombine.high %v29, %v38
    %v1731 = vcombine.low %v47, %v56
    %v1732 = vcombine.high %v47, %v56
    %v1734 = vunpack.c.l.s4 1966171168
    %v1735 = vunpack.c.0.s8 %v1734
    %v1736 = vlaneseq
    %v1737 = vshrl.u32 %v1736, 7
    %v1738 = vsub.s32 %v1735, %v1737
    %v1739 = vrot.slane %v1729, %v1738
    %v1741 = vunpack.c.l.s4 1966171168
    %v1742 = vunpack.c.0.s8 %v1741
    %v1743 = vlaneseq
    %v1744 = vshrl.u32 %v1743, 7
    %v1745 = vsub.s32 %v1742, %v1744
    %v1746 = vrot.slane %v1730, %v1745
    %v1748 = vunpack.c.l.s4 1966171168
    %v1749 = vunpack.c.0.s8 %v1748
    %v1750 = vlaneseq
    %v1751 = vshrl.u32 %v1750, 7
    %v1752 = vsub.s32 %v1749, %v1751
    %v1753 = vrot.slane %v1731, %v1752
    %v1755 = vunpack.c.l.s4 1966171168
    %v1756 = vunpack.c.0.s8 %v1755
    %v1757 = vlaneseq
    %v1758 = vshrl.u32 %v1757, 7
    %v1759 = vsub.s32 %v1756, %v1758
    %v1760 = vrot.slane %v1732, %v1759
    %v1761 = vcombine.low %v1739, %v1753
    %v1762 = vcombine.high %v1739, %v1753
    %v1763 = vcombine.low %v1746, %v1760
    %v1764 = vcombine.high %v1746, %v1760
    %v1766 = vunpack.c.l.s4 1966171168
    %v1767 = vunpack.c.0.s8 %v1766
    %v1768 = vlaneseq
    %v1769 = vshrl.u32 %v1768, 7
    %v1770 = vsub.s32 %v1767, %v1769
    %v1771 = vrot.slane %v1761, %v1770
    %v1773 = vunpack.c.l.s4 1966171168
    %v1774 = vunpack.c.0.s8 %v1773
    %v1775 = vlaneseq
    %v1776 = vshrl.u32 %v1775, 7
    %v1777 = vsub.s32 %v1774, %v1776
    %v1778 = vrot.slane %v1763, %v1777
    %v1780 = vunpack.c.l.s4 1966171168
    %v1781 = vunpack.c.0.s8 %v1780
    %v1782 = vlaneseq
    %v1783 = vshrl.u32 %v1782, 7
    %v1784 = vsub.s32 %v1781, %v1783
    %v1785 = vrot.slane %v1762, %v1784
    %v1787 = vunpack.c.l.s4 1966171168
    %v1788 = vunpack.c.0.s8 %v1787
    %v1789 = vlaneseq
    %v1790 = vshrl.u32 %v1789, 7
    %v1791 = vsub.s32 %v1788, %v1790
    %v1792 = vrot.slane %v1764, %v1791
    %v1793 = vcombine.high %v1771, %v1771
    %v1794 = vcombine.high %v1778, %v1778
    %v1795 = vcombine.high %v1785, %v1785
    %v1796 = vcombine.high %v1792, %v1792
    %v1797 = vcombine.low %v30, %v39
    %v1798 = vcombine.high %v30, %v39
    %v1799 = vcombine.low %v48, %v57
    %v1800 = vcombine.high %v48, %v57
    %v1802 = vunpack.c.l.s4 1966171168
    %v1803 = vunpack.c.0.s8 %v1802
    %v1804 = vlaneseq
    %v1805 = vshrl.u32 %v1804, 7
    %v1806 = vsub.s32 %v1803, %v1805
    %v1807 = vrot.slane %v1797, %v1806
    %v1809 = vunpack.c.l.s4 1966171168
    %v1810 = vunpack.c.0.s8 %v1809
    %v1811 = vlaneseq
    %v1812 = vshrl.u32 %v1811, 7
    %v1813 = vsub.s32 %v1810, %v1812
    %v1814 = vrot.slane %v1798, %v1813
    %v1816 = vunpack.c.l.s4 1966171168
    %v1817 = vunpack.c.0.s8 %v1816
    %v1818 = vlaneseq
    %v1819 = vshrl.u32 %v1818, 7
    %v1820 = vsub.s32 %v1817, %v1819
    %v1821 = vrot.slane %v1799, %v1820
    %v1823 = vunpack.c.l.s4 1966171168
    %v1824 = vunpack.c.0.s8 %v1823
    %v1825 = vlaneseq
    %v1826 = vshrl.u32 %v1825, 7
    %v1827 = vsub.s32 %v1824, %v1826
    %v1828 = vrot.slane %v1800, %v1827
    %v1829 = vcombine.low %v1807, %v1821
    %v1830 = vcombine.high %v1807, %v1821
    %v1831 = vcombine.low %v1814, %v1828
    %v1832 = vcombine.high %v1814, %v1828
    %v1834 = vunpack.c.l.s4 1966171168
    %v1835 = vunpack.c.0.s8 %v1834
    %v1836 = vlaneseq
    %v1837 = vshrl.u32 %v1836, 7
    %v1838 = vsub.s32 %v1835, %v1837
    %v1839 = vrot.slane %v1829, %v1838
    %v1841 = vunpack.c.l.s4 1966171168
    %v1842 = vunpack.c.0.s8 %v1841
    %v1843 = vlaneseq
    %v1844 = vshrl.u32 %v1843, 7
    %v1845 = vsub.s32 %v1842, %v1844
    %v1846 = vrot.slane %v1831, %v1845
    %v1848 = vunpack.c.l.s4 1966171168
    %v1849 = vunpack.c.0.s8 %v1848
    %v1850 = vlaneseq
    %v1851 = vshrl.u32 %v1850, 7
    %v1852 = vsub.s32 %v1849, %v1851
    %v1853 = vrot.slane %v1830, %v1852
    %v1855 = vunpack.c.l.s4 1966171168
    %v1856 = vunpack.c.0.s8 %v1855
    %v1857 = vlaneseq
    %v1858 = vshrl.u32 %v1857, 7
    %v1859 = vsub.s32 %v1856, %v1858
    %v1860 = vrot.slane %v1832, %v1859
    %v1861 = vcombine.high %v1839, %v1839
    %v1862 = vcombine.high %v1846, %v1846
    %v1863 = vcombine.high %v1853, %v1853
    %v1864 = vcombine.high %v1860, %v1860
    %v3089 = vunpack.c.l.b16 %v58
    %v3090 = vunpack.c.l.b16 %v59
    %v3091 = vunpack.c.l.b16 %v60
    %v3092 = vunpack.c.l.b16 %v61
    %v3093 = vunpack.c.l.b16 %v62
    %v3094 = vunpack.c.l.b16 %v63
    %v3095 = vunpack.c.l.b16 %v64
    %v3096 = vunpack.c.l.b16 %v65
    %v3097 = vunpack.c.l.b16 %v66
    %v3098 = vunpack.c.l.b16 %v67
    %v3099 = vunpack.c.l.b16 %v68
    %v3100 = vunpack.c.l.b16 %v69
    %v3101 = vunpack.c.l.b16 %v70
    %v3102 = vunpack.c.l.b16 %v71
    %v3103 = vunpack.c.l.b16 %v72
    %v3104 = vunpack.c.l.b16 %v73
    %v3105 = vunpack.c.l.b16 %v74
    %v3106 = vunpack.c.l.b16 %v75
    %v3107 = vunpack.c.l.b16 %v76
    %v3108 = vunpack.c.l.b16 %v77
    %v3109 = vunpack.c.l.b16 %v78
    %v3110 = vunpack.c.l.b16 %v79
    %v3111 = vunpack.c.l.b16 %v80
    %v3112 = vunpack.c.l.b16 %v81
    %v3113 = vunpack.c.l.b16 %v82
    %v3114 = vunpack.c.l.b16 %v83
    %v3115 = vunpack.c.l.b16 %v84
    %v3116 = vunpack.c.l.b16 %v85
    %v3117 = vunpack.c.l.b16 %v86
    %v3118 = vunpack.c.l.b16 %v87
    %v3119 = vunpack.c.l.b16 %v88
    %v3120 = vunpack.c.l.b16 %v89
    %v3121 = vunpack.c.l.b16 %v90
    %v3122 = vunpack.c.l.b16 %v91
    %v3123 = vunpack.c.l.b16 %v92
    %v3124 = vunpack.c.l.b16 %v93
    %v3125 = vunpack.c.l.b16 %v94
    %v3126 = vunpack.c.l.b16 %v95
    %v3127 = vunpack.c.l.b16 %v96
    %v3128 = vunpack.c.l.b16 %v97
    %v3129 = vunpack.c.l.b16 %v98
    %v3130 = vunpack.c.l.b16 %v99
    %v3131 = vunpack.c.l.b16 %v100
    %v3132 = vunpack.c.l.b16 %v101
    %v3133 = vunpack.c.l.b16 %v102
    %v3134 = vunpack.c.l.b16 %v103
    %v3135 = vunpack.c.l.b16 %v104
    %v3136 = vunpack.c.l.b16 %v105
    %v3137 = vunpack.c.l.b16 %v106
    %v3138 = vunpack.c.l.b16 %v107
    %v3139 = vunpack.c.l.b16 %v108
    %v3140 = vunpack.c.l.b16 %v109
    %v3141 = vunpack.c.l.b16 %v110
    %v3142 = vunpack.c.l.b16 %v111
    %v3143 = vunpack.c.l.b16 %v112
    %v3144 = vunpack.c.l.b16 %v113
    %v3145 = vunpack.c.l.b16 %v114
    %v3146 = vunpack.c.l.b16 %v115
    %v3147 = vunpack.c.l.b16 %v116
    %v3148 = vunpack.c.l.b16 %v117
    %v3149 = vunpack.c.l.b16 %v118
    %v3150 = vunpack.c.l.b16 %v119
    %v3151 = vunpack.c.l.b16 %v120
    %v3152 = vunpack.c.l.b16 %v121
    %v3153 = vunpack.c.l.b16 %v122
    %v3154 = vunpack.c.l.b16 %v123
    %v3155 = vunpack.c.l.b16 %v124
    %v3156 = vunpack.c.l.b16 %v125
    %v3157 = vunpack.c.l.b16 %v126
    %v3158 = vunpack.c.l.b16 %v127
    %v3159 = vunpack.c.l.b16 %v128
    %v3160 = vunpack.c.l.b16 %v129
    %v3161 = vunpack.c.l.b16 %v130
    %v3162 = vunpack.c.l.b16 %v131
    %v3163 = vunpack.c.l.b16 %v132
    %v3164 = vunpack.c.l.b16 %v133
    %v3165 = vunpack.c.l.b16 %v134
    %v3166 = vunpack.c.l.b16 %v135
    %v3167 = vunpack.c.l.b16 %v136
    %v3168 = vunpack.c.l.b16 %v137
    %v3169 = vunpack.c.l.b16 %v138
    %v3170 = vunpack.c.l.b16 %v139
    %v3171 = vunpack.c.l.b16 %v140
    %v3172 = vunpack.c.l.b16 %v141
    %v3173 = vunpack.c.l.b16 %v142
    %v3174 = vunpack.c.l.b16 %v143
    %v3175 = vunpack.c.l.b16 %v144
    %v3176 = vunpack.c.l.b16 %v145
    %v3177 = vunpack.c.l.b16 %v146
    %v3178 = vunpack.c.l.b16 %v147
    %v3179 = vunpack.c.l.b16 %v148
    %v3180 = vunpack.c.l.b16 %v149
    %v3181 = vunpack.c.l.b16 %v150
    %v3182 = vunpack.c.l.b16 %v151
    %v3183 = vunpack.c.l.b16 %v152
    %v3184 = vunpack.c.l.b16 %v153
    %v3185 = vunpack.c.l.b16 %v154
    %v3186 = vunpack.c.l.b16 %v155
    %v3187 = vunpack.c.l.b16 %v156
    %v3188 = vunpack.c.l.b16 %v157
    %v3189 = vunpack.c.l.b16 %v158
    %v3190 = vunpack.c.l.b16 %v159
    %v3191 = vunpack.c.l.b16 %v160
    %v3192 = vunpack.c.l.b16 %v161
    %v3193 = vunpack.c.l.b16 %v162
    %v3194 = vunpack.c.l.b16 %v163
    %v3195 = vunpack.c.l.b16 %v164
    %v3196 = vunpack.c.l.b16 %v165
    %v3197 = vunpack.c.l.b16 %v166
    %v3198 = vunpack.c.l.b16 %v167
    %v3199 = vunpack.c.l.b16 %v168
    %v3200 = vunpack.c.l.b16 %v169
    %v3201 = vunpack.c.l.b16 %v170
    %v3202 = vunpack.c.l.b16 %v171
    %v3203 = vunpack.c.l.b16 %v172
    %v3204 = vunpack.c.l.b16 %v173
    %v3205 = vunpack.c.l.b16 %v174
    %v3206 = vunpack.c.l.b16 %v175
    %v3207 = vunpack.c.l.b16 %v176
    %v3208 = vunpack.c.l.b16 %v177
    %v3209 = vunpack.c.l.b16 %v178
    %v3210 = vunpack.c.l.b16 %v179
    %v3211 = vunpack.c.l.b16 %v180
    %v3212 = vunpack.c.l.b16 %v181
    %v3213 = vunpack.c.l.b16 %v182
    %v3214 = vunpack.c.l.b16 %v183
    %v3215 = vunpack.c.l.b16 %v184
    %v3216 = vunpack.c.l.b16 %v185
    %v3217 = vunpack.c.l.b16 %v186
    %v3218 = vunpack.c.l.b16 %v187
    %v3219 = vunpack.c.l.b16 %v188
    %v3220 = vunpack.c.l.b16 %v189
    %v3221 = vunpack.c.l.b16 %v190
    %v3222 = vunpack.c.l.b16 %v191
    %v3223 = vunpack.c.l.b16 %v192
    %v3224 = vunpack.c.l.b16 %v193
    %v3225 = vunpack.c.l.b16 %v194
    %v3226 = vunpack.c.l.b16 %v195
    %v3227 = vunpack.c.l.b16 %v196
    %v3228 = vunpack.c.l.b16 %v197
    %v3229 = vunpack.c.l.b16 %v198
    %v3230 = vunpack.c.l.b16 %v199
    %v3231 = vunpack.c.l.b16 %v200
    %v3232 = vunpack.c.l.b16 %v201
    %v3233 = vunpack.c.l.b16 %v202
    %v3234 = vunpack.c.l.b16 %v203
    %v3235 = vunpack.c.l.b16 %v204
    %v3236 = vunpack.c.l.b16 %v205
    %v3237 = vunpack.c.l.b16 %v206
    %v3238 = vunpack.c.l.b16 %v207
    %v3239 = vunpack.c.l.b16 %v208
    %v3240 = vunpack.c.l.b16 %v209
    %v3241 = vunpack.c.l.b16 %v210
    %v3242 = vunpack.c.l.b16 %v211
    %v3243 = vunpack.c.l.b16 %v212
    %v3244 = vunpack.c.l.b16 %v213
    %v3245 = vunpack.c.l.b16 %v214
    %v3246 = vunpack.c.l.b16 %v215
    %v3247 = vunpack.c.l.b16 %v216
    %v3248 = vunpack.c.l.b16 %v217
    %v3249 = vunpack.c.l.b16 %v218
    %v3250 = vunpack.c.l.b16 %v219
    %v3251 = vunpack.c.l.b16 %v220
    %v3252 = vunpack.c.l.b16 %v221
    %v3253 = vunpack.c.l.b16 %v222
    %v3254 = vunpack.c.l.b16 %v223
    %v3255 = vunpack.c.l.b16 %v224
    %v3256 = vunpack.c.l.b16 %v225
    %v3257 = vunpack.c.l.b16 %v226
    %v3258 = vunpack.c.l.b16 %v227
    %v3259 = vunpack.c.l.b16 %v228
    %v3260 = vunpack.c.l.b16 %v229
    %v3261 = vunpack.c.l.b16 %v230
    %v3262 = vunpack.c.l.b16 %v231
    %v3263 = vunpack.c.l.b16 %v232
    %v3264 = vunpack.c.l.b16 %v233
    %v3265 = vunpack.c.l.b16 %v234
    %v3266 = vunpack.c.l.b16 %v235
    %v3267 = vunpack.c.l.b16 %v236
    %v3268 = vunpack.c.l.b16 %v237
    %v3269 = vunpack.c.l.b16 %v238
    %v3270 = vunpack.c.l.b16 %v239
    %v3271 = vunpack.c.l.b16 %v240
    %v3272 = vunpack.c.l.b16 %v241
    %v3273 = vunpack.c.l.b16 %v242
    %v3274 = vunpack.c.l.b16 %v243
    %v3275 = vunpack.c.l.b16 %v244
    %v3276 = vunpack.c.l.b16 %v245
    %v3277 = vunpack.c.l.b16 %v246
    %v3278 = vunpack.c.l.b16 %v247
    %v3279 = vunpack.c.l.b16 %v248
    %v3280 = vunpack.c.l.b16 %v249
    %v3281 = vunpack.c.l.b16 %v250
    %v3282 = vunpack.c.l.b16 %v251
    %v3283 = vunpack.c.l.b16 %v252
    %v3284 = vunpack.c.l.b16 %v253
    %v3285 = vunpack.c.l.b16 %v254
    %v3286 = vunpack.c.l.b16 %v255
    %v3287 = vunpack.c.l.b16 %v256
    %v3288 = vunpack.c.l.b16 %v257
    %v3289 = vunpack.c.l.b16 %v258
    %v3290 = vunpack.c.l.b16 %v259
    %v3291 = vunpack.c.l.b16 %v260
    %v3292 = vunpack.c.l.b16 %v261
    %v3293 = vunpack.c.l.b16 %v262
    %v3294 = vunpack.c.l.b16 %v263
    %v3295 = vunpack.c.l.b16 %v264
    %v3296 = vunpack.c.l.b16 %v265
    %v3297 = vunpack.c.l.b16 %v266
    %v3298 = vunpack.c.l.b16 %v267
    %v3299 = vunpack.c.l.b16 %v268
    %v3300 = vunpack.c.l.b16 %v269
    %v3301 = vunpack.c.l.b16 %v270
    %v3302 = vunpack.c.l.b16 %v271
    %v3303 = vunpack.c.l.b16 %v272
    %v3304 = vunpack.c.l.b16 %v273
    %v3305 = vunpack.c.l.b16 %v274
    %v3306 = vunpack.c.l.b16 %v275
    %v3307 = vunpack.c.l.b16 %v276
    %v3308 = vunpack.c.l.b16 %v277
    %v3309 = vunpack.c.l.b16 %v278
    %v3310 = vunpack.c.l.b16 %v279
    %v3311 = vunpack.c.l.b16 %v280
    %v3312 = vunpack.c.l.b16 %v281
    %v3313 = vunpack.c.l.b16 %v282
    %v3314 = vunpack.c.l.b16 %v283
    %v3315 = vunpack.c.l.b16 %v284
    %v3316 = vunpack.c.l.b16 %v285
    %v3317 = vunpack.c.l.b16 %v286
    %v3318 = vunpack.c.l.b16 %v287
    %v3319 = vunpack.c.l.b16 %v288
    %v3320 = vunpack.c.l.b16 %v289
    %v3321 = vunpack.c.l.b16 %v290
    %v3322 = vunpack.c.l.b16 %v291
    %v3323 = vunpack.c.l.b16 %v292
    %v3324 = vunpack.c.l.b16 %v293
    %v3325 = vunpack.c.l.b16 %v294
    %v3326 = vunpack.c.l.b16 %v295
    %v3327 = vunpack.c.l.b16 %v296
    %v3328 = vunpack.c.l.b16 %v297
    %v3329 = vunpack.c.l.b16 %v298
    %v3330 = vunpack.c.l.b16 %v299
    %v3331 = vunpack.c.l.b16 %v300
    %v3332 = vunpack.c.l.b16 %v301
    %v3333 = vunpack.c.l.b16 %v302
    %v3334 = vunpack.c.l.b16 %v303
    %v3335 = vunpack.c.l.b16 %v304
    %v3336 = vunpack.c.l.b16 %v305
    %v3337 = vunpack.c.l.b16 %v306
    %v3338 = vunpack.c.l.b16 %v307
    %v3339 = vunpack.c.l.b16 %v308
    %v3340 = vunpack.c.l.b16 %v309
    %v3341 = vunpack.c.l.b16 %v310
    %v3342 = vunpack.c.l.b16 %v311
    %v3343 = vunpack.c.l.b16 %v312
    %v3344 = vunpack.c.l.b16 %v313
    %v3345 = vunpack.c.l.b16 %v314
    %v3346 = vunpack.c.l.b16 %v315
    %v3347 = vunpack.c.l.b16 %v316
    %v3348 = vunpack.c.l.b16 %v317
    %v3349 = vunpack.c.l.b16 %v318
    %v3350 = vunpack.c.l.b16 %v319
    %v3351 = vunpack.c.l.b16 %v320
    %v3352 = vunpack.c.l.b16 %v321
    %v3353 = vunpack.c.l.b16 %v322
    %v3354 = vunpack.c.l.b16 %v323
    %v3355 = vunpack.c.l.b16 %v324
    %v3356 = vunpack.c.l.b16 %v325
    %v3357 = vunpack.c.l.b16 %v326
    %v3358 = vunpack.c.l.b16 %v327
    %v3359 = vunpack.c.l.b16 %v328
    %v3360 = vunpack.c.l.b16 %v329
    %v3361 = vunpack.c.l.b16 %v330
    %v3362 = vunpack.c.l.b16 %v331
    %v3363 = vunpack.c.l.b16 %v332
    %v3364 = vunpack.c.l.b16 %v333
    %v3365 = vunpack.c.l.b16 %v334
    %v3366 = vunpack.c.l.b16 %v335
    %v3367 = vunpack.c.l.b16 %v336
    %v3368 = vunpack.c.l.b16 %v337
    %v3369 = vunpack.c.l.b16 %v338
    %v3370 = vunpack.c.l.b16 %v339
    %v3371 = vunpack.c.l.b16 %v340
    %v3372 = vunpack.c.l.b16 %v341
    %v3373 = vunpack.c.l.b16 %v342
    %v3374 = vunpack.c.l.b16 %v343
    %v3375 = vunpack.c.l.b16 %v344
    %v3376 = vunpack.c.l.b16 %v345
    %v3377 = vunpack.c.l.b16 %v346
    %v3378 = vunpack.c.l.b16 %v347
    %v3379 = vunpack.c.l.b16 %v348
    %v3380 = vunpack.c.l.b16 %v349
    %v3381 = vunpack.c.l.b16 %v350
    %v3382 = vunpack.c.l.b16 %v351
    %v3383 = vunpack.c.l.b16 %v352
    %v3384 = vunpack.c.l.b16 %v353
    %v3385 = vunpack.c.l.b16 %v354
    %v3386 = vunpack.c.l.b16 %v355
    %v3387 = vunpack.c.l.b16 %v356
    %v3388 = vunpack.c.l.b16 %v357
    %v3389 = vunpack.c.l.b16 %v358
    %v3390 = vunpack.c.l.b16 %v359
    %v3391 = vunpack.c.l.b16 %v360
    %v3392 = vunpack.c.l.b16 %v361
    %v3393 = vunpack.c.l.b16 %v362
    %v3394 = vunpack.c.l.b16 %v363
    %v3395 = vunpack.c.l.b16 %v364
    %v3396 = vunpack.c.l.b16 %v365
    %v3397 = vunpack.c.l.b16 %v366
    %v3398 = vunpack.c.l.b16 %v367
    %v3399 = vunpack.c.l.b16 %v368
    %v3400 = vunpack.c.l.b16 %v369
    %v3401 = vunpack.c.l.b16 %v370
    %v3402 = vunpack.c.l.b16 %v371
    %v3403 = vunpack.c.l.b16 %v372
    %v3404 = vunpack.c.l.b16 %v373
    %v3405 = vunpack.c.l.b16 %v374
    %v3406 = vunpack.c.l.b16 %v375
    %v3407 = vunpack.c.l.b16 %v376
    %v3408 = vunpack.c.l.b16 %v377
    %v3409 = vunpack.c.l.b16 %v378
    %v3410 = vunpack.c.l.b16 %v379
    %v3411 = vunpack.c.l.b16 %v380
    %v3412 = vunpack.c.l.b16 %v381
    %v3413 = vunpack.c.l.b16 %v382
    %v3414 = vunpack.c.l.b16 %v383
    %v3415 = vunpack.c.l.b16 %v384
    %v3416 = vunpack.c.l.b16 %v385
    %v3417 = vunpack.c.l.b16 %v386
    %v3418 = vunpack.c.l.b16 %v387
    %v3419 = vunpack.c.l.b16 %v388
    %v3420 = vunpack.c.l.b16 %v389
    %v3421 = vunpack.c.l.b16 %v390
    %v3422 = vunpack.c.l.b16 %v391
    %v3423 = vunpack.c.l.b16 %v392
    %v3424 = vunpack.c.l.b16 %v393
    %v3425 = vunpack.c.l.b16 %v394
    %v3426 = vunpack.c.l.b16 %v395
    %v3427 = vunpack.c.l.b16 %v396
    %v3428 = vunpack.c.l.b16 %v397
    %v3429 = vunpack.c.l.b16 %v398
    %v3430 = vunpack.c.l.b16 %v399
    %v3431 = vunpack.c.l.b16 %v400
    %v3432 = vunpack.c.l.b16 %v401
    %v3433 = vunpack.c.l.b16 %v402
    %v3434 = vunpack.c.l.b16 %v403
    %v3435 = vunpack.c.l.b16 %v404
    %v3436 = vunpack.c.l.b16 %v405
    %v3437 = vunpack.c.l.b16 %v406
    %v3438 = vunpack.c.l.b16 %v407
    %v3439 = vunpack.c.l.b16 %v408
    %v3440 = vunpack.c.l.b16 %v409
    %v3441 = vunpack.c.l.b16 %v410
    %v3442 = vunpack.c.l.b16 %v411
    %v3443 = vunpack.c.l.b16 %v412
    %v3444 = vunpack.c.l.b16 %v413
    %v3445 = vunpack.c.l.b16 %v414
    %v3446 = vunpack.c.l.b16 %v415
    %v3447 = vunpack.c.l.b16 %v416
    %v3448 = vunpack.c.l.b16 %v417
    %v3449 = vunpack.c.l.b16 %v418
    %v3450 = vunpack.c.l.b16 %v419
    %v3451 = vunpack.c.l.b16 %v420
    %v3452 = vunpack.c.l.b16 %v421
    %v3453 = vunpack.c.l.b16 %v422
    %v3454 = vunpack.c.l.b16 %v423
    %v3455 = vunpack.c.l.b16 %v424
    %v3456 = vunpack.c.l.b16 %v425
    %v3457 = vunpack.c.l.b16 %v426
    %v3458 = vunpack.c.l.b16 %v427
    %v3459 = vunpack.c.l.b16 %v428
    %v3460 = vunpack.c.l.b16 %v429
    %v3461 = vunpack.c.l.b16 %v430
    %v3462 = vunpack.c.l.b16 %v431
    %v3463 = vunpack.c.l.b16 %v432
    %v3464 = vunpack.c.l.b16 %v433
    %v3465 = vunpack.c.l.b16 %v434
    %v3466 = vunpack.c.l.b16 %v435
    %v3467 = vunpack.c.l.b16 %v436
    %v3468 = vunpack.c.l.b16 %v437
    %v3469 = vunpack.c.l.b16 %v438
    %v3470 = vunpack.c.l.b16 %v439
    %v3471 = vunpack.c.l.b16 %v440
    %v3472 = vunpack.c.l.b16 %v441
    %v3473 = vunpack.c.l.b16 %v442
    %v3474 = vunpack.c.l.b16 %v443
    %v3475 = vunpack.c.l.b16 %v444
    %v3476 = vunpack.c.l.b16 %v445
    %v3477 = vunpack.c.l.b16 %v446
    %v3478 = vunpack.c.l.b16 %v447
    %v3479 = vunpack.c.l.b16 %v448
    %v3480 = vunpack.c.l.b16 %v449
    %v3481 = vunpack.c.l.b16 %v450
    %v3482 = vunpack.c.l.b16 %v451
    %v3483 = vunpack.c.l.b16 %v452
    %v3484 = vunpack.c.l.b16 %v453
    %v3485 = vunpack.c.l.b16 %v454
    %v3486 = vunpack.c.l.b16 %v455
    %v3487 = vunpack.c.l.b16 %v456
    %v3488 = vunpack.c.l.b16 %v457
    %v3489 = vunpack.c.l.b16 %v458
    %v3490 = vunpack.c.l.b16 %v459
    %v3491 = vunpack.c.l.b16 %v460
    %v3492 = vunpack.c.l.b16 %v461
    %v3493 = vunpack.c.l.b16 %v462
    %v3494 = vunpack.c.l.b16 %v463
    %v3495 = vunpack.c.l.b16 %v464
    %v3496 = vunpack.c.l.b16 %v465
    %v3497 = vunpack.c.l.b16 %v466
    %v3498 = vunpack.c.l.b16 %v467
    %v3499 = vunpack.c.l.b16 %v468
    %v3500 = vunpack.c.l.b16 %v469
    %v3501 = vunpack.c.l.b16 %v470
    %v3502 = vunpack.c.l.b16 %v471
    %v3503 = vunpack.c.l.b16 %v472
    %v3504 = vunpack.c.l.b16 %v473
    %v3505 = vunpack.c.l.b16 %v474
    %v3506 = vunpack.c.l.b16 %v475
    %v3507 = vunpack.c.l.b16 %v476
    %v3508 = vunpack.c.l.b16 %v477
    %v3509 = vunpack.c.l.b16 %v478
    %v3510 = vunpack.c.l.b16 %v479
    %v3511 = vunpack.c.l.b16 %v480
    %v3512 = vunpack.c.l.b16 %v481
    %v3513 = vunpack.c.l.b16 %v482
    %v3514 = vunpack.c.l.b16 %v483
    %v3515 = vunpack.c.l.b16 %v484
    %v3516 = vunpack.c.l.b16 %v485
    %v3517 = vunpack.c.l.b16 %v486
    %v3518 = vunpack.c.l.b16 %v487
    %v3519 = vunpack.c.l.b16 %v488
    %v3520 = vunpack.c.l.b16 %v489
    %v3521 = vunpack.c.l.b16 %v490
    %v3522 = vunpack.c.l.b16 %v491
    %v3523 = vunpack.c.l.b16 %v492
    %v3524 = vunpack.c.l.b16 %v493
    %v3525 = vunpack.c.l.b16 %v494
    %v3526 = vunpack.c.l.b16 %v495
    %v3527 = vunpack.c.l.b16 %v496
    %v3528 = vunpack.c.l.b16 %v497
    %v3529 = vunpack.c.l.b16 %v498
    %v3530 = vunpack.c.l.b16 %v499
    %v3531 = vunpack.c.l.b16 %v500
    %v3532 = vunpack.c.l.b16 %v501
    %v3533 = vunpack.c.l.b16 %v502
    %v3534 = vunpack.c.l.b16 %v503
    %v3535 = vunpack.c.l.b16 %v504
    %v3536 = vunpack.c.l.b16 %v505
    %v3537 = vunpack.c.l.b16 %v506
    %v3538 = vunpack.c.l.b16 %v507
    %v3539 = vunpack.c.l.b16 %v508
    %v3540 = vunpack.c.l.b16 %v509
    %v3541 = vunpack.c.l.b16 %v510
    %v3542 = vunpack.c.l.b16 %v511
    %v3543 = vunpack.c.l.b16 %v512
    %v3544 = vunpack.c.l.b16 %v513
    %v3545 = vunpack.c.l.b16 %v514
    %v3546 = vunpack.c.l.b16 %v515
    %v3547 = vunpack.c.l.b16 %v516
    %v3548 = vunpack.c.l.b16 %v517
    %v3549 = vunpack.c.l.b16 %v518
    %v3550 = vunpack.c.l.b16 %v519
    %v3551 = vunpack.c.l.b16 %v520
    %v3552 = vunpack.c.l.b16 %v521
    %v3553 = vunpack.c.l.b16 %v522
    %v3554 = vunpack.c.l.b16 %v523
    %v3555 = vunpack.c.l.b16 %v524
    %v3556 = vunpack.c.l.b16 %v525
    %v3557 = vunpack.c.l.b16 %v526
    %v3558 = vunpack.c.l.b16 %v527
    %v3559 = vunpack.c.l.b16 %v528
    %v3560 = vunpack.c.l.b16 %v529
    %v3561 = vunpack.c.l.b16 %v530
    %v3562 = vunpack.c.l.b16 %v531
    %v3563 = vunpack.c.l.b16 %v532
    %v3564 = vunpack.c.l.b16 %v533
    %v3565 = vunpack.c.l.b16 %v534
    %v3566 = vunpack.c.l.b16 %v535
    %v3567 = vunpack.c.l.b16 %v536
    %v3568 = vunpack.c.l.b16 %v537
    %v3569 = vunpack.c.l.b16 %v538
    %v3570 = vunpack.c.l.b16 %v539
    %v3571 = vunpack.c.l.b16 %v540
    %v3572 = vunpack.c.l.b16 %v541
    %v3573 = vunpack.c.l.b16 %v542
    %v3574 = vunpack.c.l.b16 %v543
    %v3575 = vunpack.c.l.b16 %v544
    %v3576 = vunpack.c.l.b16 %v545
    %v3577 = vunpack.c.l.b16 %v546
    %v3578 = vunpack.c.l.b16 %v547
    %v3579 = vunpack.c.l.b16 %v548
    %v3580 = vunpack.c.l.b16 %v549
    %v3581 = vunpack.c.l.b16 %v550
    %v3582 = vunpack.c.l.b16 %v551
    %v3583 = vunpack.c.l.b16 %v552
    %v3584 = vunpack.c.l.b16 %v553
    %v3585 = vunpack.c.l.b16 %v554
    %v3586 = vunpack.c.l.b16 %v555
    %v3587 = vunpack.c.l.b16 %v556
    %v3588 = vunpack.c.l.b16 %v557
    %v3589 = vunpack.c.l.b16 %v558
    %v3590 = vunpack.c.l.b16 %v559
    %v3591 = vunpack.c.l.b16 %v560
    %v3592 = vunpack.c.l.b16 %v561
    %v3593 = vunpack.c.l.b16 %v562
    %v3594 = vunpack.c.l.b16 %v563
    %v3595 = vunpack.c.l.b16 %v564
    %v3596 = vunpack.c.l.b16 %v565
    %v3597 = vunpack.c.l.b16 %v566
    %v3598 = vunpack.c.l.b16 %v567
    %v3599 = vunpack.c.l.b16 %v568
    %v3600 = vunpack.c.l.b16 %v569
    %v3601 = vunpack.c.l.b16 %v570
    %v3602 = vunpack.c.l.b16 %v571
    %v3603 = vunpack.c.l.b16 %v572
    %v3604 = vunpack.c.l.b16 %v573
    %v3605 = vunpack.c.l.b16 %v574
    %v3606 = vunpack.c.l.b16 %v575
    %v3607 = vunpack.c.l.b16 %v576
    %v3608 = vunpack.c.l.b16 %v577
    %v3609 = vunpack.c.l.b16 %v578
    %v3610 = vunpack.c.l.b16 %v579
    %v3611 = vunpack.c.l.b16 %v580
    %v3612 = vunpack.c.l.b16 %v581
    %v3613 = vunpack.c.l.b16 %v582
    %v3614 = vunpack.c.l.b16 %v583
    %v3615 = vunpack.c.l.b16 %v584
    %v3616 = vunpack.c.l.b16 %v585
    %v3617 = vunpack.c.l.b16 %v586
    %v3618 = vunpack.c.l.b16 %v587
    %v3619 = vunpack.c.l.b16 %v588
    %v3620 = vunpack.c.l.b16 %v589
    %v3621 = vunpack.c.l.b16 %v590
    %v3622 = vunpack.c.l.b16 %v591
    %v3623 = vunpack.c.l.b16 %v592
    %v3624 = vunpack.c.l.b16 %v593
    %v3625 = vunpack.c.l.b16 %v594
    %v3626 = vunpack.c.l.b16 %v595
    %v3627 = vunpack.c.l.b16 %v596
    %v3628 = vunpack.c.l.b16 %v597
    %v3629 = vunpack.c.l.b16 %v598
    %v3630 = vunpack.c.l.b16 %v599
    %v3631 = vunpack.c.l.b16 %v600
    %v3632 = vunpack.c.l.b16 %v601
    %v3633 = vunpack.c.l.b16 %v602
    %v3634 = vunpack.c.l.b16 %v603
    %v3635 = vunpack.c.l.b16 %v604
    %v3636 = vunpack.c.l.b16 %v605
    %v3637 = vunpack.c.l.b16 %v606
    %v3638 = vunpack.c.l.b16 %v607
    %v3639 = vunpack.c.l.b16 %v608
    %v3640 = vunpack.c.l.b16 %v609
    %v3641 = vunpack.c.l.b16 %v610
    %v3642 = vunpack.c.l.b16 %v611
    %v3643 = vunpack.c.l.b16 %v612
    %v3644 = vunpack.c.l.b16 %v613
    %v3645 = vunpack.c.l.b16 %v614
    %v3646 = vunpack.c.l.b16 %v615
    %v3647 = vunpack.c.l.b16 %v616
    %v3648 = vunpack.c.l.b16 %v617
    %v3649 = vunpack.c.l.b16 %v618
    %v3650 = vunpack.c.l.b16 %v619
    %v3651 = vunpack.c.l.b16 %v620
    %v3652 = vunpack.c.l.b16 %v621
    %v3653 = vunpack.c.l.b16 %v622
    %v3654 = vunpack.c.l.b16 %v623
    %v3655 = vunpack.c.l.b16 %v624
    %v3656 = vunpack.c.l.b16 %v625
    %v3657 = vunpack.c.l.b16 %v626
    %v3658 = vunpack.c.l.b16 %v627
    %v3659 = vunpack.c.l.b16 %v628
    %v3660 = vunpack.c.l.b16 %v629
    %v3661 = vunpack.c.l.b16 %v630
    %v3662 = vunpack.c.l.b16 %v631
    %v3663 = vunpack.c.l.b16 %v632
    %v3664 = vunpack.c.l.b16 %v633
    %v3665 = vunpack.c.l.b16 %v634
    %v3666 = vunpack.c.l.b16 %v635
    %v3667 = vunpack.c.l.b16 %v636
    %v3668 = vunpack.c.l.b16 %v637
    %v3669 = vunpack.c.l.b16 %v638
    %v3670 = vunpack.c.l.b16 %v639
    %v3671 = vunpack.c.l.b16 %v640
    %v3672 = vunpack.c.l.b16 %v641
    %v3673 = vunpack.c.l.b16 %v642
    %v3674 = vunpack.c.l.b16 %v643
    %v3675 = vunpack.c.l.b16 %v644
    %v3676 = vunpack.c.l.b16 %v645
    %v3677 = vunpack.c.l.b16 %v646
    %v3678 = vunpack.c.l.b16 %v647
    %v3679 = vunpack.c.l.b16 %v648
    %v3680 = vunpack.c.l.b16 %v649
    %v3681 = vunpack.c.l.b16 %v650
    %v3682 = vunpack.c.l.b16 %v651
    %v3683 = vunpack.c.l.b16 %v652
    %v3684 = vunpack.c.l.b16 %v653
    %v3685 = vunpack.c.l.b16 %v654
    %v3686 = vunpack.c.l.b16 %v655
    %v3687 = vunpack.c.l.b16 %v656
    %v3688 = vunpack.c.l.b16 %v657
    %v3689 = vunpack.c.l.b16 %v658
    %v3690 = vunpack.c.l.b16 %v659
    %v3691 = vunpack.c.l.b16 %v660
    %v3692 = vunpack.c.l.b16 %v661
    %v3693 = vunpack.c.l.b16 %v662
    %v3694 = vunpack.c.l.b16 %v663
    %v3695 = vunpack.c.l.b16 %v664
    %v3696 = vunpack.c.l.b16 %v665
    %v3697 = vunpack.c.l.b16 %v666
    %v3698 = vunpack.c.l.b16 %v667
    %v3699 = vunpack.c.l.b16 %v668
    %v3700 = vunpack.c.l.b16 %v669
    %v3701 = vunpack.c.l.b16 %v670
    %v3702 = vunpack.c.l.b16 %v671
    %v3703 = vunpack.c.l.b16 %v672
    %v3704 = vunpack.c.l.b16 %v673
    %v3705 = vunpack.c.l.b16 %v674
    %v3706 = vunpack.c.l.b16 %v675
    %v3707 = vunpack.c.l.b16 %v676
    %v3708 = vunpack.c.l.b16 %v677
    %v3709 = vunpack.c.l.b16 %v678
    %v3710 = vunpack.c.l.b16 %v679
    %v3711 = vunpack.c.l.b16 %v680
    %v3712 = vunpack.c.l.b16 %v681
    %v3713 = vunpack.c.l.b16 %v682
    %v3714 = vunpack.c.l.b16 %v683
    %v3715 = vunpack.c.l.b16 %v684
    %v3716 = vunpack.c.l.b16 %v685
    %v3717 = vunpack.c.l.b16 %v686
    %v3718 = vunpack.c.l.b16 %v687
    %v3719 = vunpack.c.l.b16 %v688
    %v3720 = vunpack.c.l.b16 %v689
    %v3721 = vunpack.c.l.b16 %v690
    %v3722 = vunpack.c.l.b16 %v691
    %v3723 = vunpack.c.l.b16 %v692
    %v3724 = vunpack.c.l.b16 %v693
    %v3725 = vunpack.c.l.b16 %v694
    %v3726 = vunpack.c.l.b16 %v695
    %v3727 = vunpack.c.l.b16 %v696
    %v3728 = vunpack.c.l.b16 %v697
    %v3729 = vunpack.c.l.b16 %v698
    %v3730 = vunpack.c.l.b16 %v699
    %v3731 = vunpack.c.l.b16 %v700
    %v3732 = vunpack.c.l.b16 %v701
    %v3733 = vunpack.c.l.b16 %v702
    %v3734 = vunpack.c.l.b16 %v703
    %v3735 = vunpack.c.l.b16 %v704
    %v3736 = vunpack.c.l.b16 %v705
    %v3737 = vunpack.c.l.b16 %v706
    %v3738 = vunpack.c.l.b16 %v707
    %v3739 = vunpack.c.l.b16 %v708
    %v3740 = vunpack.c.l.b16 %v709
    %v3741 = vunpack.c.l.b16 %v710
    %v3742 = vunpack.c.l.b16 %v711
    %v3743 = vunpack.c.l.b16 %v712
    %v3744 = vunpack.c.l.b16 %v713
    %v3745 = vunpack.c.l.b16 %v714
    %v3746 = vunpack.c.l.b16 %v715
    %v3747 = vunpack.c.l.b16 %v716
    %v3748 = vunpack.c.l.b16 %v717
    %v3749 = vunpack.c.l.b16 %v718
    %v3750 = vunpack.c.l.b16 %v719
    %v3751 = vunpack.c.l.b16 %v720
    %v3752 = vunpack.c.l.b16 %v721
    %v3753 = vunpack.c.l.b16 %v722
    %v3754 = vunpack.c.l.b16 %v723
    %v3755 = vunpack.c.l.b16 %v724
    %v3756 = vunpack.c.l.b16 %v725
    %v3757 = vunpack.c.l.b16 %v726
    %v3758 = vunpack.c.l.b16 %v727
    %v3759 = vunpack.c.l.b16 %v728
    %v3760 = vunpack.c.l.b16 %v729
    %v3761 = vunpack.c.l.b16 %v730
    %v3762 = vunpack.c.l.b16 %v731
    %v3763 = vunpack.c.l.b16 %v732
    %v3764 = vunpack.c.l.b16 %v733
    %v3765 = vunpack.c.l.b16 %v734
    %v3766 = vunpack.c.l.b16 %v735
    %v3767 = vunpack.c.l.b16 %v736
    %v3768 = vunpack.c.l.b16 %v737
    %v3769 = vunpack.c.l.b16 %v738
    %v3770 = vunpack.c.l.b16 %v739
    %v3771 = vunpack.c.l.b16 %v740
    %v3772 = vunpack.c.l.b16 %v741
    %v3773 = vunpack.c.l.b16 %v742
    %v3774 = vunpack.c.l.b16 %v743
    %v3775 = vunpack.c.l.b16 %v744
    %v3776 = vunpack.c.l.b16 %v745
    %v3777 = vunpack.c.l.b16 %v746
    %v3778 = vunpack.c.l.b16 %v747
    %v3779 = vunpack.c.l.b16 %v748
    %v3780 = vunpack.c.l.b16 %v749
    %v3781 = vunpack.c.l.b16 %v750
    %v3782 = vunpack.c.l.b16 %v751
    %v3783 = vunpack.c.l.b16 %v752
    %v3784 = vunpack.c.l.b16 %v753
    %v3785 = vunpack.c.l.b16 %v754
    %v3786 = vunpack.c.l.b16 %v755
    %v3787 = vunpack.c.l.b16 %v756
    %v3788 = vunpack.c.l.b16 %v757
    %v3789 = vunpack.c.l.b16 %v758
    %v3790 = vunpack.c.l.b16 %v759
    %v3791 = vunpack.c.l.b16 %v760
    %v3792 = vunpack.c.l.b16 %v761
    %v3793 = vunpack.c.l.b16 %v762
    %v3794 = vunpack.c.l.b16 %v763
    %v3795 = vunpack.c.l.b16 %v764
    %v3796 = vunpack.c.l.b16 %v765
    %v3797 = vunpack.c.l.b16 %v766
    %v3798 = vunpack.c.l.b16 %v767
    %v3799 = vunpack.c.l.b16 %v768
    %v3800 = vunpack.c.l.b16 %v769
    %v3801 = vunpack.c.l.b16 %v770
    %v3802 = vunpack.c.l.b16 %v771
    %v3803 = vunpack.c.l.b16 %v772
    %v3804 = vunpack.c.l.b16 %v773
    %v3805 = vunpack.c.l.b16 %v774
    %v3806 = vunpack.c.l.b16 %v775
    %v3807 = vunpack.c.l.b16 %v776
    %v3808 = vunpack.c.l.b16 %v777
    %v3809 = vunpack.c.l.b16 %v778
    %v3810 = vunpack.c.l.b16 %v779
    %v3811 = vunpack.c.l.b16 %v780
    %v3812 = vunpack.c.l.b16 %v781
    %v3813 = vunpack.c.l.b16 %v782
    %v3814 = vunpack.c.l.b16 %v783
    %v3815 = vunpack.c.l.b16 %v784
    %v3816 = vunpack.c.l.b16 %v785
    %v3817 = vunpack.c.l.b16 %v786
    %v3818 = vunpack.c.l.b16 %v787
    %v3819 = vunpack.c.l.b16 %v788
    %v3820 = vunpack.c.l.b16 %v789
    %v3821 = vunpack.c.l.b16 %v790
    %v3822 = vunpack.c.l.b16 %v791
    %v3823 = vunpack.c.l.b16 %v792
    %v3824 = vunpack.c.l.b16 %v793
    %v3825 = vunpack.c.l.b16 %v794
    %v3826 = vunpack.c.l.b16 %v795
    %v3827 = vunpack.c.l.b16 %v796
    %v3828 = vunpack.c.l.b16 %v797
    %v3829 = vunpack.c.l.b16 %v798
    %v3830 = vunpack.c.l.b16 %v799
    %v3831 = vunpack.c.l.b16 %v800
    %v3832 = vunpack.c.l.b16 %v801
    %v3833 = vunpack.c.l.b16 %v802
    %v3834 = vunpack.c.l.b16 %v803
    %v3835 = vunpack.c.l.b16 %v804
    %v3836 = vunpack.c.l.b16 %v805
    %v3837 = vunpack.c.l.b16 %v806
    %v3838 = vunpack.c.l.b16 %v807
    %v3839 = vunpack.c.l.b16 %v808
    %v3840 = vunpack.c.l.b16 %v809
    %v3841 = vunpack.c.l.b16 %v810
    %v3842 = vunpack.c.l.b16 %v811
    %v3843 = vunpack.c.l.b16 %v812
    %v3844 = vunpack.c.l.b16 %v813
    %v3845 = vunpack.c.l.b16 %v814
    %v3846 = vunpack.c.l.b16 %v815
    %v3847 = vunpack.c.l.b16 %v816
    %v3848 = vunpack.c.l.b16 %v817
    %v3849 = vunpack.c.l.b16 %v818
    %v3850 = vunpack.c.l.b16 %v819
    %v3851 = vunpack.c.l.b16 %v820
    %v3852 = vunpack.c.l.b16 %v821
    %v3853 = vunpack.c.l.b16 %v822
    %v3854 = vunpack.c.l.b16 %v823
    %v3855 = vunpack.c.l.b16 %v824
    %v3856 = vunpack.c.l.b16 %v825
    %v3857 = vunpack.c.l.b16 %v826
    %v3858 = vunpack.c.l.b16 %v827
    %v3859 = vunpack.c.l.b16 %v828
    %v3860 = vunpack.c.l.b16 %v829
    %v3861 = vunpack.c.l.b16 %v830
    %v3862 = vunpack.c.l.b16 %v831
    %v3863 = vunpack.c.l.b16 %v832
    %v3864 = vunpack.c.l.b16 %v833
    %v3865 = vunpack.c.l.b16 %v834
    %v3866 = vunpack.c.l.b16 %v835
    %v3867 = vunpack.c.l.b16 %v836
    %v3868 = vunpack.c.l.b16 %v837
    %v3869 = vunpack.c.l.b16 %v838
    %v3870 = vunpack.c.l.b16 %v839
    %v3871 = vunpack.c.l.b16 %v840
    %v3872 = vunpack.c.l.b16 %v841
    %v3873 = vunpack.c.l.b16 %v842
    %v3874 = vunpack.c.l.b16 %v843
    %v3875 = vunpack.c.l.b16 %v844
    %v3876 = vunpack.c.l.b16 %v845
    %v3877 = vunpack.c.l.b16 %v846
    %v3878 = vunpack.c.l.b16 %v847
    %v3879 = vunpack.c.l.b16 %v848
    %v3880 = vunpack.c.l.b16 %v849
    %v3881 = vunpack.c.l.b16 %v850
    %v3882 = vunpack.c.l.b16 %v851
    %v3883 = vunpack.c.l.b16 %v852
    %v3884 = vunpack.c.l.b16 %v853
    %v3885 = vunpack.c.l.b16 %v854
    %v3886 = vunpack.c.l.b16 %v855
    %v3887 = vunpack.c.l.b16 %v856
    %v3888 = vunpack.c.l.b16 %v857
    %v3889 = vunpack.c.l.b16 %v858
    %v3890 = vunpack.c.l.b16 %v859
    %v3891 = vunpack.c.l.b16 %v860
    %v3892 = vunpack.c.l.b16 %v861
    %v3893 = vunpack.c.l.b16 %v862
    %v3894 = vunpack.c.l.b16 %v863
    %v3895 = vunpack.c.l.b16 %v864
    %v3896 = vunpack.c.l.b16 %v865
    %v3897 = vunpack.c.l.b16 %v866
    %v3898 = vunpack.c.l.b16 %v867
    %v3899 = vunpack.c.l.b16 %v868
    %v3900 = vunpack.c.l.b16 %v869
    %v3901 = vunpack.c.l.b16 %v870
    %v3902 = vunpack.c.l.b16 %v871
    %v3903 = vunpack.c.l.b16 %v872
    %v3904 = vunpack.c.l.b16 %v873
    %v3905 = vunpack.c.l.b16 %v874
    %v3906 = vunpack.c.l.b16 %v875
    %v3907 = vunpack.c.l.b16 %v876
    %v3908 = vunpack.c.l.b16 %v877
    %v3909 = vunpack.c.l.b16 %v878
    %v3910 = vunpack.c.l.b16 %v879
    %v3911 = vunpack.c.l.b16 %v880
    %v3912 = vunpack.c.l.b16 %v881
    %v3913 = vunpack.c.l.b16 %v882
    %v3914 = vunpack.c.l.b16 %v883
    %v3915 = vunpack.c.l.b16 %v884
    %v3916 = vunpack.c.l.b16 %v885
    %v3917 = vunpack.c.l.b16 %v886
    %v3918 = vunpack.c.l.b16 %v887
    %v3919 = vunpack.c.l.b16 %v888
    %v3920 = vunpack.c.l.b16 %v889
    %v3921 = vunpack.c.l.b16 %v890
    %v3922 = vunpack.c.l.b16 %v891
    %v3923 = vunpack.c.l.b16 %v892
    %v3924 = vunpack.c.l.b16 %v893
    %v3925 = vunpack.c.l.b16 %v894
    %v3926 = vunpack.c.l.b16 %v895
    %v3927 = vunpack.c.l.b16 %v896
    %v3928 = vunpack.c.l.b16 %v897
    %v3929 = vunpack.c.l.b16 %v898
    %v3930 = vunpack.c.l.b16 %v899
    %v3931 = vunpack.c.l.b16 %v900
    %v3932 = vunpack.c.l.b16 %v901
    %v3933 = vunpack.c.l.b16 %v902
    %v3934 = vunpack.c.l.b16 %v903
    %v3935 = vunpack.c.l.b16 %v904
    %v3936 = vunpack.c.l.b16 %v905
    %v3937 = vunpack.c.l.b16 %v906
    %v3938 = vunpack.c.l.b16 %v907
    %v3939 = vunpack.c.l.b16 %v908
    %v3940 = vunpack.c.l.b16 %v909
    %v3941 = vunpack.c.l.b16 %v910
    %v3942 = vunpack.c.l.b16 %v911
    %v3943 = vunpack.c.l.b16 %v912
    %v3944 = vunpack.c.l.b16 %v913
    %v3945 = vunpack.c.l.b16 %v914
    %v3946 = vunpack.c.l.b16 %v915
    %v3947 = vunpack.c.l.b16 %v916
    %v3948 = vunpack.c.l.b16 %v917
    %v3949 = vunpack.c.l.b16 %v918
    %v3950 = vunpack.c.l.b16 %v919
    %v3951 = vunpack.c.l.b16 %v920
    %v3952 = vunpack.c.l.b16 %v921
    %v3953 = vunpack.c.l.b16 %v922
    %v3954 = vunpack.c.l.b16 %v923
    %v3955 = vunpack.c.l.b16 %v924
    %v3956 = vunpack.c.l.b16 %v925
    %v3957 = vunpack.c.l.b16 %v926
    %v3958 = vunpack.c.l.b16 %v927
    %v3959 = vunpack.c.l.b16 %v928
    %v3960 = vunpack.c.l.b16 %v929
    %v3961 = vunpack.c.l.b16 %v930
    %v3962 = vunpack.c.l.b16 %v931
    %v3963 = vunpack.c.l.b16 %v932
    %v3964 = vunpack.c.l.b16 %v933
    %v3965 = vunpack.c.l.b16 %v934
    %v3966 = vunpack.c.l.b16 %v935
    %v3967 = vunpack.c.l.b16 %v936
    %v3968 = vunpack.c.l.b16 %v937
    %v3969 = vunpack.c.l.b16 %v938
    %v3970 = vunpack.c.l.b16 %v939
    %v3971 = vunpack.c.l.b16 %v940
    %v3972 = vunpack.c.l.b16 %v941
    %v3973 = vunpack.c.l.b16 %v942
    %v3974 = vunpack.c.l.b16 %v943
    %v3975 = vunpack.c.l.b16 %v944
    %v3976 = vunpack.c.l.b16 %v945
    %v3977 = vunpack.c.l.b16 %v946
    %v3978 = vunpack.c.l.b16 %v947
    %v3979 = vunpack.c.l.b16 %v948
    %v3980 = vunpack.c.l.b16 %v949
    %v3981 = vunpack.c.l.b16 %v950
    %v3982 = vunpack.c.l.b16 %v951
    %v3983 = vunpack.c.l.b16 %v952
    %v3984 = vunpack.c.l.b16 %v953
    %v3985 = vunpack.c.l.b16 %v954
    %v3986 = vunpack.c.l.b16 %v955
    %v3987 = vunpack.c.l.b16 %v956
    %v3988 = vunpack.c.l.b16 %v957
    %v3989 = vunpack.c.l.b16 %v958
    %v3990 = vunpack.c.l.b16 %v959
    %v3991 = vunpack.c.l.b16 %v960
    %v3992 = vunpack.c.l.b16 %v961
    %v3993 = vunpack.c.l.b16 %v962
    %v3994 = vunpack.c.l.b16 %v963
    %v3995 = vunpack.c.l.b16 %v964
    %v3996 = vunpack.c.l.b16 %v965
    %v3997 = vunpack.c.l.b16 %v966
    %v3998 = vunpack.c.l.b16 %v967
    %v3999 = vunpack.c.l.b16 %v968
    %v4000 = vunpack.c.l.b16 %v969
    %v4001 = vunpack.c.l.b16 %v970
    %v4002 = vunpack.c.l.b16 %v971
    %v4003 = vunpack.c.l.b16 %v972
    %v4004 = vunpack.c.l.b16 %v973
    %v4005 = vunpack.c.l.b16 %v974
    %v4006 = vunpack.c.l.b16 %v975
    %v4007 = vunpack.c.l.b16 %v976
    %v4008 = vunpack.c.l.b16 %v977
    %v4009 = vunpack.c.l.b16 %v978
    %v4010 = vunpack.c.l.b16 %v979
    %v4011 = vunpack.c.l.b16 %v980
    %v4012 = vunpack.c.l.b16 %v981
    %v4013 = vunpack.c.l.b16 %v982
    %v4014 = vunpack.c.l.b16 %v983
    %v4015 = vunpack.c.l.b16 %v984
    %v4016 = vunpack.c.l.b16 %v985
    %v4017 = vunpack.c.l.b16 %v986
    %v4018 = vunpack.c.l.b16 %v987
    %v4019 = vunpack.c.l.b16 %v988
    %v4020 = vunpack.c.l.b16 %v989
    %v4021 = vunpack.c.l.b16 %v990
    %v4022 = vunpack.c.l.b16 %v991
    %v4023 = vunpack.c.l.b16 %v992
    %v4024 = vunpack.c.l.b16 %v993
    %v4025 = vunpack.c.l.b16 %v994
    %v4026 = vunpack.c.l.b16 %v995
    %v4027 = vunpack.c.l.b16 %v996
    %v4028 = vunpack.c.l.b16 %v997
    %v4029 = vunpack.c.l.b16 %v998
    %v4030 = vunpack.c.l.b16 %v999
    %v4031 = vunpack.c.l.b16 %v1000
    %v4032 = vunpack.c.l.b16 %v1001
    %v4033 = vunpack.c.l.b16 %v1002
    %v4034 = vunpack.c.l.b16 %v1003
    %v4035 = vunpack.c.l.b16 %v1004
    %v4036 = vunpack.c.l.b16 %v1005
    %v4037 = vunpack.c.l.b16 %v1006
    %v4038 = vunpack.c.l.b16 %v1007
    %v4039 = vunpack.c.l.b16 %v1008
    %v4040 = vunpack.c.l.b16 %v1009
    %v4041 = vunpack.c.l.b16 %v1010
    %v4042 = vunpack.c.l.b16 %v1011
    %v4043 = vunpack.c.l.b16 %v1012
    %v4044 = vunpack.c.l.b16 %v1013
    %v4045 = vunpack.c.l.b16 %v1014
    %v4046 = vunpack.c.l.b16 %v1015
    %v4047 = vunpack.c.l.b16 %v1016
    %v4048 = vunpack.c.l.b16 %v1017
    %v4049 = vunpack.c.l.b16 %v1018
    %v4050 = vunpack.c.l.b16 %v1019
    %v4051 = vunpack.c.l.b16 %v1020
    %v4052 = vunpack.c.l.b16 %v1021
    %v4053 = vunpack.c.l.b16 %v1022
    %v4054 = vunpack.c.l.b16 %v1023
    %v4055 = vunpack.c.l.b16 %v1024
    %v4056 = vunpack.c.l.b16 %v1025
    %v4057 = vunpack.c.l.b16 %v1026
    %v4058 = vunpack.c.l.b16 %v1027
    %v4059 = vunpack.c.l.b16 %v1028
    %v4060 = vunpack.c.l.b16 %v1029
    %v4061 = vunpack.c.l.b16 %v1030
    %v4062 = vunpack.c.l.b16 %v1031
    %v4063 = vunpack.c.l.b16 %v1032
    %v4064 = vunpack.c.l.b16 %v1033
    %v4065 = vunpack.c.l.b16 %v1034
    %v4066 = vunpack.c.l.b16 %v1035
    %v4067 = vunpack.c.l.b16 %v1036
    %v4068 = vunpack.c.l.b16 %v1037
    %v4069 = vunpack.c.l.b16 %v1038
    %v4070 = vunpack.c.l.b16 %v1039
    %v4071 = vunpack.c.l.b16 %v1040
    %v4072 = vunpack.c.l.b16 %v1041
    %v4073 = vunpack.c.l.b16 %v1042
    %v4074 = vunpack.c.l.b16 %v1043
    %v4075 = vunpack.c.l.b16 %v1044
    %v4076 = vunpack.c.l.b16 %v1045
    %v4077 = vunpack.c.l.b16 %v1046
    %v4078 = vunpack.c.l.b16 %v1047
    %v4079 = vunpack.c.l.b16 %v1048
    %v4080 = vunpack.c.l.b16 %v1049
    %v4081 = vunpack.c.l.b16 %v1050
    %v4082 = vunpack.c.l.b16 %v1051
    %v4083 = vunpack.c.l.b16 %v1052
    %v4084 = vunpack.c.l.b16 %v1053
    %v4085 = vunpack.c.l.b16 %v1054
    %v4086 = vunpack.c.l.b16 %v1055
    %v4087 = vunpack.c.l.b16 %v1056
    %v4088 = vunpack.c.l.b16 %v1057
    %v4089 = vunpack.c.l.b16 %v1058
    %v4090 = vunpack.c.l.b16 %v1059
    %v4091 = vunpack.c.l.b16 %v1060
    %v4092 = vunpack.c.l.b16 %v1061
    %v4093 = vunpack.c.l.b16 %v1062
    %v4094 = vunpack.c.l.b16 %v1063
    %v4095 = vunpack.c.l.b16 %v1064
    %v4096 = vunpack.c.l.b16 %v1065
    %v4097 = vunpack.c.l.b16 %v1066
    %v4098 = vunpack.c.l.b16 %v1067
    %v4099 = vunpack.c.l.b16 %v1068
    %v4100 = vunpack.c.l.b16 %v1069
    %v4101 = vunpack.c.l.b16 %v1070
    %v4102 = vunpack.c.l.b16 %v1071
    %v4103 = vunpack.c.l.b16 %v1072
    %v4104 = vunpack.c.l.b16 %v1073
    %v4105 = vunpack.c.l.b16 %v1074
    %v4106 = vunpack.c.l.b16 %v1075
    %v4107 = vunpack.c.l.b16 %v1076
    %v4108 = vunpack.c.l.b16 %v1077
    %v4109 = vunpack.c.l.b16 %v1078
    %v4110 = vunpack.c.l.b16 %v1079
    %v4111 = vunpack.c.l.b16 %v1080
    %v4112 = vunpack.c.l.b16 %v1081
    %v4113 = vunpack.c.l.b16 %v1082
    %v4114 = vunpack.c.l.b16 %v1083
    %v4115 = vunpack.c.l.b16 %v1084
    %v4116 = vunpack.c.l.b16 %v1085
    %v4117 = vunpack.c.l.b16 %v1086
    %v4118 = vunpack.c.l.b16 %v1087
    %v4119 = vunpack.c.l.b16 %v1088
    %v4120 = vunpack.c.l.b16 %v1089
    %v4121 = vunpack.c.l.b16 %v1090
    %v4122 = vunpack.c.l.b16 %v1091
    %v4123 = vunpack.c.l.b16 %v1092
    %v4124 = vunpack.c.l.b16 %v1093
    %v4125 = vunpack.c.l.b16 %v1094
    %v4126 = vunpack.c.l.b16 %v1095
    %v4127 = vunpack.c.l.b16 %v1096
    %v4128 = vunpack.c.l.b16 %v1097
    %v4129 = vunpack.c.l.b16 %v1098
    %v4130 = vunpack.c.l.b16 %v1099
    %v4131 = vunpack.c.l.b16 %v1100
    %v4132 = vunpack.c.l.b16 %v1101
    %v4133 = vunpack.c.l.b16 %v1102
    %v4134 = vunpack.c.l.b16 %v1103
    %v4135 = vunpack.c.l.b16 %v1104
    %v4136 = vunpack.c.l.b16 %v1105
    %v4137 = vunpack.c.l.b16 %v1106
    %v4138 = vunpack.c.l.b16 %v1107
    %v4139 = vunpack.c.l.b16 %v1108
    %v4140 = vunpack.c.l.b16 %v1109
    %v4141 = vunpack.c.l.b16 %v1110
    %v4142 = vunpack.c.l.b16 %v1111
    %v4143 = vunpack.c.l.b16 %v1112
    %v4144 = vunpack.c.l.b16 %v1113
    %v4145 = vunpack.c.l.b16 %v1114
    %v4146 = vunpack.c.l.b16 %v1115
    %v4147 = vunpack.c.l.b16 %v1116
    %v4148 = vunpack.c.l.b16 %v1117
    %v4149 = vunpack.c.l.b16 %v1118
    %v4150 = vunpack.c.l.b16 %v1119
    %v4151 = vunpack.c.l.b16 %v1120
    %v4152 = vunpack.c.l.b16 %v1121
    %v4153 = vunpack.c.l.b16 %v1122
    %v4154 = vunpack.c.l.b16 %v1123
    %v4155 = vunpack.c.l.b16 %v1124
    %v4156 = vunpack.c.l.b16 %v1125
    %v4157 = vunpack.c.l.b16 %v1126
    %v4158 = vunpack.c.l.b16 %v1127
    %v4159 = vunpack.c.l.b16 %v1128
    %v4160 = vunpack.c.l.b16 %v1129
    %v4161 = vunpack.c.l.b16 %v1130
    %v4162 = vunpack.c.l.b16 %v1131
    %v4163 = vunpack.c.l.b16 %v1132
    %v4164 = vunpack.c.l.b16 %v1133
    %v4165 = vunpack.c.l.b16 %v1134
    %v4166 = vunpack.c.l.b16 %v1135
    %v4167 = vunpack.c.l.b16 %v1136
    %v4168 = vunpack.c.l.b16 %v1137
    %v4169 = vunpack.c.l.b16 %v1138
    %v4170 = vunpack.c.l.b16 %v1139
    %v4171 = vunpack.c.l.b16 %v1140
    %v4172 = vunpack.c.l.b16 %v1141
    %v4173 = vunpack.c.l.b16 %v1142
    %v4174 = vunpack.c.l.b16 %v1143
    %v4175 = vunpack.c.l.b16 %v1144
    %v4176 = vunpack.c.l.b16 %v1145
    %v4177 = vunpack.c.l.b16 %v1146
    %v4178 = vunpack.c.l.b16 %v1147
    %v4179 = vunpack.c.l.b16 %v1148
    %v4180 = vunpack.c.l.b16 %v1149
    %v4181 = vunpack.c.l.b16 %v1150
    %v4182 = vunpack.c.l.b16 %v1151
    %v4183 = vunpack.c.l.b16 %v1152
    %v4184 = vunpack.c.l.b16 %v1153
    %v4185 = vunpack.c.l.b16 %v1154
    %v4186 = vunpack.c.l.b16 %v1155
    %v4187 = vunpack.c.l.b16 %v1156
    %v4188 = vunpack.c.l.b16 %v1157
    %v4189 = vunpack.c.l.b16 %v1158
    %v4190 = vunpack.c.l.b16 %v1159
    %v4191 = vunpack.c.l.b16 %v1160
    %v4192 = vunpack.c.l.b16 %v1161
    %v4193 = vunpack.c.l.b16 %v1162
    %v4194 = vunpack.c.l.b16 %v1163
    %v4195 = vunpack.c.l.b16 %v1164
    %v4196 = vunpack.c.l.b16 %v1165
    %v4197 = vunpack.c.l.b16 %v1166
    %v4198 = vunpack.c.l.b16 %v1167
    %v4199 = vunpack.c.l.b16 %v1168
    %v4200 = vunpack.c.l.b16 %v1169
    %v4201 = vunpack.c.l.b16 %v1170
    %v4202 = vunpack.c.l.b16 %v1171
    %v4203 = vunpack.c.l.b16 %v1172
    %v4204 = vunpack.c.l.b16 %v1173
    %v4205 = vunpack.c.l.b16 %v1174
    %v4206 = vunpack.c.l.b16 %v1175
    %v4207 = vunpack.c.l.b16 %v1176
    %v4208 = vunpack.c.l.b16 %v1177
    %v4209 = vunpack.c.l.b16 %v1178
    %v4210 = vunpack.c.l.b16 %v1179
    %v4211 = vunpack.c.l.b16 %v1180
    %v4212 = vunpack.c.l.b16 %v1181
    %v4213 = vunpack.c.l.b16 %v1182
    %v4214 = vunpack.c.l.b16 %v1183
    %v4215 = vunpack.c.l.b16 %v1184
    %v4216 = vunpack.c.l.b16 %v1185
    %v4217 = vunpack.c.l.b16 %v1186
    %v4218 = vunpack.c.l.b16 %v1187
    %v4219 = vunpack.c.l.b16 %v1188
    %v4220 = vunpack.c.l.b16 %v1189
    %v4221 = vunpack.c.l.b16 %v1190
    %v4222 = vunpack.c.l.b16 %v1191
    %v4223 = vunpack.c.l.b16 %v1192
    %v4224 = vunpack.c.l.b16 %v1193
    %v4225 = vunpack.c.l.b16 %v1194
    %v4226 = vunpack.c.l.b16 %v1195
    %v4227 = vunpack.c.l.b16 %v1196
    %v4228 = vunpack.c.l.b16 %v1197
    %v4229 = vunpack.c.l.b16 %v1198
    %v4230 = vunpack.c.l.b16 %v1199
    %v4231 = vunpack.c.l.b16 %v1200
    %v4232 = vunpack.c.l.b16 %v1201
    %v4233 = vunpack.c.l.b16 %v1202
    %v4234 = vunpack.c.l.b16 %v1203
    %v4235 = vunpack.c.l.b16 %v1204
    %v4236 = vunpack.c.l.b16 %v1205
    %v4237 = vunpack.c.l.b16 %v1206
    %v4238 = vunpack.c.l.b16 %v1207
    %v4239 = vunpack.c.l.b16 %v1208
    %v4240 = vunpack.c.l.b16 %v1209
    %v4241 = vpack.c.b16 %v3090, %v3089
    %v4242 = vpack.c.b16 %v3092, %v3091
    %v4243 = vpack.c.b16 %v3094, %v3093
    %v4244 = vpack.c.b16 %v3096, %v3095
    %v4245 = vpack.c.b16 %v3098, %v3097
    %v4246 = vpack.c.b16 %v3100, %v3099
    %v4247 = vpack.c.b16 %v3102, %v3101
    %v4248 = vpack.c.b16 %v3104, %v3103
    %v4249 = vpack.c.b16 %v3106, %v3105
    %v4250 = vpack.c.b16 %v3108, %v3107
    %v4251 = vpack.c.b16 %v3110, %v3109
    %v4252 = vpack.c.b16 %v3112, %v3111
    %v4253 = vpack.c.b16 %v3114, %v3113
    %v4254 = vpack.c.b16 %v3116, %v3115
    %v4255 = vpack.c.b16 %v3118, %v3117
    %v4256 = vpack.c.b16 %v3120, %v3119
    %v4257 = vpack.c.b16 %v3122, %v3121
    %v4258 = vpack.c.b16 %v3124, %v3123
    %v4259 = vpack.c.b16 %v3126, %v3125
    %v4260 = vpack.c.b16 %v3128, %v3127
    %v4261 = vpack.c.b16 %v3130, %v3129
    %v4262 = vpack.c.b16 %v3132, %v3131
    %v4263 = vpack.c.b16 %v3134, %v3133
    %v4264 = vpack.c.b16 %v3136, %v3135
    %v4265 = vpack.c.b16 %v3138, %v3137
    %v4266 = vpack.c.b16 %v3140, %v3139
    %v4267 = vpack.c.b16 %v3142, %v3141
    %v4268 = vpack.c.b16 %v3144, %v3143
    %v4269 = vpack.c.b16 %v3146, %v3145
    %v4270 = vpack.c.b16 %v3148, %v3147
    %v4271 = vpack.c.b16 %v3150, %v3149
    %v4272 = vpack.c.b16 %v3152, %v3151
    %v4273 = vpack.c.b16 %v3154, %v3153
    %v4274 = vpack.c.b16 %v3156, %v3155
    %v4275 = vpack.c.b16 %v3158, %v3157
    %v4276 = vpack.c.b16 %v3160, %v3159
    %v4277 = vpack.c.b16 %v3162, %v3161
    %v4278 = vpack.c.b16 %v3164, %v3163
    %v4279 = vpack.c.b16 %v3166, %v3165
    %v4280 = vpack.c.b16 %v3168, %v3167
    %v4281 = vpack.c.b16 %v3170, %v3169
    %v4282 = vpack.c.b16 %v3172, %v3171
    %v4283 = vpack.c.b16 %v3174, %v3173
    %v4284 = vpack.c.b16 %v3176, %v3175
    %v4285 = vpack.c.b16 %v3178, %v3177
    %v4286 = vpack.c.b16 %v3180, %v3179
    %v4287 = vpack.c.b16 %v3182, %v3181
    %v4288 = vpack.c.b16 %v3184, %v3183
    %v4289 = vpack.c.b16 %v3186, %v3185
    %v4290 = vpack.c.b16 %v3188, %v3187
    %v4291 = vpack.c.b16 %v3190, %v3189
    %v4292 = vpack.c.b16 %v3192, %v3191
    %v4293 = vpack.c.b16 %v3194, %v3193
    %v4294 = vpack.c.b16 %v3196, %v3195
    %v4295 = vpack.c.b16 %v3198, %v3197
    %v4296 = vpack.c.b16 %v3200, %v3199
    %v4297 = vpack.c.b16 %v3202, %v3201
    %v4298 = vpack.c.b16 %v3204, %v3203
    %v4299 = vpack.c.b16 %v3206, %v3205
    %v4300 = vpack.c.b16 %v3208, %v3207
    %v4301 = vpack.c.b16 %v3210, %v3209
    %v4302 = vpack.c.b16 %v3212, %v3211
    %v4303 = vpack.c.b16 %v3214, %v3213
    %v4304 = vpack.c.b16 %v3216, %v3215
    %v4305 = vpack.c.b16 %v3218, %v3217
    %v4306 = vpack.c.b16 %v3220, %v3219
    %v4307 = vpack.c.b16 %v3222, %v3221
    %v4308 = vpack.c.b16 %v3224, %v3223
    %v4309 = vpack.c.b16 %v3226, %v3225
    %v4310 = vpack.c.b16 %v3228, %v3227
    %v4311 = vpack.c.b16 %v3230, %v3229
    %v4312 = vpack.c.b16 %v3232, %v3231
    %v4313 = vpack.c.b16 %v3234, %v3233
    %v4314 = vpack.c.b16 %v3236, %v3235
    %v4315 = vpack.c.b16 %v3238, %v3237
    %v4316 = vpack.c.b16 %v3240, %v3239
    %v4317 = vpack.c.b16 %v3242, %v3241
    %v4318 = vpack.c.b16 %v3244, %v3243
    %v4319 = vpack.c.b16 %v3246, %v3245
    %v4320 = vpack.c.b16 %v3248, %v3247
    %v4321 = vpack.c.b16 %v3250, %v3249
    %v4322 = vpack.c.b16 %v3252, %v3251
    %v4323 = vpack.c.b16 %v3254, %v3253
    %v4324 = vpack.c.b16 %v3256, %v3255
    %v4325 = vpack.c.b16 %v3258, %v3257
    %v4326 = vpack.c.b16 %v3260, %v3259
    %v4327 = vpack.c.b16 %v3262, %v3261
    %v4328 = vpack.c.b16 %v3264, %v3263
    %v4329 = vpack.c.b16 %v3266, %v3265
    %v4330 = vpack.c.b16 %v3268, %v3267
    %v4331 = vpack.c.b16 %v3270, %v3269
    %v4332 = vpack.c.b16 %v3272, %v3271
    %v4333 = vpack.c.b16 %v3274, %v3273
    %v4334 = vpack.c.b16 %v3276, %v3275
    %v4335 = vpack.c.b16 %v3278, %v3277
    %v4336 = vpack.c.b16 %v3280, %v3279
    %v4337 = vpack.c.b16 %v3282, %v3281
    %v4338 = vpack.c.b16 %v3284, %v3283
    %v4339 = vpack.c.b16 %v3286, %v3285
    %v4340 = vpack.c.b16 %v3288, %v3287
    %v4341 = vpack.c.b16 %v3290, %v3289
    %v4342 = vpack.c.b16 %v3292, %v3291
    %v4343 = vpack.c.b16 %v3294, %v3293
    %v4344 = vpack.c.b16 %v3296, %v3295
    %v4345 = vpack.c.b16 %v3298, %v3297
    %v4346 = vpack.c.b16 %v3300, %v3299
    %v4347 = vpack.c.b16 %v3302, %v3301
    %v4348 = vpack.c.b16 %v3304, %v3303
    %v4349 = vpack.c.b16 %v3306, %v3305
    %v4350 = vpack.c.b16 %v3308, %v3307
    %v4351 = vpack.c.b16 %v3310, %v3309
    %v4352 = vpack.c.b16 %v3312, %v3311
    %v4353 = vpack.c.b16 %v3314, %v3313
    %v4354 = vpack.c.b16 %v3316, %v3315
    %v4355 = vpack.c.b16 %v3318, %v3317
    %v4356 = vpack.c.b16 %v3320, %v3319
    %v4357 = vpack.c.b16 %v3322, %v3321
    %v4358 = vpack.c.b16 %v3324, %v3323
    %v4359 = vpack.c.b16 %v3326, %v3325
    %v4360 = vpack.c.b16 %v3328, %v3327
    %v4361 = vpack.c.b16 %v3330, %v3329
    %v4362 = vpack.c.b16 %v3332, %v3331
    %v4363 = vpack.c.b16 %v3334, %v3333
    %v4364 = vpack.c.b16 %v3336, %v3335
    %v4365 = vpack.c.b16 %v3338, %v3337
    %v4366 = vpack.c.b16 %v3340, %v3339
    %v4367 = vpack.c.b16 %v3342, %v3341
    %v4368 = vpack.c.b16 %v3344, %v3343
    %v4369 = vpack.c.b16 %v3346, %v3345
    %v4370 = vpack.c.b16 %v3348, %v3347
    %v4371 = vpack.c.b16 %v3350, %v3349
    %v4372 = vpack.c.b16 %v3352, %v3351
    %v4373 = vpack.c.b16 %v3354, %v3353
    %v4374 = vpack.c.b16 %v3356, %v3355
    %v4375 = vpack.c.b16 %v3358, %v3357
    %v4376 = vpack.c.b16 %v3360, %v3359
    %v4377 = vpack.c.b16 %v3362, %v3361
    %v4378 = vpack.c.b16 %v3364, %v3363
    %v4379 = vpack.c.b16 %v3366, %v3365
    %v4380 = vpack.c.b16 %v3368, %v3367
    %v4381 = vpack.c.b16 %v3370, %v3369
    %v4382 = vpack.c.b16 %v3372, %v3371
    %v4383 = vpack.c.b16 %v3374, %v3373
    %v4384 = vpack.c.b16 %v3376, %v3375
    %v4385 = vpack.c.b16 %v3378, %v3377
    %v4386 = vpack.c.b16 %v3380, %v3379
    %v4387 = vpack.c.b16 %v3382, %v3381
    %v4388 = vpack.c.b16 %v3384, %v3383
    %v4389 = vpack.c.b16 %v3386, %v3385
    %v4390 = vpack.c.b16 %v3388, %v3387
    %v4391 = vpack.c.b16 %v3390, %v3389
    %v4392 = vpack.c.b16 %v3392, %v3391
    %v4393 = vpack.c.b16 %v3394, %v3393
    %v4394 = vpack.c.b16 %v3396, %v3395
    %v4395 = vpack.c.b16 %v3398, %v3397
    %v4396 = vpack.c.b16 %v3400, %v3399
    %v4397 = vpack.c.b16 %v3402, %v3401
    %v4398 = vpack.c.b16 %v3404, %v3403
    %v4399 = vpack.c.b16 %v3406, %v3405
    %v4400 = vpack.c.b16 %v3408, %v3407
    %v4401 = vpack.c.b16 %v3410, %v3409
    %v4402 = vpack.c.b16 %v3412, %v3411
    %v4403 = vpack.c.b16 %v3414, %v3413
    %v4404 = vpack.c.b16 %v3416, %v3415
    %v4405 = vpack.c.b16 %v3418, %v3417
    %v4406 = vpack.c.b16 %v3420, %v3419
    %v4407 = vpack.c.b16 %v3422, %v3421
    %v4408 = vpack.c.b16 %v3424, %v3423
    %v4409 = vpack.c.b16 %v3426, %v3425
    %v4410 = vpack.c.b16 %v3428, %v3427
    %v4411 = vpack.c.b16 %v3430, %v3429
    %v4412 = vpack.c.b16 %v3432, %v3431
    %v4413 = vpack.c.b16 %v3434, %v3433
    %v4414 = vpack.c.b16 %v3436, %v3435
    %v4415 = vpack.c.b16 %v3438, %v3437
    %v4416 = vpack.c.b16 %v3440, %v3439
    %v4417 = vpack.c.b16 %v3442, %v3441
    %v4418 = vpack.c.b16 %v3444, %v3443
    %v4419 = vpack.c.b16 %v3446, %v3445
    %v4420 = vpack.c.b16 %v3448, %v3447
    %v4421 = vpack.c.b16 %v3450, %v3449
    %v4422 = vpack.c.b16 %v3452, %v3451
    %v4423 = vpack.c.b16 %v3454, %v3453
    %v4424 = vpack.c.b16 %v3456, %v3455
    %v4425 = vpack.c.b16 %v3458, %v3457
    %v4426 = vpack.c.b16 %v3460, %v3459
    %v4427 = vpack.c.b16 %v3462, %v3461
    %v4428 = vpack.c.b16 %v3464, %v3463
    %v4429 = vpack.c.b16 %v3466, %v3465
    %v4430 = vpack.c.b16 %v3468, %v3467
    %v4431 = vpack.c.b16 %v3470, %v3469
    %v4432 = vpack.c.b16 %v3472, %v3471
    %v4433 = vpack.c.b16 %v3474, %v3473
    %v4434 = vpack.c.b16 %v3476, %v3475
    %v4435 = vpack.c.b16 %v3478, %v3477
    %v4436 = vpack.c.b16 %v3480, %v3479
    %v4437 = vpack.c.b16 %v3482, %v3481
    %v4438 = vpack.c.b16 %v3484, %v3483
    %v4439 = vpack.c.b16 %v3486, %v3485
    %v4440 = vpack.c.b16 %v3488, %v3487
    %v4441 = vpack.c.b16 %v3490, %v3489
    %v4442 = vpack.c.b16 %v3492, %v3491
    %v4443 = vpack.c.b16 %v3494, %v3493
    %v4444 = vpack.c.b16 %v3496, %v3495
    %v4445 = vpack.c.b16 %v3498, %v3497
    %v4446 = vpack.c.b16 %v3500, %v3499
    %v4447 = vpack.c.b16 %v3502, %v3501
    %v4448 = vpack.c.b16 %v3504, %v3503
    %v4449 = vpack.c.b16 %v3506, %v3505
    %v4450 = vpack.c.b16 %v3508, %v3507
    %v4451 = vpack.c.b16 %v3510, %v3509
    %v4452 = vpack.c.b16 %v3512, %v3511
    %v4453 = vpack.c.b16 %v3514, %v3513
    %v4454 = vpack.c.b16 %v3516, %v3515
    %v4455 = vpack.c.b16 %v3518, %v3517
    %v4456 = vpack.c.b16 %v3520, %v3519
    %v4457 = vpack.c.b16 %v3522, %v3521
    %v4458 = vpack.c.b16 %v3524, %v3523
    %v4459 = vpack.c.b16 %v3526, %v3525
    %v4460 = vpack.c.b16 %v3528, %v3527
    %v4461 = vpack.c.b16 %v3530, %v3529
    %v4462 = vpack.c.b16 %v3532, %v3531
    %v4463 = vpack.c.b16 %v3534, %v3533
    %v4464 = vpack.c.b16 %v3536, %v3535
    %v4465 = vpack.c.b16 %v3538, %v3537
    %v4466 = vpack.c.b16 %v3540, %v3539
    %v4467 = vpack.c.b16 %v3542, %v3541
    %v4468 = vpack.c.b16 %v3544, %v3543
    %v4469 = vpack.c.b16 %v3546, %v3545
    %v4470 = vpack.c.b16 %v3548, %v3547
    %v4471 = vpack.c.b16 %v3550, %v3549
    %v4472 = vpack.c.b16 %v3552, %v3551
    %v4473 = vpack.c.b16 %v3554, %v3553
    %v4474 = vpack.c.b16 %v3556, %v3555
    %v4475 = vpack.c.b16 %v3558, %v3557
    %v4476 = vpack.c.b16 %v3560, %v3559
    %v4477 = vpack.c.b16 %v3562, %v3561
    %v4478 = vpack.c.b16 %v3564, %v3563
    %v4479 = vpack.c.b16 %v3566, %v3565
    %v4480 = vpack.c.b16 %v3568, %v3567
    %v4481 = vpack.c.b16 %v3570, %v3569
    %v4482 = vpack.c.b16 %v3572, %v3571
    %v4483 = vpack.c.b16 %v3574, %v3573
    %v4484 = vpack.c.b16 %v3576, %v3575
    %v4485 = vpack.c.b16 %v3578, %v3577
    %v4486 = vpack.c.b16 %v3580, %v3579
    %v4487 = vpack.c.b16 %v3582, %v3581
    %v4488 = vpack.c.b16 %v3584, %v3583
    %v4489 = vpack.c.b16 %v3586, %v3585
    %v4490 = vpack.c.b16 %v3588, %v3587
    %v4491 = vpack.c.b16 %v3590, %v3589
    %v4492 = vpack.c.b16 %v3592, %v3591
    %v4493 = vpack.c.b16 %v3594, %v3593
    %v4494 = vpack.c.b16 %v3596, %v3595
    %v4495 = vpack.c.b16 %v3598, %v3597
    %v4496 = vpack.c.b16 %v3600, %v3599
    %v4497 = vpack.c.b16 %v3602, %v3601
    %v4498 = vpack.c.b16 %v3604, %v3603
    %v4499 = vpack.c.b16 %v3606, %v3605
    %v4500 = vpack.c.b16 %v3608, %v3607
    %v4501 = vpack.c.b16 %v3610, %v3609
    %v4502 = vpack.c.b16 %v3612, %v3611
    %v4503 = vpack.c.b16 %v3614, %v3613
    %v4504 = vpack.c.b16 %v3616, %v3615
    %v4505 = vpack.c.b16 %v3618, %v3617
    %v4506 = vpack.c.b16 %v3620, %v3619
    %v4507 = vpack.c.b16 %v3622, %v3621
    %v4508 = vpack.c.b16 %v3624, %v3623
    %v4509 = vpack.c.b16 %v3626, %v3625
    %v4510 = vpack.c.b16 %v3628, %v3627
    %v4511 = vpack.c.b16 %v3630, %v3629
    %v4512 = vpack.c.b16 %v3632, %v3631
    %v4513 = vpack.c.b16 %v3634, %v3633
    %v4514 = vpack.c.b16 %v3636, %v3635
    %v4515 = vpack.c.b16 %v3638, %v3637
    %v4516 = vpack.c.b16 %v3640, %v3639
    %v4517 = vpack.c.b16 %v3642, %v3641
    %v4518 = vpack.c.b16 %v3644, %v3643
    %v4519 = vpack.c.b16 %v3646, %v3645
    %v4520 = vpack.c.b16 %v3648, %v3647
    %v4521 = vpack.c.b16 %v3650, %v3649
    %v4522 = vpack.c.b16 %v3652, %v3651
    %v4523 = vpack.c.b16 %v3654, %v3653
    %v4524 = vpack.c.b16 %v3656, %v3655
    %v4525 = vpack.c.b16 %v3658, %v3657
    %v4526 = vpack.c.b16 %v3660, %v3659
    %v4527 = vpack.c.b16 %v3662, %v3661
    %v4528 = vpack.c.b16 %v3664, %v3663
    %v4529 = vpack.c.b16 %v3666, %v3665
    %v4530 = vpack.c.b16 %v3668, %v3667
    %v4531 = vpack.c.b16 %v3670, %v3669
    %v4532 = vpack.c.b16 %v3672, %v3671
    %v4533 = vpack.c.b16 %v3674, %v3673
    %v4534 = vpack.c.b16 %v3676, %v3675
    %v4535 = vpack.c.b16 %v3678, %v3677
    %v4536 = vpack.c.b16 %v3680, %v3679
    %v4537 = vpack.c.b16 %v3682, %v3681
    %v4538 = vpack.c.b16 %v3684, %v3683
    %v4539 = vpack.c.b16 %v3686, %v3685
    %v4540 = vpack.c.b16 %v3688, %v3687
    %v4541 = vpack.c.b16 %v3690, %v3689
    %v4542 = vpack.c.b16 %v3692, %v3691
    %v4543 = vpack.c.b16 %v3694, %v3693
    %v4544 = vpack.c.b16 %v3696, %v3695
    %v4545 = vpack.c.b16 %v3698, %v3697
    %v4546 = vpack.c.b16 %v3700, %v3699
    %v4547 = vpack.c.b16 %v3702, %v3701
    %v4548 = vpack.c.b16 %v3704, %v3703
    %v4549 = vpack.c.b16 %v3706, %v3705
    %v4550 = vpack.c.b16 %v3708, %v3707
    %v4551 = vpack.c.b16 %v3710, %v3709
    %v4552 = vpack.c.b16 %v3712, %v3711
    %v4553 = vpack.c.b16 %v3714, %v3713
    %v4554 = vpack.c.b16 %v3716, %v3715
    %v4555 = vpack.c.b16 %v3718, %v3717
    %v4556 = vpack.c.b16 %v3720, %v3719
    %v4557 = vpack.c.b16 %v3722, %v3721
    %v4558 = vpack.c.b16 %v3724, %v3723
    %v4559 = vpack.c.b16 %v3726, %v3725
    %v4560 = vpack.c.b16 %v3728, %v3727
    %v4561 = vpack.c.b16 %v3730, %v3729
    %v4562 = vpack.c.b16 %v3732, %v3731
    %v4563 = vpack.c.b16 %v3734, %v3733
    %v4564 = vpack.c.b16 %v3736, %v3735
    %v4565 = vpack.c.b16 %v3738, %v3737
    %v4566 = vpack.c.b16 %v3740, %v3739
    %v4567 = vpack.c.b16 %v3742, %v3741
    %v4568 = vpack.c.b16 %v3744, %v3743
    %v4569 = vpack.c.b16 %v3746, %v3745
    %v4570 = vpack.c.b16 %v3748, %v3747
    %v4571 = vpack.c.b16 %v3750, %v3749
    %v4572 = vpack.c.b16 %v3752, %v3751
    %v4573 = vpack.c.b16 %v3754, %v3753
    %v4574 = vpack.c.b16 %v3756, %v3755
    %v4575 = vpack.c.b16 %v3758, %v3757
    %v4576 = vpack.c.b16 %v3760, %v3759
    %v4577 = vpack.c.b16 %v3762, %v3761
    %v4578 = vpack.c.b16 %v3764, %v3763
    %v4579 = vpack.c.b16 %v3766, %v3765
    %v4580 = vpack.c.b16 %v3768, %v3767
    %v4581 = vpack.c.b16 %v3770, %v3769
    %v4582 = vpack.c.b16 %v3772, %v3771
    %v4583 = vpack.c.b16 %v3774, %v3773
    %v4584 = vpack.c.b16 %v3776, %v3775
    %v4585 = vpack.c.b16 %v3778, %v3777
    %v4586 = vpack.c.b16 %v3780, %v3779
    %v4587 = vpack.c.b16 %v3782, %v3781
    %v4588 = vpack.c.b16 %v3784, %v3783
    %v4589 = vpack.c.b16 %v3786, %v3785
    %v4590 = vpack.c.b16 %v3788, %v3787
    %v4591 = vpack.c.b16 %v3790, %v3789
    %v4592 = vpack.c.b16 %v3792, %v3791
    %v4593 = vpack.c.b16 %v3794, %v3793
    %v4594 = vpack.c.b16 %v3796, %v3795
    %v4595 = vpack.c.b16 %v3798, %v3797
    %v4596 = vpack.c.b16 %v3800, %v3799
    %v4597 = vpack.c.b16 %v3802, %v3801
    %v4598 = vpack.c.b16 %v3804, %v3803
    %v4599 = vpack.c.b16 %v3806, %v3805
    %v4600 = vpack.c.b16 %v3808, %v3807
    %v4601 = vpack.c.b16 %v3810, %v3809
    %v4602 = vpack.c.b16 %v3812, %v3811
    %v4603 = vpack.c.b16 %v3814, %v3813
    %v4604 = vpack.c.b16 %v3816, %v3815
    %v4605 = vpack.c.b16 %v3818, %v3817
    %v4606 = vpack.c.b16 %v3820, %v3819
    %v4607 = vpack.c.b16 %v3822, %v3821
    %v4608 = vpack.c.b16 %v3824, %v3823
    %v4609 = vpack.c.b16 %v3826, %v3825
    %v4610 = vpack.c.b16 %v3828, %v3827
    %v4611 = vpack.c.b16 %v3830, %v3829
    %v4612 = vpack.c.b16 %v3832, %v3831
    %v4613 = vpack.c.b16 %v3834, %v3833
    %v4614 = vpack.c.b16 %v3836, %v3835
    %v4615 = vpack.c.b16 %v3838, %v3837
    %v4616 = vpack.c.b16 %v3840, %v3839
    %v4617 = vpack.c.b16 %v3842, %v3841
    %v4618 = vpack.c.b16 %v3844, %v3843
    %v4619 = vpack.c.b16 %v3846, %v3845
    %v4620 = vpack.c.b16 %v3848, %v3847
    %v4621 = vpack.c.b16 %v3850, %v3849
    %v4622 = vpack.c.b16 %v3852, %v3851
    %v4623 = vpack.c.b16 %v3854, %v3853
    %v4624 = vpack.c.b16 %v3856, %v3855
    %v4625 = vpack.c.b16 %v3858, %v3857
    %v4626 = vpack.c.b16 %v3860, %v3859
    %v4627 = vpack.c.b16 %v3862, %v3861
    %v4628 = vpack.c.b16 %v3864, %v3863
    %v4629 = vpack.c.b16 %v3866, %v3865
    %v4630 = vpack.c.b16 %v3868, %v3867
    %v4631 = vpack.c.b16 %v3870, %v3869
    %v4632 = vpack.c.b16 %v3872, %v3871
    %v4633 = vpack.c.b16 %v3874, %v3873
    %v4634 = vpack.c.b16 %v3876, %v3875
    %v4635 = vpack.c.b16 %v3878, %v3877
    %v4636 = vpack.c.b16 %v3880, %v3879
    %v4637 = vpack.c.b16 %v3882, %v3881
    %v4638 = vpack.c.b16 %v3884, %v3883
    %v4639 = vpack.c.b16 %v3886, %v3885
    %v4640 = vpack.c.b16 %v3888, %v3887
    %v4641 = vpack.c.b16 %v3890, %v3889
    %v4642 = vpack.c.b16 %v3892, %v3891
    %v4643 = vpack.c.b16 %v3894, %v3893
    %v4644 = vpack.c.b16 %v3896, %v3895
    %v4645 = vpack.c.b16 %v3898, %v3897
    %v4646 = vpack.c.b16 %v3900, %v3899
    %v4647 = vpack.c.b16 %v3902, %v3901
    %v4648 = vpack.c.b16 %v3904, %v3903
    %v4649 = vpack.c.b16 %v3906, %v3905
    %v4650 = vpack.c.b16 %v3908, %v3907
    %v4651 = vpack.c.b16 %v3910, %v3909
    %v4652 = vpack.c.b16 %v3912, %v3911
    %v4653 = vpack.c.b16 %v3914, %v3913
    %v4654 = vpack.c.b16 %v3916, %v3915
    %v4655 = vpack.c.b16 %v3918, %v3917
    %v4656 = vpack.c.b16 %v3920, %v3919
    %v4657 = vpack.c.b16 %v3922, %v3921
    %v4658 = vpack.c.b16 %v3924, %v3923
    %v4659 = vpack.c.b16 %v3926, %v3925
    %v4660 = vpack.c.b16 %v3928, %v3927
    %v4661 = vpack.c.b16 %v3930, %v3929
    %v4662 = vpack.c.b16 %v3932, %v3931
    %v4663 = vpack.c.b16 %v3934, %v3933
    %v4664 = vpack.c.b16 %v3936, %v3935
    %v4665 = vpack.c.b16 %v3938, %v3937
    %v4666 = vpack.c.b16 %v3940, %v3939
    %v4667 = vpack.c.b16 %v3942, %v3941
    %v4668 = vpack.c.b16 %v3944, %v3943
    %v4669 = vpack.c.b16 %v3946, %v3945
    %v4670 = vpack.c.b16 %v3948, %v3947
    %v4671 = vpack.c.b16 %v3950, %v3949
    %v4672 = vpack.c.b16 %v3952, %v3951
    %v4673 = vpack.c.b16 %v3954, %v3953
    %v4674 = vpack.c.b16 %v3956, %v3955
    %v4675 = vpack.c.b16 %v3958, %v3957
    %v4676 = vpack.c.b16 %v3960, %v3959
    %v4677 = vpack.c.b16 %v3962, %v3961
    %v4678 = vpack.c.b16 %v3964, %v3963
    %v4679 = vpack.c.b16 %v3966, %v3965
    %v4680 = vpack.c.b16 %v3968, %v3967
    %v4681 = vpack.c.b16 %v3970, %v3969
    %v4682 = vpack.c.b16 %v3972, %v3971
    %v4683 = vpack.c.b16 %v3974, %v3973
    %v4684 = vpack.c.b16 %v3976, %v3975
    %v4685 = vpack.c.b16 %v3978, %v3977
    %v4686 = vpack.c.b16 %v3980, %v3979
    %v4687 = vpack.c.b16 %v3982, %v3981
    %v4688 = vpack.c.b16 %v3984, %v3983
    %v4689 = vpack.c.b16 %v3986, %v3985
    %v4690 = vpack.c.b16 %v3988, %v3987
    %v4691 = vpack.c.b16 %v3990, %v3989
    %v4692 = vpack.c.b16 %v3992, %v3991
    %v4693 = vpack.c.b16 %v3994, %v3993
    %v4694 = vpack.c.b16 %v3996, %v3995
    %v4695 = vpack.c.b16 %v3998, %v3997
    %v4696 = vpack.c.b16 %v4000, %v3999
    %v4697 = vpack.c.b16 %v4002, %v4001
    %v4698 = vpack.c.b16 %v4004, %v4003
    %v4699 = vpack.c.b16 %v4006, %v4005
    %v4700 = vpack.c.b16 %v4008, %v4007
    %v4701 = vpack.c.b16 %v4010, %v4009
    %v4702 = vpack.c.b16 %v4012, %v4011
    %v4703 = vpack.c.b16 %v4014, %v4013
    %v4704 = vpack.c.b16 %v4016, %v4015
    %v4705 = vpack.c.b16 %v4018, %v4017
    %v4706 = vpack.c.b16 %v4020, %v4019
    %v4707 = vpack.c.b16 %v4022, %v4021
    %v4708 = vpack.c.b16 %v4024, %v4023
    %v4709 = vpack.c.b16 %v4026, %v4025
    %v4710 = vpack.c.b16 %v4028, %v4027
    %v4711 = vpack.c.b16 %v4030, %v4029
    %v4712 = vpack.c.b16 %v4032, %v4031
    %v4713 = vpack.c.b16 %v4034, %v4033
    %v4714 = vpack.c.b16 %v4036, %v4035
    %v4715 = vpack.c.b16 %v4038, %v4037
    %v4716 = vpack.c.b16 %v4040, %v4039
    %v4717 = vpack.c.b16 %v4042, %v4041
    %v4718 = vpack.c.b16 %v4044, %v4043
    %v4719 = vpack.c.b16 %v4046, %v4045
    %v4720 = vpack.c.b16 %v4048, %v4047
    %v4721 = vpack.c.b16 %v4050, %v4049
    %v4722 = vpack.c.b16 %v4052, %v4051
    %v4723 = vpack.c.b16 %v4054, %v4053
    %v4724 = vpack.c.b16 %v4056, %v4055
    %v4725 = vpack.c.b16 %v4058, %v4057
    %v4726 = vpack.c.b16 %v4060, %v4059
    %v4727 = vpack.c.b16 %v4062, %v4061
    %v4728 = vpack.c.b16 %v4064, %v4063
    %v4729 = vpack.c.b16 %v4066, %v4065
    %v4730 = vpack.c.b16 %v4068, %v4067
    %v4731 = vpack.c.b16 %v4070, %v4069
    %v4732 = vpack.c.b16 %v4072, %v4071
    %v4733 = vpack.c.b16 %v4074, %v4073
    %v4734 = vpack.c.b16 %v4076, %v4075
    %v4735 = vpack.c.b16 %v4078, %v4077
    %v4736 = vpack.c.b16 %v4080, %v4079
    %v4737 = vpack.c.b16 %v4082, %v4081
    %v4738 = vpack.c.b16 %v4084, %v4083
    %v4739 = vpack.c.b16 %v4086, %v4085
    %v4740 = vpack.c.b16 %v4088, %v4087
    %v4741 = vpack.c.b16 %v4090, %v4089
    %v4742 = vpack.c.b16 %v4092, %v4091
    %v4743 = vpack.c.b16 %v4094, %v4093
    %v4744 = vpack.c.b16 %v4096, %v4095
    %v4745 = vpack.c.b16 %v4098, %v4097
    %v4746 = vpack.c.b16 %v4100, %v4099
    %v4747 = vpack.c.b16 %v4102, %v4101
    %v4748 = vpack.c.b16 %v4104, %v4103
    %v4749 = vpack.c.b16 %v4106, %v4105
    %v4750 = vpack.c.b16 %v4108, %v4107
    %v4751 = vpack.c.b16 %v4110, %v4109
    %v4752 = vpack.c.b16 %v4112, %v4111
    %v4753 = vpack.c.b16 %v4114, %v4113
    %v4754 = vpack.c.b16 %v4116, %v4115
    %v4755 = vpack.c.b16 %v4118, %v4117
    %v4756 = vpack.c.b16 %v4120, %v4119
    %v4757 = vpack.c.b16 %v4122, %v4121
    %v4758 = vpack.c.b16 %v4124, %v4123
    %v4759 = vpack.c.b16 %v4126, %v4125
    %v4760 = vpack.c.b16 %v4128, %v4127
    %v4761 = vpack.c.b16 %v4130, %v4129
    %v4762 = vpack.c.b16 %v4132, %v4131
    %v4763 = vpack.c.b16 %v4134, %v4133
    %v4764 = vpack.c.b16 %v4136, %v4135
    %v4765 = vpack.c.b16 %v4138, %v4137
    %v4766 = vpack.c.b16 %v4140, %v4139
    %v4767 = vpack.c.b16 %v4142, %v4141
    %v4768 = vpack.c.b16 %v4144, %v4143
    %v4769 = vpack.c.b16 %v4146, %v4145
    %v4770 = vpack.c.b16 %v4148, %v4147
    %v4771 = vpack.c.b16 %v4150, %v4149
    %v4772 = vpack.c.b16 %v4152, %v4151
    %v4773 = vpack.c.b16 %v4154, %v4153
    %v4774 = vpack.c.b16 %v4156, %v4155
    %v4775 = vpack.c.b16 %v4158, %v4157
    %v4776 = vpack.c.b16 %v4160, %v4159
    %v4777 = vpack.c.b16 %v4162, %v4161
    %v4778 = vpack.c.b16 %v4164, %v4163
    %v4779 = vpack.c.b16 %v4166, %v4165
    %v4780 = vpack.c.b16 %v4168, %v4167
    %v4781 = vpack.c.b16 %v4170, %v4169
    %v4782 = vpack.c.b16 %v4172, %v4171
    %v4783 = vpack.c.b16 %v4174, %v4173
    %v4784 = vpack.c.b16 %v4176, %v4175
    %v4785 = vpack.c.b16 %v4178, %v4177
    %v4786 = vpack.c.b16 %v4180, %v4179
    %v4787 = vpack.c.b16 %v4182, %v4181
    %v4788 = vpack.c.b16 %v4184, %v4183
    %v4789 = vpack.c.b16 %v4186, %v4185
    %v4790 = vpack.c.b16 %v4188, %v4187
    %v4791 = vpack.c.b16 %v4190, %v4189
    %v4792 = vpack.c.b16 %v4192, %v4191
    %v4793 = vpack.c.b16 %v4194, %v4193
    %v4794 = vpack.c.b16 %v4196, %v4195
    %v4795 = vpack.c.b16 %v4198, %v4197
    %v4796 = vpack.c.b16 %v4200, %v4199
    %v4797 = vpack.c.b16 %v4202, %v4201
    %v4798 = vpack.c.b16 %v4204, %v4203
    %v4799 = vpack.c.b16 %v4206, %v4205
    %v4800 = vpack.c.b16 %v4208, %v4207
    %v4801 = vpack.c.b16 %v4210, %v4209
    %v4802 = vpack.c.b16 %v4212, %v4211
    %v4803 = vpack.c.b16 %v4214, %v4213
    %v4804 = vpack.c.b16 %v4216, %v4215
    %v4805 = vpack.c.b16 %v4218, %v4217
    %v4806 = vpack.c.b16 %v4220, %v4219
    %v4807 = vpack.c.b16 %v4222, %v4221
    %v4808 = vpack.c.b16 %v4224, %v4223
    %v4809 = vpack.c.b16 %v4226, %v4225
    %v4810 = vpack.c.b16 %v4228, %v4227
    %v4811 = vpack.c.b16 %v4230, %v4229
    %v4812 = vpack.c.b16 %v4232, %v4231
    %v4813 = vpack.c.b16 %v4234, %v4233
    %v4814 = vpack.c.b16 %v4236, %v4235
    %v4815 = vpack.c.b16 %v4238, %v4237
    %v4816 = vpack.c.b16 %v4240, %v4239
    %5393 = vmatprep.subr.bf16.mxu0 0
    %5394 = vmatpush1.bf16.msra.mxu0 %v4248
    %5395 = vmatprep.subr.bf16.mxu0 0
    %5396 = vmatpush1.bf16.msra.mxu0 %v4247
    %5397 = vmatprep.subr.bf16.mxu0 0
    %5398 = vmatpush1.bf16.msra.mxu0 %v4246
    %5399 = vmatprep.subr.bf16.mxu0 0
    %5400 = vmatpush1.bf16.msra.mxu0 %v4245
    %5401 = vmatprep.subr.bf16.mxu0 0
    %5402 = vmatpush1.bf16.msra.mxu0 %v4244
    %5403 = vmatprep.subr.bf16.mxu0 0
    %5404 = vmatpush1.bf16.msra.mxu0 %v4243
    %5405 = vmatprep.subr.bf16.mxu0 0
    %5406 = vmatpush1.bf16.msra.mxu0 %v4242
    %5407 = vmatprep.subr.bf16.mxu0 0
    %5408 = vmatpush1.bf16.msra.mxu0 %v4241
    %5409 = vmatprep.subr.bf16.mxu0 0
    %5410 = vmatpush2.bf16.msra.mxu0 %v4256
    %5411 = vmatprep.subr.bf16.mxu0 0
    %5412 = vmatpush2.bf16.msra.mxu0 %v4255
    %5413 = vmatprep.subr.bf16.mxu0 0
    %5414 = vmatpush2.bf16.msra.mxu0 %v4254
    %5415 = vmatprep.subr.bf16.mxu0 0
    %5416 = vmatpush2.bf16.msra.mxu0 %v4253
    %5417 = vmatprep.subr.bf16.mxu0 0
    %5418 = vmatpush2.bf16.msra.mxu0 %v4252
    %5419 = vmatprep.subr.bf16.mxu0 0
    %5420 = vmatpush2.bf16.msra.mxu0 %v4251
    %5421 = vmatprep.subr.bf16.mxu0 0
    %5422 = vmatpush2.bf16.msra.mxu0 %v4250
    %5423 = vmatprep.subr.bf16.mxu0 0
    %5424 = vmatpush2.bf16.msra.mxu0 %v4249
    %5425 = vmatprep.mubr.bf16.mxu0 %v1309
    %5426 = vmatmul.mubr.bf16.gmra.mxu0 %v1295
    %v5427 = vpop.f32.mrf.mxu0
    %v5428 = vadd.f32 %v1215, %v5427
    %v5429 = vpop.f32.mrf.mxu0
    %v5430 = vpop.f32.mrf.mxu0
    %v5431 = vpop.f32.mrf.mxu0
    %5432 = vdwg.mxu0
    %5433 = vmatprep.subr.bf16.mxu0 0
    %5434 = vmatpush1.bf16.msra.mxu0 %v4264
    %5435 = vmatprep.subr.bf16.mxu0 0
    %5436 = vmatpush1.bf16.msra.mxu0 %v4263
    %5437 = vmatprep.subr.bf16.mxu0 0
    %5438 = vmatpush1.bf16.msra.mxu0 %v4262
    %5439 = vmatprep.subr.bf16.mxu0 0
    %5440 = vmatpush1.bf16.msra.mxu0 %v4261
    %5441 = vmatprep.subr.bf16.mxu0 0
    %5442 = vmatpush1.bf16.msra.mxu0 %v4260
    %5443 = vmatprep.subr.bf16.mxu0 0
    %5444 = vmatpush1.bf16.msra.mxu0 %v4259
    %5445 = vmatprep.subr.bf16.mxu0 0
    %5446 = vmatpush1.bf16.msra.mxu0 %v4258
    %5447 = vmatprep.subr.bf16.mxu0 0
    %5448 = vmatpush1.bf16.msra.mxu0 %v4257
    %5449 = vmatprep.subr.bf16.mxu0 0
    %5450 = vmatpush2.bf16.msra.mxu0 %v4272
    %5451 = vmatprep.subr.bf16.mxu0 0
    %5452 = vmatpush2.bf16.msra.mxu0 %v4271
    %5453 = vmatprep.subr.bf16.mxu0 0
    %5454 = vmatpush2.bf16.msra.mxu0 %v4270
    %5455 = vmatprep.subr.bf16.mxu0 0
    %5456 = vmatpush2.bf16.msra.mxu0 %v4269
    %5457 = vmatprep.subr.bf16.mxu0 0
    %5458 = vmatpush2.bf16.msra.mxu0 %v4268
    %5459 = vmatprep.subr.bf16.mxu0 0
    %5460 = vmatpush2.bf16.msra.mxu0 %v4267
    %5461 = vmatprep.subr.bf16.mxu0 0
    %5462 = vmatpush2.bf16.msra.mxu0 %v4266
    %5463 = vmatprep.subr.bf16.mxu0 0
    %5464 = vmatpush2.bf16.msra.mxu0 %v4265
    %5465 = vmatprep.mubr.bf16.mxu0 %v1319
    %5466 = vmatmul.mubr.bf16.gmra.mxu0 %v1317
    %v5467 = vpop.f32.mrf.mxu0
    %v5468 = vadd.f32 %v5428, %v5467
    %v5469 = vpop.f32.mrf.mxu0
    %v5470 = vpop.f32.mrf.mxu0
    %v5471 = vpop.f32.mrf.mxu0
    %5472 = vdwg.mxu0
    %5473 = vmatprep.subr.bf16.mxu0 0
    %5474 = vmatpush1.bf16.msra.mxu0 %v4280
    %5475 = vmatprep.subr.bf16.mxu0 0
    %5476 = vmatpush1.bf16.msra.mxu0 %v4279
    %5477 = vmatprep.subr.bf16.mxu0 0
    %5478 = vmatpush1.bf16.msra.mxu0 %v4278
    %5479 = vmatprep.subr.bf16.mxu0 0
    %5480 = vmatpush1.bf16.msra.mxu0 %v4277
    %5481 = vmatprep.subr.bf16.mxu0 0
    %5482 = vmatpush1.bf16.msra.mxu0 %v4276
    %5483 = vmatprep.subr.bf16.mxu0 0
    %5484 = vmatpush1.bf16.msra.mxu0 %v4275
    %5485 = vmatprep.subr.bf16.mxu0 0
    %5486 = vmatpush1.bf16.msra.mxu0 %v4274
    %5487 = vmatprep.subr.bf16.mxu0 0
    %5488 = vmatpush1.bf16.msra.mxu0 %v4273
    %5489 = vmatprep.subr.bf16.mxu0 0
    %5490 = vmatpush2.bf16.msra.mxu0 %v4288
    %5491 = vmatprep.subr.bf16.mxu0 0
    %5492 = vmatpush2.bf16.msra.mxu0 %v4287
    %5493 = vmatprep.subr.bf16.mxu0 0
    %5494 = vmatpush2.bf16.msra.mxu0 %v4286
    %5495 = vmatprep.subr.bf16.mxu0 0
    %5496 = vmatpush2.bf16.msra.mxu0 %v4285
    %5497 = vmatprep.subr.bf16.mxu0 0
    %5498 = vmatpush2.bf16.msra.mxu0 %v4284
    %5499 = vmatprep.subr.bf16.mxu0 0
    %5500 = vmatpush2.bf16.msra.mxu0 %v4283
    %5501 = vmatprep.subr.bf16.mxu0 0
    %5502 = vmatpush2.bf16.msra.mxu0 %v4282
    %5503 = vmatprep.subr.bf16.mxu0 0
    %5504 = vmatpush2.bf16.msra.mxu0 %v4281
    %5505 = vmatprep.mubr.bf16.mxu0 %v1316
    %5506 = vmatmul.mubr.bf16.gmra.mxu0 %v1302
    %v5507 = vpop.f32.mrf.mxu0
    %v5508 = vadd.f32 %v5468, %v5507
    %v5509 = vpop.f32.mrf.mxu0
    %v5510 = vpop.f32.mrf.mxu0
    %v5511 = vpop.f32.mrf.mxu0
    %5512 = vdwg.mxu0
    %5513 = vmatprep.subr.bf16.mxu0 0
    %5514 = vmatpush1.bf16.msra.mxu0 %v4296
    %5515 = vmatprep.subr.bf16.mxu0 0
    %5516 = vmatpush1.bf16.msra.mxu0 %v4295
    %5517 = vmatprep.subr.bf16.mxu0 0
    %5518 = vmatpush1.bf16.msra.mxu0 %v4294
    %5519 = vmatprep.subr.bf16.mxu0 0
    %5520 = vmatpush1.bf16.msra.mxu0 %v4293
    %5521 = vmatprep.subr.bf16.mxu0 0
    %5522 = vmatpush1.bf16.msra.mxu0 %v4292
    %5523 = vmatprep.subr.bf16.mxu0 0
    %5524 = vmatpush1.bf16.msra.mxu0 %v4291
    %5525 = vmatprep.subr.bf16.mxu0 0
    %5526 = vmatpush1.bf16.msra.mxu0 %v4290
    %5527 = vmatprep.subr.bf16.mxu0 0
    %5528 = vmatpush1.bf16.msra.mxu0 %v4289
    %5529 = vmatprep.subr.bf16.mxu0 0
    %5530 = vmatpush2.bf16.msra.mxu0 %v4304
    %5531 = vmatprep.subr.bf16.mxu0 0
    %5532 = vmatpush2.bf16.msra.mxu0 %v4303
    %5533 = vmatprep.subr.bf16.mxu0 0
    %5534 = vmatpush2.bf16.msra.mxu0 %v4302
    %5535 = vmatprep.subr.bf16.mxu0 0
    %5536 = vmatpush2.bf16.msra.mxu0 %v4301
    %5537 = vmatprep.subr.bf16.mxu0 0
    %5538 = vmatpush2.bf16.msra.mxu0 %v4300
    %5539 = vmatprep.subr.bf16.mxu0 0
    %5540 = vmatpush2.bf16.msra.mxu0 %v4299
    %5541 = vmatprep.subr.bf16.mxu0 0
    %5542 = vmatpush2.bf16.msra.mxu0 %v4298
    %5543 = vmatprep.subr.bf16.mxu0 0
    %5544 = vmatpush2.bf16.msra.mxu0 %v4297
    %5545 = vmatprep.mubr.bf16.mxu0 %v1320
    %5546 = vmatmul.mubr.bf16.gmra.mxu0 %v1318
    %v5547 = vpop.f32.mrf.mxu0
    %v5548 = vadd.f32 %v5508, %v5547
    %v5549 = vpop.f32.mrf.mxu0
    %v5550 = vpop.f32.mrf.mxu0
    %v5551 = vpop.f32.mrf.mxu0
    %5552 = vdwg.mxu0
    %5553 = vmatprep.subr.bf16.mxu0 0
    %5554 = vmatpush1.bf16.msra.mxu0 %v4312
    %5555 = vmatprep.subr.bf16.mxu0 0
    %5556 = vmatpush1.bf16.msra.mxu0 %v4311
    %5557 = vmatprep.subr.bf16.mxu0 0
    %5558 = vmatpush1.bf16.msra.mxu0 %v4310
    %5559 = vmatprep.subr.bf16.mxu0 0
    %5560 = vmatpush1.bf16.msra.mxu0 %v4309
    %5561 = vmatprep.subr.bf16.mxu0 0
    %5562 = vmatpush1.bf16.msra.mxu0 %v4308
    %5563 = vmatprep.subr.bf16.mxu0 0
    %5564 = vmatpush1.bf16.msra.mxu0 %v4307
    %5565 = vmatprep.subr.bf16.mxu0 0
    %5566 = vmatpush1.bf16.msra.mxu0 %v4306
    %5567 = vmatprep.subr.bf16.mxu0 0
    %5568 = vmatpush1.bf16.msra.mxu0 %v4305
    %5569 = vmatprep.subr.bf16.mxu0 0
    %5570 = vmatpush2.bf16.msra.mxu0 %v4320
    %5571 = vmatprep.subr.bf16.mxu0 0
    %5572 = vmatpush2.bf16.msra.mxu0 %v4319
    %5573 = vmatprep.subr.bf16.mxu0 0
    %5574 = vmatpush2.bf16.msra.mxu0 %v4318
    %5575 = vmatprep.subr.bf16.mxu0 0
    %5576 = vmatpush2.bf16.msra.mxu0 %v4317
    %5577 = vmatprep.subr.bf16.mxu0 0
    %5578 = vmatpush2.bf16.msra.mxu0 %v4316
    %5579 = vmatprep.subr.bf16.mxu0 0
    %5580 = vmatpush2.bf16.msra.mxu0 %v4315
    %5581 = vmatprep.subr.bf16.mxu0 0
    %5582 = vmatpush2.bf16.msra.mxu0 %v4314
    %5583 = vmatprep.subr.bf16.mxu0 0
    %5584 = vmatpush2.bf16.msra.mxu0 %v4313
    %5585 = vmatprep.mubr.bf16.mxu0 %v1377
    %5586 = vmatmul.mubr.bf16.gmra.mxu0 %v1363
    %v5587 = vpop.f32.mrf.mxu0
    %v5588 = vadd.f32 %v5548, %v5587
    %v5589 = vpop.f32.mrf.mxu0
    %v5590 = vpop.f32.mrf.mxu0
    %v5591 = vpop.f32.mrf.mxu0
    %5592 = vdwg.mxu0
    %5593 = vmatprep.subr.bf16.mxu0 0
    %5594 = vmatpush1.bf16.msra.mxu0 %v4328
    %5595 = vmatprep.subr.bf16.mxu0 0
    %5596 = vmatpush1.bf16.msra.mxu0 %v4327
    %5597 = vmatprep.subr.bf16.mxu0 0
    %5598 = vmatpush1.bf16.msra.mxu0 %v4326
    %5599 = vmatprep.subr.bf16.mxu0 0
    %5600 = vmatpush1.bf16.msra.mxu0 %v4325
    %5601 = vmatprep.subr.bf16.mxu0 0
    %5602 = vmatpush1.bf16.msra.mxu0 %v4324
    %5603 = vmatprep.subr.bf16.mxu0 0
    %5604 = vmatpush1.bf16.msra.mxu0 %v4323
    %5605 = vmatprep.subr.bf16.mxu0 0
    %5606 = vmatpush1.bf16.msra.mxu0 %v4322
    %5607 = vmatprep.subr.bf16.mxu0 0
    %5608 = vmatpush1.bf16.msra.mxu0 %v4321
    %5609 = vmatprep.subr.bf16.mxu0 0
    %5610 = vmatpush2.bf16.msra.mxu0 %v4336
    %5611 = vmatprep.subr.bf16.mxu0 0
    %5612 = vmatpush2.bf16.msra.mxu0 %v4335
    %5613 = vmatprep.subr.bf16.mxu0 0
    %5614 = vmatpush2.bf16.msra.mxu0 %v4334
    %5615 = vmatprep.subr.bf16.mxu0 0
    %5616 = vmatpush2.bf16.msra.mxu0 %v4333
    %5617 = vmatprep.subr.bf16.mxu0 0
    %5618 = vmatpush2.bf16.msra.mxu0 %v4332
    %5619 = vmatprep.subr.bf16.mxu0 0
    %5620 = vmatpush2.bf16.msra.mxu0 %v4331
    %5621 = vmatprep.subr.bf16.mxu0 0
    %5622 = vmatpush2.bf16.msra.mxu0 %v4330
    %5623 = vmatprep.subr.bf16.mxu0 0
    %5624 = vmatpush2.bf16.msra.mxu0 %v4329
    %5625 = vmatprep.mubr.bf16.mxu0 %v1387
    %5626 = vmatmul.mubr.bf16.gmra.mxu0 %v1385
    %v5627 = vpop.f32.mrf.mxu0
    %v5628 = vadd.f32 %v5588, %v5627
    %v5629 = vpop.f32.mrf.mxu0
    %v5630 = vpop.f32.mrf.mxu0
    %v5631 = vpop.f32.mrf.mxu0
    %5632 = vdwg.mxu0
    %5633 = vmatprep.subr.bf16.mxu0 0
    %5634 = vmatpush1.bf16.msra.mxu0 %v4344
    %5635 = vmatprep.subr.bf16.mxu0 0
    %5636 = vmatpush1.bf16.msra.mxu0 %v4343
    %5637 = vmatprep.subr.bf16.mxu0 0
    %5638 = vmatpush1.bf16.msra.mxu0 %v4342
    %5639 = vmatprep.subr.bf16.mxu0 0
    %5640 = vmatpush1.bf16.msra.mxu0 %v4341
    %5641 = vmatprep.subr.bf16.mxu0 0
    %5642 = vmatpush1.bf16.msra.mxu0 %v4340
    %5643 = vmatprep.subr.bf16.mxu0 0
    %5644 = vmatpush1.bf16.msra.mxu0 %v4339
    %5645 = vmatprep.subr.bf16.mxu0 0
    %5646 = vmatpush1.bf16.msra.mxu0 %v4338
    %5647 = vmatprep.subr.bf16.mxu0 0
    %5648 = vmatpush1.bf16.msra.mxu0 %v4337
    %5649 = vmatprep.subr.bf16.mxu0 0
    %5650 = vmatpush2.bf16.msra.mxu0 %v4352
    %5651 = vmatprep.subr.bf16.mxu0 0
    %5652 = vmatpush2.bf16.msra.mxu0 %v4351
    %5653 = vmatprep.subr.bf16.mxu0 0
    %5654 = vmatpush2.bf16.msra.mxu0 %v4350
    %5655 = vmatprep.subr.bf16.mxu0 0
    %5656 = vmatpush2.bf16.msra.mxu0 %v4349
    %5657 = vmatprep.subr.bf16.mxu0 0
    %5658 = vmatpush2.bf16.msra.mxu0 %v4348
    %5659 = vmatprep.subr.bf16.mxu0 0
    %5660 = vmatpush2.bf16.msra.mxu0 %v4347
    %5661 = vmatprep.subr.bf16.mxu0 0
    %5662 = vmatpush2.bf16.msra.mxu0 %v4346
    %5663 = vmatprep.subr.bf16.mxu0 0
    %5664 = vmatpush2.bf16.msra.mxu0 %v4345
    %5665 = vmatprep.mubr.bf16.mxu0 %v1384
    %5666 = vmatmul.mubr.bf16.gmra.mxu0 %v1370
    %v5667 = vpop.f32.mrf.mxu0
    %v5668 = vadd.f32 %v5628, %v5667
    %v5669 = vpop.f32.mrf.mxu0
    %v5670 = vpop.f32.mrf.mxu0
    %v5671 = vpop.f32.mrf.mxu0
    %5672 = vdwg.mxu0
    %5673 = vmatprep.subr.bf16.mxu0 0
    %5674 = vmatpush1.bf16.msra.mxu0 %v4360
    %5675 = vmatprep.subr.bf16.mxu0 0
    %5676 = vmatpush1.bf16.msra.mxu0 %v4359
    %5677 = vmatprep.subr.bf16.mxu0 0
    %5678 = vmatpush1.bf16.msra.mxu0 %v4358
    %5679 = vmatprep.subr.bf16.mxu0 0
    %5680 = vmatpush1.bf16.msra.mxu0 %v4357
    %5681 = vmatprep.subr.bf16.mxu0 0
    %5682 = vmatpush1.bf16.msra.mxu0 %v4356
    %5683 = vmatprep.subr.bf16.mxu0 0
    %5684 = vmatpush1.bf16.msra.mxu0 %v4355
    %5685 = vmatprep.subr.bf16.mxu0 0
    %5686 = vmatpush1.bf16.msra.mxu0 %v4354
    %5687 = vmatprep.subr.bf16.mxu0 0
    %5688 = vmatpush1.bf16.msra.mxu0 %v4353
    %5689 = vmatprep.subr.bf16.mxu0 0
    %5690 = vmatpush2.bf16.msra.mxu0 %v4368
    %5691 = vmatprep.subr.bf16.mxu0 0
    %5692 = vmatpush2.bf16.msra.mxu0 %v4367
    %5693 = vmatprep.subr.bf16.mxu0 0
    %5694 = vmatpush2.bf16.msra.mxu0 %v4366
    %5695 = vmatprep.subr.bf16.mxu0 0
    %5696 = vmatpush2.bf16.msra.mxu0 %v4365
    %5697 = vmatprep.subr.bf16.mxu0 0
    %5698 = vmatpush2.bf16.msra.mxu0 %v4364
    %5699 = vmatprep.subr.bf16.mxu0 0
    %5700 = vmatpush2.bf16.msra.mxu0 %v4363
    %5701 = vmatprep.subr.bf16.mxu0 0
    %5702 = vmatpush2.bf16.msra.mxu0 %v4362
    %5703 = vmatprep.subr.bf16.mxu0 0
    %5704 = vmatpush2.bf16.msra.mxu0 %v4361
    %5705 = vmatprep.mubr.bf16.mxu0 %v1388
    %5706 = vmatmul.mubr.bf16.gmra.mxu0 %v1386
    %v5707 = vpop.f32.mrf.mxu0
    %v5708 = vadd.f32 %v5668, %v5707
    %v5709 = vpop.f32.mrf.mxu0
    %v5710 = vpop.f32.mrf.mxu0
    %v5711 = vpop.f32.mrf.mxu0
    %5712 = vdwg.mxu0
    %5713 = vmatprep.subr.bf16.mxu0 0
    %5714 = vmatpush1.bf16.msra.mxu0 %v4376
    %5715 = vmatprep.subr.bf16.mxu0 0
    %5716 = vmatpush1.bf16.msra.mxu0 %v4375
    %5717 = vmatprep.subr.bf16.mxu0 0
    %5718 = vmatpush1.bf16.msra.mxu0 %v4374
    %5719 = vmatprep.subr.bf16.mxu0 0
    %5720 = vmatpush1.bf16.msra.mxu0 %v4373
    %5721 = vmatprep.subr.bf16.mxu0 0
    %5722 = vmatpush1.bf16.msra.mxu0 %v4372
    %5723 = vmatprep.subr.bf16.mxu0 0
    %5724 = vmatpush1.bf16.msra.mxu0 %v4371
    %5725 = vmatprep.subr.bf16.mxu0 0
    %5726 = vmatpush1.bf16.msra.mxu0 %v4370
    %5727 = vmatprep.subr.bf16.mxu0 0
    %5728 = vmatpush1.bf16.msra.mxu0 %v4369
    %5729 = vmatprep.subr.bf16.mxu0 0
    %5730 = vmatpush2.bf16.msra.mxu0 %v4384
    %5731 = vmatprep.subr.bf16.mxu0 0
    %5732 = vmatpush2.bf16.msra.mxu0 %v4383
    %5733 = vmatprep.subr.bf16.mxu0 0
    %5734 = vmatpush2.bf16.msra.mxu0 %v4382
    %5735 = vmatprep.subr.bf16.mxu0 0
    %5736 = vmatpush2.bf16.msra.mxu0 %v4381
    %5737 = vmatprep.subr.bf16.mxu0 0
    %5738 = vmatpush2.bf16.msra.mxu0 %v4380
    %5739 = vmatprep.subr.bf16.mxu0 0
    %5740 = vmatpush2.bf16.msra.mxu0 %v4379
    %5741 = vmatprep.subr.bf16.mxu0 0
    %5742 = vmatpush2.bf16.msra.mxu0 %v4378
    %5743 = vmatprep.subr.bf16.mxu0 0
    %5744 = vmatpush2.bf16.msra.mxu0 %v4377
    %5745 = vmatprep.mubr.bf16.mxu0 %v1445
    %5746 = vmatmul.mubr.bf16.gmra.mxu0 %v1431
    %v5747 = vpop.f32.mrf.mxu0
    %v5748 = vadd.f32 %v5708, %v5747
    %v5749 = vpop.f32.mrf.mxu0
    %v5750 = vpop.f32.mrf.mxu0
    %v5751 = vpop.f32.mrf.mxu0
    %5752 = vdwg.mxu0
    %5753 = vmatprep.subr.bf16.mxu0 0
    %5754 = vmatpush1.bf16.msra.mxu0 %v4392
    %5755 = vmatprep.subr.bf16.mxu0 0
    %5756 = vmatpush1.bf16.msra.mxu0 %v4391
    %5757 = vmatprep.subr.bf16.mxu0 0
    %5758 = vmatpush1.bf16.msra.mxu0 %v4390
    %5759 = vmatprep.subr.bf16.mxu0 0
    %5760 = vmatpush1.bf16.msra.mxu0 %v4389
    %5761 = vmatprep.subr.bf16.mxu0 0
    %5762 = vmatpush1.bf16.msra.mxu0 %v4388
    %5763 = vmatprep.subr.bf16.mxu0 0
    %5764 = vmatpush1.bf16.msra.mxu0 %v4387
    %5765 = vmatprep.subr.bf16.mxu0 0
    %5766 = vmatpush1.bf16.msra.mxu0 %v4386
    %5767 = vmatprep.subr.bf16.mxu0 0
    %5768 = vmatpush1.bf16.msra.mxu0 %v4385
    %5769 = vmatprep.subr.bf16.mxu0 0
    %5770 = vmatpush2.bf16.msra.mxu0 %v4400
    %5771 = vmatprep.subr.bf16.mxu0 0
    %5772 = vmatpush2.bf16.msra.mxu0 %v4399
    %5773 = vmatprep.subr.bf16.mxu0 0
    %5774 = vmatpush2.bf16.msra.mxu0 %v4398
    %5775 = vmatprep.subr.bf16.mxu0 0
    %5776 = vmatpush2.bf16.msra.mxu0 %v4397
    %5777 = vmatprep.subr.bf16.mxu0 0
    %5778 = vmatpush2.bf16.msra.mxu0 %v4396
    %5779 = vmatprep.subr.bf16.mxu0 0
    %5780 = vmatpush2.bf16.msra.mxu0 %v4395
    %5781 = vmatprep.subr.bf16.mxu0 0
    %5782 = vmatpush2.bf16.msra.mxu0 %v4394
    %5783 = vmatprep.subr.bf16.mxu0 0
    %5784 = vmatpush2.bf16.msra.mxu0 %v4393
    %5785 = vmatprep.mubr.bf16.mxu0 %v1455
    %5786 = vmatmul.mubr.bf16.gmra.mxu0 %v1453
    %v5787 = vpop.f32.mrf.mxu0
    %v5788 = vadd.f32 %v5748, %v5787
    %v5789 = vpop.f32.mrf.mxu0
    %v5790 = vpop.f32.mrf.mxu0
    %v5791 = vpop.f32.mrf.mxu0
    %5792 = vdwg.mxu0
    %5793 = vmatprep.subr.bf16.mxu0 0
    %5794 = vmatpush1.bf16.msra.mxu0 %v4408
    %5795 = vmatprep.subr.bf16.mxu0 0
    %5796 = vmatpush1.bf16.msra.mxu0 %v4407
    %5797 = vmatprep.subr.bf16.mxu0 0
    %5798 = vmatpush1.bf16.msra.mxu0 %v4406
    %5799 = vmatprep.subr.bf16.mxu0 0
    %5800 = vmatpush1.bf16.msra.mxu0 %v4405
    %5801 = vmatprep.subr.bf16.mxu0 0
    %5802 = vmatpush1.bf16.msra.mxu0 %v4404
    %5803 = vmatprep.subr.bf16.mxu0 0
    %5804 = vmatpush1.bf16.msra.mxu0 %v4403
    %5805 = vmatprep.subr.bf16.mxu0 0
    %5806 = vmatpush1.bf16.msra.mxu0 %v4402
    %5807 = vmatprep.subr.bf16.mxu0 0
    %5808 = vmatpush1.bf16.msra.mxu0 %v4401
    %5809 = vmatprep.subr.bf16.mxu0 0
    %5810 = vmatpush2.bf16.msra.mxu0 %v4416
    %5811 = vmatprep.subr.bf16.mxu0 0
    %5812 = vmatpush2.bf16.msra.mxu0 %v4415
    %5813 = vmatprep.subr.bf16.mxu0 0
    %5814 = vmatpush2.bf16.msra.mxu0 %v4414
    %5815 = vmatprep.subr.bf16.mxu0 0
    %5816 = vmatpush2.bf16.msra.mxu0 %v4413
    %5817 = vmatprep.subr.bf16.mxu0 0
    %5818 = vmatpush2.bf16.msra.mxu0 %v4412
    %5819 = vmatprep.subr.bf16.mxu0 0
    %5820 = vmatpush2.bf16.msra.mxu0 %v4411
    %5821 = vmatprep.subr.bf16.mxu0 0
    %5822 = vmatpush2.bf16.msra.mxu0 %v4410
    %5823 = vmatprep.subr.bf16.mxu0 0
    %5824 = vmatpush2.bf16.msra.mxu0 %v4409
    %5825 = vmatprep.mubr.bf16.mxu0 %v1452
    %5826 = vmatmul.mubr.bf16.gmra.mxu0 %v1438
    %v5827 = vpop.f32.mrf.mxu0
    %v5828 = vadd.f32 %v5788, %v5827
    %v5829 = vpop.f32.mrf.mxu0
    %v5830 = vpop.f32.mrf.mxu0
    %v5831 = vpop.f32.mrf.mxu0
    %5832 = vdwg.mxu0
    %5833 = vmatprep.subr.bf16.mxu0 0
    %5834 = vmatpush1.bf16.msra.mxu0 %v4424
    %5835 = vmatprep.subr.bf16.mxu0 0
    %5836 = vmatpush1.bf16.msra.mxu0 %v4423
    %5837 = vmatprep.subr.bf16.mxu0 0
    %5838 = vmatpush1.bf16.msra.mxu0 %v4422
    %5839 = vmatprep.subr.bf16.mxu0 0
    %5840 = vmatpush1.bf16.msra.mxu0 %v4421
    %5841 = vmatprep.subr.bf16.mxu0 0
    %5842 = vmatpush1.bf16.msra.mxu0 %v4420
    %5843 = vmatprep.subr.bf16.mxu0 0
    %5844 = vmatpush1.bf16.msra.mxu0 %v4419
    %5845 = vmatprep.subr.bf16.mxu0 0
    %5846 = vmatpush1.bf16.msra.mxu0 %v4418
    %5847 = vmatprep.subr.bf16.mxu0 0
    %5848 = vmatpush1.bf16.msra.mxu0 %v4417
    %5849 = vmatprep.subr.bf16.mxu0 0
    %5850 = vmatpush2.bf16.msra.mxu0 %v4432
    %5851 = vmatprep.subr.bf16.mxu0 0
    %5852 = vmatpush2.bf16.msra.mxu0 %v4431
    %5853 = vmatprep.subr.bf16.mxu0 0
    %5854 = vmatpush2.bf16.msra.mxu0 %v4430
    %5855 = vmatprep.subr.bf16.mxu0 0
    %5856 = vmatpush2.bf16.msra.mxu0 %v4429
    %5857 = vmatprep.subr.bf16.mxu0 0
    %5858 = vmatpush2.bf16.msra.mxu0 %v4428
    %5859 = vmatprep.subr.bf16.mxu0 0
    %5860 = vmatpush2.bf16.msra.mxu0 %v4427
    %5861 = vmatprep.subr.bf16.mxu0 0
    %5862 = vmatpush2.bf16.msra.mxu0 %v4426
    %5863 = vmatprep.subr.bf16.mxu0 0
    %5864 = vmatpush2.bf16.msra.mxu0 %v4425
    %5865 = vmatprep.mubr.bf16.mxu0 %v1456
    %5866 = vmatmul.mubr.bf16.gmra.mxu0 %v1454
    %v5867 = vpop.f32.mrf.mxu0
    %v5868 = vadd.f32 %v5828, %v5867
    %v5869 = vpop.f32.mrf.mxu0
    %v5870 = vpop.f32.mrf.mxu0
    %v5871 = vpop.f32.mrf.mxu0
    %5872 = vdwg.mxu0
    %5873 = vmatprep.subr.bf16.mxu0 0
    %5874 = vmatpush1.bf16.msra.mxu0 %v4440
    %5875 = vmatprep.subr.bf16.mxu0 0
    %5876 = vmatpush1.bf16.msra.mxu0 %v4439
    %5877 = vmatprep.subr.bf16.mxu0 0
    %5878 = vmatpush1.bf16.msra.mxu0 %v4438
    %5879 = vmatprep.subr.bf16.mxu0 0
    %5880 = vmatpush1.bf16.msra.mxu0 %v4437
    %5881 = vmatprep.subr.bf16.mxu0 0
    %5882 = vmatpush1.bf16.msra.mxu0 %v4436
    %5883 = vmatprep.subr.bf16.mxu0 0
    %5884 = vmatpush1.bf16.msra.mxu0 %v4435
    %5885 = vmatprep.subr.bf16.mxu0 0
    %5886 = vmatpush1.bf16.msra.mxu0 %v4434
    %5887 = vmatprep.subr.bf16.mxu0 0
    %5888 = vmatpush1.bf16.msra.mxu0 %v4433
    %5889 = vmatprep.subr.bf16.mxu0 0
    %5890 = vmatpush2.bf16.msra.mxu0 %v4448
    %5891 = vmatprep.subr.bf16.mxu0 0
    %5892 = vmatpush2.bf16.msra.mxu0 %v4447
    %5893 = vmatprep.subr.bf16.mxu0 0
    %5894 = vmatpush2.bf16.msra.mxu0 %v4446
    %5895 = vmatprep.subr.bf16.mxu0 0
    %5896 = vmatpush2.bf16.msra.mxu0 %v4445
    %5897 = vmatprep.subr.bf16.mxu0 0
    %5898 = vmatpush2.bf16.msra.mxu0 %v4444
    %5899 = vmatprep.subr.bf16.mxu0 0
    %5900 = vmatpush2.bf16.msra.mxu0 %v4443
    %5901 = vmatprep.subr.bf16.mxu0 0
    %5902 = vmatpush2.bf16.msra.mxu0 %v4442
    %5903 = vmatprep.subr.bf16.mxu0 0
    %5904 = vmatpush2.bf16.msra.mxu0 %v4441
    %5905 = vmatprep.mubr.bf16.mxu0 %v1513
    %5906 = vmatmul.mubr.bf16.gmra.mxu0 %v1499
    %v5907 = vpop.f32.mrf.mxu0
    %v5908 = vadd.f32 %v5868, %v5907
    %v5909 = vpop.f32.mrf.mxu0
    %v5910 = vpop.f32.mrf.mxu0
    %v5911 = vpop.f32.mrf.mxu0
    %5912 = vdwg.mxu0
    %5913 = vmatprep.subr.bf16.mxu0 0
    %5914 = vmatpush1.bf16.msra.mxu0 %v4456
    %5915 = vmatprep.subr.bf16.mxu0 0
    %5916 = vmatpush1.bf16.msra.mxu0 %v4455
    %5917 = vmatprep.subr.bf16.mxu0 0
    %5918 = vmatpush1.bf16.msra.mxu0 %v4454
    %5919 = vmatprep.subr.bf16.mxu0 0
    %5920 = vmatpush1.bf16.msra.mxu0 %v4453
    %5921 = vmatprep.subr.bf16.mxu0 0
    %5922 = vmatpush1.bf16.msra.mxu0 %v4452
    %5923 = vmatprep.subr.bf16.mxu0 0
    %5924 = vmatpush1.bf16.msra.mxu0 %v4451
    %5925 = vmatprep.subr.bf16.mxu0 0
    %5926 = vmatpush1.bf16.msra.mxu0 %v4450
    %5927 = vmatprep.subr.bf16.mxu0 0
    %5928 = vmatpush1.bf16.msra.mxu0 %v4449
    %5929 = vmatprep.subr.bf16.mxu0 0
    %5930 = vmatpush2.bf16.msra.mxu0 %v4464
    %5931 = vmatprep.subr.bf16.mxu0 0
    %5932 = vmatpush2.bf16.msra.mxu0 %v4463
    %5933 = vmatprep.subr.bf16.mxu0 0
    %5934 = vmatpush2.bf16.msra.mxu0 %v4462
    %5935 = vmatprep.subr.bf16.mxu0 0
    %5936 = vmatpush2.bf16.msra.mxu0 %v4461
    %5937 = vmatprep.subr.bf16.mxu0 0
    %5938 = vmatpush2.bf16.msra.mxu0 %v4460
    %5939 = vmatprep.subr.bf16.mxu0 0
    %5940 = vmatpush2.bf16.msra.mxu0 %v4459
    %5941 = vmatprep.subr.bf16.mxu0 0
    %5942 = vmatpush2.bf16.msra.mxu0 %v4458
    %5943 = vmatprep.subr.bf16.mxu0 0
    %5944 = vmatpush2.bf16.msra.mxu0 %v4457
    %5945 = vmatprep.mubr.bf16.mxu0 %v1523
    %5946 = vmatmul.mubr.bf16.gmra.mxu0 %v1521
    %v5947 = vpop.f32.mrf.mxu0
    %v5948 = vadd.f32 %v5908, %v5947
    %v5949 = vpop.f32.mrf.mxu0
    %v5950 = vpop.f32.mrf.mxu0
    %v5951 = vpop.f32.mrf.mxu0
    %5952 = vdwg.mxu0
    %5953 = vmatprep.subr.bf16.mxu0 0
    %5954 = vmatpush1.bf16.msra.mxu0 %v4472
    %5955 = vmatprep.subr.bf16.mxu0 0
    %5956 = vmatpush1.bf16.msra.mxu0 %v4471
    %5957 = vmatprep.subr.bf16.mxu0 0
    %5958 = vmatpush1.bf16.msra.mxu0 %v4470
    %5959 = vmatprep.subr.bf16.mxu0 0
    %5960 = vmatpush1.bf16.msra.mxu0 %v4469
    %5961 = vmatprep.subr.bf16.mxu0 0
    %5962 = vmatpush1.bf16.msra.mxu0 %v4468
    %5963 = vmatprep.subr.bf16.mxu0 0
    %5964 = vmatpush1.bf16.msra.mxu0 %v4467
    %5965 = vmatprep.subr.bf16.mxu0 0
    %5966 = vmatpush1.bf16.msra.mxu0 %v4466
    %5967 = vmatprep.subr.bf16.mxu0 0
    %5968 = vmatpush1.bf16.msra.mxu0 %v4465
    %5969 = vmatprep.subr.bf16.mxu0 0
    %5970 = vmatpush2.bf16.msra.mxu0 %v4480
    %5971 = vmatprep.subr.bf16.mxu0 0
    %5972 = vmatpush2.bf16.msra.mxu0 %v4479
    %5973 = vmatprep.subr.bf16.mxu0 0
    %5974 = vmatpush2.bf16.msra.mxu0 %v4478
    %5975 = vmatprep.subr.bf16.mxu0 0
    %5976 = vmatpush2.bf16.msra.mxu0 %v4477
    %5977 = vmatprep.subr.bf16.mxu0 0
    %5978 = vmatpush2.bf16.msra.mxu0 %v4476
    %5979 = vmatprep.subr.bf16.mxu0 0
    %5980 = vmatpush2.bf16.msra.mxu0 %v4475
    %5981 = vmatprep.subr.bf16.mxu0 0
    %5982 = vmatpush2.bf16.msra.mxu0 %v4474
    %5983 = vmatprep.subr.bf16.mxu0 0
    %5984 = vmatpush2.bf16.msra.mxu0 %v4473
    %5985 = vmatprep.mubr.bf16.mxu0 %v1520
    %5986 = vmatmul.mubr.bf16.gmra.mxu0 %v1506
    %v5987 = vpop.f32.mrf.mxu0
    %v5988 = vadd.f32 %v5948, %v5987
    %v5989 = vpop.f32.mrf.mxu0
    %v5990 = vpop.f32.mrf.mxu0
    %v5991 = vpop.f32.mrf.mxu0
    %5992 = vdwg.mxu0
    %5993 = vmatprep.subr.bf16.mxu0 0
    %5994 = vmatpush1.bf16.msra.mxu0 %v4488
    %5995 = vmatprep.subr.bf16.mxu0 0
    %5996 = vmatpush1.bf16.msra.mxu0 %v4487
    %5997 = vmatprep.subr.bf16.mxu0 0
    %5998 = vmatpush1.bf16.msra.mxu0 %v4486
    %5999 = vmatprep.subr.bf16.mxu0 0
    %6000 = vmatpush1.bf16.msra.mxu0 %v4485
    %6001 = vmatprep.subr.bf16.mxu0 0
    %6002 = vmatpush1.bf16.msra.mxu0 %v4484
    %6003 = vmatprep.subr.bf16.mxu0 0
    %6004 = vmatpush1.bf16.msra.mxu0 %v4483
    %6005 = vmatprep.subr.bf16.mxu0 0
    %6006 = vmatpush1.bf16.msra.mxu0 %v4482
    %6007 = vmatprep.subr.bf16.mxu0 0
    %6008 = vmatpush1.bf16.msra.mxu0 %v4481
    %6009 = vmatprep.subr.bf16.mxu0 0
    %6010 = vmatpush2.bf16.msra.mxu0 %v4496
    %6011 = vmatprep.subr.bf16.mxu0 0
    %6012 = vmatpush2.bf16.msra.mxu0 %v4495
    %6013 = vmatprep.subr.bf16.mxu0 0
    %6014 = vmatpush2.bf16.msra.mxu0 %v4494
    %6015 = vmatprep.subr.bf16.mxu0 0
    %6016 = vmatpush2.bf16.msra.mxu0 %v4493
    %6017 = vmatprep.subr.bf16.mxu0 0
    %6018 = vmatpush2.bf16.msra.mxu0 %v4492
    %6019 = vmatprep.subr.bf16.mxu0 0
    %6020 = vmatpush2.bf16.msra.mxu0 %v4491
    %6021 = vmatprep.subr.bf16.mxu0 0
    %6022 = vmatpush2.bf16.msra.mxu0 %v4490
    %6023 = vmatprep.subr.bf16.mxu0 0
    %6024 = vmatpush2.bf16.msra.mxu0 %v4489
    %6025 = vmatprep.mubr.bf16.mxu0 %v1524
    %6026 = vmatmul.mubr.bf16.gmra.mxu0 %v1522
    %v6027 = vpop.f32.mrf.mxu0
    %v6028 = vadd.f32 %v5988, %v6027
    %v6029 = vpop.f32.mrf.mxu0
    %v6030 = vpop.f32.mrf.mxu0
    %v6031 = vpop.f32.mrf.mxu0
    %6032 = vdwg.mxu0
    %6033 = vmatprep.subr.bf16.mxu0 0
    %6034 = vmatpush1.bf16.msra.mxu0 %v4504
    %6035 = vmatprep.subr.bf16.mxu0 0
    %6036 = vmatpush1.bf16.msra.mxu0 %v4503
    %6037 = vmatprep.subr.bf16.mxu0 0
    %6038 = vmatpush1.bf16.msra.mxu0 %v4502
    %6039 = vmatprep.subr.bf16.mxu0 0
    %6040 = vmatpush1.bf16.msra.mxu0 %v4501
    %6041 = vmatprep.subr.bf16.mxu0 0
    %6042 = vmatpush1.bf16.msra.mxu0 %v4500
    %6043 = vmatprep.subr.bf16.mxu0 0
    %6044 = vmatpush1.bf16.msra.mxu0 %v4499
    %6045 = vmatprep.subr.bf16.mxu0 0
    %6046 = vmatpush1.bf16.msra.mxu0 %v4498
    %6047 = vmatprep.subr.bf16.mxu0 0
    %6048 = vmatpush1.bf16.msra.mxu0 %v4497
    %6049 = vmatprep.subr.bf16.mxu0 0
    %6050 = vmatpush2.bf16.msra.mxu0 %v4512
    %6051 = vmatprep.subr.bf16.mxu0 0
    %6052 = vmatpush2.bf16.msra.mxu0 %v4511
    %6053 = vmatprep.subr.bf16.mxu0 0
    %6054 = vmatpush2.bf16.msra.mxu0 %v4510
    %6055 = vmatprep.subr.bf16.mxu0 0
    %6056 = vmatpush2.bf16.msra.mxu0 %v4509
    %6057 = vmatprep.subr.bf16.mxu0 0
    %6058 = vmatpush2.bf16.msra.mxu0 %v4508
    %6059 = vmatprep.subr.bf16.mxu0 0
    %6060 = vmatpush2.bf16.msra.mxu0 %v4507
    %6061 = vmatprep.subr.bf16.mxu0 0
    %6062 = vmatpush2.bf16.msra.mxu0 %v4506
    %6063 = vmatprep.subr.bf16.mxu0 0
    %6064 = vmatpush2.bf16.msra.mxu0 %v4505
    %6065 = vmatprep.mubr.bf16.mxu0 %v1581
    %6066 = vmatmul.mubr.bf16.gmra.mxu0 %v1567
    %v6067 = vpop.f32.mrf.mxu0
    %v6068 = vadd.f32 %v6028, %v6067
    %v6069 = vpop.f32.mrf.mxu0
    %v6070 = vpop.f32.mrf.mxu0
    %v6071 = vpop.f32.mrf.mxu0
    %6072 = vdwg.mxu0
    %6073 = vmatprep.subr.bf16.mxu0 0
    %6074 = vmatpush1.bf16.msra.mxu0 %v4520
    %6075 = vmatprep.subr.bf16.mxu0 0
    %6076 = vmatpush1.bf16.msra.mxu0 %v4519
    %6077 = vmatprep.subr.bf16.mxu0 0
    %6078 = vmatpush1.bf16.msra.mxu0 %v4518
    %6079 = vmatprep.subr.bf16.mxu0 0
    %6080 = vmatpush1.bf16.msra.mxu0 %v4517
    %6081 = vmatprep.subr.bf16.mxu0 0
    %6082 = vmatpush1.bf16.msra.mxu0 %v4516
    %6083 = vmatprep.subr.bf16.mxu0 0
    %6084 = vmatpush1.bf16.msra.mxu0 %v4515
    %6085 = vmatprep.subr.bf16.mxu0 0
    %6086 = vmatpush1.bf16.msra.mxu0 %v4514
    %6087 = vmatprep.subr.bf16.mxu0 0
    %6088 = vmatpush1.bf16.msra.mxu0 %v4513
    %6089 = vmatprep.subr.bf16.mxu0 0
    %6090 = vmatpush2.bf16.msra.mxu0 %v4528
    %6091 = vmatprep.subr.bf16.mxu0 0
    %6092 = vmatpush2.bf16.msra.mxu0 %v4527
    %6093 = vmatprep.subr.bf16.mxu0 0
    %6094 = vmatpush2.bf16.msra.mxu0 %v4526
    %6095 = vmatprep.subr.bf16.mxu0 0
    %6096 = vmatpush2.bf16.msra.mxu0 %v4525
    %6097 = vmatprep.subr.bf16.mxu0 0
    %6098 = vmatpush2.bf16.msra.mxu0 %v4524
    %6099 = vmatprep.subr.bf16.mxu0 0
    %6100 = vmatpush2.bf16.msra.mxu0 %v4523
    %6101 = vmatprep.subr.bf16.mxu0 0
    %6102 = vmatpush2.bf16.msra.mxu0 %v4522
    %6103 = vmatprep.subr.bf16.mxu0 0
    %6104 = vmatpush2.bf16.msra.mxu0 %v4521
    %6105 = vmatprep.mubr.bf16.mxu0 %v1591
    %6106 = vmatmul.mubr.bf16.gmra.mxu0 %v1589
    %v6107 = vpop.f32.mrf.mxu0
    %v6108 = vadd.f32 %v6068, %v6107
    %v6109 = vpop.f32.mrf.mxu0
    %v6110 = vpop.f32.mrf.mxu0
    %v6111 = vpop.f32.mrf.mxu0
    %6112 = vdwg.mxu0
    %6113 = vmatprep.subr.bf16.mxu0 0
    %6114 = vmatpush1.bf16.msra.mxu0 %v4536
    %6115 = vmatprep.subr.bf16.mxu0 0
    %6116 = vmatpush1.bf16.msra.mxu0 %v4535
    %6117 = vmatprep.subr.bf16.mxu0 0
    %6118 = vmatpush1.bf16.msra.mxu0 %v4534
    %6119 = vmatprep.subr.bf16.mxu0 0
    %6120 = vmatpush1.bf16.msra.mxu0 %v4533
    %6121 = vmatprep.subr.bf16.mxu0 0
    %6122 = vmatpush1.bf16.msra.mxu0 %v4532
    %6123 = vmatprep.subr.bf16.mxu0 0
    %6124 = vmatpush1.bf16.msra.mxu0 %v4531
    %6125 = vmatprep.subr.bf16.mxu0 0
    %6126 = vmatpush1.bf16.msra.mxu0 %v4530
    %6127 = vmatprep.subr.bf16.mxu0 0
    %6128 = vmatpush1.bf16.msra.mxu0 %v4529
    %6129 = vmatprep.subr.bf16.mxu0 0
    %6130 = vmatpush2.bf16.msra.mxu0 %v4544
    %6131 = vmatprep.subr.bf16.mxu0 0
    %6132 = vmatpush2.bf16.msra.mxu0 %v4543
    %6133 = vmatprep.subr.bf16.mxu0 0
    %6134 = vmatpush2.bf16.msra.mxu0 %v4542
    %6135 = vmatprep.subr.bf16.mxu0 0
    %6136 = vmatpush2.bf16.msra.mxu0 %v4541
    %6137 = vmatprep.subr.bf16.mxu0 0
    %6138 = vmatpush2.bf16.msra.mxu0 %v4540
    %6139 = vmatprep.subr.bf16.mxu0 0
    %6140 = vmatpush2.bf16.msra.mxu0 %v4539
    %6141 = vmatprep.subr.bf16.mxu0 0
    %6142 = vmatpush2.bf16.msra.mxu0 %v4538
    %6143 = vmatprep.subr.bf16.mxu0 0
    %6144 = vmatpush2.bf16.msra.mxu0 %v4537
    %6145 = vmatprep.mubr.bf16.mxu0 %v1588
    %6146 = vmatmul.mubr.bf16.gmra.mxu0 %v1574
    %v6147 = vpop.f32.mrf.mxu0
    %v6148 = vadd.f32 %v6108, %v6147
    %v6149 = vpop.f32.mrf.mxu0
    %v6150 = vpop.f32.mrf.mxu0
    %v6151 = vpop.f32.mrf.mxu0
    %6152 = vdwg.mxu0
    %6153 = vmatprep.subr.bf16.mxu0 0
    %6154 = vmatpush1.bf16.msra.mxu0 %v4552
    %6155 = vmatprep.subr.bf16.mxu0 0
    %6156 = vmatpush1.bf16.msra.mxu0 %v4551
    %6157 = vmatprep.subr.bf16.mxu0 0
    %6158 = vmatpush1.bf16.msra.mxu0 %v4550
    %6159 = vmatprep.subr.bf16.mxu0 0
    %6160 = vmatpush1.bf16.msra.mxu0 %v4549
    %6161 = vmatprep.subr.bf16.mxu0 0
    %6162 = vmatpush1.bf16.msra.mxu0 %v4548
    %6163 = vmatprep.subr.bf16.mxu0 0
    %6164 = vmatpush1.bf16.msra.mxu0 %v4547
    %6165 = vmatprep.subr.bf16.mxu0 0
    %6166 = vmatpush1.bf16.msra.mxu0 %v4546
    %6167 = vmatprep.subr.bf16.mxu0 0
    %6168 = vmatpush1.bf16.msra.mxu0 %v4545
    %6169 = vmatprep.subr.bf16.mxu0 0
    %6170 = vmatpush2.bf16.msra.mxu0 %v4560
    %6171 = vmatprep.subr.bf16.mxu0 0
    %6172 = vmatpush2.bf16.msra.mxu0 %v4559
    %6173 = vmatprep.subr.bf16.mxu0 0
    %6174 = vmatpush2.bf16.msra.mxu0 %v4558
    %6175 = vmatprep.subr.bf16.mxu0 0
    %6176 = vmatpush2.bf16.msra.mxu0 %v4557
    %6177 = vmatprep.subr.bf16.mxu0 0
    %6178 = vmatpush2.bf16.msra.mxu0 %v4556
    %6179 = vmatprep.subr.bf16.mxu0 0
    %6180 = vmatpush2.bf16.msra.mxu0 %v4555
    %6181 = vmatprep.subr.bf16.mxu0 0
    %6182 = vmatpush2.bf16.msra.mxu0 %v4554
    %6183 = vmatprep.subr.bf16.mxu0 0
    %6184 = vmatpush2.bf16.msra.mxu0 %v4553
    %6185 = vmatprep.mubr.bf16.mxu0 %v1592
    %6186 = vmatmul.mubr.bf16.gmra.mxu0 %v1590
    %v6187 = vpop.f32.mrf.mxu0
    %v6188 = vadd.f32 %v6148, %v6187
    %v6189 = vpop.f32.mrf.mxu0
    %v6190 = vpop.f32.mrf.mxu0
    %v6191 = vpop.f32.mrf.mxu0
    %6192 = vdwg.mxu0
    %6193 = vmatprep.subr.bf16.mxu0 0
    %6194 = vmatpush1.bf16.msra.mxu0 %v4568
    %6195 = vmatprep.subr.bf16.mxu0 0
    %6196 = vmatpush1.bf16.msra.mxu0 %v4567
    %6197 = vmatprep.subr.bf16.mxu0 0
    %6198 = vmatpush1.bf16.msra.mxu0 %v4566
    %6199 = vmatprep.subr.bf16.mxu0 0
    %6200 = vmatpush1.bf16.msra.mxu0 %v4565
    %6201 = vmatprep.subr.bf16.mxu0 0
    %6202 = vmatpush1.bf16.msra.mxu0 %v4564
    %6203 = vmatprep.subr.bf16.mxu0 0
    %6204 = vmatpush1.bf16.msra.mxu0 %v4563
    %6205 = vmatprep.subr.bf16.mxu0 0
    %6206 = vmatpush1.bf16.msra.mxu0 %v4562
    %6207 = vmatprep.subr.bf16.mxu0 0
    %6208 = vmatpush1.bf16.msra.mxu0 %v4561
    %6209 = vmatprep.subr.bf16.mxu0 0
    %6210 = vmatpush2.bf16.msra.mxu0 %v4576
    %6211 = vmatprep.subr.bf16.mxu0 0
    %6212 = vmatpush2.bf16.msra.mxu0 %v4575
    %6213 = vmatprep.subr.bf16.mxu0 0
    %6214 = vmatpush2.bf16.msra.mxu0 %v4574
    %6215 = vmatprep.subr.bf16.mxu0 0
    %6216 = vmatpush2.bf16.msra.mxu0 %v4573
    %6217 = vmatprep.subr.bf16.mxu0 0
    %6218 = vmatpush2.bf16.msra.mxu0 %v4572
    %6219 = vmatprep.subr.bf16.mxu0 0
    %6220 = vmatpush2.bf16.msra.mxu0 %v4571
    %6221 = vmatprep.subr.bf16.mxu0 0
    %6222 = vmatpush2.bf16.msra.mxu0 %v4570
    %6223 = vmatprep.subr.bf16.mxu0 0
    %6224 = vmatpush2.bf16.msra.mxu0 %v4569
    %6225 = vmatprep.mubr.bf16.mxu0 %v1649
    %6226 = vmatmul.mubr.bf16.gmra.mxu0 %v1635
    %v6227 = vpop.f32.mrf.mxu0
    %v6228 = vadd.f32 %v6188, %v6227
    %v6229 = vpop.f32.mrf.mxu0
    %v6230 = vpop.f32.mrf.mxu0
    %v6231 = vpop.f32.mrf.mxu0
    %6232 = vdwg.mxu0
    %6233 = vmatprep.subr.bf16.mxu0 0
    %6234 = vmatpush1.bf16.msra.mxu0 %v4584
    %6235 = vmatprep.subr.bf16.mxu0 0
    %6236 = vmatpush1.bf16.msra.mxu0 %v4583
    %6237 = vmatprep.subr.bf16.mxu0 0
    %6238 = vmatpush1.bf16.msra.mxu0 %v4582
    %6239 = vmatprep.subr.bf16.mxu0 0
    %6240 = vmatpush1.bf16.msra.mxu0 %v4581
    %6241 = vmatprep.subr.bf16.mxu0 0
    %6242 = vmatpush1.bf16.msra.mxu0 %v4580
    %6243 = vmatprep.subr.bf16.mxu0 0
    %6244 = vmatpush1.bf16.msra.mxu0 %v4579
    %6245 = vmatprep.subr.bf16.mxu0 0
    %6246 = vmatpush1.bf16.msra.mxu0 %v4578
    %6247 = vmatprep.subr.bf16.mxu0 0
    %6248 = vmatpush1.bf16.msra.mxu0 %v4577
    %6249 = vmatprep.subr.bf16.mxu0 0
    %6250 = vmatpush2.bf16.msra.mxu0 %v4592
    %6251 = vmatprep.subr.bf16.mxu0 0
    %6252 = vmatpush2.bf16.msra.mxu0 %v4591
    %6253 = vmatprep.subr.bf16.mxu0 0
    %6254 = vmatpush2.bf16.msra.mxu0 %v4590
    %6255 = vmatprep.subr.bf16.mxu0 0
    %6256 = vmatpush2.bf16.msra.mxu0 %v4589
    %6257 = vmatprep.subr.bf16.mxu0 0
    %6258 = vmatpush2.bf16.msra.mxu0 %v4588
    %6259 = vmatprep.subr.bf16.mxu0 0
    %6260 = vmatpush2.bf16.msra.mxu0 %v4587
    %6261 = vmatprep.subr.bf16.mxu0 0
    %6262 = vmatpush2.bf16.msra.mxu0 %v4586
    %6263 = vmatprep.subr.bf16.mxu0 0
    %6264 = vmatpush2.bf16.msra.mxu0 %v4585
    %6265 = vmatprep.mubr.bf16.mxu0 %v1659
    %6266 = vmatmul.mubr.bf16.gmra.mxu0 %v1657
    %v6267 = vpop.f32.mrf.mxu0
    %v6268 = vadd.f32 %v6228, %v6267
    %v6269 = vpop.f32.mrf.mxu0
    %v6270 = vpop.f32.mrf.mxu0
    %v6271 = vpop.f32.mrf.mxu0
    %6272 = vdwg.mxu0
    %6273 = vmatprep.subr.bf16.mxu0 0
    %6274 = vmatpush1.bf16.msra.mxu0 %v4600
    %6275 = vmatprep.subr.bf16.mxu0 0
    %6276 = vmatpush1.bf16.msra.mxu0 %v4599
    %6277 = vmatprep.subr.bf16.mxu0 0
    %6278 = vmatpush1.bf16.msra.mxu0 %v4598
    %6279 = vmatprep.subr.bf16.mxu0 0
    %6280 = vmatpush1.bf16.msra.mxu0 %v4597
    %6281 = vmatprep.subr.bf16.mxu0 0
    %6282 = vmatpush1.bf16.msra.mxu0 %v4596
    %6283 = vmatprep.subr.bf16.mxu0 0
    %6284 = vmatpush1.bf16.msra.mxu0 %v4595
    %6285 = vmatprep.subr.bf16.mxu0 0
    %6286 = vmatpush1.bf16.msra.mxu0 %v4594
    %6287 = vmatprep.subr.bf16.mxu0 0
    %6288 = vmatpush1.bf16.msra.mxu0 %v4593
    %6289 = vmatprep.subr.bf16.mxu0 0
    %6290 = vmatpush2.bf16.msra.mxu0 %v4608
    %6291 = vmatprep.subr.bf16.mxu0 0
    %6292 = vmatpush2.bf16.msra.mxu0 %v4607
    %6293 = vmatprep.subr.bf16.mxu0 0
    %6294 = vmatpush2.bf16.msra.mxu0 %v4606
    %6295 = vmatprep.subr.bf16.mxu0 0
    %6296 = vmatpush2.bf16.msra.mxu0 %v4605
    %6297 = vmatprep.subr.bf16.mxu0 0
    %6298 = vmatpush2.bf16.msra.mxu0 %v4604
    %6299 = vmatprep.subr.bf16.mxu0 0
    %6300 = vmatpush2.bf16.msra.mxu0 %v4603
    %6301 = vmatprep.subr.bf16.mxu0 0
    %6302 = vmatpush2.bf16.msra.mxu0 %v4602
    %6303 = vmatprep.subr.bf16.mxu0 0
    %6304 = vmatpush2.bf16.msra.mxu0 %v4601
    %6305 = vmatprep.mubr.bf16.mxu0 %v1656
    %6306 = vmatmul.mubr.bf16.gmra.mxu0 %v1642
    %v6307 = vpop.f32.mrf.mxu0
    %v6308 = vadd.f32 %v6268, %v6307
    %v6309 = vpop.f32.mrf.mxu0
    %v6310 = vpop.f32.mrf.mxu0
    %v6311 = vpop.f32.mrf.mxu0
    %6312 = vdwg.mxu0
    %6313 = vmatprep.subr.bf16.mxu0 0
    %6314 = vmatpush1.bf16.msra.mxu0 %v4616
    %6315 = vmatprep.subr.bf16.mxu0 0
    %6316 = vmatpush1.bf16.msra.mxu0 %v4615
    %6317 = vmatprep.subr.bf16.mxu0 0
    %6318 = vmatpush1.bf16.msra.mxu0 %v4614
    %6319 = vmatprep.subr.bf16.mxu0 0
    %6320 = vmatpush1.bf16.msra.mxu0 %v4613
    %6321 = vmatprep.subr.bf16.mxu0 0
    %6322 = vmatpush1.bf16.msra.mxu0 %v4612
    %6323 = vmatprep.subr.bf16.mxu0 0
    %6324 = vmatpush1.bf16.msra.mxu0 %v4611
    %6325 = vmatprep.subr.bf16.mxu0 0
    %6326 = vmatpush1.bf16.msra.mxu0 %v4610
    %6327 = vmatprep.subr.bf16.mxu0 0
    %6328 = vmatpush1.bf16.msra.mxu0 %v4609
    %6329 = vmatprep.subr.bf16.mxu0 0
    %6330 = vmatpush2.bf16.msra.mxu0 %v4624
    %6331 = vmatprep.subr.bf16.mxu0 0
    %6332 = vmatpush2.bf16.msra.mxu0 %v4623
    %6333 = vmatprep.subr.bf16.mxu0 0
    %6334 = vmatpush2.bf16.msra.mxu0 %v4622
    %6335 = vmatprep.subr.bf16.mxu0 0
    %6336 = vmatpush2.bf16.msra.mxu0 %v4621
    %6337 = vmatprep.subr.bf16.mxu0 0
    %6338 = vmatpush2.bf16.msra.mxu0 %v4620
    %6339 = vmatprep.subr.bf16.mxu0 0
    %6340 = vmatpush2.bf16.msra.mxu0 %v4619
    %6341 = vmatprep.subr.bf16.mxu0 0
    %6342 = vmatpush2.bf16.msra.mxu0 %v4618
    %6343 = vmatprep.subr.bf16.mxu0 0
    %6344 = vmatpush2.bf16.msra.mxu0 %v4617
    %6345 = vmatprep.mubr.bf16.mxu0 %v1660
    %6346 = vmatmul.mubr.bf16.gmra.mxu0 %v1658
    %v6347 = vpop.f32.mrf.mxu0
    %v6348 = vadd.f32 %v6308, %v6347
    %v6349 = vpop.f32.mrf.mxu0
    %v6350 = vpop.f32.mrf.mxu0
    %v6351 = vpop.f32.mrf.mxu0
    %6352 = vdwg.mxu0
    %6353 = vmatprep.subr.bf16.mxu0 0
    %6354 = vmatpush1.bf16.msra.mxu0 %v4632
    %6355 = vmatprep.subr.bf16.mxu0 0
    %6356 = vmatpush1.bf16.msra.mxu0 %v4631
    %6357 = vmatprep.subr.bf16.mxu0 0
    %6358 = vmatpush1.bf16.msra.mxu0 %v4630
    %6359 = vmatprep.subr.bf16.mxu0 0
    %6360 = vmatpush1.bf16.msra.mxu0 %v4629
    %6361 = vmatprep.subr.bf16.mxu0 0
    %6362 = vmatpush1.bf16.msra.mxu0 %v4628
    %6363 = vmatprep.subr.bf16.mxu0 0
    %6364 = vmatpush1.bf16.msra.mxu0 %v4627
    %6365 = vmatprep.subr.bf16.mxu0 0
    %6366 = vmatpush1.bf16.msra.mxu0 %v4626
    %6367 = vmatprep.subr.bf16.mxu0 0
    %6368 = vmatpush1.bf16.msra.mxu0 %v4625
    %6369 = vmatprep.subr.bf16.mxu0 0
    %6370 = vmatpush2.bf16.msra.mxu0 %v4640
    %6371 = vmatprep.subr.bf16.mxu0 0
    %6372 = vmatpush2.bf16.msra.mxu0 %v4639
    %6373 = vmatprep.subr.bf16.mxu0 0
    %6374 = vmatpush2.bf16.msra.mxu0 %v4638
    %6375 = vmatprep.subr.bf16.mxu0 0
    %6376 = vmatpush2.bf16.msra.mxu0 %v4637
    %6377 = vmatprep.subr.bf16.mxu0 0
    %6378 = vmatpush2.bf16.msra.mxu0 %v4636
    %6379 = vmatprep.subr.bf16.mxu0 0
    %6380 = vmatpush2.bf16.msra.mxu0 %v4635
    %6381 = vmatprep.subr.bf16.mxu0 0
    %6382 = vmatpush2.bf16.msra.mxu0 %v4634
    %6383 = vmatprep.subr.bf16.mxu0 0
    %6384 = vmatpush2.bf16.msra.mxu0 %v4633
    %6385 = vmatprep.mubr.bf16.mxu0 %v1717
    %6386 = vmatmul.mubr.bf16.gmra.mxu0 %v1703
    %v6387 = vpop.f32.mrf.mxu0
    %v6388 = vadd.f32 %v6348, %v6387
    %v6389 = vpop.f32.mrf.mxu0
    %v6390 = vpop.f32.mrf.mxu0
    %v6391 = vpop.f32.mrf.mxu0
    %6392 = vdwg.mxu0
    %6393 = vmatprep.subr.bf16.mxu0 0
    %6394 = vmatpush1.bf16.msra.mxu0 %v4648
    %6395 = vmatprep.subr.bf16.mxu0 0
    %6396 = vmatpush1.bf16.msra.mxu0 %v4647
    %6397 = vmatprep.subr.bf16.mxu0 0
    %6398 = vmatpush1.bf16.msra.mxu0 %v4646
    %6399 = vmatprep.subr.bf16.mxu0 0
    %6400 = vmatpush1.bf16.msra.mxu0 %v4645
    %6401 = vmatprep.subr.bf16.mxu0 0
    %6402 = vmatpush1.bf16.msra.mxu0 %v4644
    %6403 = vmatprep.subr.bf16.mxu0 0
    %6404 = vmatpush1.bf16.msra.mxu0 %v4643
    %6405 = vmatprep.subr.bf16.mxu0 0
    %6406 = vmatpush1.bf16.msra.mxu0 %v4642
    %6407 = vmatprep.subr.bf16.mxu0 0
    %6408 = vmatpush1.bf16.msra.mxu0 %v4641
    %6409 = vmatprep.subr.bf16.mxu0 0
    %6410 = vmatpush2.bf16.msra.mxu0 %v4656
    %6411 = vmatprep.subr.bf16.mxu0 0
    %6412 = vmatpush2.bf16.msra.mxu0 %v4655
    %6413 = vmatprep.subr.bf16.mxu0 0
    %6414 = vmatpush2.bf16.msra.mxu0 %v4654
    %6415 = vmatprep.subr.bf16.mxu0 0
    %6416 = vmatpush2.bf16.msra.mxu0 %v4653
    %6417 = vmatprep.subr.bf16.mxu0 0
    %6418 = vmatpush2.bf16.msra.mxu0 %v4652
    %6419 = vmatprep.subr.bf16.mxu0 0
    %6420 = vmatpush2.bf16.msra.mxu0 %v4651
    %6421 = vmatprep.subr.bf16.mxu0 0
    %6422 = vmatpush2.bf16.msra.mxu0 %v4650
    %6423 = vmatprep.subr.bf16.mxu0 0
    %6424 = vmatpush2.bf16.msra.mxu0 %v4649
    %6425 = vmatprep.mubr.bf16.mxu0 %v1727
    %6426 = vmatmul.mubr.bf16.gmra.mxu0 %v1725
    %v6427 = vpop.f32.mrf.mxu0
    %v6428 = vadd.f32 %v6388, %v6427
    %v6429 = vpop.f32.mrf.mxu0
    %v6430 = vpop.f32.mrf.mxu0
    %v6431 = vpop.f32.mrf.mxu0
    %6432 = vdwg.mxu0
    %6433 = vmatprep.subr.bf16.mxu0 0
    %6434 = vmatpush1.bf16.msra.mxu0 %v4664
    %6435 = vmatprep.subr.bf16.mxu0 0
    %6436 = vmatpush1.bf16.msra.mxu0 %v4663
    %6437 = vmatprep.subr.bf16.mxu0 0
    %6438 = vmatpush1.bf16.msra.mxu0 %v4662
    %6439 = vmatprep.subr.bf16.mxu0 0
    %6440 = vmatpush1.bf16.msra.mxu0 %v4661
    %6441 = vmatprep.subr.bf16.mxu0 0
    %6442 = vmatpush1.bf16.msra.mxu0 %v4660
    %6443 = vmatprep.subr.bf16.mxu0 0
    %6444 = vmatpush1.bf16.msra.mxu0 %v4659
    %6445 = vmatprep.subr.bf16.mxu0 0
    %6446 = vmatpush1.bf16.msra.mxu0 %v4658
    %6447 = vmatprep.subr.bf16.mxu0 0
    %6448 = vmatpush1.bf16.msra.mxu0 %v4657
    %6449 = vmatprep.subr.bf16.mxu0 0
    %6450 = vmatpush2.bf16.msra.mxu0 %v4672
    %6451 = vmatprep.subr.bf16.mxu0 0
    %6452 = vmatpush2.bf16.msra.mxu0 %v4671
    %6453 = vmatprep.subr.bf16.mxu0 0
    %6454 = vmatpush2.bf16.msra.mxu0 %v4670
    %6455 = vmatprep.subr.bf16.mxu0 0
    %6456 = vmatpush2.bf16.msra.mxu0 %v4669
    %6457 = vmatprep.subr.bf16.mxu0 0
    %6458 = vmatpush2.bf16.msra.mxu0 %v4668
    %6459 = vmatprep.subr.bf16.mxu0 0
    %6460 = vmatpush2.bf16.msra.mxu0 %v4667
    %6461 = vmatprep.subr.bf16.mxu0 0
    %6462 = vmatpush2.bf16.msra.mxu0 %v4666
    %6463 = vmatprep.subr.bf16.mxu0 0
    %6464 = vmatpush2.bf16.msra.mxu0 %v4665
    %6465 = vmatprep.mubr.bf16.mxu0 %v1724
    %6466 = vmatmul.mubr.bf16.gmra.mxu0 %v1710
    %v6467 = vpop.f32.mrf.mxu0
    %v6468 = vadd.f32 %v6428, %v6467
    %v6469 = vpop.f32.mrf.mxu0
    %v6470 = vpop.f32.mrf.mxu0
    %v6471 = vpop.f32.mrf.mxu0
    %6472 = vdwg.mxu0
    %6473 = vmatprep.subr.bf16.mxu0 0
    %6474 = vmatpush1.bf16.msra.mxu0 %v4680
    %6475 = vmatprep.subr.bf16.mxu0 0
    %6476 = vmatpush1.bf16.msra.mxu0 %v4679
    %6477 = vmatprep.subr.bf16.mxu0 0
    %6478 = vmatpush1.bf16.msra.mxu0 %v4678
    %6479 = vmatprep.subr.bf16.mxu0 0
    %6480 = vmatpush1.bf16.msra.mxu0 %v4677
    %6481 = vmatprep.subr.bf16.mxu0 0
    %6482 = vmatpush1.bf16.msra.mxu0 %v4676
    %6483 = vmatprep.subr.bf16.mxu0 0
    %6484 = vmatpush1.bf16.msra.mxu0 %v4675
    %6485 = vmatprep.subr.bf16.mxu0 0
    %6486 = vmatpush1.bf16.msra.mxu0 %v4674
    %6487 = vmatprep.subr.bf16.mxu0 0
    %6488 = vmatpush1.bf16.msra.mxu0 %v4673
    %6489 = vmatprep.subr.bf16.mxu0 0
    %6490 = vmatpush2.bf16.msra.mxu0 %v4688
    %6491 = vmatprep.subr.bf16.mxu0 0
    %6492 = vmatpush2.bf16.msra.mxu0 %v4687
    %6493 = vmatprep.subr.bf16.mxu0 0
    %6494 = vmatpush2.bf16.msra.mxu0 %v4686
    %6495 = vmatprep.subr.bf16.mxu0 0
    %6496 = vmatpush2.bf16.msra.mxu0 %v4685
    %6497 = vmatprep.subr.bf16.mxu0 0
    %6498 = vmatpush2.bf16.msra.mxu0 %v4684
    %6499 = vmatprep.subr.bf16.mxu0 0
    %6500 = vmatpush2.bf16.msra.mxu0 %v4683
    %6501 = vmatprep.subr.bf16.mxu0 0
    %6502 = vmatpush2.bf16.msra.mxu0 %v4682
    %6503 = vmatprep.subr.bf16.mxu0 0
    %6504 = vmatpush2.bf16.msra.mxu0 %v4681
    %6505 = vmatprep.mubr.bf16.mxu0 %v1728
    %6506 = vmatmul.mubr.bf16.gmra.mxu0 %v1726
    %v6507 = vpop.f32.mrf.mxu0
    %v6508 = vadd.f32 %v6468, %v6507
    %v6509 = vpop.f32.mrf.mxu0
    %v6510 = vpop.f32.mrf.mxu0
    %v6511 = vpop.f32.mrf.mxu0
    %6512 = vdwg.mxu0
    %6513 = vmatprep.subr.bf16.mxu0 0
    %6514 = vmatpush1.bf16.msra.mxu0 %v4696
    %6515 = vmatprep.subr.bf16.mxu0 0
    %6516 = vmatpush1.bf16.msra.mxu0 %v4695
    %6517 = vmatprep.subr.bf16.mxu0 0
    %6518 = vmatpush1.bf16.msra.mxu0 %v4694
    %6519 = vmatprep.subr.bf16.mxu0 0
    %6520 = vmatpush1.bf16.msra.mxu0 %v4693
    %6521 = vmatprep.subr.bf16.mxu0 0
    %6522 = vmatpush1.bf16.msra.mxu0 %v4692
    %6523 = vmatprep.subr.bf16.mxu0 0
    %6524 = vmatpush1.bf16.msra.mxu0 %v4691
    %6525 = vmatprep.subr.bf16.mxu0 0
    %6526 = vmatpush1.bf16.msra.mxu0 %v4690
    %6527 = vmatprep.subr.bf16.mxu0 0
    %6528 = vmatpush1.bf16.msra.mxu0 %v4689
    %6529 = vmatprep.subr.bf16.mxu0 0
    %6530 = vmatpush2.bf16.msra.mxu0 %v4704
    %6531 = vmatprep.subr.bf16.mxu0 0
    %6532 = vmatpush2.bf16.msra.mxu0 %v4703
    %6533 = vmatprep.subr.bf16.mxu0 0
    %6534 = vmatpush2.bf16.msra.mxu0 %v4702
    %6535 = vmatprep.subr.bf16.mxu0 0
    %6536 = vmatpush2.bf16.msra.mxu0 %v4701
    %6537 = vmatprep.subr.bf16.mxu0 0
    %6538 = vmatpush2.bf16.msra.mxu0 %v4700
    %6539 = vmatprep.subr.bf16.mxu0 0
    %6540 = vmatpush2.bf16.msra.mxu0 %v4699
    %6541 = vmatprep.subr.bf16.mxu0 0
    %6542 = vmatpush2.bf16.msra.mxu0 %v4698
    %6543 = vmatprep.subr.bf16.mxu0 0
    %6544 = vmatpush2.bf16.msra.mxu0 %v4697
    %6545 = vmatprep.mubr.bf16.mxu0 %v1785
    %6546 = vmatmul.mubr.bf16.gmra.mxu0 %v1771
    %v6547 = vpop.f32.mrf.mxu0
    %v6548 = vadd.f32 %v6508, %v6547
    %v6549 = vpop.f32.mrf.mxu0
    %v6550 = vpop.f32.mrf.mxu0
    %v6551 = vpop.f32.mrf.mxu0
    %6552 = vdwg.mxu0
    %6553 = vmatprep.subr.bf16.mxu0 0
    %6554 = vmatpush1.bf16.msra.mxu0 %v4712
    %6555 = vmatprep.subr.bf16.mxu0 0
    %6556 = vmatpush1.bf16.msra.mxu0 %v4711
    %6557 = vmatprep.subr.bf16.mxu0 0
    %6558 = vmatpush1.bf16.msra.mxu0 %v4710
    %6559 = vmatprep.subr.bf16.mxu0 0
    %6560 = vmatpush1.bf16.msra.mxu0 %v4709
    %6561 = vmatprep.subr.bf16.mxu0 0
    %6562 = vmatpush1.bf16.msra.mxu0 %v4708
    %6563 = vmatprep.subr.bf16.mxu0 0
    %6564 = vmatpush1.bf16.msra.mxu0 %v4707
    %6565 = vmatprep.subr.bf16.mxu0 0
    %6566 = vmatpush1.bf16.msra.mxu0 %v4706
    %6567 = vmatprep.subr.bf16.mxu0 0
    %6568 = vmatpush1.bf16.msra.mxu0 %v4705
    %6569 = vmatprep.subr.bf16.mxu0 0
    %6570 = vmatpush2.bf16.msra.mxu0 %v4720
    %6571 = vmatprep.subr.bf16.mxu0 0
    %6572 = vmatpush2.bf16.msra.mxu0 %v4719
    %6573 = vmatprep.subr.bf16.mxu0 0
    %6574 = vmatpush2.bf16.msra.mxu0 %v4718
    %6575 = vmatprep.subr.bf16.mxu0 0
    %6576 = vmatpush2.bf16.msra.mxu0 %v4717
    %6577 = vmatprep.subr.bf16.mxu0 0
    %6578 = vmatpush2.bf16.msra.mxu0 %v4716
    %6579 = vmatprep.subr.bf16.mxu0 0
    %6580 = vmatpush2.bf16.msra.mxu0 %v4715
    %6581 = vmatprep.subr.bf16.mxu0 0
    %6582 = vmatpush2.bf16.msra.mxu0 %v4714
    %6583 = vmatprep.subr.bf16.mxu0 0
    %6584 = vmatpush2.bf16.msra.mxu0 %v4713
    %6585 = vmatprep.mubr.bf16.mxu0 %v1795
    %6586 = vmatmul.mubr.bf16.gmra.mxu0 %v1793
    %v6587 = vpop.f32.mrf.mxu0
    %v6588 = vadd.f32 %v6548, %v6587
    %v6589 = vpop.f32.mrf.mxu0
    %v6590 = vpop.f32.mrf.mxu0
    %v6591 = vpop.f32.mrf.mxu0
    %6592 = vdwg.mxu0
    %6593 = vmatprep.subr.bf16.mxu0 0
    %6594 = vmatpush1.bf16.msra.mxu0 %v4728
    %6595 = vmatprep.subr.bf16.mxu0 0
    %6596 = vmatpush1.bf16.msra.mxu0 %v4727
    %6597 = vmatprep.subr.bf16.mxu0 0
    %6598 = vmatpush1.bf16.msra.mxu0 %v4726
    %6599 = vmatprep.subr.bf16.mxu0 0
    %6600 = vmatpush1.bf16.msra.mxu0 %v4725
    %6601 = vmatprep.subr.bf16.mxu0 0
    %6602 = vmatpush1.bf16.msra.mxu0 %v4724
    %6603 = vmatprep.subr.bf16.mxu0 0
    %6604 = vmatpush1.bf16.msra.mxu0 %v4723
    %6605 = vmatprep.subr.bf16.mxu0 0
    %6606 = vmatpush1.bf16.msra.mxu0 %v4722
    %6607 = vmatprep.subr.bf16.mxu0 0
    %6608 = vmatpush1.bf16.msra.mxu0 %v4721
    %6609 = vmatprep.subr.bf16.mxu0 0
    %6610 = vmatpush2.bf16.msra.mxu0 %v4736
    %6611 = vmatprep.subr.bf16.mxu0 0
    %6612 = vmatpush2.bf16.msra.mxu0 %v4735
    %6613 = vmatprep.subr.bf16.mxu0 0
    %6614 = vmatpush2.bf16.msra.mxu0 %v4734
    %6615 = vmatprep.subr.bf16.mxu0 0
    %6616 = vmatpush2.bf16.msra.mxu0 %v4733
    %6617 = vmatprep.subr.bf16.mxu0 0
    %6618 = vmatpush2.bf16.msra.mxu0 %v4732
    %6619 = vmatprep.subr.bf16.mxu0 0
    %6620 = vmatpush2.bf16.msra.mxu0 %v4731
    %6621 = vmatprep.subr.bf16.mxu0 0
    %6622 = vmatpush2.bf16.msra.mxu0 %v4730
    %6623 = vmatprep.subr.bf16.mxu0 0
    %6624 = vmatpush2.bf16.msra.mxu0 %v4729
    %6625 = vmatprep.mubr.bf16.mxu0 %v1792
    %6626 = vmatmul.mubr.bf16.gmra.mxu0 %v1778
    %v6627 = vpop.f32.mrf.mxu0
    %v6628 = vadd.f32 %v6588, %v6627
    %v6629 = vpop.f32.mrf.mxu0
    %v6630 = vpop.f32.mrf.mxu0
    %v6631 = vpop.f32.mrf.mxu0
    %6632 = vdwg.mxu0
    %6633 = vmatprep.subr.bf16.mxu0 0
    %6634 = vmatpush1.bf16.msra.mxu0 %v4744
    %6635 = vmatprep.subr.bf16.mxu0 0
    %6636 = vmatpush1.bf16.msra.mxu0 %v4743
    %6637 = vmatprep.subr.bf16.mxu0 0
    %6638 = vmatpush1.bf16.msra.mxu0 %v4742
    %6639 = vmatprep.subr.bf16.mxu0 0
    %6640 = vmatpush1.bf16.msra.mxu0 %v4741
    %6641 = vmatprep.subr.bf16.mxu0 0
    %6642 = vmatpush1.bf16.msra.mxu0 %v4740
    %6643 = vmatprep.subr.bf16.mxu0 0
    %6644 = vmatpush1.bf16.msra.mxu0 %v4739
    %6645 = vmatprep.subr.bf16.mxu0 0
    %6646 = vmatpush1.bf16.msra.mxu0 %v4738
    %6647 = vmatprep.subr.bf16.mxu0 0
    %6648 = vmatpush1.bf16.msra.mxu0 %v4737
    %6649 = vmatprep.subr.bf16.mxu0 0
    %6650 = vmatpush2.bf16.msra.mxu0 %v4752
    %6651 = vmatprep.subr.bf16.mxu0 0
    %6652 = vmatpush2.bf16.msra.mxu0 %v4751
    %6653 = vmatprep.subr.bf16.mxu0 0
    %6654 = vmatpush2.bf16.msra.mxu0 %v4750
    %6655 = vmatprep.subr.bf16.mxu0 0
    %6656 = vmatpush2.bf16.msra.mxu0 %v4749
    %6657 = vmatprep.subr.bf16.mxu0 0
    %6658 = vmatpush2.bf16.msra.mxu0 %v4748
    %6659 = vmatprep.subr.bf16.mxu0 0
    %6660 = vmatpush2.bf16.msra.mxu0 %v4747
    %6661 = vmatprep.subr.bf16.mxu0 0
    %6662 = vmatpush2.bf16.msra.mxu0 %v4746
    %6663 = vmatprep.subr.bf16.mxu0 0
    %6664 = vmatpush2.bf16.msra.mxu0 %v4745
    %6665 = vmatprep.mubr.bf16.mxu0 %v1796
    %6666 = vmatmul.mubr.bf16.gmra.mxu0 %v1794
    %v6667 = vpop.f32.mrf.mxu0
    %v6668 = vadd.f32 %v6628, %v6667
    %v6669 = vpop.f32.mrf.mxu0
    %v6670 = vpop.f32.mrf.mxu0
    %v6671 = vpop.f32.mrf.mxu0
    %6672 = vdwg.mxu0
    %6673 = vmatprep.subr.bf16.mxu0 0
    %6674 = vmatpush1.bf16.msra.mxu0 %v4760
    %6675 = vmatprep.subr.bf16.mxu0 0
    %6676 = vmatpush1.bf16.msra.mxu0 %v4759
    %6677 = vmatprep.subr.bf16.mxu0 0
    %6678 = vmatpush1.bf16.msra.mxu0 %v4758
    %6679 = vmatprep.subr.bf16.mxu0 0
    %6680 = vmatpush1.bf16.msra.mxu0 %v4757
    %6681 = vmatprep.subr.bf16.mxu0 0
    %6682 = vmatpush1.bf16.msra.mxu0 %v4756
    %6683 = vmatprep.subr.bf16.mxu0 0
    %6684 = vmatpush1.bf16.msra.mxu0 %v4755
    %6685 = vmatprep.subr.bf16.mxu0 0
    %6686 = vmatpush1.bf16.msra.mxu0 %v4754
    %6687 = vmatprep.subr.bf16.mxu0 0
    %6688 = vmatpush1.bf16.msra.mxu0 %v4753
    %6689 = vmatprep.subr.bf16.mxu0 0
    %6690 = vmatpush2.bf16.msra.mxu0 %v4768
    %6691 = vmatprep.subr.bf16.mxu0 0
    %6692 = vmatpush2.bf16.msra.mxu0 %v4767
    %6693 = vmatprep.subr.bf16.mxu0 0
    %6694 = vmatpush2.bf16.msra.mxu0 %v4766
    %6695 = vmatprep.subr.bf16.mxu0 0
    %6696 = vmatpush2.bf16.msra.mxu0 %v4765
    %6697 = vmatprep.subr.bf16.mxu0 0
    %6698 = vmatpush2.bf16.msra.mxu0 %v4764
    %6699 = vmatprep.subr.bf16.mxu0 0
    %6700 = vmatpush2.bf16.msra.mxu0 %v4763
    %6701 = vmatprep.subr.bf16.mxu0 0
    %6702 = vmatpush2.bf16.msra.mxu0 %v4762
    %6703 = vmatprep.subr.bf16.mxu0 0
    %6704 = vmatpush2.bf16.msra.mxu0 %v4761
    %6705 = vmatprep.mubr.bf16.mxu0 %v1853
    %6706 = vmatmul.mubr.bf16.gmra.mxu0 %v1839
    %v6707 = vpop.f32.mrf.mxu0
    %v6708 = vadd.f32 %v6668, %v6707
    %v6709 = vpop.f32.mrf.mxu0
    %v6710 = vpop.f32.mrf.mxu0
    %v6711 = vpop.f32.mrf.mxu0
    %6712 = vdwg.mxu0
    %6713 = vmatprep.subr.bf16.mxu0 0
    %6714 = vmatpush1.bf16.msra.mxu0 %v4776
    %6715 = vmatprep.subr.bf16.mxu0 0
    %6716 = vmatpush1.bf16.msra.mxu0 %v4775
    %6717 = vmatprep.subr.bf16.mxu0 0
    %6718 = vmatpush1.bf16.msra.mxu0 %v4774
    %6719 = vmatprep.subr.bf16.mxu0 0
    %6720 = vmatpush1.bf16.msra.mxu0 %v4773
    %6721 = vmatprep.subr.bf16.mxu0 0
    %6722 = vmatpush1.bf16.msra.mxu0 %v4772
    %6723 = vmatprep.subr.bf16.mxu0 0
    %6724 = vmatpush1.bf16.msra.mxu0 %v4771
    %6725 = vmatprep.subr.bf16.mxu0 0
    %6726 = vmatpush1.bf16.msra.mxu0 %v4770
    %6727 = vmatprep.subr.bf16.mxu0 0
    %6728 = vmatpush1.bf16.msra.mxu0 %v4769
    %6729 = vmatprep.subr.bf16.mxu0 0
    %6730 = vmatpush2.bf16.msra.mxu0 %v4784
    %6731 = vmatprep.subr.bf16.mxu0 0
    %6732 = vmatpush2.bf16.msra.mxu0 %v4783
    %6733 = vmatprep.subr.bf16.mxu0 0
    %6734 = vmatpush2.bf16.msra.mxu0 %v4782
    %6735 = vmatprep.subr.bf16.mxu0 0
    %6736 = vmatpush2.bf16.msra.mxu0 %v4781
    %6737 = vmatprep.subr.bf16.mxu0 0
    %6738 = vmatpush2.bf16.msra.mxu0 %v4780
    %6739 = vmatprep.subr.bf16.mxu0 0
    %6740 = vmatpush2.bf16.msra.mxu0 %v4779
    %6741 = vmatprep.subr.bf16.mxu0 0
    %6742 = vmatpush2.bf16.msra.mxu0 %v4778
    %6743 = vmatprep.subr.bf16.mxu0 0
    %6744 = vmatpush2.bf16.msra.mxu0 %v4777
    %6745 = vmatprep.mubr.bf16.mxu0 %v1863
    %6746 = vmatmul.mubr.bf16.gmra.mxu0 %v1861
    %v6747 = vpop.f32.mrf.mxu0
    %v6748 = vadd.f32 %v6708, %v6747
    %v6749 = vpop.f32.mrf.mxu0
    %v6750 = vpop.f32.mrf.mxu0
    %v6751 = vpop.f32.mrf.mxu0
    %6752 = vdwg.mxu0
    %6753 = vmatprep.subr.bf16.mxu0 0
    %6754 = vmatpush1.bf16.msra.mxu0 %v4792
    %6755 = vmatprep.subr.bf16.mxu0 0
    %6756 = vmatpush1.bf16.msra.mxu0 %v4791
    %6757 = vmatprep.subr.bf16.mxu0 0
    %6758 = vmatpush1.bf16.msra.mxu0 %v4790
    %6759 = vmatprep.subr.bf16.mxu0 0
    %6760 = vmatpush1.bf16.msra.mxu0 %v4789
    %6761 = vmatprep.subr.bf16.mxu0 0
    %6762 = vmatpush1.bf16.msra.mxu0 %v4788
    %6763 = vmatprep.subr.bf16.mxu0 0
    %6764 = vmatpush1.bf16.msra.mxu0 %v4787
    %6765 = vmatprep.subr.bf16.mxu0 0
    %6766 = vmatpush1.bf16.msra.mxu0 %v4786
    %6767 = vmatprep.subr.bf16.mxu0 0
    %6768 = vmatpush1.bf16.msra.mxu0 %v4785
    %6769 = vmatprep.subr.bf16.mxu0 0
    %6770 = vmatpush2.bf16.msra.mxu0 %v4800
    %6771 = vmatprep.subr.bf16.mxu0 0
    %6772 = vmatpush2.bf16.msra.mxu0 %v4799
    %6773 = vmatprep.subr.bf16.mxu0 0
    %6774 = vmatpush2.bf16.msra.mxu0 %v4798
    %6775 = vmatprep.subr.bf16.mxu0 0
    %6776 = vmatpush2.bf16.msra.mxu0 %v4797
    %6777 = vmatprep.subr.bf16.mxu0 0
    %6778 = vmatpush2.bf16.msra.mxu0 %v4796
    %6779 = vmatprep.subr.bf16.mxu0 0
    %6780 = vmatpush2.bf16.msra.mxu0 %v4795
    %6781 = vmatprep.subr.bf16.mxu0 0
    %6782 = vmatpush2.bf16.msra.mxu0 %v4794
    %6783 = vmatprep.subr.bf16.mxu0 0
    %6784 = vmatpush2.bf16.msra.mxu0 %v4793
    %6785 = vmatprep.mubr.bf16.mxu0 %v1860
    %6786 = vmatmul.mubr.bf16.gmra.mxu0 %v1846
    %v6787 = vpop.f32.mrf.mxu0
    %v6788 = vadd.f32 %v6748, %v6787
    %v6789 = vpop.f32.mrf.mxu0
    %v6790 = vpop.f32.mrf.mxu0
    %v6791 = vpop.f32.mrf.mxu0
    %6792 = vdwg.mxu0
    %6793 = vmatprep.subr.bf16.mxu0 0
    %6794 = vmatpush1.bf16.msra.mxu0 %v4808
    %6795 = vmatprep.subr.bf16.mxu0 0
    %6796 = vmatpush1.bf16.msra.mxu0 %v4807
    %6797 = vmatprep.subr.bf16.mxu0 0
    %6798 = vmatpush1.bf16.msra.mxu0 %v4806
    %6799 = vmatprep.subr.bf16.mxu0 0
    %6800 = vmatpush1.bf16.msra.mxu0 %v4805
    %6801 = vmatprep.subr.bf16.mxu0 0
    %6802 = vmatpush1.bf16.msra.mxu0 %v4804
    %6803 = vmatprep.subr.bf16.mxu0 0
    %6804 = vmatpush1.bf16.msra.mxu0 %v4803
    %6805 = vmatprep.subr.bf16.mxu0 0
    %6806 = vmatpush1.bf16.msra.mxu0 %v4802
    %6807 = vmatprep.subr.bf16.mxu0 0
    %6808 = vmatpush1.bf16.msra.mxu0 %v4801
    %6809 = vmatprep.subr.bf16.mxu0 0
    %6810 = vmatpush2.bf16.msra.mxu0 %v4816
    %6811 = vmatprep.subr.bf16.mxu0 0
    %6812 = vmatpush2.bf16.msra.mxu0 %v4815
    %6813 = vmatprep.subr.bf16.mxu0 0
    %6814 = vmatpush2.bf16.msra.mxu0 %v4814
    %6815 = vmatprep.subr.bf16.mxu0 0
    %6816 = vmatpush2.bf16.msra.mxu0 %v4813
    %6817 = vmatprep.subr.bf16.mxu0 0
    %6818 = vmatpush2.bf16.msra.mxu0 %v4812
    %6819 = vmatprep.subr.bf16.mxu0 0
    %6820 = vmatpush2.bf16.msra.mxu0 %v4811
    %6821 = vmatprep.subr.bf16.mxu0 0
    %6822 = vmatpush2.bf16.msra.mxu0 %v4810
    %6823 = vmatprep.subr.bf16.mxu0 0
    %6824 = vmatpush2.bf16.msra.mxu0 %v4809
    %6825 = vmatprep.mubr.bf16.mxu0 %v1864
    %6826 = vmatmul.mubr.bf16.gmra.mxu0 %v1862
    %v6827 = vpop.f32.mrf.mxu0
    %v6828 = vadd.f32 %v6788, %v6827
    %v6829 = vpop.f32.mrf.mxu0
    %v6830 = vpop.f32.mrf.mxu0
    %v6831 = vpop.f32.mrf.mxu0
    %6832 = vdwg.mxu0
    %v6833 = vmax.f32 %v6828, 0.0
    %v6834 = vld [vmem:[%s3] sm:$0xff]
    %v6835 = vld [vmem:[%s3 + $0x8] sm:$0xff]
    %v6836 = vld [vmem:[%s3 + $0x10] sm:$0xff]
    %v6837 = vld [vmem:[%s3 + $0x18] sm:$0xff]
    %v6838 = vld [vmem:[%s3 + $0x20] sm:$0xff]
    %v6839 = vld [vmem:[%s3 + $0x28] sm:$0xff]
    %v6840 = vld [vmem:[%s3 + $0x30] sm:$0xff]
    %v6841 = vld [vmem:[%s3 + $0x38] sm:$0xff]
    %v6842 = vld [vmem:[%s3 + $0x40] sm:$0xff]
    %v6843 = vld [vmem:[%s3 + $0x48] sm:$0xff]
    %v6844 = vld [vmem:[%s3 + $0x50] sm:$0xff]
    %v6845 = vld [vmem:[%s3 + $0x58] sm:$0xff]
    %v6846 = vld [vmem:[%s3 + $0x60] sm:$0xff]
    %v6847 = vld [vmem:[%s3 + $0x68] sm:$0xff]
    %v6848 = vld [vmem:[%s3 + $0x70] sm:$0xff]
    %v6849 = vld [vmem:[%s3 + $0x78] sm:$0xff]
    %v6850 = vld [vmem:[%s4] sm:$0x1]
    %v6852 = vlaneseq
    %v6853 = vshrl.u32 %v6852, 7
    %v6854 = vsub.s32 0, %v6853
    %v6855 = vrot.slane %v6850, %v6854
    %6857 = vmatprep.subr.mxu0 0.0
    %6858 = vmatpush1.msra.mxu0 %v6849
    %6859 = vmatprep.subr.mxu0 0.0
    %6860 = vmatpush1.msra.mxu0 %v6848
    %6861 = vmatprep.subr.mxu0 0.0
    %6862 = vmatpush1.msra.mxu0 %v6847
    %6863 = vmatprep.subr.mxu0 0.0
    %6864 = vmatpush1.msra.mxu0 %v6846
    %6865 = vmatprep.subr.mxu0 0.0
    %6866 = vmatpush1.msra.mxu0 %v6845
    %6867 = vmatprep.subr.mxu0 0.0
    %6868 = vmatpush1.msra.mxu0 %v6844
    %6869 = vmatprep.subr.mxu0 0.0
    %6870 = vmatpush1.msra.mxu0 %v6843
    %6871 = vmatprep.subr.mxu0 0.0
    %6872 = vmatpush1.msra.mxu0 %v6842
    %6873 = vmatprep.subr.mxu0 0.0
    %6874 = vmatpush1.msra.mxu0 %v6841
    %6875 = vmatprep.subr.mxu0 0.0
    %6876 = vmatpush1.msra.mxu0 %v6840
    %6877 = vmatprep.subr.mxu0 0.0
    %6878 = vmatpush1.msra.mxu0 %v6839
    %6879 = vmatprep.subr.mxu0 0.0
    %6880 = vmatpush1.msra.mxu0 %v6838
    %6881 = vmatprep.subr.mxu0 0.0
    %6882 = vmatpush1.msra.mxu0 %v6837
    %6883 = vmatprep.subr.mxu0 0.0
    %6884 = vmatpush1.msra.mxu0 %v6836
    %6885 = vmatprep.subr.mxu0 0.0
    %6886 = vmatpush1.msra.mxu0 %v6835
    %6887 = vmatprep.subr.mxu0 0.0
    %6888 = vmatpush1.msra.mxu0 %v6834
    %6889 = vmatprep.subr.mxu0 0.0
    %6890 = vmatpush2.msra.mxu0 0.0
    %6891 = vmatprep.subr.mxu0 0.0
    %6892 = vmatpush2.msra.mxu0 0.0
    %6893 = vmatprep.subr.mxu0 0.0
    %6894 = vmatpush2.msra.mxu0 0.0
    %6895 = vmatprep.subr.mxu0 0.0
    %6896 = vmatpush2.msra.mxu0 0.0
    %6897 = vmatprep.subr.mxu0 0.0
    %6898 = vmatpush2.msra.mxu0 0.0
    %6899 = vmatprep.subr.mxu0 0.0
    %6900 = vmatpush2.msra.mxu0 0.0
    %6901 = vmatprep.subr.mxu0 0.0
    %6902 = vmatpush2.msra.mxu0 0.0
    %6903 = vmatprep.subr.mxu0 0.0
    %6904 = vmatpush2.msra.mxu0 0.0
    %6905 = vmatprep.subr.mxu0 0.0
    %6906 = vmatpush2.msra.mxu0 0.0
    %6907 = vmatprep.subr.mxu0 0.0
    %6908 = vmatpush2.msra.mxu0 0.0
    %6909 = vmatprep.subr.mxu0 0.0
    %6910 = vmatpush2.msra.mxu0 0.0
    %6911 = vmatprep.subr.mxu0 0.0
    %6912 = vmatpush2.msra.mxu0 0.0
    %6913 = vmatprep.subr.mxu0 0.0
    %6914 = vmatpush2.msra.mxu0 0.0
    %6915 = vmatprep.subr.mxu0 0.0
    %6916 = vmatpush2.msra.mxu0 0.0
    %6917 = vmatprep.subr.mxu0 0.0
    %6918 = vmatpush2.msra.mxu0 0.0
    %6919 = vmatprep.subr.mxu0 0.0
    %6920 = vmatpush2.msra.mxu0 0.0
    %6921 = vmatprep.mubr.f32.mxu0 0.0
    %6922 = vmatmul.mubr.f32.gmra.mxu0 %v6833
    %v6923 = vpop.f32.mrf.mxu0
    %v6924 = vadd.f32 %v6855, %v6923
    %v6925 = vpop.f32.mrf.mxu0
    %6926 = vdwg.mxu0
    %vm6927 = vcmask 80896
    %v6928 = vsel %vm6927, %v6924, -inf
    %6929 = vmax.xlane.f32.xlu0 %v6928
    %v6930 = vpop.xlane.xlu0 %6929
    %v6931 = vsub.f32 %v6924, %v6930
    %v6932 = vmul.f32 %v6931, 1.442695
    %v6933 = vpow.pop %v6932
    %v6934 = vsel %vm6927, %v6933, 0.0
    %6935 = vadd.xlane.f32.xlu0 %v6934
    %v6936 = vpop.xlane.xlu0 %6935
    %v6937 = vlog2.pop %v6936
    %v6938 = vmul.f32 %v6937, 0.6931472
    %v6939 = vsub.f32 %v6931, %v6938
    %6940 = vst.msk [vmem:[#allocation2] sm:$0xff] %vm6927, %v6939
    // Predicated region
    $region22: #{net_forward.3} parent=1 // pred_check
      _
    $region23: #{net_forward.3} parent=1 // pred_check_branch
      %6942 = sbr.rel (0) target = $region25
    $region24: #{net_forward.3} parent=1 // pred_region
      %s6944 = ssub.s32 128, 32
      %6945 = vsyncadd [#allocation3], %s6944
      %s6946 = sshll.u32 [#allocation2], 4
      %s6947 = int_to_ptr.vmem [resolvable:$true] %s6946
      %6952 = dma.vmem_to_hbm [thread:$0]  %s6947, 32, %s5, [#allocation3], 32, 32, 2
    $region25: #{net_forward.3} parent=1 // pred_fallthru
      _
    // Predicated region
    $region26: #{net_forward.3} parent=1 // pred_check
      _
    $region27: #{net_forward.3} parent=1 // pred_check_branch
      %6954 = sbr.rel (0) target = $region29
    $region28: #{net_forward.3} parent=1 // pred_region
      %6955 = dma.done [#allocation3], 128
    $region29: #{net_forward.3} parent=1 // pred_fallthru
      _
    %6956 = vsyncpa [#allocation3], 1

</llo_original>
